<compile_context>
chip_gen: v7x
topology: tpu7x:2x2x1
jax: 0.10.0
libtpu: 0.0.40
codegen_flags: <defaults>
</compile_context>

<pallas_src>
import jax
import jax.numpy as jnp
from jax.experimental import pallas as pl
from jax.experimental.pallas import tpu as pltpu


_INV_SQRT2 = 0.7071067811865476


def _gelu_exact(x):
    # PyTorch nn.GELU() default = exact erf-based GELU.
    return 0.5 * x * (1.0 + jax.lax.erf(x * jnp.float32(_INV_SQRT2)))


def convnext_block_kernel(x_ref, dww_ref, dwb_ref, w1_ref, b1_ref, w2_ref, b2_ref,
                          out_ref, xpad_scr):
    # x_ref    : (Bt, H, W, C)        NHWC input block (also supplies the residual)
    # dww_ref  : (49, C)              depthwise 7x7 weights, row-major (ki*7+kj, c)
    # dwb_ref  : (1, C)               depthwise bias
    # w1_ref   : (C, 4C)  bf16        LN-weight-folded pwconv1 weight
    # b1_ref   : (1, 4C)  f32         LN-bias-folded pwconv1 bias
    # w2_ref   : (4C, C)  bf16        gamma-folded pwconv2 weight
    # b2_ref   : (1, C)   f32         gamma-folded pwconv2 bias
    # out_ref  : (Bt, H, W, C)
    # xpad_scr : (Bt, H+6, Wp, C) f32 VMEM scratch holding the zero-padded input
    Bt, H, W, C = x_ref.shape

    x = x_ref[...].astype(jnp.float32)

    # --- zero-pad into VMEM (re-zeroed every step: one big aligned store, and it
    #     stays correct under "parallel" grid partitioning where program_id(0)==0
    #     may never run on a given core) ---
    xpad_scr[...] = jnp.zeros_like(xpad_scr)
    xpad_scr[:, 3:3 + H, 3:3 + W, :] = x

    # --- depthwise 7x7 conv: the W (sublane) shift is hoisted to the outer loop
    #     so only 7 sublane-misaligned slices are materialized (not 49); the ki
    #     shift is a cheap leading-dim slice. ---
    acc = jnp.zeros((Bt, H, W, C), jnp.float32)
    for kj in range(7):
        xs = xpad_scr[:, :, kj:kj + W, :]               # (Bt, H+6, W, C)
        for ki in range(7):
            acc = acc + xs[:, ki:ki + H, :, :] * dww_ref[ki * 7 + kj, :]
    acc = acc + dwb_ref[...]

    # --- LayerNorm over channels (eps=1e-6, biased variance, fp32).
    #     The affine (weight/bias) is folded into w1/b1 by the wrapper. ---
    u = jnp.mean(acc, axis=-1, keepdims=True)
    xc = acc - u
    var = jnp.mean(xc * xc, axis=-1, keepdims=True)
    xn = xc * jax.lax.rsqrt(var + jnp.float32(1e-6))

    # --- pointwise MLP on the MXU: bf16 inputs, fp32 accumulation.
    #     (Bt*H*W, C) @ (C, 4C) -> GELU -> @ (4C, C) ---
    xf = xn.reshape(Bt * H * W, C).astype(jnp.bfloat16)
    h = jnp.dot(xf, w1_ref[...], preferred_element_type=jnp.float32) + b1_ref[...]
    h = _gelu_exact(h)                                   # (Bt*H*W, 4C), lane-dense
    y = jnp.dot(h.astype(jnp.bfloat16), w2_ref[...],
                preferred_element_type=jnp.float32) + b2_ref[...]

    # --- residual (layer scale already folded into w2/b2) ---
    y = y.reshape(Bt, H, W, C)
    # NOTE: a lane-dense (Bt, H, W*C) store would require a minor-dim-altering
    # reshape that Mosaic does not reliably lower for C < 128; the store is a
    # small fraction of this conv-bound kernel, so the NHWC store is kept.
    out_ref[...] = (x + y).astype(out_ref.dtype)


def _pick_block_batch(B: int, H: int, W: int, C: int,
                      budget_bytes: int = 20 * 1024 * 1024) -> int:
    """Largest batch tile that (a) fits a conservative per-step VMEM estimate and
    (b) leaves >= 2 grid steps so the "parallel" batch axis can be sharded across
    TensorCores (v7x megacore) when possible."""
    Wp = ((W + 6 + 7) // 8) * 8

    def vmem_est(bt):
        blk = bt * H * W * C * 4                     # one f32 NHWC block
        scratch = bt * (H + 6) * Wp * C * 4          # padded-input scratch
        # in + out double-buffered blocks plus live intermediates
        # (conv acc, LN temps, 4C-wide hidden in f32+bf16, result) ~ 12 blocks.
        return 4 * blk + scratch + 12 * blk

    divisors = [d for d in range(1, B + 1) if B % d == 0]
    fitting = [d for d in divisors if vmem_est(d) <= budget_bytes]
    if not fitting:
        return 1
    multi = [d for d in fitting if B // d >= 2]
    return max(multi) if multi else max(fitting)


@jax.jit
def convnext_block(x_nchw, dww, dwb, nw, nb, w1, b1, w2, b2, gamma):
    B, C, H, W = x_nchw.shape
    Bt = _pick_block_batch(B, H, W, C)
    Wp = ((W + 6 + 7) // 8) * 8          # padded width rounded to a sublane multiple

    x_nhwc = jnp.transpose(x_nchw, (0, 2, 3, 1))

    # Fold the LayerNorm affine into pwconv1 and the layer scale into pwconv2
    # (done in f32, then cast MXU weights to bf16).  Mathematically equivalent:
    #   (xn*nw + nb) @ w1 + b1 = xn @ (diag(nw) w1) + (b1 + nb @ w1)
    #   gamma * (h @ w2 + b2)  = h @ (w2 * gamma)   + gamma * b2
    w1f = (w1 * nw[0][:, None]).astype(jnp.bfloat16)     # (C, 4C)
    b1f = b1 + nb @ w1                                   # (1, 4C) f32
    w2f = (w2 * gamma[0][None, :]).astype(jnp.bfloat16)  # (4C, C)
    b2f = b2 * gamma                                     # (1, C)  f32

    out_nhwc = pl.pallas_call(
        convnext_block_kernel,
        out_shape=jax.ShapeDtypeStruct((B, H, W, C), x_nchw.dtype),
        grid=(B // Bt,),
        in_specs=[
            pl.BlockSpec((Bt, H, W, C), lambda b: (b, 0, 0, 0)),
            pl.BlockSpec((49, C), lambda b: (0, 0)),
            pl.BlockSpec((1, C), lambda b: (0, 0)),
            pl.BlockSpec((C, 4 * C), lambda b: (0, 0)),
            pl.BlockSpec((1, 4 * C), lambda b: (0, 0)),
            pl.BlockSpec((4 * C, C), lambda b: (0, 0)),
            pl.BlockSpec((1, C), lambda b: (0, 0)),
        ],
        out_specs=pl.BlockSpec((Bt, H, W, C), lambda b: (b, 0, 0, 0)),
        scratch_shapes=[pltpu.VMEM((Bt, H + 6, Wp, C), jnp.float32)],
        compiler_params=pltpu.CompilerParams(
            dimension_semantics=("parallel",),
            vmem_limit_bytes=32 * 1024 * 1024),
    )(x_nhwc, dww, dwb, w1f, b1f, w2f, b2f)

    return jnp.transpose(out_nhwc, (0, 3, 1, 2))


def ref_block(x_nchw, dww, dwb, nw, nb, w1, b1, w2, b2, gamma):
    """Pure-JAX fp32 reference of the PyTorch Block forward (unfused parameters)."""
    x = jnp.transpose(x_nchw, (0, 2, 3, 1)).astype(jnp.float32)
    B, H, W, C = x.shape
    xp = jnp.pad(x, ((0, 0), (3, 3), (3, 3), (0, 0)))
    w3 = dww.reshape(7, 7, C)
    acc = jnp.zeros_like(x)
    for ki in range(7):
        for kj in range(7):
            acc = acc + xp[:, ki:ki + H, kj:kj + W, :] * w3[ki, kj]
    acc = acc + dwb[0]
    u = acc.mean(-1, keepdims=True)
    s = ((acc - u) ** 2).mean(-1, keepdims=True)
    xn = (acc - u) / jnp.sqrt(s + 1e-6) * nw[0] + nb[0]
    h = xn @ w1 + b1[0]
    h = 0.5 * h * (1.0 + jax.lax.erf(h * _INV_SQRT2))
    y = (h @ w2 + b2[0]) * gamma[0]
    return jnp.transpose(x + y, (0, 3, 1, 2))


if __name__ == "__main__":
    B, C, H, W = 4, 32, 16, 16        # dim=32 -> hidden 4*dim = 128

    key = jax.random.PRNGKey(0)
    k = jax.random.split(key, 9)

    x = jax.random.normal(k[0], (B, C, H, W), jnp.float32)

    # Parameter shapes follow the PyTorch module __init__:
    #  dwconv: Conv2d(C, C, 7, groups=C) -> weight (C,1,7,7)->(49,C), bias (C,)
    #  norm:   LayerNorm(C) weight/bias (made non-trivial to exercise the fold)
    #  pwconv1: Linear(C, 4C)   pwconv2: Linear(4C, C)
    #  gamma:  layer-scale parameter (non-trivial here so the branch is exercised)
    dww = (jax.random.normal(k[1], (7, 7, C), jnp.float32) * 0.05).reshape(49, C)
    dwb = jax.random.normal(k[2], (1, C), jnp.float32) * 0.02
    nw = 1.0 + jax.random.normal(k[3], (1, C), jnp.float32) * 0.1
    nb = jax.random.normal(k[4], (1, C), jnp.float32) * 0.05
    w1 = jax.random.normal(k[5], (C, 4 * C), jnp.float32) * 0.05
    b1 = jax.random.normal(k[6], (1, 4 * C), jnp.float32) * 0.02
    w2 = jax.random.normal(k[7], (4 * C, C), jnp.float32) * 0.05
    b2 = jax.random.normal(k[8], (1, C), jnp.float32) * 0.02
    gamma = 0.5 * jnp.ones((1, C), jnp.float32)

    params = (dww, dwb, nw, nb, w1, b1, w2, b2, gamma)

    out = jax.block_until_ready(convnext_block(x, *params))
    ref = ref_block(x, *params)

    assert out.shape == (B, C, H, W)
    # bf16 MXU inputs with fp32 accumulation -> compare at a bf16-appropriate tolerance.
    max_err = float(jnp.max(jnp.abs(out - ref)))
    assert jnp.allclose(out, ref, atol=2e-2, rtol=2e-2), max_err

    print("KERNEL_OK")
</pallas_src>

<mosaic_0001>
module attributes {stable_mosaic.version = 11 : i64} {
  func.func @convnext_block_kernel(%arg0: i32, %arg1: memref<2x16x16x32xf32, #tpu.memory_space<vmem>>, %arg2: memref<49x32xf32, #tpu.memory_space<vmem>>, %arg3: memref<1x32xf32, #tpu.memory_space<vmem>>, %arg4: memref<32x128xbf16, #tpu.memory_space<vmem>>, %arg5: memref<1x128xf32, #tpu.memory_space<vmem>>, %arg6: memref<128x32xbf16, #tpu.memory_space<vmem>>, %arg7: memref<1x32xf32, #tpu.memory_space<vmem>>, %arg8: memref<2x16x16x32xf32, #tpu.memory_space<vmem>>, %arg9: memref<2x22x24x32xf32, #tpu.memory_space<vmem>>) attributes {dimension_semantics = [#tpu.dimension_semantics<parallel>], iteration_bounds = array<i64: 2>, scalar_prefetch = 0 : i64, scratch_operands = 1 : i64, tpu.core_type = #tpu.core_type<tc>, window_params = [{transform_indices = @transform_0, window_bounds = array<i64: 2, 16, 16, 32>}, {pipeline_mode = #tpu.pipeline_mode<synchronous>, transform_indices = @transform_1, window_bounds = array<i64: 49, 32>}, {pipeline_mode = #tpu.pipeline_mode<synchronous>, transform_indices = @transform_2, window_bounds = array<i64: 1, 32>}, {pipeline_mode = #tpu.pipeline_mode<synchronous>, transform_indices = @transform_3, window_bounds = array<i64: 32, 128>}, {pipeline_mode = #tpu.pipeline_mode<synchronous>, transform_indices = @transform_4, window_bounds = array<i64: 1, 128>}, {pipeline_mode = #tpu.pipeline_mode<synchronous>, transform_indices = @transform_5, window_bounds = array<i64: 128, 32>}, {pipeline_mode = #tpu.pipeline_mode<synchronous>, transform_indices = @transform_6, window_bounds = array<i64: 1, 32>}, {transform_indices = @transform_7, window_bounds = array<i64: 2, 16, 16, 32>}]} {
    %c0 = arith.constant 0 : index
    %c0_0 = arith.constant 0 : index
    %c0_1 = arith.constant 0 : index
    %c0_2 = arith.constant 0 : index
    %0 = vector.load %arg1[%c0, %c0_0, %c0_1, %c0_2] : memref<2x16x16x32xf32, #tpu.memory_space<vmem>>, vector<2x16x16x32xf32>
    %cst = arith.constant 0.000000e+00 : f32
    %1 = vector.broadcast %cst : f32 to vector<2x22x24x32xf32>
    %c0_3 = arith.constant 0 : index
    %c0_4 = arith.constant 0 : index
    %c0_5 = arith.constant 0 : index
    %c0_6 = arith.constant 0 : index
    %2 = vector.load %arg9[%c0_3, %c0_4, %c0_5, %c0_6] : memref<2x22x24x32xf32, #tpu.memory_space<vmem>>, vector<2x22x24x32xf32>
    tpu.vector_store %arg9[%c0_3, %c0_4, %c0_5, %c0_6], %1 {strides = array<i32>} : memref<2x22x24x32xf32, #tpu.memory_space<vmem>>, vector<2x22x24x32xf32>,
    %c0_7 = arith.constant 0 : index
    %c3 = arith.constant 3 : index
    %c3_8 = arith.constant 3 : index
    %c0_9 = arith.constant 0 : index
    %3 = vector.load %arg9[%c0_7, %c3, %c3_8, %c0_9] : memref<2x22x24x32xf32, #tpu.memory_space<vmem>>, vector<2x16x16x32xf32>
    tpu.vector_store %arg9[%c0_7, %c3, %c3_8, %c0_9], %0 {strides = array<i32>} : memref<2x22x24x32xf32, #tpu.memory_space<vmem>>, vector<2x16x16x32xf32>,
    %cst_10 = arith.constant 0.000000e+00 : f32
    %4 = vector.broadcast %cst_10 : f32 to vector<2x16x16x32xf32>
    %c0_11 = arith.constant 0 : index
    %c0_12 = arith.constant 0 : index
    %c0_13 = arith.constant 0 : index
    %c0_14 = arith.constant 0 : index
    %5 = vector.load %arg9[%c0_11, %c0_12, %c0_13, %c0_14] : memref<2x22x24x32xf32, #tpu.memory_space<vmem>>, vector<2x22x16x32xf32>
    %6 = vector.extract_strided_slice %5 {offsets = [0, 0, 0, 0], sizes = [2, 16, 16, 32], strides = [1, 1, 1, 1]} : vector<2x22x16x32xf32> to vector<2x16x16x32xf32>
    %c0_15 = arith.constant 0 : index
    %c0_16 = arith.constant 0 : index
    %7 = vector.load %arg2[%c0_15, %c0_16] : memref<49x32xf32, #tpu.memory_space<vmem>>, vector<1x32xf32>
    %8 = vector.shape_cast %7 : vector<1x32xf32> to vector<32xf32>
    %9 = vector.shape_cast %8 : vector<32xf32> to vector<1x1x1x32xf32>
    %10 = vector.broadcast %9 : vector<1x1x1x32xf32> to vector<2x16x16x32xf32>
    %11 = arith.mulf %6, %10 : vector<2x16x16x32xf32>
    %12 = arith.addf %4, %11 : vector<2x16x16x32xf32>
    %13 = vector.extract_strided_slice %5 {offsets = [0, 1, 0, 0], sizes = [2, 16, 16, 32], strides = [1, 1, 1, 1]} : vector<2x22x16x32xf32> to vector<2x16x16x32xf32>
    %c7 = arith.constant 7 : index
    %c0_17 = arith.constant 0 : index
    %14 = vector.load %arg2[%c7, %c0_17] : memref<49x32xf32, #tpu.memory_space<vmem>>, vector<1x32xf32>
    %15 = vector.shape_cast %14 : vector<1x32xf32> to vector<32xf32>
    %16 = vector.shape_cast %15 : vector<32xf32> to vector<1x1x1x32xf32>
    %17 = vector.broadcast %16 : vector<1x1x1x32xf32> to vector<2x16x16x32xf32>
    %18 = arith.mulf %13, %17 : vector<2x16x16x32xf32>
    %19 = arith.addf %12, %18 : vector<2x16x16x32xf32>
    %20 = vector.extract_strided_slice %5 {offsets = [0, 2, 0, 0], sizes = [2, 16, 16, 32], strides = [1, 1, 1, 1]} : vector<2x22x16x32xf32> to vector<2x16x16x32xf32>
    %c14 = arith.constant 14 : index
    %c0_18 = arith.constant 0 : index
    %21 = vector.load %arg2[%c14, %c0_18] : memref<49x32xf32, #tpu.memory_space<vmem>>, vector<1x32xf32>
    %22 = vector.shape_cast %21 : vector<1x32xf32> to vector<32xf32>
    %23 = vector.shape_cast %22 : vector<32xf32> to vector<1x1x1x32xf32>
    %24 = vector.broadcast %23 : vector<1x1x1x32xf32> to vector<2x16x16x32xf32>
    %25 = arith.mulf %20, %24 : vector<2x16x16x32xf32>
    %26 = arith.addf %19, %25 : vector<2x16x16x32xf32>
    %27 = vector.extract_strided_slice %5 {offsets = [0, 3, 0, 0], sizes = [2, 16, 16, 32], strides = [1, 1, 1, 1]} : vector<2x22x16x32xf32> to vector<2x16x16x32xf32>
    %c21 = arith.constant 21 : index
    %c0_19 = arith.constant 0 : index
    %28 = vector.load %arg2[%c21, %c0_19] : memref<49x32xf32, #tpu.memory_space<vmem>>, vector<1x32xf32>
    %29 = vector.shape_cast %28 : vector<1x32xf32> to vector<32xf32>
    %30 = vector.shape_cast %29 : vector<32xf32> to vector<1x1x1x32xf32>
    %31 = vector.broadcast %30 : vector<1x1x1x32xf32> to vector<2x16x16x32xf32>
    %32 = arith.mulf %27, %31 : vector<2x16x16x32xf32>
    %33 = arith.addf %26, %32 : vector<2x16x16x32xf32>
    %34 = vector.extract_strided_slice %5 {offsets = [0, 4, 0, 0], sizes = [2, 16, 16, 32], strides = [1, 1, 1, 1]} : vector<2x22x16x32xf32> to vector<2x16x16x32xf32>
    %c28 = arith.constant 28 : index
    %c0_20 = arith.constant 0 : index
    %35 = vector.load %arg2[%c28, %c0_20] : memref<49x32xf32, #tpu.memory_space<vmem>>, vector<1x32xf32>
    %36 = vector.shape_cast %35 : vector<1x32xf32> to vector<32xf32>
    %37 = vector.shape_cast %36 : vector<32xf32> to vector<1x1x1x32xf32>
    %38 = vector.broadcast %37 : vector<1x1x1x32xf32> to vector<2x16x16x32xf32>
    %39 = arith.mulf %34, %38 : vector<2x16x16x32xf32>
    %40 = arith.addf %33, %39 : vector<2x16x16x32xf32>
    %41 = vector.extract_strided_slice %5 {offsets = [0, 5, 0, 0], sizes = [2, 16, 16, 32], strides = [1, 1, 1, 1]} : vector<2x22x16x32xf32> to vector<2x16x16x32xf32>
    %c35 = arith.constant 35 : index
    %c0_21 = arith.constant 0 : index
    %42 = vector.load %arg2[%c35, %c0_21] : memref<49x32xf32, #tpu.memory_space<vmem>>, vector<1x32xf32>
    %43 = vector.shape_cast %42 : vector<1x32xf32> to vector<32xf32>
    %44 = vector.shape_cast %43 : vector<32xf32> to vector<1x1x1x32xf32>
    %45 = vector.broadcast %44 : vector<1x1x1x32xf32> to vector<2x16x16x32xf32>
    %46 = arith.mulf %41, %45 : vector<2x16x16x32xf32>
    %47 = arith.addf %40, %46 : vector<2x16x16x32xf32>
    %48 = vector.extract_strided_slice %5 {offsets = [0, 6, 0, 0], sizes = [2, 16, 16, 32], strides = [1, 1, 1, 1]} : vector<2x22x16x32xf32> to vector<2x16x16x32xf32>
    %c42 = arith.constant 42 : index
    %c0_22 = arith.constant 0 : index
    %49 = vector.load %arg2[%c42, %c0_22] : memref<49x32xf32, #tpu.memory_space<vmem>>, vector<1x32xf32>
    %50 = vector.shape_cast %49 : vector<1x32xf32> to vector<32xf32>
    %51 = vector.shape_cast %50 : vector<32xf32> to vector<1x1x1x32xf32>
    %52 = vector.broadcast %51 : vector<1x1x1x32xf32> to vector<2x16x16x32xf32>
    %53 = arith.mulf %48, %52 : vector<2x16x16x32xf32>
    %54 = arith.addf %47, %53 : vector<2x16x16x32xf32>
    %c0_23 = arith.constant 0 : index
    %c0_24 = arith.constant 0 : index
    %c1 = arith.constant 1 : index
    %c0_25 = arith.constant 0 : index
    %55 = vector.load %arg9[%c0_23, %c0_24, %c1, %c0_25] : memref<2x22x24x32xf32, #tpu.memory_space<vmem>>, vector<2x22x16x32xf32>
    %56 = vector.extract_strided_slice %55 {offsets = [0, 0, 0, 0], sizes = [2, 16, 16, 32], strides = [1, 1, 1, 1]} : vector<2x22x16x32xf32> to vector<2x16x16x32xf32>
    %c1_26 = arith.constant 1 : index
    %c0_27 = arith.constant 0 : index
    %57 = vector.load %arg2[%c1_26, %c0_27] : memref<49x32xf32, #tpu.memory_space<vmem>>, vector<1x32xf32>
    %58 = vector.shape_cast %57 : vector<1x32xf32> to vector<32xf32>
    %59 = vector.shape_cast %58 : vector<32xf32> to vector<1x1x1x32xf32>
    %60 = vector.broadcast %59 : vector<1x1x1x32xf32> to vector<2x16x16x32xf32>
    %61 = arith.mulf %56, %60 : vector<2x16x16x32xf32>
    %62 = arith.addf %54, %61 : vector<2x16x16x32xf32>
    %63 = vector.extract_strided_slice %55 {offsets = [0, 1, 0, 0], sizes = [2, 16, 16, 32], strides = [1, 1, 1, 1]} : vector<2x22x16x32xf32> to vector<2x16x16x32xf32>
    %c8 = arith.constant 8 : index
    %c0_28 = arith.constant 0 : index
    %64 = vector.load %arg2[%c8, %c0_28] : memref<49x32xf32, #tpu.memory_space<vmem>>, vector<1x32xf32>
    %65 = vector.shape_cast %64 : vector<1x32xf32> to vector<32xf32>
    %66 = vector.shape_cast %65 : vector<32xf32> to vector<1x1x1x32xf32>
    %67 = vector.broadcast %66 : vector<1x1x1x32xf32> to vector<2x16x16x32xf32>
    %68 = arith.mulf %63, %67 : vector<2x16x16x32xf32>
    %69 = arith.addf %62, %68 : vector<2x16x16x32xf32>
    %70 = vector.extract_strided_slice %55 {offsets = [0, 2, 0, 0], sizes = [2, 16, 16, 32], strides = [1, 1, 1, 1]} : vector<2x22x16x32xf32> to vector<2x16x16x32xf32>
    %c15 = arith.constant 15 : index
    %c0_29 = arith.constant 0 : index
    %71 = vector.load %arg2[%c15, %c0_29] : memref<49x32xf32, #tpu.memory_space<vmem>>, vector<1x32xf32>
    %72 = vector.shape_cast %71 : vector<1x32xf32> to vector<32xf32>
    %73 = vector.shape_cast %72 : vector<32xf32> to vector<1x1x1x32xf32>
    %74 = vector.broadcast %73 : vector<1x1x1x32xf32> to vector<2x16x16x32xf32>
    %75 = arith.mulf %70, %74 : vector<2x16x16x32xf32>
    %76 = arith.addf %69, %75 : vector<2x16x16x32xf32>
    %77 = vector.extract_strided_slice %55 {offsets = [0, 3, 0, 0], sizes = [2, 16, 16, 32], strides = [1, 1, 1, 1]} : vector<2x22x16x32xf32> to vector<2x16x16x32xf32>
    %c22 = arith.constant 22 : index
    %c0_30 = arith.constant 0 : index
    %78 = vector.load %arg2[%c22, %c0_30] : memref<49x32xf32, #tpu.memory_space<vmem>>, vector<1x32xf32>
    %79 = vector.shape_cast %78 : vector<1x32xf32> to vector<32xf32>
    %80 = vector.shape_cast %79 : vector<32xf32> to vector<1x1x1x32xf32>
    %81 = vector.broadcast %80 : vector<1x1x1x32xf32> to vector<2x16x16x32xf32>
    %82 = arith.mulf %77, %81 : vector<2x16x16x32xf32>
    %83 = arith.addf %76, %82 : vector<2x16x16x32xf32>
    %84 = vector.extract_strided_slice %55 {offsets = [0, 4, 0, 0], sizes = [2, 16, 16, 32], strides = [1, 1, 1, 1]} : vector<2x22x16x32xf32> to vector<2x16x16x32xf32>
    %c29 = arith.constant 29 : index
    %c0_31 = arith.constant 0 : index
    %85 = vector.load %arg2[%c29, %c0_31] : memref<49x32xf32, #tpu.memory_space<vmem>>, vector<1x32xf32>
    %86 = vector.shape_cast %85 : vector<1x32xf32> to vector<32xf32>
    %87 = vector.shape_cast %86 : vector<32xf32> to vector<1x1x1x32xf32>
    %88 = vector.broadcast %87 : vector<1x1x1x32xf32> to vector<2x16x16x32xf32>
    %89 = arith.mulf %84, %88 : vector<2x16x16x32xf32>
    %90 = arith.addf %83, %89 : vector<2x16x16x32xf32>
    %91 = vector.extract_strided_slice %55 {offsets = [0, 5, 0, 0], sizes = [2, 16, 16, 32], strides = [1, 1, 1, 1]} : vector<2x22x16x32xf32> to vector<2x16x16x32xf32>
    %c36 = arith.constant 36 : index
    %c0_32 = arith.constant 0 : index
    %92 = vector.load %arg2[%c36, %c0_32] : memref<49x32xf32, #tpu.memory_space<vmem>>, vector<1x32xf32>
    %93 = vector.shape_cast %92 : vector<1x32xf32> to vector<32xf32>
    %94 = vector.shape_cast %93 : vector<32xf32> to vector<1x1x1x32xf32>
    %95 = vector.broadcast %94 : vector<1x1x1x32xf32> to vector<2x16x16x32xf32>
    %96 = arith.mulf %91, %95 : vector<2x16x16x32xf32>
    %97 = arith.addf %90, %96 : vector<2x16x16x32xf32>
    %98 = vector.extract_strided_slice %55 {offsets = [0, 6, 0, 0], sizes = [2, 16, 16, 32], strides = [1, 1, 1, 1]} : vector<2x22x16x32xf32> to vector<2x16x16x32xf32>
    %c43 = arith.constant 43 : index
    %c0_33 = arith.constant 0 : index
    %99 = vector.load %arg2[%c43, %c0_33] : memref<49x32xf32, #tpu.memory_space<vmem>>, vector<1x32xf32>
    %100 = vector.shape_cast %99 : vector<1x32xf32> to vector<32xf32>
    %101 = vector.shape_cast %100 : vector<32xf32> to vector<1x1x1x32xf32>
    %102 = vector.broadcast %101 : vector<1x1x1x32xf32> to vector<2x16x16x32xf32>
    %103 = arith.mulf %98, %102 : vector<2x16x16x32xf32>
    %104 = arith.addf %97, %103 : vector<2x16x16x32xf32>
    %c0_34 = arith.constant 0 : index
    %c0_35 = arith.constant 0 : index
    %c2 = arith.constant 2 : index
    %c0_36 = arith.constant 0 : index
    %105 = vector.load %arg9[%c0_34, %c0_35, %c2, %c0_36] : memref<2x22x24x32xf32, #tpu.memory_space<vmem>>, vector<2x22x16x32xf32>
    %106 = vector.extract_strided_slice %105 {offsets = [0, 0, 0, 0], sizes = [2, 16, 16, 32], strides = [1, 1, 1, 1]} : vector<2x22x16x32xf32> to vector<2x16x16x32xf32>
    %c2_37 = arith.constant 2 : index
    %c0_38 = arith.constant 0 : index
    %107 = vector.load %arg2[%c2_37, %c0_38] : memref<49x32xf32, #tpu.memory_space<vmem>>, vector<1x32xf32>
    %108 = vector.shape_cast %107 : vector<1x32xf32> to vector<32xf32>
    %109 = vector.shape_cast %108 : vector<32xf32> to vector<1x1x1x32xf32>
    %110 = vector.broadcast %109 : vector<1x1x1x32xf32> to vector<2x16x16x32xf32>
    %111 = arith.mulf %106, %110 : vector<2x16x16x32xf32>
    %112 = arith.addf %104, %111 : vector<2x16x16x32xf32>
    %113 = vector.extract_strided_slice %105 {offsets = [0, 1, 0, 0], sizes = [2, 16, 16, 32], strides = [1, 1, 1, 1]} : vector<2x22x16x32xf32> to vector<2x16x16x32xf32>
    %c9 = arith.constant 9 : index
    %c0_39 = arith.constant 0 : index
    %114 = vector.load %arg2[%c9, %c0_39] : memref<49x32xf32, #tpu.memory_space<vmem>>, vector<1x32xf32>
    %115 = vector.shape_cast %114 : vector<1x32xf32> to vector<32xf32>
    %116 = vector.shape_cast %115 : vector<32xf32> to vector<1x1x1x32xf32>
    %117 = vector.broadcast %116 : vector<1x1x1x32xf32> to vector<2x16x16x32xf32>
    %118 = arith.mulf %113, %117 : vector<2x16x16x32xf32>
    %119 = arith.addf %112, %118 : vector<2x16x16x32xf32>
    %120 = vector.extract_strided_slice %105 {offsets = [0, 2, 0, 0], sizes = [2, 16, 16, 32], strides = [1, 1, 1, 1]} : vector<2x22x16x32xf32> to vector<2x16x16x32xf32>
    %c16 = arith.constant 16 : index
    %c0_40 = arith.constant 0 : index
    %121 = vector.load %arg2[%c16, %c0_40] : memref<49x32xf32, #tpu.memory_space<vmem>>, vector<1x32xf32>
    %122 = vector.shape_cast %121 : vector<1x32xf32> to vector<32xf32>
    %123 = vector.shape_cast %122 : vector<32xf32> to vector<1x1x1x32xf32>
    %124 = vector.broadcast %123 : vector<1x1x1x32xf32> to vector<2x16x16x32xf32>
    %125 = arith.mulf %120, %124 : vector<2x16x16x32xf32>
    %126 = arith.addf %119, %125 : vector<2x16x16x32xf32>
    %127 = vector.extract_strided_slice %105 {offsets = [0, 3, 0, 0], sizes = [2, 16, 16, 32], strides = [1, 1, 1, 1]} : vector<2x22x16x32xf32> to vector<2x16x16x32xf32>
    %c23 = arith.constant 23 : index
    %c0_41 = arith.constant 0 : index
    %128 = vector.load %arg2[%c23, %c0_41] : memref<49x32xf32, #tpu.memory_space<vmem>>, vector<1x32xf32>
    %129 = vector.shape_cast %128 : vector<1x32xf32> to vector<32xf32>
    %130 = vector.shape_cast %129 : vector<32xf32> to vector<1x1x1x32xf32>
    %131 = vector.broadcast %130 : vector<1x1x1x32xf32> to vector<2x16x16x32xf32>
    %132 = arith.mulf %127, %131 : vector<2x16x16x32xf32>
    %133 = arith.addf %126, %132 : vector<2x16x16x32xf32>
    %134 = vector.extract_strided_slice %105 {offsets = [0, 4, 0, 0], sizes = [2, 16, 16, 32], strides = [1, 1, 1, 1]} : vector<2x22x16x32xf32> to vector<2x16x16x32xf32>
    %c30 = arith.constant 30 : index
    %c0_42 = arith.constant 0 : index
    %135 = vector.load %arg2[%c30, %c0_42] : memref<49x32xf32, #tpu.memory_space<vmem>>, vector<1x32xf32>
    %136 = vector.shape_cast %135 : vector<1x32xf32> to vector<32xf32>
    %137 = vector.shape_cast %136 : vector<32xf32> to vector<1x1x1x32xf32>
    %138 = vector.broadcast %137 : vector<1x1x1x32xf32> to vector<2x16x16x32xf32>
    %139 = arith.mulf %134, %138 : vector<2x16x16x32xf32>
    %140 = arith.addf %133, %139 : vector<2x16x16x32xf32>
    %141 = vector.extract_strided_slice %105 {offsets = [0, 5, 0, 0], sizes = [2, 16, 16, 32], strides = [1, 1, 1, 1]} : vector<2x22x16x32xf32> to vector<2x16x16x32xf32>
    %c37 = arith.constant 37 : index
    %c0_43 = arith.constant 0 : index
    %142 = vector.load %arg2[%c37, %c0_43] : memref<49x32xf32, #tpu.memory_space<vmem>>, vector<1x32xf32>
    %143 = vector.shape_cast %142 : vector<1x32xf32> to vector<32xf32>
    %144 = vector.shape_cast %143 : vector<32xf32> to vector<1x1x1x32xf32>
    %145 = vector.broadcast %144 : vector<1x1x1x32xf32> to vector<2x16x16x32xf32>
    %146 = arith.mulf %141, %145 : vector<2x16x16x32xf32>
    %147 = arith.addf %140, %146 : vector<2x16x16x32xf32>
    %148 = vector.extract_strided_slice %105 {offsets = [0, 6, 0, 0], sizes = [2, 16, 16, 32], strides = [1, 1, 1, 1]} : vector<2x22x16x32xf32> to vector<2x16x16x32xf32>
    %c44 = arith.constant 44 : index
    %c0_44 = arith.constant 0 : index
    %149 = vector.load %arg2[%c44, %c0_44] : memref<49x32xf32, #tpu.memory_space<vmem>>, vector<1x32xf32>
    %150 = vector.shape_cast %149 : vector<1x32xf32> to vector<32xf32>
    %151 = vector.shape_cast %150 : vector<32xf32> to vector<1x1x1x32xf32>
    %152 = vector.broadcast %151 : vector<1x1x1x32xf32> to vector<2x16x16x32xf32>
    %153 = arith.mulf %148, %152 : vector<2x16x16x32xf32>
    %154 = arith.addf %147, %153 : vector<2x16x16x32xf32>
    %c0_45 = arith.constant 0 : index
    %c0_46 = arith.constant 0 : index
    %c3_47 = arith.constant 3 : index
    %c0_48 = arith.constant 0 : index
    %155 = vector.load %arg9[%c0_45, %c0_46, %c3_47, %c0_48] : memref<2x22x24x32xf32, #tpu.memory_space<vmem>>, vector<2x22x16x32xf32>
    %156 = vector.extract_strided_slice %155 {offsets = [0, 0, 0, 0], sizes = [2, 16, 16, 32], strides = [1, 1, 1, 1]} : vector<2x22x16x32xf32> to vector<2x16x16x32xf32>
    %c3_49 = arith.constant 3 : index
    %c0_50 = arith.constant 0 : index
    %157 = vector.load %arg2[%c3_49, %c0_50] : memref<49x32xf32, #tpu.memory_space<vmem>>, vector<1x32xf32>
    %158 = vector.shape_cast %157 : vector<1x32xf32> to vector<32xf32>
    %159 = vector.shape_cast %158 : vector<32xf32> to vector<1x1x1x32xf32>
    %160 = vector.broadcast %159 : vector<1x1x1x32xf32> to vector<2x16x16x32xf32>
    %161 = arith.mulf %156, %160 : vector<2x16x16x32xf32>
    %162 = arith.addf %154, %161 : vector<2x16x16x32xf32>
    %163 = vector.extract_strided_slice %155 {offsets = [0, 1, 0, 0], sizes = [2, 16, 16, 32], strides = [1, 1, 1, 1]} : vector<2x22x16x32xf32> to vector<2x16x16x32xf32>
    %c10 = arith.constant 10 : index
    %c0_51 = arith.constant 0 : index
    %164 = vector.load %arg2[%c10, %c0_51] : memref<49x32xf32, #tpu.memory_space<vmem>>, vector<1x32xf32>
    %165 = vector.shape_cast %164 : vector<1x32xf32> to vector<32xf32>
    %166 = vector.shape_cast %165 : vector<32xf32> to vector<1x1x1x32xf32>
    %167 = vector.broadcast %166 : vector<1x1x1x32xf32> to vector<2x16x16x32xf32>
    %168 = arith.mulf %163, %167 : vector<2x16x16x32xf32>
    %169 = arith.addf %162, %168 : vector<2x16x16x32xf32>
    %170 = vector.extract_strided_slice %155 {offsets = [0, 2, 0, 0], sizes = [2, 16, 16, 32], strides = [1, 1, 1, 1]} : vector<2x22x16x32xf32> to vector<2x16x16x32xf32>
    %c17 = arith.constant 17 : index
    %c0_52 = arith.constant 0 : index
    %171 = vector.load %arg2[%c17, %c0_52] : memref<49x32xf32, #tpu.memory_space<vmem>>, vector<1x32xf32>
    %172 = vector.shape_cast %171 : vector<1x32xf32> to vector<32xf32>
    %173 = vector.shape_cast %172 : vector<32xf32> to vector<1x1x1x32xf32>
    %174 = vector.broadcast %173 : vector<1x1x1x32xf32> to vector<2x16x16x32xf32>
    %175 = arith.mulf %170, %174 : vector<2x16x16x32xf32>
    %176 = arith.addf %169, %175 : vector<2x16x16x32xf32>
    %177 = vector.extract_strided_slice %155 {offsets = [0, 3, 0, 0], sizes = [2, 16, 16, 32], strides = [1, 1, 1, 1]} : vector<2x22x16x32xf32> to vector<2x16x16x32xf32>
    %c24 = arith.constant 24 : index
    %c0_53 = arith.constant 0 : index
    %178 = vector.load %arg2[%c24, %c0_53] : memref<49x32xf32, #tpu.memory_space<vmem>>, vector<1x32xf32>
    %179 = vector.shape_cast %178 : vector<1x32xf32> to vector<32xf32>
    %180 = vector.shape_cast %179 : vector<32xf32> to vector<1x1x1x32xf32>
    %181 = vector.broadcast %180 : vector<1x1x1x32xf32> to vector<2x16x16x32xf32>
    %182 = arith.mulf %177, %181 : vector<2x16x16x32xf32>
    %183 = arith.addf %176, %182 : vector<2x16x16x32xf32>
    %184 = vector.extract_strided_slice %155 {offsets = [0, 4, 0, 0], sizes = [2, 16, 16, 32], strides = [1, 1, 1, 1]} : vector<2x22x16x32xf32> to vector<2x16x16x32xf32>
    %c31 = arith.constant 31 : index
    %c0_54 = arith.constant 0 : index
    %185 = vector.load %arg2[%c31, %c0_54] : memref<49x32xf32, #tpu.memory_space<vmem>>, vector<1x32xf32>
    %186 = vector.shape_cast %185 : vector<1x32xf32> to vector<32xf32>
    %187 = vector.shape_cast %186 : vector<32xf32> to vector<1x1x1x32xf32>
    %188 = vector.broadcast %187 : vector<1x1x1x32xf32> to vector<2x16x16x32xf32>
    %189 = arith.mulf %184, %188 : vector<2x16x16x32xf32>
    %190 = arith.addf %183, %189 : vector<2x16x16x32xf32>
    %191 = vector.extract_strided_slice %155 {offsets = [0, 5, 0, 0], sizes = [2, 16, 16, 32], strides = [1, 1, 1, 1]} : vector<2x22x16x32xf32> to vector<2x16x16x32xf32>
    %c38 = arith.constant 38 : index
    %c0_55 = arith.constant 0 : index
    %192 = vector.load %arg2[%c38, %c0_55] : memref<49x32xf32, #tpu.memory_space<vmem>>, vector<1x32xf32>
    %193 = vector.shape_cast %192 : vector<1x32xf32> to vector<32xf32>
    %194 = vector.shape_cast %193 : vector<32xf32> to vector<1x1x1x32xf32>
    %195 = vector.broadcast %194 : vector<1x1x1x32xf32> to vector<2x16x16x32xf32>
    %196 = arith.mulf %191, %195 : vector<2x16x16x32xf32>
    %197 = arith.addf %190, %196 : vector<2x16x16x32xf32>
    %198 = vector.extract_strided_slice %155 {offsets = [0, 6, 0, 0], sizes = [2, 16, 16, 32], strides = [1, 1, 1, 1]} : vector<2x22x16x32xf32> to vector<2x16x16x32xf32>
    %c45 = arith.constant 45 : index
    %c0_56 = arith.constant 0 : index
    %199 = vector.load %arg2[%c45, %c0_56] : memref<49x32xf32, #tpu.memory_space<vmem>>, vector<1x32xf32>
    %200 = vector.shape_cast %199 : vector<1x32xf32> to vector<32xf32>
    %201 = vector.shape_cast %200 : vector<32xf32> to vector<1x1x1x32xf32>
    %202 = vector.broadcast %201 : vector<1x1x1x32xf32> to vector<2x16x16x32xf32>
    %203 = arith.mulf %198, %202 : vector<2x16x16x32xf32>
    %204 = arith.addf %197, %203 : vector<2x16x16x32xf32>
    %c0_57 = arith.constant 0 : index
    %c0_58 = arith.constant 0 : index
    %c4 = arith.constant 4 : index
    %c0_59 = arith.constant 0 : index
    %205 = vector.load %arg9[%c0_57, %c0_58, %c4, %c0_59] : memref<2x22x24x32xf32, #tpu.memory_space<vmem>>, vector<2x22x16x32xf32>
    %206 = vector.extract_strided_slice %205 {offsets = [0, 0, 0, 0], sizes = [2, 16, 16, 32], strides = [1, 1, 1, 1]} : vector<2x22x16x32xf32> to vector<2x16x16x32xf32>
    %c4_60 = arith.constant 4 : index
    %c0_61 = arith.constant 0 : index
    %207 = vector.load %arg2[%c4_60, %c0_61] : memref<49x32xf32, #tpu.memory_space<vmem>>, vector<1x32xf32>
    %208 = vector.shape_cast %207 : vector<1x32xf32> to vector<32xf32>
    %209 = vector.shape_cast %208 : vector<32xf32> to vector<1x1x1x32xf32>
    %210 = vector.broadcast %209 : vector<1x1x1x32xf32> to vector<2x16x16x32xf32>
    %211 = arith.mulf %206, %210 : vector<2x16x16x32xf32>
    %212 = arith.addf %204, %211 : vector<2x16x16x32xf32>
    %213 = vector.extract_strided_slice %205 {offsets = [0, 1, 0, 0], sizes = [2, 16, 16, 32], strides = [1, 1, 1, 1]} : vector<2x22x16x32xf32> to vector<2x16x16x32xf32>
    %c11 = arith.constant 11 : index
    %c0_62 = arith.constant 0 : index
    %214 = vector.load %arg2[%c11, %c0_62] : memref<49x32xf32, #tpu.memory_space<vmem>>, vector<1x32xf32>
    %215 = vector.shape_cast %214 : vector<1x32xf32> to vector<32xf32>
    %216 = vector.shape_cast %215 : vector<32xf32> to vector<1x1x1x32xf32>
    %217 = vector.broadcast %216 : vector<1x1x1x32xf32> to vector<2x16x16x32xf32>
    %218 = arith.mulf %213, %217 : vector<2x16x16x32xf32>
    %219 = arith.addf %212, %218 : vector<2x16x16x32xf32>
    %220 = vector.extract_strided_slice %205 {offsets = [0, 2, 0, 0], sizes = [2, 16, 16, 32], strides = [1, 1, 1, 1]} : vector<2x22x16x32xf32> to vector<2x16x16x32xf32>
    %c18 = arith.constant 18 : index
    %c0_63 = arith.constant 0 : index
    %221 = vector.load %arg2[%c18, %c0_63] : memref<49x32xf32, #tpu.memory_space<vmem>>, vector<1x32xf32>
    %222 = vector.shape_cast %221 : vector<1x32xf32> to vector<32xf32>
    %223 = vector.shape_cast %222 : vector<32xf32> to vector<1x1x1x32xf32>
    %224 = vector.broadcast %223 : vector<1x1x1x32xf32> to vector<2x16x16x32xf32>
    %225 = arith.mulf %220, %224 : vector<2x16x16x32xf32>
    %226 = arith.addf %219, %225 : vector<2x16x16x32xf32>
    %227 = vector.extract_strided_slice %205 {offsets = [0, 3, 0, 0], sizes = [2, 16, 16, 32], strides = [1, 1, 1, 1]} : vector<2x22x16x32xf32> to vector<2x16x16x32xf32>
    %c25 = arith.constant 25 : index
    %c0_64 = arith.constant 0 : index
    %228 = vector.load %arg2[%c25, %c0_64] : memref<49x32xf32, #tpu.memory_space<vmem>>, vector<1x32xf32>
    %229 = vector.shape_cast %228 : vector<1x32xf32> to vector<32xf32>
    %230 = vector.shape_cast %229 : vector<32xf32> to vector<1x1x1x32xf32>
    %231 = vector.broadcast %230 : vector<1x1x1x32xf32> to vector<2x16x16x32xf32>
    %232 = arith.mulf %227, %231 : vector<2x16x16x32xf32>
    %233 = arith.addf %226, %232 : vector<2x16x16x32xf32>
    %234 = vector.extract_strided_slice %205 {offsets = [0, 4, 0, 0], sizes = [2, 16, 16, 32], strides = [1, 1, 1, 1]} : vector<2x22x16x32xf32> to vector<2x16x16x32xf32>
    %c32 = arith.constant 32 : index
    %c0_65 = arith.constant 0 : index
    %235 = vector.load %arg2[%c32, %c0_65] : memref<49x32xf32, #tpu.memory_space<vmem>>, vector<1x32xf32>
    %236 = vector.shape_cast %235 : vector<1x32xf32> to vector<32xf32>
    %237 = vector.shape_cast %236 : vector<32xf32> to vector<1x1x1x32xf32>
    %238 = vector.broadcast %237 : vector<1x1x1x32xf32> to vector<2x16x16x32xf32>
    %239 = arith.mulf %234, %238 : vector<2x16x16x32xf32>
    %240 = arith.addf %233, %239 : vector<2x16x16x32xf32>
    %241 = vector.extract_strided_slice %205 {offsets = [0, 5, 0, 0], sizes = [2, 16, 16, 32], strides = [1, 1, 1, 1]} : vector<2x22x16x32xf32> to vector<2x16x16x32xf32>
    %c39 = arith.constant 39 : index
    %c0_66 = arith.constant 0 : index
    %242 = vector.load %arg2[%c39, %c0_66] : memref<49x32xf32, #tpu.memory_space<vmem>>, vector<1x32xf32>
    %243 = vector.shape_cast %242 : vector<1x32xf32> to vector<32xf32>
    %244 = vector.shape_cast %243 : vector<32xf32> to vector<1x1x1x32xf32>
    %245 = vector.broadcast %244 : vector<1x1x1x32xf32> to vector<2x16x16x32xf32>
    %246 = arith.mulf %241, %245 : vector<2x16x16x32xf32>
    %247 = arith.addf %240, %246 : vector<2x16x16x32xf32>
    %248 = vector.extract_strided_slice %205 {offsets = [0, 6, 0, 0], sizes = [2, 16, 16, 32], strides = [1, 1, 1, 1]} : vector<2x22x16x32xf32> to vector<2x16x16x32xf32>
    %c46 = arith.constant 46 : index
    %c0_67 = arith.constant 0 : index
    %249 = vector.load %arg2[%c46, %c0_67] : memref<49x32xf32, #tpu.memory_space<vmem>>, vector<1x32xf32>
    %250 = vector.shape_cast %249 : vector<1x32xf32> to vector<32xf32>
    %251 = vector.shape_cast %250 : vector<32xf32> to vector<1x1x1x32xf32>
    %252 = vector.broadcast %251 : vector<1x1x1x32xf32> to vector<2x16x16x32xf32>
    %253 = arith.mulf %248, %252 : vector<2x16x16x32xf32>
    %254 = arith.addf %247, %253 : vector<2x16x16x32xf32>
    %c0_68 = arith.constant 0 : index
    %c0_69 = arith.constant 0 : index
    %c5 = arith.constant 5 : index
    %c0_70 = arith.constant 0 : index
    %255 = vector.load %arg9[%c0_68, %c0_69, %c5, %c0_70] : memref<2x22x24x32xf32, #tpu.memory_space<vmem>>, vector<2x22x16x32xf32>
    %256 = vector.extract_strided_slice %255 {offsets = [0, 0, 0, 0], sizes = [2, 16, 16, 32], strides = [1, 1, 1, 1]} : vector<2x22x16x32xf32> to vector<2x16x16x32xf32>
    %c5_71 = arith.constant 5 : index
    %c0_72 = arith.constant 0 : index
    %257 = vector.load %arg2[%c5_71, %c0_72] : memref<49x32xf32, #tpu.memory_space<vmem>>, vector<1x32xf32>
    %258 = vector.shape_cast %257 : vector<1x32xf32> to vector<32xf32>
    %259 = vector.shape_cast %258 : vector<32xf32> to vector<1x1x1x32xf32>
    %260 = vector.broadcast %259 : vector<1x1x1x32xf32> to vector<2x16x16x32xf32>
    %261 = arith.mulf %256, %260 : vector<2x16x16x32xf32>
    %262 = arith.addf %254, %261 : vector<2x16x16x32xf32>
    %263 = vector.extract_strided_slice %255 {offsets = [0, 1, 0, 0], sizes = [2, 16, 16, 32], strides = [1, 1, 1, 1]} : vector<2x22x16x32xf32> to vector<2x16x16x32xf32>
    %c12 = arith.constant 12 : index
    %c0_73 = arith.constant 0 : index
    %264 = vector.load %arg2[%c12, %c0_73] : memref<49x32xf32, #tpu.memory_space<vmem>>, vector<1x32xf32>
    %265 = vector.shape_cast %264 : vector<1x32xf32> to vector<32xf32>
    %266 = vector.shape_cast %265 : vector<32xf32> to vector<1x1x1x32xf32>
    %267 = vector.broadcast %266 : vector<1x1x1x32xf32> to vector<2x16x16x32xf32>
    %268 = arith.mulf %263, %267 : vector<2x16x16x32xf32>
    %269 = arith.addf %262, %268 : vector<2x16x16x32xf32>
    %270 = vector.extract_strided_slice %255 {offsets = [0, 2, 0, 0], sizes = [2, 16, 16, 32], strides = [1, 1, 1, 1]} : vector<2x22x16x32xf32> to vector<2x16x16x32xf32>
    %c19 = arith.constant 19 : index
    %c0_74 = arith.constant 0 : index
    %271 = vector.load %arg2[%c19, %c0_74] : memref<49x32xf32, #tpu.memory_space<vmem>>, vector<1x32xf32>
    %272 = vector.shape_cast %271 : vector<1x32xf32> to vector<32xf32>
    %273 = vector.shape_cast %272 : vector<32xf32> to vector<1x1x1x32xf32>
    %274 = vector.broadcast %273 : vector<1x1x1x32xf32> to vector<2x16x16x32xf32>
    %275 = arith.mulf %270, %274 : vector<2x16x16x32xf32>
    %276 = arith.addf %269, %275 : vector<2x16x16x32xf32>
    %277 = vector.extract_strided_slice %255 {offsets = [0, 3, 0, 0], sizes = [2, 16, 16, 32], strides = [1, 1, 1, 1]} : vector<2x22x16x32xf32> to vector<2x16x16x32xf32>
    %c26 = arith.constant 26 : index
    %c0_75 = arith.constant 0 : index
    %278 = vector.load %arg2[%c26, %c0_75] : memref<49x32xf32, #tpu.memory_space<vmem>>, vector<1x32xf32>
    %279 = vector.shape_cast %278 : vector<1x32xf32> to vector<32xf32>
    %280 = vector.shape_cast %279 : vector<32xf32> to vector<1x1x1x32xf32>
    %281 = vector.broadcast %280 : vector<1x1x1x32xf32> to vector<2x16x16x32xf32>
    %282 = arith.mulf %277, %281 : vector<2x16x16x32xf32>
    %283 = arith.addf %276, %282 : vector<2x16x16x32xf32>
    %284 = vector.extract_strided_slice %255 {offsets = [0, 4, 0, 0], sizes = [2, 16, 16, 32], strides = [1, 1, 1, 1]} : vector<2x22x16x32xf32> to vector<2x16x16x32xf32>
    %c33 = arith.constant 33 : index
    %c0_76 = arith.constant 0 : index
    %285 = vector.load %arg2[%c33, %c0_76] : memref<49x32xf32, #tpu.memory_space<vmem>>, vector<1x32xf32>
    %286 = vector.shape_cast %285 : vector<1x32xf32> to vector<32xf32>
    %287 = vector.shape_cast %286 : vector<32xf32> to vector<1x1x1x32xf32>
    %288 = vector.broadcast %287 : vector<1x1x1x32xf32> to vector<2x16x16x32xf32>
    %289 = arith.mulf %284, %288 : vector<2x16x16x32xf32>
    %290 = arith.addf %283, %289 : vector<2x16x16x32xf32>
    %291 = vector.extract_strided_slice %255 {offsets = [0, 5, 0, 0], sizes = [2, 16, 16, 32], strides = [1, 1, 1, 1]} : vector<2x22x16x32xf32> to vector<2x16x16x32xf32>
    %c40 = arith.constant 40 : index
    %c0_77 = arith.constant 0 : index
    %292 = vector.load %arg2[%c40, %c0_77] : memref<49x32xf32, #tpu.memory_space<vmem>>, vector<1x32xf32>
    %293 = vector.shape_cast %292 : vector<1x32xf32> to vector<32xf32>
    %294 = vector.shape_cast %293 : vector<32xf32> to vector<1x1x1x32xf32>
    %295 = vector.broadcast %294 : vector<1x1x1x32xf32> to vector<2x16x16x32xf32>
    %296 = arith.mulf %291, %295 : vector<2x16x16x32xf32>
    %297 = arith.addf %290, %296 : vector<2x16x16x32xf32>
    %298 = vector.extract_strided_slice %255 {offsets = [0, 6, 0, 0], sizes = [2, 16, 16, 32], strides = [1, 1, 1, 1]} : vector<2x22x16x32xf32> to vector<2x16x16x32xf32>
    %c47 = arith.constant 47 : index
    %c0_78 = arith.constant 0 : index
    %299 = vector.load %arg2[%c47, %c0_78] : memref<49x32xf32, #tpu.memory_space<vmem>>, vector<1x32xf32>
    %300 = vector.shape_cast %299 : vector<1x32xf32> to vector<32xf32>
    %301 = vector.shape_cast %300 : vector<32xf32> to vector<1x1x1x32xf32>
    %302 = vector.broadcast %301 : vector<1x1x1x32xf32> to vector<2x16x16x32xf32>
    %303 = arith.mulf %298, %302 : vector<2x16x16x32xf32>
    %304 = arith.addf %297, %303 : vector<2x16x16x32xf32>
    %c0_79 = arith.constant 0 : index
    %c0_80 = arith.constant 0 : index
    %c6 = arith.constant 6 : index
    %c0_81 = arith.constant 0 : index
    %305 = vector.load %arg9[%c0_79, %c0_80, %c6, %c0_81] : memref<2x22x24x32xf32, #tpu.memory_space<vmem>>, vector<2x22x16x32xf32>
    %306 = vector.extract_strided_slice %305 {offsets = [0, 0, 0, 0], sizes = [2, 16, 16, 32], strides = [1, 1, 1, 1]} : vector<2x22x16x32xf32> to vector<2x16x16x32xf32>
    %c6_82 = arith.constant 6 : index
    %c0_83 = arith.constant 0 : index
    %307 = vector.load %arg2[%c6_82, %c0_83] : memref<49x32xf32, #tpu.memory_space<vmem>>, vector<1x32xf32>
    %308 = vector.shape_cast %307 : vector<1x32xf32> to vector<32xf32>
    %309 = vector.shape_cast %308 : vector<32xf32> to vector<1x1x1x32xf32>
    %310 = vector.broadcast %309 : vector<1x1x1x32xf32> to vector<2x16x16x32xf32>
    %311 = arith.mulf %306, %310 : vector<2x16x16x32xf32>
    %312 = arith.addf %304, %311 : vector<2x16x16x32xf32>
    %313 = vector.extract_strided_slice %305 {offsets = [0, 1, 0, 0], sizes = [2, 16, 16, 32], strides = [1, 1, 1, 1]} : vector<2x22x16x32xf32> to vector<2x16x16x32xf32>
    %c13 = arith.constant 13 : index
    %c0_84 = arith.constant 0 : index
    %314 = vector.load %arg2[%c13, %c0_84] : memref<49x32xf32, #tpu.memory_space<vmem>>, vector<1x32xf32>
    %315 = vector.shape_cast %314 : vector<1x32xf32> to vector<32xf32>
    %316 = vector.shape_cast %315 : vector<32xf32> to vector<1x1x1x32xf32>
    %317 = vector.broadcast %316 : vector<1x1x1x32xf32> to vector<2x16x16x32xf32>
    %318 = arith.mulf %313, %317 : vector<2x16x16x32xf32>
    %319 = arith.addf %312, %318 : vector<2x16x16x32xf32>
    %320 = vector.extract_strided_slice %305 {offsets = [0, 2, 0, 0], sizes = [2, 16, 16, 32], strides = [1, 1, 1, 1]} : vector<2x22x16x32xf32> to vector<2x16x16x32xf32>
    %c20 = arith.constant 20 : index
    %c0_85 = arith.constant 0 : index
    %321 = vector.load %arg2[%c20, %c0_85] : memref<49x32xf32, #tpu.memory_space<vmem>>, vector<1x32xf32>
    %322 = vector.shape_cast %321 : vector<1x32xf32> to vector<32xf32>
    %323 = vector.shape_cast %322 : vector<32xf32> to vector<1x1x1x32xf32>
    %324 = vector.broadcast %323 : vector<1x1x1x32xf32> to vector<2x16x16x32xf32>
    %325 = arith.mulf %320, %324 : vector<2x16x16x32xf32>
    %326 = arith.addf %319, %325 : vector<2x16x16x32xf32>
    %327 = vector.extract_strided_slice %305 {offsets = [0, 3, 0, 0], sizes = [2, 16, 16, 32], strides = [1, 1, 1, 1]} : vector<2x22x16x32xf32> to vector<2x16x16x32xf32>
    %c27 = arith.constant 27 : index
    %c0_86 = arith.constant 0 : index
    %328 = vector.load %arg2[%c27, %c0_86] : memref<49x32xf32, #tpu.memory_space<vmem>>, vector<1x32xf32>
    %329 = vector.shape_cast %328 : vector<1x32xf32> to vector<32xf32>
    %330 = vector.shape_cast %329 : vector<32xf32> to vector<1x1x1x32xf32>
    %331 = vector.broadcast %330 : vector<1x1x1x32xf32> to vector<2x16x16x32xf32>
    %332 = arith.mulf %327, %331 : vector<2x16x16x32xf32>
    %333 = arith.addf %326, %332 : vector<2x16x16x32xf32>
    %334 = vector.extract_strided_slice %305 {offsets = [0, 4, 0, 0], sizes = [2, 16, 16, 32], strides = [1, 1, 1, 1]} : vector<2x22x16x32xf32> to vector<2x16x16x32xf32>
    %c34 = arith.constant 34 : index
    %c0_87 = arith.constant 0 : index
    %335 = vector.load %arg2[%c34, %c0_87] : memref<49x32xf32, #tpu.memory_space<vmem>>, vector<1x32xf32>
    %336 = vector.shape_cast %335 : vector<1x32xf32> to vector<32xf32>
    %337 = vector.shape_cast %336 : vector<32xf32> to vector<1x1x1x32xf32>
    %338 = vector.broadcast %337 : vector<1x1x1x32xf32> to vector<2x16x16x32xf32>
    %339 = arith.mulf %334, %338 : vector<2x16x16x32xf32>
    %340 = arith.addf %333, %339 : vector<2x16x16x32xf32>
    %341 = vector.extract_strided_slice %305 {offsets = [0, 5, 0, 0], sizes = [2, 16, 16, 32], strides = [1, 1, 1, 1]} : vector<2x22x16x32xf32> to vector<2x16x16x32xf32>
    %c41 = arith.constant 41 : index
    %c0_88 = arith.constant 0 : index
    %342 = vector.load %arg2[%c41, %c0_88] : memref<49x32xf32, #tpu.memory_space<vmem>>, vector<1x32xf32>
    %343 = vector.shape_cast %342 : vector<1x32xf32> to vector<32xf32>
    %344 = vector.shape_cast %343 : vector<32xf32> to vector<1x1x1x32xf32>
    %345 = vector.broadcast %344 : vector<1x1x1x32xf32> to vector<2x16x16x32xf32>
    %346 = arith.mulf %341, %345 : vector<2x16x16x32xf32>
    %347 = arith.addf %340, %346 : vector<2x16x16x32xf32>
    %348 = vector.extract_strided_slice %305 {offsets = [0, 6, 0, 0], sizes = [2, 16, 16, 32], strides = [1, 1, 1, 1]} : vector<2x22x16x32xf32> to vector<2x16x16x32xf32>
    %c48 = arith.constant 48 : index
    %c0_89 = arith.constant 0 : index
    %349 = vector.load %arg2[%c48, %c0_89] : memref<49x32xf32, #tpu.memory_space<vmem>>, vector<1x32xf32>
    %350 = vector.shape_cast %349 : vector<1x32xf32> to vector<32xf32>
    %351 = vector.shape_cast %350 : vector<32xf32> to vector<1x1x1x32xf32>
    %352 = vector.broadcast %351 : vector<1x1x1x32xf32> to vector<2x16x16x32xf32>
    %353 = arith.mulf %348, %352 : vector<2x16x16x32xf32>
    %354 = arith.addf %347, %353 : vector<2x16x16x32xf32>
    %c0_90 = arith.constant 0 : index
    %c0_91 = arith.constant 0 : index
    %355 = vector.load %arg3[%c0_90, %c0_91] : memref<1x32xf32, #tpu.memory_space<vmem>>, vector<1x32xf32>
    %356 = vector.shape_cast %355 : vector<1x32xf32> to vector<1x1x1x32xf32>
    %357 = vector.broadcast %356 : vector<1x1x1x32xf32> to vector<2x16x16x32xf32>
    %358 = arith.addf %354, %357 : vector<2x16x16x32xf32>
    %cst_92 = arith.constant dense<0.000000e+00> : vector<2x16x16xf32>
    %359 = vector.multi_reduction <add>, %358, %cst_92 [3] : vector<2x16x16x32xf32> to vector<2x16x16xf32>
    %360 = vector.shape_cast %359 : vector<2x16x16xf32> to vector<2x16x16x1xf32>
    %cst_93 = arith.constant 3.200000e+01 : f32
    %361 = vector.broadcast %cst_93 : f32 to vector<2x16x16x1xf32>
    %362 = arith.divf %360, %361 : vector<2x16x16x1xf32>
    %363 = vector.broadcast %362 : vector<2x16x16x1xf32> to vector<2x16x16x32xf32>
    %364 = arith.subf %358, %363 : vector<2x16x16x32xf32>
    %365 = arith.mulf %364, %364 : vector<2x16x16x32xf32>
    %cst_94 = arith.constant dense<0.000000e+00> : vector<2x16x16xf32>
    %366 = vector.multi_reduction <add>, %365, %cst_94 [3] : vector<2x16x16x32xf32> to vector<2x16x16xf32>
    %367 = vector.shape_cast %366 : vector<2x16x16xf32> to vector<2x16x16x1xf32>
    %cst_95 = arith.constant 3.200000e+01 : f32
    %368 = vector.broadcast %cst_95 : f32 to vector<2x16x16x1xf32>
    %369 = arith.divf %367, %368 : vector<2x16x16x1xf32>
    %cst_96 = arith.constant 9.99999997E-7 : f32
    %370 = vector.broadcast %cst_96 : f32 to vector<2x16x16x1xf32>
    %371 = arith.addf %369, %370 : vector<2x16x16x1xf32>
    %372 = math.rsqrt %371 : vector<2x16x16x1xf32>
    %373 = vector.broadcast %372 : vector<2x16x16x1xf32> to vector<2x16x16x32xf32>
    %374 = arith.mulf %364, %373 : vector<2x16x16x32xf32>
    %375 = vector.shape_cast %374 : vector<2x16x16x32xf32> to vector<512x32xf32>
    %376 = arith.truncf %375 : vector<512x32xf32> to vector<512x32xbf16>
    %c0_97 = arith.constant 0 : index
    %c0_98 = arith.constant 0 : index
    %377 = vector.load %arg4[%c0_97, %c0_98] : memref<32x128xbf16, #tpu.memory_space<vmem>>, vector<32x128xbf16>
    %cst_99 = arith.constant dense<0.000000e+00> : vector<512x128xf32>
    %378 = tpu.matmul %376, %377, %cst_99 {dimension_numbers = #tpu.dot_dimension_numbers<[1], [0], [0], [1], [0, 0, 1, 1], [], []>} : vector<512x32xbf16>, vector<32x128xbf16>, vector<512x128xf32> -> vector<512x128xf32>
    %c0_100 = arith.constant 0 : index
    %c0_101 = arith.constant 0 : index
    %379 = vector.load %arg5[%c0_100, %c0_101] : memref<1x128xf32, #tpu.memory_space<vmem>>, vector<1x128xf32>
    %380 = vector.broadcast %379 : vector<1x128xf32> to vector<512x128xf32>
    %381 = arith.addf %378, %380 : vector<512x128xf32>
    %cst_102 = arith.constant 5.000000e-01 : f32
    %382 = vector.broadcast %cst_102 : f32 to vector<512x128xf32>
    %383 = arith.mulf %382, %381 : vector<512x128xf32>
    %cst_103 = arith.constant 0.707106769 : f32
    %384 = vector.broadcast %cst_103 : f32 to vector<512x128xf32>
    %385 = arith.mulf %381, %384 : vector<512x128xf32>
    %386 = math.erf %385 : vector<512x128xf32>
    %cst_104 = arith.constant 1.000000e+00 : f32
    %387 = vector.broadcast %cst_104 : f32 to vector<512x128xf32>
    %388 = arith.addf %387, %386 : vector<512x128xf32>
    %389 = arith.mulf %383, %388 : vector<512x128xf32>
    %390 = arith.truncf %389 : vector<512x128xf32> to vector<512x128xbf16>
    %c0_105 = arith.constant 0 : index
    %c0_106 = arith.constant 0 : index
    %391 = vector.load %arg6[%c0_105, %c0_106] : memref<128x32xbf16, #tpu.memory_space<vmem>>, vector<128x32xbf16>
    %cst_107 = arith.constant dense<0.000000e+00> : vector<512x32xf32>
    %392 = tpu.matmul %390, %391, %cst_107 {dimension_numbers = #tpu.dot_dimension_numbers<[1], [0], [0], [1], [0, 0, 1, 1], [], []>} : vector<512x128xbf16>, vector<128x32xbf16>, vector<512x32xf32> -> vector<512x32xf32>
    %c0_108 = arith.constant 0 : index
    %c0_109 = arith.constant 0 : index
    %393 = vector.load %arg7[%c0_108, %c0_109] : memref<1x32xf32, #tpu.memory_space<vmem>>, vector<1x32xf32>
    %394 = vector.broadcast %393 : vector<1x32xf32> to vector<512x32xf32>
    %395 = arith.addf %392, %394 : vector<512x32xf32>
    %396 = vector.shape_cast %395 : vector<512x32xf32> to vector<2x16x16x32xf32>
    %397 = arith.addf %0, %396 : vector<2x16x16x32xf32>
    %c0_110 = arith.constant 0 : index
    %c0_111 = arith.constant 0 : index
    %c0_112 = arith.constant 0 : index
    %c0_113 = arith.constant 0 : index
    %398 = vector.load %arg8[%c0_110, %c0_111, %c0_112, %c0_113] : memref<2x16x16x32xf32, #tpu.memory_space<vmem>>, vector<2x16x16x32xf32>
    tpu.vector_store %arg8[%c0_110, %c0_111, %c0_112, %c0_113], %397 {strides = array<i32>} : memref<2x16x16x32xf32, #tpu.memory_space<vmem>>, vector<2x16x16x32xf32>,
    return
  }
  func.func @transform_0(%arg0: i32) -> (i32, i32, i32, i32) {
    %c0_i32 = arith.constant 0 : i32
    %c0_i32_0 = arith.constant 0 : i32
    %c0_i32_1 = arith.constant 0 : i32
    %c0_i32_2 = arith.constant 0 : i32
    return %arg0, %c0_i32, %c0_i32_0, %c0_i32_1 : i32, i32, i32, i32
  }
  func.func @transform_1(%arg0: i32) -> (i32, i32) {
    %c0_i32 = arith.constant 0 : i32
    %c0_i32_0 = arith.constant 0 : i32
    %c0_i32_1 = arith.constant 0 : i32
    return %c0_i32, %c0_i32_0 : i32, i32
  }
  func.func @transform_2(%arg0: i32) -> (i32, i32) {
    %c0_i32 = arith.constant 0 : i32
    %c0_i32_0 = arith.constant 0 : i32
    %c0_i32_1 = arith.constant 0 : i32
    return %c0_i32, %c0_i32_0 : i32, i32
  }
  func.func @transform_3(%arg0: i32) -> (i32, i32) {
    %c0_i32 = arith.constant 0 : i32
    %c0_i32_0 = arith.constant 0 : i32
    %c0_i32_1 = arith.constant 0 : i32
    return %c0_i32, %c0_i32_0 : i32, i32
  }
  func.func @transform_4(%arg0: i32) -> (i32, i32) {
    %c0_i32 = arith.constant 0 : i32
    %c0_i32_0 = arith.constant 0 : i32
    %c0_i32_1 = arith.constant 0 : i32
    return %c0_i32, %c0_i32_0 : i32, i32
  }
  func.func @transform_5(%arg0: i32) -> (i32, i32) {
    %c0_i32 = arith.constant 0 : i32
    %c0_i32_0 = arith.constant 0 : i32
    %c0_i32_1 = arith.constant 0 : i32
    return %c0_i32, %c0_i32_0 : i32, i32
  }
  func.func @transform_6(%arg0: i32) -> (i32, i32) {
    %c0_i32 = arith.constant 0 : i32
    %c0_i32_0 = arith.constant 0 : i32
    %c0_i32_1 = arith.constant 0 : i32
    return %c0_i32, %c0_i32_0 : i32, i32
  }
  func.func @transform_7(%arg0: i32) -> (i32, i32, i32, i32) {
    %c0_i32 = arith.constant 0 : i32
    %c0_i32_0 = arith.constant 0 : i32
    %c0_i32_1 = arith.constant 0 : i32
    %c0_i32_2 = arith.constant 0 : i32
    return %arg0, %c0_i32, %c0_i32_0, %c0_i32_1 : i32, i32, i32, i32
  }
}

</mosaic_0001>

<llo_original>
// kernel: mul.17
$region0: #{mul.17}
  #allocation0 [shape = 's32[1]{0}', space=sflag, size = 0x4, scoped, tag = 'scoped memory for mul.17']
  %s0 = inlined_call_operand.vmem [shape: f32[1,32], index: 0, kind: input, shape index: {}]
  %s1 = inlined_call_operand.vmem [shape: f32[1,32], index: 1, kind: input, shape index: {}]
  %s2 = inlined_call_operand.vmem [shape: f32[1,32], index: 2, kind: output, shape index: {}]
  %v3 = vld [vmem:[%s0] sm:$0x1]
  %v4 = vld [vmem:[%s1] sm:$0x1]
  %5 = xla_tuple %v3, %v4
  %6 = xla_tuple %5
  %v7 = vmul.f32 %v3, %v4
  %8 = xla_tuple %v7
  %9 = vst [vmem:[%s2] sm:$0x1] %v7

// kernel: convnext_block.1
$region0: #{convnext_block.1}
  #allocation0 [shape = 'u32[]', space=smem, size = 0x4, offset = 0x4, fixed_abs, tag = 'smem constant byte address 0x4 - core index']
  #allocation1 [shape = 'u32[144,128]{1,0:T(1,128)}', space=vmem, size = 0x12000, scoped, tag = 'internal scratch']
  #allocation2 [shape = 'f32[2,22,24,32]{3,2,1,0:T(8,128)}', space=vmem, size = 0x84000, scoped, tag = 'scratch operand']
  %s0 = inlined_call_operand.hbm [shape: f32[4,16,16,32], index: 0, kind: input, shape index: {}]
  %s1 = inlined_call_operand.vmem [shape: f32[49,32], index: 1, kind: input, shape index: {}]
  %s2 = inlined_call_operand.vmem [shape: f32[1,32], index: 2, kind: input, shape index: {}]
  %s3 = inlined_call_operand.vmem [shape: bf16[32,128], index: 3, kind: input, shape index: {}]
  %s4 = inlined_call_operand.vmem [shape: f32[1,128], index: 4, kind: input, shape index: {}]
  %s5 = inlined_call_operand.vmem [shape: bf16[128,32], index: 5, kind: input, shape index: {}]
  %s6 = inlined_call_operand.vmem [shape: f32[1,32], index: 6, kind: input, shape index: {}]
  %s7 = inlined_call_operand.hbm [shape: f32[4,16,16,32], index: 7, kind: output, shape index: {}]
  %s8 = sld [smem:[#allocation0]]
  $region65: #{convnext_block.1} parent=0
    _
  %s10 = ssub.s32 1, %s8
  %s11 = scalar_select 0, %s10, %s8
  $region1: #{convnext_block.1} parent=0
    #allocation3 [shape = 'u8[524288]{0}', space=vmem, size = 0x80000, scoped, tag = 'input window, operand 0']
    #allocation4 [shape = 's32[2]{0}', space=sflag, size = 0x8, scoped, tag = 'scoped memory for convnext_block.1']
    #allocation5 [shape = 's32[2]{0}', space=sflag, size = 0x8, scoped, tag = 'scoped memory for convnext_block.1']
    #allocation6 [shape = 'u8[524288]{0}', space=vmem, size = 0x80000, scoped, tag = 'output window, operand 0']
    %12 = vsyncpa [#allocation4], 0
    %s13 = scalar_lea.sflag [#allocation4], 1
    %14 = vsyncpa %s13, 0
    %15 = vsyncpa [#allocation5], 0
    %s16 = scalar_lea.sflag [#allocation5], 1
    %17 = vsyncpa %s16, 0
    loop: start=0, step=1, limit=4
    $region2: #{convnext_block.1} parent=1 // loop_pre_header
      _
    $region3: #{convnext_block.1} parent=1 // loop_header
      %s19 = sphi 0, %s23
      %p20 = scmp.ge.s32.totalorder %s19, 4
      %s29 = sphi 0, %s31
      %s32 = sphi 0, %s29
      %s33 = sphi 0, %s32
      %s49 = sphi 0, %s33
      %s53 = sphi 0, %s53
      %s55 = sphi 0, %s53
      %s56 = sphi 0, %s55
      %s70 = sphi 0, %s56
      %s74 = sphi 0, %s74
      %s76 = sphi 0, %s74
      %s77 = sphi 0, %s76
      %s91 = sphi 0, %s77
      %s95 = sphi 0, %s95
      %s97 = sphi 0, %s95
      %s98 = sphi 0, %s97
      %s112 = sphi 0, %s98
      %s116 = sphi 0, %s116
      %s118 = sphi 0, %s116
      %s119 = sphi 0, %s118
      %s133 = sphi 0, %s119
      %s137 = sphi 0, %s137
      %s139 = sphi 0, %s137
      %s140 = sphi 0, %s139
      %s154 = sphi 0, %s140
      %s158 = sphi 0, %s158
      %s160 = sphi 0, %s158
      %s161 = sphi 0, %s160
      %s175 = sphi 0, %s161
      %s181 = sphi 0, %s183
      %s184 = sphi 0, %s181
      %s185 = sphi 0, %s184
      %s201 = sphi 0, %s185
    $region4: #{convnext_block.1} parent=1 // loop_header_branch
      %22 = sbr.rel (%p20) target = $region8
    $region5: #{convnext_block.1} parent=1 // loop_body
      %s24 = ssub.s32 %s19, 1
      %s25 = ssub.s32 %s19, 2
      %s26 = sadd.s32 %s19, 1
      %s27 = ssub.s32 %s19, %s26
      %p28 = scmp.eq.s32.totalorder %s27, 0
      %s30 = sadd.s32 %s29, 1
      %s31 = scalar_select %p28, %s29, %s30
      %p34 = pneg %p28
      %p35 = scmp.eq.s32.totalorder %s19, 1
      %p36 = por %p34, %p35
      %p37 = scmp.ne.s32.totalorder %s29, %s32
      %p38 = scmp.eq.s32.totalorder %s19, 0
      %p39 = por %p37, %p38
      %p40 = scmp.ne.s32.totalorder %s29, %s32
      %p41 = scmp.eq.s32.totalorder %s24, 1
      %p42 = por %p40, %p41
      %p43 = scmp.ne.s32.totalorder %s32, %s33
      %p44 = scmp.eq.s32.totalorder %s24, 0
      %p45 = por %p43, %p44
      %p46 = scmp.ne.s32.totalorder %s32, %s33
      %p47 = scmp.eq.s32.totalorder %s25, 1
      %p48 = por %p46, %p47
      %p50 = scmp.ne.s32.totalorder %s33, %s49
      %p51 = scmp.eq.s32.totalorder %s25, 0
      %p52 = por %p50, %p51
      %s54 = sadd.s32 %s53, 1
      %p57 = scmp.eq.s32.totalorder %s19, 1
      %p58 = scmp.ne.s32.totalorder %s53, %s55
      %p59 = scmp.eq.s32.totalorder %s19, 0
      %p60 = por %p58, %p59
      %p61 = scmp.ne.s32.totalorder %s53, %s55
      %p62 = scmp.eq.s32.totalorder %s24, 1
      %p63 = por %p61, %p62
      %p64 = scmp.ne.s32.totalorder %s55, %s56
      %p65 = scmp.eq.s32.totalorder %s24, 0
      %p66 = por %p64, %p65
      %p67 = scmp.ne.s32.totalorder %s55, %s56
      %p68 = scmp.eq.s32.totalorder %s25, 1
      %p69 = por %p67, %p68
      %p71 = scmp.ne.s32.totalorder %s56, %s70
      %p72 = scmp.eq.s32.totalorder %s25, 0
      %p73 = por %p71, %p72
      %s75 = sadd.s32 %s74, 1
      %p78 = scmp.eq.s32.totalorder %s19, 1
      %p79 = scmp.ne.s32.totalorder %s74, %s76
      %p80 = scmp.eq.s32.totalorder %s19, 0
      %p81 = por %p79, %p80
      %p82 = scmp.ne.s32.totalorder %s74, %s76
      %p83 = scmp.eq.s32.totalorder %s24, 1
      %p84 = por %p82, %p83
      %p85 = scmp.ne.s32.totalorder %s76, %s77
      %p86 = scmp.eq.s32.totalorder %s24, 0
      %p87 = por %p85, %p86
      %p88 = scmp.ne.s32.totalorder %s76, %s77
      %p89 = scmp.eq.s32.totalorder %s25, 1
      %p90 = por %p88, %p89
      %p92 = scmp.ne.s32.totalorder %s77, %s91
      %p93 = scmp.eq.s32.totalorder %s25, 0
      %p94 = por %p92, %p93
      %s96 = sadd.s32 %s95, 1
      %p99 = scmp.eq.s32.totalorder %s19, 1
      %p100 = scmp.ne.s32.totalorder %s95, %s97
      %p101 = scmp.eq.s32.totalorder %s19, 0
      %p102 = por %p100, %p101
      %p103 = scmp.ne.s32.totalorder %s95, %s97
      %p104 = scmp.eq.s32.totalorder %s24, 1
      %p105 = por %p103, %p104
      %p106 = scmp.ne.s32.totalorder %s97, %s98
      %p107 = scmp.eq.s32.totalorder %s24, 0
      %p108 = por %p106, %p107
      %p109 = scmp.ne.s32.totalorder %s97, %s98
      %p110 = scmp.eq.s32.totalorder %s25, 1
      %p111 = por %p109, %p110
      %p113 = scmp.ne.s32.totalorder %s98, %s112
      %p114 = scmp.eq.s32.totalorder %s25, 0
      %p115 = por %p113, %p114
      %s117 = sadd.s32 %s116, 1
      %p120 = scmp.eq.s32.totalorder %s19, 1
      %p121 = scmp.ne.s32.totalorder %s116, %s118
      %p122 = scmp.eq.s32.totalorder %s19, 0
      %p123 = por %p121, %p122
      %p124 = scmp.ne.s32.totalorder %s116, %s118
      %p125 = scmp.eq.s32.totalorder %s24, 1
      %p126 = por %p124, %p125
      %p127 = scmp.ne.s32.totalorder %s118, %s119
      %p128 = scmp.eq.s32.totalorder %s24, 0
      %p129 = por %p127, %p128
      %p130 = scmp.ne.s32.totalorder %s118, %s119
      %p131 = scmp.eq.s32.totalorder %s25, 1
      %p132 = por %p130, %p131
      %p134 = scmp.ne.s32.totalorder %s119, %s133
      %p135 = scmp.eq.s32.totalorder %s25, 0
      %p136 = por %p134, %p135
      %s138 = sadd.s32 %s137, 1
      %p141 = scmp.eq.s32.totalorder %s19, 1
      %p142 = scmp.ne.s32.totalorder %s137, %s139
      %p143 = scmp.eq.s32.totalorder %s19, 0
      %p144 = por %p142, %p143
      %p145 = scmp.ne.s32.totalorder %s137, %s139
      %p146 = scmp.eq.s32.totalorder %s24, 1
      %p147 = por %p145, %p146
      %p148 = scmp.ne.s32.totalorder %s139, %s140
      %p149 = scmp.eq.s32.totalorder %s24, 0
      %p150 = por %p148, %p149
      %p151 = scmp.ne.s32.totalorder %s139, %s140
      %p152 = scmp.eq.s32.totalorder %s25, 1
      %p153 = por %p151, %p152
      %p155 = scmp.ne.s32.totalorder %s140, %s154
      %p156 = scmp.eq.s32.totalorder %s25, 0
      %p157 = por %p155, %p156
      %s159 = sadd.s32 %s158, 1
      %p162 = scmp.eq.s32.totalorder %s19, 1
      %p163 = scmp.ne.s32.totalorder %s158, %s160
      %p164 = scmp.eq.s32.totalorder %s19, 0
      %p165 = por %p163, %p164
      %p166 = scmp.ne.s32.totalorder %s158, %s160
      %p167 = scmp.eq.s32.totalorder %s24, 1
      %p168 = por %p166, %p167
      %p169 = scmp.ne.s32.totalorder %s160, %s161
      %p170 = scmp.eq.s32.totalorder %s24, 0
      %p171 = por %p169, %p170
      %p172 = scmp.ne.s32.totalorder %s160, %s161
      %p173 = scmp.eq.s32.totalorder %s25, 1
      %p174 = por %p172, %p173
      %p176 = scmp.ne.s32.totalorder %s161, %s175
      %p177 = scmp.eq.s32.totalorder %s25, 0
      %p178 = por %p176, %p177
      %s179 = ssub.s32 %s19, %s26
      %p180 = scmp.eq.s32.totalorder %s179, 0
      %s182 = sadd.s32 %s181, 1
      %s183 = scalar_select %p180, %s181, %s182
      %p186 = pneg %p180
      %p187 = scmp.eq.s32.totalorder %s19, 1
      %p188 = por %p186, %p187
      %p189 = scmp.ne.s32.totalorder %s181, %s184
      %p190 = scmp.eq.s32.totalorder %s19, 0
      %p191 = por %p189, %p190
      %p192 = scmp.ne.s32.totalorder %s181, %s184
      %p193 = scmp.eq.s32.totalorder %s24, 1
      %p194 = por %p192, %p193
      %p195 = scmp.ne.s32.totalorder %s184, %s185
      %p196 = scmp.eq.s32.totalorder %s24, 0
      %p197 = por %p195, %p196
      %p198 = scmp.ne.s32.totalorder %s184, %s185
      %p199 = scmp.eq.s32.totalorder %s25, 1
      %p200 = por %p198, %p199
      %p202 = scmp.ne.s32.totalorder %s185, %s201
      %p203 = scmp.eq.s32.totalorder %s25, 0
      %p204 = por %p202, %p203
      %p205 = scmp.le.s32.totalorder 1, %s19
      %p206 = scmp.lt.s32.totalorder %s19, 3
      %p207 = pnand %p205, %p206
      %p208 = pneg %p207
      // Predicated region
      $region9: #{convnext_block.1} parent=5 // pred_check
        _
      $region10: #{convnext_block.1} parent=5 // pred_check_branch
        %210 = sbr.rel (%p207) target = $region12
      $region11: #{convnext_block.1} parent=5 // pred_region
        %s211 = ssub.s32 %s19, 1
        // Predicated region
        $region13: #{convnext_block.1} parent=11 // pred_check
          %p212 = pneg %p66
        $region14: #{convnext_block.1} parent=11 // pred_check_branch
          %214 = sbr.rel (%p212) target = $region16
        $region15: #{convnext_block.1} parent=11 // pred_region
          _
        $region16: #{convnext_block.1} parent=11 // pred_fallthru
          _
        // Predicated region
        $region17: #{convnext_block.1} parent=11 // pred_check
          %p215 = pneg %p87
        $region18: #{convnext_block.1} parent=11 // pred_check_branch
          %217 = sbr.rel (%p215) target = $region20
        $region19: #{convnext_block.1} parent=11 // pred_region
          _
        $region20: #{convnext_block.1} parent=11 // pred_fallthru
          _
        // Predicated region
        $region21: #{convnext_block.1} parent=11 // pred_check
          %p218 = pneg %p108
        $region22: #{convnext_block.1} parent=11 // pred_check_branch
          %220 = sbr.rel (%p218) target = $region24
        $region23: #{convnext_block.1} parent=11 // pred_region
          _
        $region24: #{convnext_block.1} parent=11 // pred_fallthru
          _
        // Predicated region
        $region25: #{convnext_block.1} parent=11 // pred_check
          %p221 = pneg %p129
        $region26: #{convnext_block.1} parent=11 // pred_check_branch
          %223 = sbr.rel (%p221) target = $region28
        $region27: #{convnext_block.1} parent=11 // pred_region
          _
        $region28: #{convnext_block.1} parent=11 // pred_fallthru
          _
        // Predicated region
        $region29: #{convnext_block.1} parent=11 // pred_check
          %p224 = pneg %p150
        $region30: #{convnext_block.1} parent=11 // pred_check_branch
          %226 = sbr.rel (%p224) target = $region32
        $region31: #{convnext_block.1} parent=11 // pred_region
          _
        $region32: #{convnext_block.1} parent=11 // pred_fallthru
          _
        // Predicated region
        $region33: #{convnext_block.1} parent=11 // pred_check
          %p227 = pneg %p171
        $region34: #{convnext_block.1} parent=11 // pred_check_branch
          %229 = sbr.rel (%p227) target = $region36
        $region35: #{convnext_block.1} parent=11 // pred_region
          _
        $region36: #{convnext_block.1} parent=11 // pred_fallthru
          _
      $region12: #{convnext_block.1} parent=5 // pred_fallthru
        _
      %p230 = scmp.lt.s32.totalorder %s19, 2
      // Predicated region
      $region37: #{convnext_block.1} parent=5 // pred_check
        %p231 = pneg %p230
      $region38: #{convnext_block.1} parent=5 // pred_check_branch
        %233 = sbr.rel (%p231) target = $region40
      $region39: #{convnext_block.1} parent=5 // pred_region
        // Predicated region
        $region41: #{convnext_block.1} parent=39 // pred_check
          %p234 = pneg %p39
        $region42: #{convnext_block.1} parent=39 // pred_check_branch
          %236 = sbr.rel (%p234) target = $region44
        $region43: #{convnext_block.1} parent=39 // pred_region
          %s237 = sand.u32 %s29, 1
          %s238 = scalar_lea.sflag [#allocation4], %s237
          %s239 = sand.u32 %s29, 1
          %s240 = smul.addr %s239, 512
          %s241 = scalar_lea.vmem [#allocation3], %s240
          %s242 = smul.u32 2, %s19
          %s244 = ssub.s32 8192, 8192
          %245 = vsyncadd %s238, %s244
          %s246 = smul.addr %s242, 32
          %s247 = smul.addr %s246, 128
          %s248 = scalar_lea.hbm %s0, %s247
          %s249 = sshll.u32 %s241, 4
          %s250 = int_to_ptr.vmem [resolvable:$true] %s249
          %255 = dma.hbm_to_vmem [thread:$0]  %s248, 8192, %s250, %s238, 128, 128, 8
        $region44: #{convnext_block.1} parent=39 // pred_fallthru
          _
      $region40: #{convnext_block.1} parent=5 // pred_fallthru
        _
      %p256 = scmp.le.s32.totalorder 1, %s19
      %p257 = scmp.lt.s32.totalorder %s19, 3
      %p258 = pnand %p256, %p257
      %p259 = pneg %p258
      // Predicated region
      $region45: #{convnext_block.1} parent=5 // pred_check
        _
      $region46: #{convnext_block.1} parent=5 // pred_check_branch
        %261 = sbr.rel (%p258) target = $region48
      $region47: #{convnext_block.1} parent=5 // pred_region
        %s262 = ssub.s32 %s19, 1
        %s263 = sand.u32 %s32, 1
        %s264 = scalar_lea.sflag [#allocation4], %s263
        %s265 = sand.u32 %s32, 1
        %s266 = smul.addr %s265, 512
        %s267 = scalar_lea.vmem [#allocation3], %s266
        // Predicated region
        $region49: #{convnext_block.1} parent=47 // pred_check
          %p268 = pneg %p45
        $region50: #{convnext_block.1} parent=47 // pred_check_branch
          %270 = sbr.rel (%p268) target = $region52
        $region51: #{convnext_block.1} parent=47 // pred_region
          %271 = dma.done %s264, 8192
        $region52: #{convnext_block.1} parent=47 // pred_fallthru
          _
        %s272 = sand.u32 %s32, 1
        %s273 = scalar_lea.sflag [#allocation4], %s272
        %s274 = sand.u32 %s32, 1
        %s275 = smul.addr %s274, 512
        %s276 = scalar_lea.vmem [#allocation3], %s275
        %p277 = pneg %p45
        %p278 = pneg %p42
        %p279 = pneg %p66
        %p280 = pneg %p63
        %p281 = pneg %p87
        %p282 = pneg %p84
        %p283 = pneg %p108
        %p284 = pneg %p105
        %p285 = pneg %p129
        %p286 = pneg %p126
        %p287 = pneg %p150
        %p288 = pneg %p147
        %p289 = pneg %p171
        %p290 = pneg %p168
        %p291 = pneg %p197
        %p292 = pneg %p194
        %s293 = sand.u32 %s184, 1
        %s294 = scalar_lea.sflag [#allocation5], %s293
        %s295 = sand.u32 %s184, 1
        %s296 = smul.addr %s295, 512
        %s297 = scalar_lea.vmem [#allocation6], %s296
        %s298 = smul.u32 2, %s24
        %s299 = smul.u32 2, %s24
        %v301 = vld [vmem:[%s267] sm:$0xff]
        %v302 = vld [vmem:[%s267 + $0x8] sm:$0xff]
        %v303 = vld [vmem:[%s267 + $0x10] sm:$0xff]
        %v304 = vld [vmem:[%s267 + $0x18] sm:$0xff]
        %v305 = vld [vmem:[%s267 + $0x20] sm:$0xff]
        %v306 = vld [vmem:[%s267 + $0x28] sm:$0xff]
        %v307 = vld [vmem:[%s267 + $0x30] sm:$0xff]
        %v308 = vld [vmem:[%s267 + $0x38] sm:$0xff]
        %v309 = vld [vmem:[%s267 + $0x40] sm:$0xff]
        %v310 = vld [vmem:[%s267 + $0x48] sm:$0xff]
        %v311 = vld [vmem:[%s267 + $0x50] sm:$0xff]
        %v312 = vld [vmem:[%s267 + $0x58] sm:$0xff]
        %v313 = vld [vmem:[%s267 + $0x60] sm:$0xff]
        %v314 = vld [vmem:[%s267 + $0x68] sm:$0xff]
        %v315 = vld [vmem:[%s267 + $0x70] sm:$0xff]
        %v316 = vld [vmem:[%s267 + $0x78] sm:$0xff]
        %v317 = vld [vmem:[%s267 + $0x80] sm:$0xff]
        %v318 = vld [vmem:[%s267 + $0x88] sm:$0xff]
        %v319 = vld [vmem:[%s267 + $0x90] sm:$0xff]
        %v320 = vld [vmem:[%s267 + $0x98] sm:$0xff]
        %v321 = vld [vmem:[%s267 + $0xa0] sm:$0xff]
        %v322 = vld [vmem:[%s267 + $0xa8] sm:$0xff]
        %v323 = vld [vmem:[%s267 + $0xb0] sm:$0xff]
        %v324 = vld [vmem:[%s267 + $0xb8] sm:$0xff]
        %v325 = vld [vmem:[%s267 + $0xc0] sm:$0xff]
        %v326 = vld [vmem:[%s267 + $0xc8] sm:$0xff]
        %v327 = vld [vmem:[%s267 + $0xd0] sm:$0xff]
        %v328 = vld [vmem:[%s267 + $0xd8] sm:$0xff]
        %v329 = vld [vmem:[%s267 + $0xe0] sm:$0xff]
        %v330 = vld [vmem:[%s267 + $0xe8] sm:$0xff]
        %v331 = vld [vmem:[%s267 + $0xf0] sm:$0xff]
        %v332 = vld [vmem:[%s267 + $0xf8] sm:$0xff]
        %v333 = vld [vmem:[%s267 + $0x100] sm:$0xff]
        %v334 = vld [vmem:[%s267 + $0x108] sm:$0xff]
        %v335 = vld [vmem:[%s267 + $0x110] sm:$0xff]
        %v336 = vld [vmem:[%s267 + $0x118] sm:$0xff]
        %v337 = vld [vmem:[%s267 + $0x120] sm:$0xff]
        %v338 = vld [vmem:[%s267 + $0x128] sm:$0xff]
        %v339 = vld [vmem:[%s267 + $0x130] sm:$0xff]
        %v340 = vld [vmem:[%s267 + $0x138] sm:$0xff]
        %v341 = vld [vmem:[%s267 + $0x140] sm:$0xff]
        %v342 = vld [vmem:[%s267 + $0x148] sm:$0xff]
        %v343 = vld [vmem:[%s267 + $0x150] sm:$0xff]
        %v344 = vld [vmem:[%s267 + $0x158] sm:$0xff]
        %v345 = vld [vmem:[%s267 + $0x160] sm:$0xff]
        %v346 = vld [vmem:[%s267 + $0x168] sm:$0xff]
        %v347 = vld [vmem:[%s267 + $0x170] sm:$0xff]
        %v348 = vld [vmem:[%s267 + $0x178] sm:$0xff]
        %v349 = vld [vmem:[%s267 + $0x180] sm:$0xff]
        %v350 = vld [vmem:[%s267 + $0x188] sm:$0xff]
        %v351 = vld [vmem:[%s267 + $0x190] sm:$0xff]
        %v352 = vld [vmem:[%s267 + $0x198] sm:$0xff]
        %v353 = vld [vmem:[%s267 + $0x1a0] sm:$0xff]
        %v354 = vld [vmem:[%s267 + $0x1a8] sm:$0xff]
        %v355 = vld [vmem:[%s267 + $0x1b0] sm:$0xff]
        %v356 = vld [vmem:[%s267 + $0x1b8] sm:$0xff]
        %v357 = vld [vmem:[%s267 + $0x1c0] sm:$0xff]
        %v358 = vld [vmem:[%s267 + $0x1c8] sm:$0xff]
        %v359 = vld [vmem:[%s267 + $0x1d0] sm:$0xff]
        %v360 = vld [vmem:[%s267 + $0x1d8] sm:$0xff]
        %v361 = vld [vmem:[%s267 + $0x1e0] sm:$0xff]
        %v362 = vld [vmem:[%s267 + $0x1e8] sm:$0xff]
        %v363 = vld [vmem:[%s267 + $0x1f0] sm:$0xff]
        %v364 = vld [vmem:[%s267 + $0x1f8] sm:$0xff]
        %vm365 = vcmask 261120
        %366 = vst.msk [vmem:[#allocation2] sm:$0xff] %vm365, 0.0
        %367 = vst.msk [vmem:[#allocation2 + $0x8] sm:$0xff] %vm365, 0.0
        %368 = vst.msk [vmem:[#allocation2 + $0x10] sm:$0xff] %vm365, 0.0
        %369 = vst.msk [vmem:[#allocation2 + $0x18] sm:$0xff] %vm365, 0.0
        %370 = vst.msk [vmem:[#allocation2 + $0x20] sm:$0xff] %vm365, 0.0
        %371 = vst.msk [vmem:[#allocation2 + $0x28] sm:$0xff] %vm365, 0.0
        %372 = vst.msk [vmem:[#allocation2 + $0x30] sm:$0xff] %vm365, 0.0
        %373 = vst.msk [vmem:[#allocation2 + $0x38] sm:$0xff] %vm365, 0.0
        %374 = vst.msk [vmem:[#allocation2 + $0x40] sm:$0xff] %vm365, 0.0
        %375 = vst.msk [vmem:[#allocation2 + $0x48] sm:$0xff] %vm365, 0.0
        %376 = vst.msk [vmem:[#allocation2 + $0x50] sm:$0xff] %vm365, 0.0
        %377 = vst.msk [vmem:[#allocation2 + $0x58] sm:$0xff] %vm365, 0.0
        %378 = vst.msk [vmem:[#allocation2 + $0x60] sm:$0xff] %vm365, 0.0
        %379 = vst.msk [vmem:[#allocation2 + $0x68] sm:$0xff] %vm365, 0.0
        %380 = vst.msk [vmem:[#allocation2 + $0x70] sm:$0xff] %vm365, 0.0
        %381 = vst.msk [vmem:[#allocation2 + $0x78] sm:$0xff] %vm365, 0.0
        %382 = vst.msk [vmem:[#allocation2 + $0x80] sm:$0xff] %vm365, 0.0
        %383 = vst.msk [vmem:[#allocation2 + $0x88] sm:$0xff] %vm365, 0.0
        %384 = vst.msk [vmem:[#allocation2 + $0x90] sm:$0xff] %vm365, 0.0
        %385 = vst.msk [vmem:[#allocation2 + $0x98] sm:$0xff] %vm365, 0.0
        %386 = vst.msk [vmem:[#allocation2 + $0xa0] sm:$0xff] %vm365, 0.0
        %387 = vst.msk [vmem:[#allocation2 + $0xa8] sm:$0xff] %vm365, 0.0
        %388 = vst.msk [vmem:[#allocation2 + $0xb0] sm:$0xff] %vm365, 0.0
        %389 = vst.msk [vmem:[#allocation2 + $0xb8] sm:$0xff] %vm365, 0.0
        %390 = vst.msk [vmem:[#allocation2 + $0xc0] sm:$0xff] %vm365, 0.0
        %391 = vst.msk [vmem:[#allocation2 + $0xc8] sm:$0xff] %vm365, 0.0
        %392 = vst.msk [vmem:[#allocation2 + $0xd0] sm:$0xff] %vm365, 0.0
        %393 = vst.msk [vmem:[#allocation2 + $0xd8] sm:$0xff] %vm365, 0.0
        %394 = vst.msk [vmem:[#allocation2 + $0xe0] sm:$0xff] %vm365, 0.0
        %395 = vst.msk [vmem:[#allocation2 + $0xe8] sm:$0xff] %vm365, 0.0
        %396 = vst.msk [vmem:[#allocation2 + $0xf0] sm:$0xff] %vm365, 0.0
        %397 = vst.msk [vmem:[#allocation2 + $0xf8] sm:$0xff] %vm365, 0.0
        %398 = vst.msk [vmem:[#allocation2 + $0x100] sm:$0xff] %vm365, 0.0
        %399 = vst.msk [vmem:[#allocation2 + $0x108] sm:$0xff] %vm365, 0.0
        %400 = vst.msk [vmem:[#allocation2 + $0x110] sm:$0xff] %vm365, 0.0
        %401 = vst.msk [vmem:[#allocation2 + $0x118] sm:$0xff] %vm365, 0.0
        %402 = vst.msk [vmem:[#allocation2 + $0x120] sm:$0xff] %vm365, 0.0
        %403 = vst.msk [vmem:[#allocation2 + $0x128] sm:$0xff] %vm365, 0.0
        %404 = vst.msk [vmem:[#allocation2 + $0x130] sm:$0xff] %vm365, 0.0
        %405 = vst.msk [vmem:[#allocation2 + $0x138] sm:$0xff] %vm365, 0.0
        %406 = vst.msk [vmem:[#allocation2 + $0x140] sm:$0xff] %vm365, 0.0
        %407 = vst.msk [vmem:[#allocation2 + $0x148] sm:$0xff] %vm365, 0.0
        %408 = vst.msk [vmem:[#allocation2 + $0x150] sm:$0xff] %vm365, 0.0
        %409 = vst.msk [vmem:[#allocation2 + $0x158] sm:$0xff] %vm365, 0.0
        %410 = vst.msk [vmem:[#allocation2 + $0x160] sm:$0xff] %vm365, 0.0
        %411 = vst.msk [vmem:[#allocation2 + $0x168] sm:$0xff] %vm365, 0.0
        %412 = vst.msk [vmem:[#allocation2 + $0x170] sm:$0xff] %vm365, 0.0
        %413 = vst.msk [vmem:[#allocation2 + $0x178] sm:$0xff] %vm365, 0.0
        %414 = vst.msk [vmem:[#allocation2 + $0x180] sm:$0xff] %vm365, 0.0
        %415 = vst.msk [vmem:[#allocation2 + $0x188] sm:$0xff] %vm365, 0.0
        %416 = vst.msk [vmem:[#allocation2 + $0x190] sm:$0xff] %vm365, 0.0
        %417 = vst.msk [vmem:[#allocation2 + $0x198] sm:$0xff] %vm365, 0.0
        %418 = vst.msk [vmem:[#allocation2 + $0x1a0] sm:$0xff] %vm365, 0.0
        %419 = vst.msk [vmem:[#allocation2 + $0x1a8] sm:$0xff] %vm365, 0.0
        %420 = vst.msk [vmem:[#allocation2 + $0x1b0] sm:$0xff] %vm365, 0.0
        %421 = vst.msk [vmem:[#allocation2 + $0x1b8] sm:$0xff] %vm365, 0.0
        %422 = vst.msk [vmem:[#allocation2 + $0x1c0] sm:$0xff] %vm365, 0.0
        %423 = vst.msk [vmem:[#allocation2 + $0x1c8] sm:$0xff] %vm365, 0.0
        %424 = vst.msk [vmem:[#allocation2 + $0x1d0] sm:$0xff] %vm365, 0.0
        %425 = vst.msk [vmem:[#allocation2 + $0x1d8] sm:$0xff] %vm365, 0.0
        %426 = vst.msk [vmem:[#allocation2 + $0x1e0] sm:$0xff] %vm365, 0.0
        %427 = vst.msk [vmem:[#allocation2 + $0x1e8] sm:$0xff] %vm365, 0.0
        %428 = vst.msk [vmem:[#allocation2 + $0x1f0] sm:$0xff] %vm365, 0.0
        %429 = vst.msk [vmem:[#allocation2 + $0x1f8] sm:$0xff] %vm365, 0.0
        %430 = vst.msk [vmem:[#allocation2 + $0x200] sm:$0xff] %vm365, 0.0
        %431 = vst.msk [vmem:[#allocation2 + $0x208] sm:$0xff] %vm365, 0.0
        %432 = vst.msk [vmem:[#allocation2 + $0x210] sm:$0xff] %vm365, 0.0
        %433 = vst.msk [vmem:[#allocation2 + $0x218] sm:$0xff] %vm365, 0.0
        %434 = vst.msk [vmem:[#allocation2 + $0x220] sm:$0xff] %vm365, 0.0
        %435 = vst.msk [vmem:[#allocation2 + $0x228] sm:$0xff] %vm365, 0.0
        %436 = vst.msk [vmem:[#allocation2 + $0x230] sm:$0xff] %vm365, 0.0
        %437 = vst.msk [vmem:[#allocation2 + $0x238] sm:$0xff] %vm365, 0.0
        %438 = vst.msk [vmem:[#allocation2 + $0x240] sm:$0xff] %vm365, 0.0
        %439 = vst.msk [vmem:[#allocation2 + $0x248] sm:$0xff] %vm365, 0.0
        %440 = vst.msk [vmem:[#allocation2 + $0x250] sm:$0xff] %vm365, 0.0
        %441 = vst.msk [vmem:[#allocation2 + $0x258] sm:$0xff] %vm365, 0.0
        %442 = vst.msk [vmem:[#allocation2 + $0x260] sm:$0xff] %vm365, 0.0
        %443 = vst.msk [vmem:[#allocation2 + $0x268] sm:$0xff] %vm365, 0.0
        %444 = vst.msk [vmem:[#allocation2 + $0x270] sm:$0xff] %vm365, 0.0
        %445 = vst.msk [vmem:[#allocation2 + $0x278] sm:$0xff] %vm365, 0.0
        %446 = vst.msk [vmem:[#allocation2 + $0x280] sm:$0xff] %vm365, 0.0
        %447 = vst.msk [vmem:[#allocation2 + $0x288] sm:$0xff] %vm365, 0.0
        %448 = vst.msk [vmem:[#allocation2 + $0x290] sm:$0xff] %vm365, 0.0
        %449 = vst.msk [vmem:[#allocation2 + $0x298] sm:$0xff] %vm365, 0.0
        %450 = vst.msk [vmem:[#allocation2 + $0x2a0] sm:$0xff] %vm365, 0.0
        %451 = vst.msk [vmem:[#allocation2 + $0x2a8] sm:$0xff] %vm365, 0.0
        %452 = vst.msk [vmem:[#allocation2 + $0x2b0] sm:$0xff] %vm365, 0.0
        %453 = vst.msk [vmem:[#allocation2 + $0x2b8] sm:$0xff] %vm365, 0.0
        %454 = vst.msk [vmem:[#allocation2 + $0x2c0] sm:$0xff] %vm365, 0.0
        %455 = vst.msk [vmem:[#allocation2 + $0x2c8] sm:$0xff] %vm365, 0.0
        %456 = vst.msk [vmem:[#allocation2 + $0x2d0] sm:$0xff] %vm365, 0.0
        %457 = vst.msk [vmem:[#allocation2 + $0x2d8] sm:$0xff] %vm365, 0.0
        %458 = vst.msk [vmem:[#allocation2 + $0x2e0] sm:$0xff] %vm365, 0.0
        %459 = vst.msk [vmem:[#allocation2 + $0x2e8] sm:$0xff] %vm365, 0.0
        %460 = vst.msk [vmem:[#allocation2 + $0x2f0] sm:$0xff] %vm365, 0.0
        %461 = vst.msk [vmem:[#allocation2 + $0x2f8] sm:$0xff] %vm365, 0.0
        %462 = vst.msk [vmem:[#allocation2 + $0x300] sm:$0xff] %vm365, 0.0
        %463 = vst.msk [vmem:[#allocation2 + $0x308] sm:$0xff] %vm365, 0.0
        %464 = vst.msk [vmem:[#allocation2 + $0x310] sm:$0xff] %vm365, 0.0
        %465 = vst.msk [vmem:[#allocation2 + $0x318] sm:$0xff] %vm365, 0.0
        %466 = vst.msk [vmem:[#allocation2 + $0x320] sm:$0xff] %vm365, 0.0
        %467 = vst.msk [vmem:[#allocation2 + $0x328] sm:$0xff] %vm365, 0.0
        %468 = vst.msk [vmem:[#allocation2 + $0x330] sm:$0xff] %vm365, 0.0
        %469 = vst.msk [vmem:[#allocation2 + $0x338] sm:$0xff] %vm365, 0.0
        %470 = vst.msk [vmem:[#allocation2 + $0x340] sm:$0xff] %vm365, 0.0
        %471 = vst.msk [vmem:[#allocation2 + $0x348] sm:$0xff] %vm365, 0.0
        %472 = vst.msk [vmem:[#allocation2 + $0x350] sm:$0xff] %vm365, 0.0
        %473 = vst.msk [vmem:[#allocation2 + $0x358] sm:$0xff] %vm365, 0.0
        %474 = vst.msk [vmem:[#allocation2 + $0x360] sm:$0xff] %vm365, 0.0
        %475 = vst.msk [vmem:[#allocation2 + $0x368] sm:$0xff] %vm365, 0.0
        %476 = vst.msk [vmem:[#allocation2 + $0x370] sm:$0xff] %vm365, 0.0
        %477 = vst.msk [vmem:[#allocation2 + $0x378] sm:$0xff] %vm365, 0.0
        %478 = vst.msk [vmem:[#allocation2 + $0x380] sm:$0xff] %vm365, 0.0
        %479 = vst.msk [vmem:[#allocation2 + $0x388] sm:$0xff] %vm365, 0.0
        %480 = vst.msk [vmem:[#allocation2 + $0x390] sm:$0xff] %vm365, 0.0
        %481 = vst.msk [vmem:[#allocation2 + $0x398] sm:$0xff] %vm365, 0.0
        %482 = vst.msk [vmem:[#allocation2 + $0x3a0] sm:$0xff] %vm365, 0.0
        %483 = vst.msk [vmem:[#allocation2 + $0x3a8] sm:$0xff] %vm365, 0.0
        %484 = vst.msk [vmem:[#allocation2 + $0x3b0] sm:$0xff] %vm365, 0.0
        %485 = vst.msk [vmem:[#allocation2 + $0x3b8] sm:$0xff] %vm365, 0.0
        %486 = vst.msk [vmem:[#allocation2 + $0x3c0] sm:$0xff] %vm365, 0.0
        %487 = vst.msk [vmem:[#allocation2 + $0x3c8] sm:$0xff] %vm365, 0.0
        %488 = vst.msk [vmem:[#allocation2 + $0x3d0] sm:$0xff] %vm365, 0.0
        %489 = vst.msk [vmem:[#allocation2 + $0x3d8] sm:$0xff] %vm365, 0.0
        %490 = vst.msk [vmem:[#allocation2 + $0x3e0] sm:$0xff] %vm365, 0.0
        %491 = vst.msk [vmem:[#allocation2 + $0x3e8] sm:$0xff] %vm365, 0.0
        %492 = vst.msk [vmem:[#allocation2 + $0x3f0] sm:$0xff] %vm365, 0.0
        %493 = vst.msk [vmem:[#allocation2 + $0x3f8] sm:$0xff] %vm365, 0.0
        %494 = vst.msk [vmem:[#allocation2 + $0x400] sm:$0xff] %vm365, 0.0
        %495 = vst.msk [vmem:[#allocation2 + $0x408] sm:$0xff] %vm365, 0.0
        %496 = vst.msk [vmem:[#allocation2 + $0x410] sm:$0xff] %vm365, 0.0
        %497 = vst.msk [vmem:[#allocation2 + $0x418] sm:$0xff] %vm365, 0.0
        %s498 = scalar_lea.vmem [#allocation2], 72
        %499 = vst.msk [vmem:[%s498 + $0x3] sm:$0xff] %vm365, %v301
        %500 = vst.msk [vmem:[%s498 + $0xb] sm:$0xff] %vm365, %v302
        %501 = vst.msk [vmem:[%s498 + $0x1b] sm:$0xff] %vm365, %v303
        %502 = vst.msk [vmem:[%s498 + $0x23] sm:$0xff] %vm365, %v304
        %503 = vst.msk [vmem:[%s498 + $0x33] sm:$0xff] %vm365, %v305
        %504 = vst.msk [vmem:[%s498 + $0x3b] sm:$0xff] %vm365, %v306
        %505 = vst.msk [vmem:[%s498 + $0x4b] sm:$0xff] %vm365, %v307
        %506 = vst.msk [vmem:[%s498 + $0x53] sm:$0xff] %vm365, %v308
        %507 = vst.msk [vmem:[%s498 + $0x63] sm:$0xff] %vm365, %v309
        %508 = vst.msk [vmem:[%s498 + $0x6b] sm:$0xff] %vm365, %v310
        %509 = vst.msk [vmem:[%s498 + $0x7b] sm:$0xff] %vm365, %v311
        %510 = vst.msk [vmem:[%s498 + $0x83] sm:$0xff] %vm365, %v312
        %511 = vst.msk [vmem:[%s498 + $0x93] sm:$0xff] %vm365, %v313
        %512 = vst.msk [vmem:[%s498 + $0x9b] sm:$0xff] %vm365, %v314
        %513 = vst.msk [vmem:[%s498 + $0xab] sm:$0xff] %vm365, %v315
        %514 = vst.msk [vmem:[%s498 + $0xb3] sm:$0xff] %vm365, %v316
        %515 = vst.msk [vmem:[%s498 + $0xc3] sm:$0xff] %vm365, %v317
        %516 = vst.msk [vmem:[%s498 + $0xcb] sm:$0xff] %vm365, %v318
        %517 = vst.msk [vmem:[%s498 + $0xdb] sm:$0xff] %vm365, %v319
        %518 = vst.msk [vmem:[%s498 + $0xe3] sm:$0xff] %vm365, %v320
        %519 = vst.msk [vmem:[%s498 + $0xf3] sm:$0xff] %vm365, %v321
        %520 = vst.msk [vmem:[%s498 + $0xfb] sm:$0xff] %vm365, %v322
        %521 = vst.msk [vmem:[%s498 + $0x10b] sm:$0xff] %vm365, %v323
        %522 = vst.msk [vmem:[%s498 + $0x113] sm:$0xff] %vm365, %v324
        %523 = vst.msk [vmem:[%s498 + $0x123] sm:$0xff] %vm365, %v325
        %524 = vst.msk [vmem:[%s498 + $0x12b] sm:$0xff] %vm365, %v326
        %525 = vst.msk [vmem:[%s498 + $0x13b] sm:$0xff] %vm365, %v327
        %526 = vst.msk [vmem:[%s498 + $0x143] sm:$0xff] %vm365, %v328
        %527 = vst.msk [vmem:[%s498 + $0x153] sm:$0xff] %vm365, %v329
        %528 = vst.msk [vmem:[%s498 + $0x15b] sm:$0xff] %vm365, %v330
        %529 = vst.msk [vmem:[%s498 + $0x16b] sm:$0xff] %vm365, %v331
        %530 = vst.msk [vmem:[%s498 + $0x173] sm:$0xff] %vm365, %v332
        %531 = vst.msk [vmem:[%s498 + $0x213] sm:$0xff] %vm365, %v333
        %532 = vst.msk [vmem:[%s498 + $0x21b] sm:$0xff] %vm365, %v334
        %533 = vst.msk [vmem:[%s498 + $0x22b] sm:$0xff] %vm365, %v335
        %534 = vst.msk [vmem:[%s498 + $0x233] sm:$0xff] %vm365, %v336
        %535 = vst.msk [vmem:[%s498 + $0x243] sm:$0xff] %vm365, %v337
        %536 = vst.msk [vmem:[%s498 + $0x24b] sm:$0xff] %vm365, %v338
        %537 = vst.msk [vmem:[%s498 + $0x25b] sm:$0xff] %vm365, %v339
        %538 = vst.msk [vmem:[%s498 + $0x263] sm:$0xff] %vm365, %v340
        %539 = vst.msk [vmem:[%s498 + $0x273] sm:$0xff] %vm365, %v341
        %540 = vst.msk [vmem:[%s498 + $0x27b] sm:$0xff] %vm365, %v342
        %541 = vst.msk [vmem:[%s498 + $0x28b] sm:$0xff] %vm365, %v343
        %542 = vst.msk [vmem:[%s498 + $0x293] sm:$0xff] %vm365, %v344
        %543 = vst.msk [vmem:[%s498 + $0x2a3] sm:$0xff] %vm365, %v345
        %544 = vst.msk [vmem:[%s498 + $0x2ab] sm:$0xff] %vm365, %v346
        %545 = vst.msk [vmem:[%s498 + $0x2bb] sm:$0xff] %vm365, %v347
        %546 = vst.msk [vmem:[%s498 + $0x2c3] sm:$0xff] %vm365, %v348
        %547 = vst.msk [vmem:[%s498 + $0x2d3] sm:$0xff] %vm365, %v349
        %548 = vst.msk [vmem:[%s498 + $0x2db] sm:$0xff] %vm365, %v350
        %549 = vst.msk [vmem:[%s498 + $0x2eb] sm:$0xff] %vm365, %v351
        %550 = vst.msk [vmem:[%s498 + $0x2f3] sm:$0xff] %vm365, %v352
        %551 = vst.msk [vmem:[%s498 + $0x303] sm:$0xff] %vm365, %v353
        %552 = vst.msk [vmem:[%s498 + $0x30b] sm:$0xff] %vm365, %v354
        %553 = vst.msk [vmem:[%s498 + $0x31b] sm:$0xff] %vm365, %v355
        %554 = vst.msk [vmem:[%s498 + $0x323] sm:$0xff] %vm365, %v356
        %555 = vst.msk [vmem:[%s498 + $0x333] sm:$0xff] %vm365, %v357
        %556 = vst.msk [vmem:[%s498 + $0x33b] sm:$0xff] %vm365, %v358
        %557 = vst.msk [vmem:[%s498 + $0x34b] sm:$0xff] %vm365, %v359
        %558 = vst.msk [vmem:[%s498 + $0x353] sm:$0xff] %vm365, %v360
        %559 = vst.msk [vmem:[%s498 + $0x363] sm:$0xff] %vm365, %v361
        %560 = vst.msk [vmem:[%s498 + $0x36b] sm:$0xff] %vm365, %v362
        %561 = vst.msk [vmem:[%s498 + $0x37b] sm:$0xff] %vm365, %v363
        %562 = vst.msk [vmem:[%s498 + $0x383] sm:$0xff] %vm365, %v364
        %v563 = vld [vmem:[#allocation2] sm:$0xff]
        %v564 = vld [vmem:[#allocation2 + $0x8] sm:$0xff]
        %v565 = vld [vmem:[#allocation2 + $0x18] sm:$0xff]
        %v566 = vld [vmem:[#allocation2 + $0x20] sm:$0xff]
        %v567 = vld [vmem:[#allocation2 + $0x30] sm:$0xff]
        %v568 = vld [vmem:[#allocation2 + $0x38] sm:$0xff]
        %v569 = vld [vmem:[#allocation2 + $0x48] sm:$0xff]
        %v570 = vld [vmem:[#allocation2 + $0x50] sm:$0xff]
        %v571 = vld [vmem:[#allocation2 + $0x60] sm:$0xff]
        %v572 = vld [vmem:[#allocation2 + $0x68] sm:$0xff]
        %v573 = vld [vmem:[#allocation2 + $0x78] sm:$0xff]
        %v574 = vld [vmem:[#allocation2 + $0x80] sm:$0xff]
        %v575 = vld [vmem:[#allocation2 + $0x90] sm:$0xff]
        %v576 = vld [vmem:[#allocation2 + $0x98] sm:$0xff]
        %v577 = vld [vmem:[#allocation2 + $0xa8] sm:$0xff]
        %v578 = vld [vmem:[#allocation2 + $0xb0] sm:$0xff]
        %v579 = vld [vmem:[#allocation2 + $0xc0] sm:$0xff]
        %v580 = vld [vmem:[#allocation2 + $0xc8] sm:$0xff]
        %v581 = vld [vmem:[#allocation2 + $0xd8] sm:$0xff]
        %v582 = vld [vmem:[#allocation2 + $0xe0] sm:$0xff]
        %v583 = vld [vmem:[#allocation2 + $0xf0] sm:$0xff]
        %v584 = vld [vmem:[#allocation2 + $0xf8] sm:$0xff]
        %v585 = vld [vmem:[#allocation2 + $0x108] sm:$0xff]
        %v586 = vld [vmem:[#allocation2 + $0x110] sm:$0xff]
        %v587 = vld [vmem:[#allocation2 + $0x120] sm:$0xff]
        %v588 = vld [vmem:[#allocation2 + $0x128] sm:$0xff]
        %v589 = vld [vmem:[#allocation2 + $0x138] sm:$0xff]
        %v590 = vld [vmem:[#allocation2 + $0x140] sm:$0xff]
        %v591 = vld [vmem:[#allocation2 + $0x150] sm:$0xff]
        %v592 = vld [vmem:[#allocation2 + $0x158] sm:$0xff]
        %v593 = vld [vmem:[#allocation2 + $0x168] sm:$0xff]
        %v594 = vld [vmem:[#allocation2 + $0x170] sm:$0xff]
        %v595 = vld [vmem:[#allocation2 + $0x180] sm:$0xff]
        %v596 = vld [vmem:[#allocation2 + $0x188] sm:$0xff]
        %v597 = vld [vmem:[#allocation2 + $0x198] sm:$0xff]
        %v598 = vld [vmem:[#allocation2 + $0x1a0] sm:$0xff]
        %v599 = vld [vmem:[#allocation2 + $0x1b0] sm:$0xff]
        %v600 = vld [vmem:[#allocation2 + $0x1b8] sm:$0xff]
        %v601 = vld [vmem:[#allocation2 + $0x1c8] sm:$0xff]
        %v602 = vld [vmem:[#allocation2 + $0x1d0] sm:$0xff]
        %v603 = vld [vmem:[#allocation2 + $0x1e0] sm:$0xff]
        %v604 = vld [vmem:[#allocation2 + $0x1e8] sm:$0xff]
        %v605 = vld [vmem:[#allocation2 + $0x1f8] sm:$0xff]
        %v606 = vld [vmem:[#allocation2 + $0x200] sm:$0xff]
        %v607 = vld [vmem:[#allocation2 + $0x210] sm:$0xff]
        %v608 = vld [vmem:[#allocation2 + $0x218] sm:$0xff]
        %v609 = vld [vmem:[#allocation2 + $0x228] sm:$0xff]
        %v610 = vld [vmem:[#allocation2 + $0x230] sm:$0xff]
        %v611 = vld [vmem:[#allocation2 + $0x240] sm:$0xff]
        %v612 = vld [vmem:[#allocation2 + $0x248] sm:$0xff]
        %v613 = vld [vmem:[#allocation2 + $0x258] sm:$0xff]
        %v614 = vld [vmem:[#allocation2 + $0x260] sm:$0xff]
        %v615 = vld [vmem:[#allocation2 + $0x270] sm:$0xff]
        %v616 = vld [vmem:[#allocation2 + $0x278] sm:$0xff]
        %v617 = vld [vmem:[#allocation2 + $0x288] sm:$0xff]
        %v618 = vld [vmem:[#allocation2 + $0x290] sm:$0xff]
        %v619 = vld [vmem:[#allocation2 + $0x2a0] sm:$0xff]
        %v620 = vld [vmem:[#allocation2 + $0x2a8] sm:$0xff]
        %v621 = vld [vmem:[#allocation2 + $0x2b8] sm:$0xff]
        %v622 = vld [vmem:[#allocation2 + $0x2c0] sm:$0xff]
        %v623 = vld [vmem:[#allocation2 + $0x2d0] sm:$0xff]
        %v624 = vld [vmem:[#allocation2 + $0x2d8] sm:$0xff]
        %v625 = vld [vmem:[#allocation2 + $0x2e8] sm:$0xff]
        %v626 = vld [vmem:[#allocation2 + $0x2f0] sm:$0xff]
        %v627 = vld [vmem:[#allocation2 + $0x300] sm:$0xff]
        %v628 = vld [vmem:[#allocation2 + $0x308] sm:$0xff]
        %v629 = vld [vmem:[#allocation2 + $0x318] sm:$0xff]
        %v630 = vld [vmem:[#allocation2 + $0x320] sm:$0xff]
        %v631 = vld [vmem:[#allocation2 + $0x330] sm:$0xff]
        %v632 = vld [vmem:[#allocation2 + $0x338] sm:$0xff]
        %v633 = vld [vmem:[#allocation2 + $0x348] sm:$0xff]
        %v634 = vld [vmem:[#allocation2 + $0x350] sm:$0xff]
        %v635 = vld [vmem:[#allocation2 + $0x360] sm:$0xff]
        %v636 = vld [vmem:[#allocation2 + $0x368] sm:$0xff]
        %v637 = vld [vmem:[#allocation2 + $0x378] sm:$0xff]
        %v638 = vld [vmem:[#allocation2 + $0x380] sm:$0xff]
        %v639 = vld [vmem:[#allocation2 + $0x390] sm:$0xff]
        %v640 = vld [vmem:[#allocation2 + $0x398] sm:$0xff]
        %v641 = vld [vmem:[#allocation2 + $0x3a8] sm:$0xff]
        %v642 = vld [vmem:[#allocation2 + $0x3b0] sm:$0xff]
        %v643 = vld [vmem:[#allocation2 + $0x3c0] sm:$0xff]
        %v644 = vld [vmem:[#allocation2 + $0x3c8] sm:$0xff]
        %v645 = vld [vmem:[#allocation2 + $0x3d8] sm:$0xff]
        %v646 = vld [vmem:[#allocation2 + $0x3e0] sm:$0xff]
        %v647 = vld [vmem:[#allocation2 + $0x3f0] sm:$0xff]
        %v648 = vld [vmem:[#allocation2 + $0x3f8] sm:$0xff]
        %v649 = vld [vmem:[#allocation2 + $0x408] sm:$0xff]
        %v650 = vld [vmem:[#allocation2 + $0x410] sm:$0xff]
        %v651 = vld [vmem:[%s1] sm:$0x1]
        %v652 = vlaneseq
        %v653 = vshrl.u32 %v652, 7
        %v654 = vsub.s32 0, %v653
        %v655 = vrot.slane %v651, %v654
        %v656 = vmul.f32 %v563, %v655
        %v657 = vmul.f32 %v564, %v655
        %v658 = vmul.f32 %v565, %v655
        %v659 = vmul.f32 %v566, %v655
        %v660 = vmul.f32 %v567, %v655
        %v661 = vmul.f32 %v568, %v655
        %v662 = vmul.f32 %v569, %v655
        %v663 = vmul.f32 %v570, %v655
        %v664 = vmul.f32 %v571, %v655
        %v665 = vmul.f32 %v572, %v655
        %v666 = vmul.f32 %v573, %v655
        %v667 = vmul.f32 %v574, %v655
        %v668 = vmul.f32 %v575, %v655
        %v669 = vmul.f32 %v576, %v655
        %v670 = vmul.f32 %v577, %v655
        %v671 = vmul.f32 %v578, %v655
        %v672 = vmul.f32 %v579, %v655
        %v673 = vmul.f32 %v580, %v655
        %v674 = vmul.f32 %v581, %v655
        %v675 = vmul.f32 %v582, %v655
        %v676 = vmul.f32 %v583, %v655
        %v677 = vmul.f32 %v584, %v655
        %v678 = vmul.f32 %v585, %v655
        %v679 = vmul.f32 %v586, %v655
        %v680 = vmul.f32 %v587, %v655
        %v681 = vmul.f32 %v588, %v655
        %v682 = vmul.f32 %v589, %v655
        %v683 = vmul.f32 %v590, %v655
        %v684 = vmul.f32 %v591, %v655
        %v685 = vmul.f32 %v592, %v655
        %v686 = vmul.f32 %v593, %v655
        %v687 = vmul.f32 %v594, %v655
        %v688 = vmul.f32 %v607, %v655
        %v689 = vmul.f32 %v608, %v655
        %v690 = vmul.f32 %v609, %v655
        %v691 = vmul.f32 %v610, %v655
        %v692 = vmul.f32 %v611, %v655
        %v693 = vmul.f32 %v612, %v655
        %v694 = vmul.f32 %v613, %v655
        %v695 = vmul.f32 %v614, %v655
        %v696 = vmul.f32 %v615, %v655
        %v697 = vmul.f32 %v616, %v655
        %v698 = vmul.f32 %v617, %v655
        %v699 = vmul.f32 %v618, %v655
        %v700 = vmul.f32 %v619, %v655
        %v701 = vmul.f32 %v620, %v655
        %v702 = vmul.f32 %v621, %v655
        %v703 = vmul.f32 %v622, %v655
        %v704 = vmul.f32 %v623, %v655
        %v705 = vmul.f32 %v624, %v655
        %v706 = vmul.f32 %v625, %v655
        %v707 = vmul.f32 %v626, %v655
        %v708 = vmul.f32 %v627, %v655
        %v709 = vmul.f32 %v628, %v655
        %v710 = vmul.f32 %v629, %v655
        %v711 = vmul.f32 %v630, %v655
        %v712 = vmul.f32 %v631, %v655
        %v713 = vmul.f32 %v632, %v655
        %v714 = vmul.f32 %v633, %v655
        %v715 = vmul.f32 %v634, %v655
        %v716 = vmul.f32 %v635, %v655
        %v717 = vmul.f32 %v636, %v655
        %v718 = vmul.f32 %v637, %v655
        %v719 = vmul.f32 %v638, %v655
        %v720 = vadd.f32 %v656, 0.0
        %v721 = vadd.f32 %v657, 0.0
        %v722 = vadd.f32 %v658, 0.0
        %v723 = vadd.f32 %v659, 0.0
        %v724 = vadd.f32 %v660, 0.0
        %v725 = vadd.f32 %v661, 0.0
        %v726 = vadd.f32 %v662, 0.0
        %v727 = vadd.f32 %v663, 0.0
        %v728 = vadd.f32 %v664, 0.0
        %v729 = vadd.f32 %v665, 0.0
        %v730 = vadd.f32 %v666, 0.0
        %v731 = vadd.f32 %v667, 0.0
        %v732 = vadd.f32 %v668, 0.0
        %v733 = vadd.f32 %v669, 0.0
        %v734 = vadd.f32 %v670, 0.0
        %v735 = vadd.f32 %v671, 0.0
        %v736 = vadd.f32 %v672, 0.0
        %v737 = vadd.f32 %v673, 0.0
        %v738 = vadd.f32 %v674, 0.0
        %v739 = vadd.f32 %v675, 0.0
        %v740 = vadd.f32 %v676, 0.0
        %v741 = vadd.f32 %v677, 0.0
        %v742 = vadd.f32 %v678, 0.0
        %v743 = vadd.f32 %v679, 0.0
        %v744 = vadd.f32 %v680, 0.0
        %v745 = vadd.f32 %v681, 0.0
        %v746 = vadd.f32 %v682, 0.0
        %v747 = vadd.f32 %v683, 0.0
        %v748 = vadd.f32 %v684, 0.0
        %v749 = vadd.f32 %v685, 0.0
        %v750 = vadd.f32 %v686, 0.0
        %v751 = vadd.f32 %v687, 0.0
        %v752 = vadd.f32 %v688, 0.0
        %v753 = vadd.f32 %v689, 0.0
        %v754 = vadd.f32 %v690, 0.0
        %v755 = vadd.f32 %v691, 0.0
        %v756 = vadd.f32 %v692, 0.0
        %v757 = vadd.f32 %v693, 0.0
        %v758 = vadd.f32 %v694, 0.0
        %v759 = vadd.f32 %v695, 0.0
        %v760 = vadd.f32 %v696, 0.0
        %v761 = vadd.f32 %v697, 0.0
        %v762 = vadd.f32 %v698, 0.0
        %v763 = vadd.f32 %v699, 0.0
        %v764 = vadd.f32 %v700, 0.0
        %v765 = vadd.f32 %v701, 0.0
        %v766 = vadd.f32 %v702, 0.0
        %v767 = vadd.f32 %v703, 0.0
        %v768 = vadd.f32 %v704, 0.0
        %v769 = vadd.f32 %v705, 0.0
        %v770 = vadd.f32 %v706, 0.0
        %v771 = vadd.f32 %v707, 0.0
        %v772 = vadd.f32 %v708, 0.0
        %v773 = vadd.f32 %v709, 0.0
        %v774 = vadd.f32 %v710, 0.0
        %v775 = vadd.f32 %v711, 0.0
        %v776 = vadd.f32 %v712, 0.0
        %v777 = vadd.f32 %v713, 0.0
        %v778 = vadd.f32 %v714, 0.0
        %v779 = vadd.f32 %v715, 0.0
        %v780 = vadd.f32 %v716, 0.0
        %v781 = vadd.f32 %v717, 0.0
        %v782 = vadd.f32 %v718, 0.0
        %v783 = vadd.f32 %v719, 0.0
        %v784 = vld [vmem:[%s1 + $0x7] sm:$0x1]
        %v785 = vlaneseq
        %v786 = vshrl.u32 %v785, 7
        %v787 = vsub.s32 0, %v786
        %v788 = vrot.slane %v784, %v787
        %v789 = vmul.f32 %v565, %v788
        %v790 = vmul.f32 %v566, %v788
        %v791 = vmul.f32 %v567, %v788
        %v792 = vmul.f32 %v568, %v788
        %v793 = vmul.f32 %v569, %v788
        %v794 = vmul.f32 %v570, %v788
        %v795 = vmul.f32 %v571, %v788
        %v796 = vmul.f32 %v572, %v788
        %v797 = vmul.f32 %v573, %v788
        %v798 = vmul.f32 %v574, %v788
        %v799 = vmul.f32 %v575, %v788
        %v800 = vmul.f32 %v576, %v788
        %v801 = vmul.f32 %v577, %v788
        %v802 = vmul.f32 %v578, %v788
        %v803 = vmul.f32 %v579, %v788
        %v804 = vmul.f32 %v580, %v788
        %v805 = vmul.f32 %v581, %v788
        %v806 = vmul.f32 %v582, %v788
        %v807 = vmul.f32 %v583, %v788
        %v808 = vmul.f32 %v584, %v788
        %v809 = vmul.f32 %v585, %v788
        %v810 = vmul.f32 %v586, %v788
        %v811 = vmul.f32 %v587, %v788
        %v812 = vmul.f32 %v588, %v788
        %v813 = vmul.f32 %v589, %v788
        %v814 = vmul.f32 %v590, %v788
        %v815 = vmul.f32 %v591, %v788
        %v816 = vmul.f32 %v592, %v788
        %v817 = vmul.f32 %v593, %v788
        %v818 = vmul.f32 %v594, %v788
        %v819 = vmul.f32 %v595, %v788
        %v820 = vmul.f32 %v596, %v788
        %v821 = vmul.f32 %v609, %v788
        %v822 = vmul.f32 %v610, %v788
        %v823 = vmul.f32 %v611, %v788
        %v824 = vmul.f32 %v612, %v788
        %v825 = vmul.f32 %v613, %v788
        %v826 = vmul.f32 %v614, %v788
        %v827 = vmul.f32 %v615, %v788
        %v828 = vmul.f32 %v616, %v788
        %v829 = vmul.f32 %v617, %v788
        %v830 = vmul.f32 %v618, %v788
        %v831 = vmul.f32 %v619, %v788
        %v832 = vmul.f32 %v620, %v788
        %v833 = vmul.f32 %v621, %v788
        %v834 = vmul.f32 %v622, %v788
        %v835 = vmul.f32 %v623, %v788
        %v836 = vmul.f32 %v624, %v788
        %v837 = vmul.f32 %v625, %v788
        %v838 = vmul.f32 %v626, %v788
        %v839 = vmul.f32 %v627, %v788
        %v840 = vmul.f32 %v628, %v788
        %v841 = vmul.f32 %v629, %v788
        %v842 = vmul.f32 %v630, %v788
        %v843 = vmul.f32 %v631, %v788
        %v844 = vmul.f32 %v632, %v788
        %v845 = vmul.f32 %v633, %v788
        %v846 = vmul.f32 %v634, %v788
        %v847 = vmul.f32 %v635, %v788
        %v848 = vmul.f32 %v636, %v788
        %v849 = vmul.f32 %v637, %v788
        %v850 = vmul.f32 %v638, %v788
        %v851 = vmul.f32 %v639, %v788
        %v852 = vmul.f32 %v640, %v788
        %v853 = vadd.f32 %v720, %v789
        %v854 = vadd.f32 %v721, %v790
        %v855 = vadd.f32 %v722, %v791
        %v856 = vadd.f32 %v723, %v792
        %v857 = vadd.f32 %v724, %v793
        %v858 = vadd.f32 %v725, %v794
        %v859 = vadd.f32 %v726, %v795
        %v860 = vadd.f32 %v727, %v796
        %v861 = vadd.f32 %v728, %v797
        %v862 = vadd.f32 %v729, %v798
        %v863 = vadd.f32 %v730, %v799
        %v864 = vadd.f32 %v731, %v800
        %v865 = vadd.f32 %v732, %v801
        %v866 = vadd.f32 %v733, %v802
        %v867 = vadd.f32 %v734, %v803
        %v868 = vadd.f32 %v735, %v804
        %v869 = vadd.f32 %v736, %v805
        %v870 = vadd.f32 %v737, %v806
        %v871 = vadd.f32 %v738, %v807
        %v872 = vadd.f32 %v739, %v808
        %v873 = vadd.f32 %v740, %v809
        %v874 = vadd.f32 %v741, %v810
        %v875 = vadd.f32 %v742, %v811
        %v876 = vadd.f32 %v743, %v812
        %v877 = vadd.f32 %v744, %v813
        %v878 = vadd.f32 %v745, %v814
        %v879 = vadd.f32 %v746, %v815
        %v880 = vadd.f32 %v747, %v816
        %v881 = vadd.f32 %v748, %v817
        %v882 = vadd.f32 %v749, %v818
        %v883 = vadd.f32 %v750, %v819
        %v884 = vadd.f32 %v751, %v820
        %v885 = vadd.f32 %v752, %v821
        %v886 = vadd.f32 %v753, %v822
        %v887 = vadd.f32 %v754, %v823
        %v888 = vadd.f32 %v755, %v824
        %v889 = vadd.f32 %v756, %v825
        %v890 = vadd.f32 %v757, %v826
        %v891 = vadd.f32 %v758, %v827
        %v892 = vadd.f32 %v759, %v828
        %v893 = vadd.f32 %v760, %v829
        %v894 = vadd.f32 %v761, %v830
        %v895 = vadd.f32 %v762, %v831
        %v896 = vadd.f32 %v763, %v832
        %v897 = vadd.f32 %v764, %v833
        %v898 = vadd.f32 %v765, %v834
        %v899 = vadd.f32 %v766, %v835
        %v900 = vadd.f32 %v767, %v836
        %v901 = vadd.f32 %v768, %v837
        %v902 = vadd.f32 %v769, %v838
        %v903 = vadd.f32 %v770, %v839
        %v904 = vadd.f32 %v771, %v840
        %v905 = vadd.f32 %v772, %v841
        %v906 = vadd.f32 %v773, %v842
        %v907 = vadd.f32 %v774, %v843
        %v908 = vadd.f32 %v775, %v844
        %v909 = vadd.f32 %v776, %v845
        %v910 = vadd.f32 %v777, %v846
        %v911 = vadd.f32 %v778, %v847
        %v912 = vadd.f32 %v779, %v848
        %v913 = vadd.f32 %v780, %v849
        %v914 = vadd.f32 %v781, %v850
        %v915 = vadd.f32 %v782, %v851
        %v916 = vadd.f32 %v783, %v852
        %v917 = vld [vmem:[%s1 + $0xe] sm:$0x1]
        %v918 = vlaneseq
        %v919 = vshrl.u32 %v918, 7
        %v920 = vsub.s32 0, %v919
        %v921 = vrot.slane %v917, %v920
        %v922 = vmul.f32 %v567, %v921
        %v923 = vmul.f32 %v568, %v921
        %v924 = vmul.f32 %v569, %v921
        %v925 = vmul.f32 %v570, %v921
        %v926 = vmul.f32 %v571, %v921
        %v927 = vmul.f32 %v572, %v921
        %v928 = vmul.f32 %v573, %v921
        %v929 = vmul.f32 %v574, %v921
        %v930 = vmul.f32 %v575, %v921
        %v931 = vmul.f32 %v576, %v921
        %v932 = vmul.f32 %v577, %v921
        %v933 = vmul.f32 %v578, %v921
        %v934 = vmul.f32 %v579, %v921
        %v935 = vmul.f32 %v580, %v921
        %v936 = vmul.f32 %v581, %v921
        %v937 = vmul.f32 %v582, %v921
        %v938 = vmul.f32 %v583, %v921
        %v939 = vmul.f32 %v584, %v921
        %v940 = vmul.f32 %v585, %v921
        %v941 = vmul.f32 %v586, %v921
        %v942 = vmul.f32 %v587, %v921
        %v943 = vmul.f32 %v588, %v921
        %v944 = vmul.f32 %v589, %v921
        %v945 = vmul.f32 %v590, %v921
        %v946 = vmul.f32 %v591, %v921
        %v947 = vmul.f32 %v592, %v921
        %v948 = vmul.f32 %v593, %v921
        %v949 = vmul.f32 %v594, %v921
        %v950 = vmul.f32 %v595, %v921
        %v951 = vmul.f32 %v596, %v921
        %v952 = vmul.f32 %v597, %v921
        %v953 = vmul.f32 %v598, %v921
        %v954 = vmul.f32 %v611, %v921
        %v955 = vmul.f32 %v612, %v921
        %v956 = vmul.f32 %v613, %v921
        %v957 = vmul.f32 %v614, %v921
        %v958 = vmul.f32 %v615, %v921
        %v959 = vmul.f32 %v616, %v921
        %v960 = vmul.f32 %v617, %v921
        %v961 = vmul.f32 %v618, %v921
        %v962 = vmul.f32 %v619, %v921
        %v963 = vmul.f32 %v620, %v921
        %v964 = vmul.f32 %v621, %v921
        %v965 = vmul.f32 %v622, %v921
        %v966 = vmul.f32 %v623, %v921
        %v967 = vmul.f32 %v624, %v921
        %v968 = vmul.f32 %v625, %v921
        %v969 = vmul.f32 %v626, %v921
        %v970 = vmul.f32 %v627, %v921
        %v971 = vmul.f32 %v628, %v921
        %v972 = vmul.f32 %v629, %v921
        %v973 = vmul.f32 %v630, %v921
        %v974 = vmul.f32 %v631, %v921
        %v975 = vmul.f32 %v632, %v921
        %v976 = vmul.f32 %v633, %v921
        %v977 = vmul.f32 %v634, %v921
        %v978 = vmul.f32 %v635, %v921
        %v979 = vmul.f32 %v636, %v921
        %v980 = vmul.f32 %v637, %v921
        %v981 = vmul.f32 %v638, %v921
        %v982 = vmul.f32 %v639, %v921
        %v983 = vmul.f32 %v640, %v921
        %v984 = vmul.f32 %v641, %v921
        %v985 = vmul.f32 %v642, %v921
        %v986 = vadd.f32 %v853, %v922
        %v987 = vadd.f32 %v854, %v923
        %v988 = vadd.f32 %v855, %v924
        %v989 = vadd.f32 %v856, %v925
        %v990 = vadd.f32 %v857, %v926
        %v991 = vadd.f32 %v858, %v927
        %v992 = vadd.f32 %v859, %v928
        %v993 = vadd.f32 %v860, %v929
        %v994 = vadd.f32 %v861, %v930
        %v995 = vadd.f32 %v862, %v931
        %v996 = vadd.f32 %v863, %v932
        %v997 = vadd.f32 %v864, %v933
        %v998 = vadd.f32 %v865, %v934
        %v999 = vadd.f32 %v866, %v935
        %v1000 = vadd.f32 %v867, %v936
        %v1001 = vadd.f32 %v868, %v937
        %v1002 = vadd.f32 %v869, %v938
        %v1003 = vadd.f32 %v870, %v939
        %v1004 = vadd.f32 %v871, %v940
        %v1005 = vadd.f32 %v872, %v941
        %v1006 = vadd.f32 %v873, %v942
        %v1007 = vadd.f32 %v874, %v943
        %v1008 = vadd.f32 %v875, %v944
        %v1009 = vadd.f32 %v876, %v945
        %v1010 = vadd.f32 %v877, %v946
        %v1011 = vadd.f32 %v878, %v947
        %v1012 = vadd.f32 %v879, %v948
        %v1013 = vadd.f32 %v880, %v949
        %v1014 = vadd.f32 %v881, %v950
        %v1015 = vadd.f32 %v882, %v951
        %v1016 = vadd.f32 %v883, %v952
        %v1017 = vadd.f32 %v884, %v953
        %v1018 = vadd.f32 %v885, %v954
        %v1019 = vadd.f32 %v886, %v955
        %v1020 = vadd.f32 %v887, %v956
        %v1021 = vadd.f32 %v888, %v957
        %v1022 = vadd.f32 %v889, %v958
        %v1023 = vadd.f32 %v890, %v959
        %v1024 = vadd.f32 %v891, %v960
        %v1025 = vadd.f32 %v892, %v961
        %v1026 = vadd.f32 %v893, %v962
        %v1027 = vadd.f32 %v894, %v963
        %v1028 = vadd.f32 %v895, %v964
        %v1029 = vadd.f32 %v896, %v965
        %v1030 = vadd.f32 %v897, %v966
        %v1031 = vadd.f32 %v898, %v967
        %v1032 = vadd.f32 %v899, %v968
        %v1033 = vadd.f32 %v900, %v969
        %v1034 = vadd.f32 %v901, %v970
        %v1035 = vadd.f32 %v902, %v971
        %v1036 = vadd.f32 %v903, %v972
        %v1037 = vadd.f32 %v904, %v973
        %v1038 = vadd.f32 %v905, %v974
        %v1039 = vadd.f32 %v906, %v975
        %v1040 = vadd.f32 %v907, %v976
        %v1041 = vadd.f32 %v908, %v977
        %v1042 = vadd.f32 %v909, %v978
        %v1043 = vadd.f32 %v910, %v979
        %v1044 = vadd.f32 %v911, %v980
        %v1045 = vadd.f32 %v912, %v981
        %v1046 = vadd.f32 %v913, %v982
        %v1047 = vadd.f32 %v914, %v983
        %v1048 = vadd.f32 %v915, %v984
        %v1049 = vadd.f32 %v916, %v985
        %v1050 = vld [vmem:[%s1 + $0x15] sm:$0x1]
        %v1051 = vlaneseq
        %v1052 = vshrl.u32 %v1051, 7
        %v1053 = vsub.s32 0, %v1052
        %v1054 = vrot.slane %v1050, %v1053
        %v1055 = vmul.f32 %v569, %v1054
        %v1056 = vmul.f32 %v570, %v1054
        %v1057 = vmul.f32 %v571, %v1054
        %v1058 = vmul.f32 %v572, %v1054
        %v1059 = vmul.f32 %v573, %v1054
        %v1060 = vmul.f32 %v574, %v1054
        %v1061 = vmul.f32 %v575, %v1054
        %v1062 = vmul.f32 %v576, %v1054
        %v1063 = vmul.f32 %v577, %v1054
        %v1064 = vmul.f32 %v578, %v1054
        %v1065 = vmul.f32 %v579, %v1054
        %v1066 = vmul.f32 %v580, %v1054
        %v1067 = vmul.f32 %v581, %v1054
        %v1068 = vmul.f32 %v582, %v1054
        %v1069 = vmul.f32 %v583, %v1054
        %v1070 = vmul.f32 %v584, %v1054
        %v1071 = vmul.f32 %v585, %v1054
        %v1072 = vmul.f32 %v586, %v1054
        %v1073 = vmul.f32 %v587, %v1054
        %v1074 = vmul.f32 %v588, %v1054
        %v1075 = vmul.f32 %v589, %v1054
        %v1076 = vmul.f32 %v590, %v1054
        %v1077 = vmul.f32 %v591, %v1054
        %v1078 = vmul.f32 %v592, %v1054
        %v1079 = vmul.f32 %v593, %v1054
        %v1080 = vmul.f32 %v594, %v1054
        %v1081 = vmul.f32 %v595, %v1054
        %v1082 = vmul.f32 %v596, %v1054
        %v1083 = vmul.f32 %v597, %v1054
        %v1084 = vmul.f32 %v598, %v1054
        %v1085 = vmul.f32 %v599, %v1054
        %v1086 = vmul.f32 %v600, %v1054
        %v1087 = vmul.f32 %v613, %v1054
        %v1088 = vmul.f32 %v614, %v1054
        %v1089 = vmul.f32 %v615, %v1054
        %v1090 = vmul.f32 %v616, %v1054
        %v1091 = vmul.f32 %v617, %v1054
        %v1092 = vmul.f32 %v618, %v1054
        %v1093 = vmul.f32 %v619, %v1054
        %v1094 = vmul.f32 %v620, %v1054
        %v1095 = vmul.f32 %v621, %v1054
        %v1096 = vmul.f32 %v622, %v1054
        %v1097 = vmul.f32 %v623, %v1054
        %v1098 = vmul.f32 %v624, %v1054
        %v1099 = vmul.f32 %v625, %v1054
        %v1100 = vmul.f32 %v626, %v1054
        %v1101 = vmul.f32 %v627, %v1054
        %v1102 = vmul.f32 %v628, %v1054
        %v1103 = vmul.f32 %v629, %v1054
        %v1104 = vmul.f32 %v630, %v1054
        %v1105 = vmul.f32 %v631, %v1054
        %v1106 = vmul.f32 %v632, %v1054
        %v1107 = vmul.f32 %v633, %v1054
        %v1108 = vmul.f32 %v634, %v1054
        %v1109 = vmul.f32 %v635, %v1054
        %v1110 = vmul.f32 %v636, %v1054
        %v1111 = vmul.f32 %v637, %v1054
        %v1112 = vmul.f32 %v638, %v1054
        %v1113 = vmul.f32 %v639, %v1054
        %v1114 = vmul.f32 %v640, %v1054
        %v1115 = vmul.f32 %v641, %v1054
        %v1116 = vmul.f32 %v642, %v1054
        %v1117 = vmul.f32 %v643, %v1054
        %v1118 = vmul.f32 %v644, %v1054
        %v1119 = vadd.f32 %v986, %v1055
        %v1120 = vadd.f32 %v987, %v1056
        %v1121 = vadd.f32 %v988, %v1057
        %v1122 = vadd.f32 %v989, %v1058
        %v1123 = vadd.f32 %v990, %v1059
        %v1124 = vadd.f32 %v991, %v1060
        %v1125 = vadd.f32 %v992, %v1061
        %v1126 = vadd.f32 %v993, %v1062
        %v1127 = vadd.f32 %v994, %v1063
        %v1128 = vadd.f32 %v995, %v1064
        %v1129 = vadd.f32 %v996, %v1065
        %v1130 = vadd.f32 %v997, %v1066
        %v1131 = vadd.f32 %v998, %v1067
        %v1132 = vadd.f32 %v999, %v1068
        %v1133 = vadd.f32 %v1000, %v1069
        %v1134 = vadd.f32 %v1001, %v1070
        %v1135 = vadd.f32 %v1002, %v1071
        %v1136 = vadd.f32 %v1003, %v1072
        %v1137 = vadd.f32 %v1004, %v1073
        %v1138 = vadd.f32 %v1005, %v1074
        %v1139 = vadd.f32 %v1006, %v1075
        %v1140 = vadd.f32 %v1007, %v1076
        %v1141 = vadd.f32 %v1008, %v1077
        %v1142 = vadd.f32 %v1009, %v1078
        %v1143 = vadd.f32 %v1010, %v1079
        %v1144 = vadd.f32 %v1011, %v1080
        %v1145 = vadd.f32 %v1012, %v1081
        %v1146 = vadd.f32 %v1013, %v1082
        %v1147 = vadd.f32 %v1014, %v1083
        %v1148 = vadd.f32 %v1015, %v1084
        %v1149 = vadd.f32 %v1016, %v1085
        %v1150 = vadd.f32 %v1017, %v1086
        %v1151 = vadd.f32 %v1018, %v1087
        %v1152 = vadd.f32 %v1019, %v1088
        %v1153 = vadd.f32 %v1020, %v1089
        %v1154 = vadd.f32 %v1021, %v1090
        %v1155 = vadd.f32 %v1022, %v1091
        %v1156 = vadd.f32 %v1023, %v1092
        %v1157 = vadd.f32 %v1024, %v1093
        %v1158 = vadd.f32 %v1025, %v1094
        %v1159 = vadd.f32 %v1026, %v1095
        %v1160 = vadd.f32 %v1027, %v1096
        %v1161 = vadd.f32 %v1028, %v1097
        %v1162 = vadd.f32 %v1029, %v1098
        %v1163 = vadd.f32 %v1030, %v1099
        %v1164 = vadd.f32 %v1031, %v1100
        %v1165 = vadd.f32 %v1032, %v1101
        %v1166 = vadd.f32 %v1033, %v1102
        %v1167 = vadd.f32 %v1034, %v1103
        %v1168 = vadd.f32 %v1035, %v1104
        %v1169 = vadd.f32 %v1036, %v1105
        %v1170 = vadd.f32 %v1037, %v1106
        %v1171 = vadd.f32 %v1038, %v1107
        %v1172 = vadd.f32 %v1039, %v1108
        %v1173 = vadd.f32 %v1040, %v1109
        %v1174 = vadd.f32 %v1041, %v1110
        %v1175 = vadd.f32 %v1042, %v1111
        %v1176 = vadd.f32 %v1043, %v1112
        %v1177 = vadd.f32 %v1044, %v1113
        %v1178 = vadd.f32 %v1045, %v1114
        %v1179 = vadd.f32 %v1046, %v1115
        %v1180 = vadd.f32 %v1047, %v1116
        %v1181 = vadd.f32 %v1048, %v1117
        %v1182 = vadd.f32 %v1049, %v1118
        %v1183 = vld [vmem:[%s1 + $0x1c] sm:$0x1]
        %v1184 = vlaneseq
        %v1185 = vshrl.u32 %v1184, 7
        %v1186 = vsub.s32 0, %v1185
        %v1187 = vrot.slane %v1183, %v1186
        %v1188 = vmul.f32 %v571, %v1187
        %v1189 = vmul.f32 %v572, %v1187
        %v1190 = vmul.f32 %v573, %v1187
        %v1191 = vmul.f32 %v574, %v1187
        %v1192 = vmul.f32 %v575, %v1187
        %v1193 = vmul.f32 %v576, %v1187
        %v1194 = vmul.f32 %v577, %v1187
        %v1195 = vmul.f32 %v578, %v1187
        %v1196 = vmul.f32 %v579, %v1187
        %v1197 = vmul.f32 %v580, %v1187
        %v1198 = vmul.f32 %v581, %v1187
        %v1199 = vmul.f32 %v582, %v1187
        %v1200 = vmul.f32 %v583, %v1187
        %v1201 = vmul.f32 %v584, %v1187
        %v1202 = vmul.f32 %v585, %v1187
        %v1203 = vmul.f32 %v586, %v1187
        %v1204 = vmul.f32 %v587, %v1187
        %v1205 = vmul.f32 %v588, %v1187
        %v1206 = vmul.f32 %v589, %v1187
        %v1207 = vmul.f32 %v590, %v1187
        %v1208 = vmul.f32 %v591, %v1187
        %v1209 = vmul.f32 %v592, %v1187
        %v1210 = vmul.f32 %v593, %v1187
        %v1211 = vmul.f32 %v594, %v1187
        %v1212 = vmul.f32 %v595, %v1187
        %v1213 = vmul.f32 %v596, %v1187
        %v1214 = vmul.f32 %v597, %v1187
        %v1215 = vmul.f32 %v598, %v1187
        %v1216 = vmul.f32 %v599, %v1187
        %v1217 = vmul.f32 %v600, %v1187
        %v1218 = vmul.f32 %v601, %v1187
        %v1219 = vmul.f32 %v602, %v1187
        %v1220 = vmul.f32 %v615, %v1187
        %v1221 = vmul.f32 %v616, %v1187
        %v1222 = vmul.f32 %v617, %v1187
        %v1223 = vmul.f32 %v618, %v1187
        %v1224 = vmul.f32 %v619, %v1187
        %v1225 = vmul.f32 %v620, %v1187
        %v1226 = vmul.f32 %v621, %v1187
        %v1227 = vmul.f32 %v622, %v1187
        %v1228 = vmul.f32 %v623, %v1187
        %v1229 = vmul.f32 %v624, %v1187
        %v1230 = vmul.f32 %v625, %v1187
        %v1231 = vmul.f32 %v626, %v1187
        %v1232 = vmul.f32 %v627, %v1187
        %v1233 = vmul.f32 %v628, %v1187
        %v1234 = vmul.f32 %v629, %v1187
        %v1235 = vmul.f32 %v630, %v1187
        %v1236 = vmul.f32 %v631, %v1187
        %v1237 = vmul.f32 %v632, %v1187
        %v1238 = vmul.f32 %v633, %v1187
        %v1239 = vmul.f32 %v634, %v1187
        %v1240 = vmul.f32 %v635, %v1187
        %v1241 = vmul.f32 %v636, %v1187
        %v1242 = vmul.f32 %v637, %v1187
        %v1243 = vmul.f32 %v638, %v1187
        %v1244 = vmul.f32 %v639, %v1187
        %v1245 = vmul.f32 %v640, %v1187
        %v1246 = vmul.f32 %v641, %v1187
        %v1247 = vmul.f32 %v642, %v1187
        %v1248 = vmul.f32 %v643, %v1187
        %v1249 = vmul.f32 %v644, %v1187
        %v1250 = vmul.f32 %v645, %v1187
        %v1251 = vmul.f32 %v646, %v1187
        %v1252 = vadd.f32 %v1119, %v1188
        %v1253 = vadd.f32 %v1120, %v1189
        %v1254 = vadd.f32 %v1121, %v1190
        %v1255 = vadd.f32 %v1122, %v1191
        %v1256 = vadd.f32 %v1123, %v1192
        %v1257 = vadd.f32 %v1124, %v1193
        %v1258 = vadd.f32 %v1125, %v1194
        %v1259 = vadd.f32 %v1126, %v1195
        %v1260 = vadd.f32 %v1127, %v1196
        %v1261 = vadd.f32 %v1128, %v1197
        %v1262 = vadd.f32 %v1129, %v1198
        %v1263 = vadd.f32 %v1130, %v1199
        %v1264 = vadd.f32 %v1131, %v1200
        %v1265 = vadd.f32 %v1132, %v1201
        %v1266 = vadd.f32 %v1133, %v1202
        %v1267 = vadd.f32 %v1134, %v1203
        %v1268 = vadd.f32 %v1135, %v1204
        %v1269 = vadd.f32 %v1136, %v1205
        %v1270 = vadd.f32 %v1137, %v1206
        %v1271 = vadd.f32 %v1138, %v1207
        %v1272 = vadd.f32 %v1139, %v1208
        %v1273 = vadd.f32 %v1140, %v1209
        %v1274 = vadd.f32 %v1141, %v1210
        %v1275 = vadd.f32 %v1142, %v1211
        %v1276 = vadd.f32 %v1143, %v1212
        %v1277 = vadd.f32 %v1144, %v1213
        %v1278 = vadd.f32 %v1145, %v1214
        %v1279 = vadd.f32 %v1146, %v1215
        %v1280 = vadd.f32 %v1147, %v1216
        %v1281 = vadd.f32 %v1148, %v1217
        %v1282 = vadd.f32 %v1149, %v1218
        %v1283 = vadd.f32 %v1150, %v1219
        %v1284 = vadd.f32 %v1151, %v1220
        %v1285 = vadd.f32 %v1152, %v1221
        %v1286 = vadd.f32 %v1153, %v1222
        %v1287 = vadd.f32 %v1154, %v1223
        %v1288 = vadd.f32 %v1155, %v1224
        %v1289 = vadd.f32 %v1156, %v1225
        %v1290 = vadd.f32 %v1157, %v1226
        %v1291 = vadd.f32 %v1158, %v1227
        %v1292 = vadd.f32 %v1159, %v1228
        %v1293 = vadd.f32 %v1160, %v1229
        %v1294 = vadd.f32 %v1161, %v1230
        %v1295 = vadd.f32 %v1162, %v1231
        %v1296 = vadd.f32 %v1163, %v1232
        %v1297 = vadd.f32 %v1164, %v1233
        %v1298 = vadd.f32 %v1165, %v1234
        %v1299 = vadd.f32 %v1166, %v1235
        %v1300 = vadd.f32 %v1167, %v1236
        %v1301 = vadd.f32 %v1168, %v1237
        %v1302 = vadd.f32 %v1169, %v1238
        %v1303 = vadd.f32 %v1170, %v1239
        %v1304 = vadd.f32 %v1171, %v1240
        %v1305 = vadd.f32 %v1172, %v1241
        %v1306 = vadd.f32 %v1173, %v1242
        %v1307 = vadd.f32 %v1174, %v1243
        %v1308 = vadd.f32 %v1175, %v1244
        %v1309 = vadd.f32 %v1176, %v1245
        %v1310 = vadd.f32 %v1177, %v1246
        %v1311 = vadd.f32 %v1178, %v1247
        %v1312 = vadd.f32 %v1179, %v1248
        %v1313 = vadd.f32 %v1180, %v1249
        %v1314 = vadd.f32 %v1181, %v1250
        %v1315 = vadd.f32 %v1182, %v1251
        %v1316 = vld [vmem:[%s1 + $0x23] sm:$0x1]
        %v1317 = vlaneseq
        %v1318 = vshrl.u32 %v1317, 7
        %v1319 = vsub.s32 0, %v1318
        %v1320 = vrot.slane %v1316, %v1319
        %v1321 = vmul.f32 %v573, %v1320
        %v1322 = vmul.f32 %v574, %v1320
        %v1323 = vmul.f32 %v575, %v1320
        %v1324 = vmul.f32 %v576, %v1320
        %v1325 = vmul.f32 %v577, %v1320
        %v1326 = vmul.f32 %v578, %v1320
        %v1327 = vmul.f32 %v579, %v1320
        %v1328 = vmul.f32 %v580, %v1320
        %v1329 = vmul.f32 %v581, %v1320
        %v1330 = vmul.f32 %v582, %v1320
        %v1331 = vmul.f32 %v583, %v1320
        %v1332 = vmul.f32 %v584, %v1320
        %v1333 = vmul.f32 %v585, %v1320
        %v1334 = vmul.f32 %v586, %v1320
        %v1335 = vmul.f32 %v587, %v1320
        %v1336 = vmul.f32 %v588, %v1320
        %v1337 = vmul.f32 %v589, %v1320
        %v1338 = vmul.f32 %v590, %v1320
        %v1339 = vmul.f32 %v591, %v1320
        %v1340 = vmul.f32 %v592, %v1320
        %v1341 = vmul.f32 %v593, %v1320
        %v1342 = vmul.f32 %v594, %v1320
        %v1343 = vmul.f32 %v595, %v1320
        %v1344 = vmul.f32 %v596, %v1320
        %v1345 = vmul.f32 %v597, %v1320
        %v1346 = vmul.f32 %v598, %v1320
        %v1347 = vmul.f32 %v599, %v1320
        %v1348 = vmul.f32 %v600, %v1320
        %v1349 = vmul.f32 %v601, %v1320
        %v1350 = vmul.f32 %v602, %v1320
        %v1351 = vmul.f32 %v603, %v1320
        %v1352 = vmul.f32 %v604, %v1320
        %v1353 = vmul.f32 %v617, %v1320
        %v1354 = vmul.f32 %v618, %v1320
        %v1355 = vmul.f32 %v619, %v1320
        %v1356 = vmul.f32 %v620, %v1320
        %v1357 = vmul.f32 %v621, %v1320
        %v1358 = vmul.f32 %v622, %v1320
        %v1359 = vmul.f32 %v623, %v1320
        %v1360 = vmul.f32 %v624, %v1320
        %v1361 = vmul.f32 %v625, %v1320
        %v1362 = vmul.f32 %v626, %v1320
        %v1363 = vmul.f32 %v627, %v1320
        %v1364 = vmul.f32 %v628, %v1320
        %v1365 = vmul.f32 %v629, %v1320
        %v1366 = vmul.f32 %v630, %v1320
        %v1367 = vmul.f32 %v631, %v1320
        %v1368 = vmul.f32 %v632, %v1320
        %v1369 = vmul.f32 %v633, %v1320
        %v1370 = vmul.f32 %v634, %v1320
        %v1371 = vmul.f32 %v635, %v1320
        %v1372 = vmul.f32 %v636, %v1320
        %v1373 = vmul.f32 %v637, %v1320
        %v1374 = vmul.f32 %v638, %v1320
        %v1375 = vmul.f32 %v639, %v1320
        %v1376 = vmul.f32 %v640, %v1320
        %v1377 = vmul.f32 %v641, %v1320
        %v1378 = vmul.f32 %v642, %v1320
        %v1379 = vmul.f32 %v643, %v1320
        %v1380 = vmul.f32 %v644, %v1320
        %v1381 = vmul.f32 %v645, %v1320
        %v1382 = vmul.f32 %v646, %v1320
        %v1383 = vmul.f32 %v647, %v1320
        %v1384 = vmul.f32 %v648, %v1320
        %v1385 = vadd.f32 %v1252, %v1321
        %v1386 = vadd.f32 %v1253, %v1322
        %v1387 = vadd.f32 %v1254, %v1323
        %v1388 = vadd.f32 %v1255, %v1324
        %v1389 = vadd.f32 %v1256, %v1325
        %v1390 = vadd.f32 %v1257, %v1326
        %v1391 = vadd.f32 %v1258, %v1327
        %v1392 = vadd.f32 %v1259, %v1328
        %v1393 = vadd.f32 %v1260, %v1329
        %v1394 = vadd.f32 %v1261, %v1330
        %v1395 = vadd.f32 %v1262, %v1331
        %v1396 = vadd.f32 %v1263, %v1332
        %v1397 = vadd.f32 %v1264, %v1333
        %v1398 = vadd.f32 %v1265, %v1334
        %v1399 = vadd.f32 %v1266, %v1335
        %v1400 = vadd.f32 %v1267, %v1336
        %v1401 = vadd.f32 %v1268, %v1337
        %v1402 = vadd.f32 %v1269, %v1338
        %v1403 = vadd.f32 %v1270, %v1339
        %v1404 = vadd.f32 %v1271, %v1340
        %v1405 = vadd.f32 %v1272, %v1341
        %v1406 = vadd.f32 %v1273, %v1342
        %v1407 = vadd.f32 %v1274, %v1343
        %v1408 = vadd.f32 %v1275, %v1344
        %v1409 = vadd.f32 %v1276, %v1345
        %v1410 = vadd.f32 %v1277, %v1346
        %v1411 = vadd.f32 %v1278, %v1347
        %v1412 = vadd.f32 %v1279, %v1348
        %v1413 = vadd.f32 %v1280, %v1349
        %v1414 = vadd.f32 %v1281, %v1350
        %v1415 = vadd.f32 %v1282, %v1351
        %v1416 = vadd.f32 %v1283, %v1352
        %v1417 = vadd.f32 %v1284, %v1353
        %v1418 = vadd.f32 %v1285, %v1354
        %v1419 = vadd.f32 %v1286, %v1355
        %v1420 = vadd.f32 %v1287, %v1356
        %v1421 = vadd.f32 %v1288, %v1357
        %v1422 = vadd.f32 %v1289, %v1358
        %v1423 = vadd.f32 %v1290, %v1359
        %v1424 = vadd.f32 %v1291, %v1360
        %v1425 = vadd.f32 %v1292, %v1361
        %v1426 = vadd.f32 %v1293, %v1362
        %v1427 = vadd.f32 %v1294, %v1363
        %v1428 = vadd.f32 %v1295, %v1364
        %v1429 = vadd.f32 %v1296, %v1365
        %v1430 = vadd.f32 %v1297, %v1366
        %v1431 = vadd.f32 %v1298, %v1367
        %v1432 = vadd.f32 %v1299, %v1368
        %v1433 = vadd.f32 %v1300, %v1369
        %v1434 = vadd.f32 %v1301, %v1370
        %v1435 = vadd.f32 %v1302, %v1371
        %v1436 = vadd.f32 %v1303, %v1372
        %v1437 = vadd.f32 %v1304, %v1373
        %v1438 = vadd.f32 %v1305, %v1374
        %v1439 = vadd.f32 %v1306, %v1375
        %v1440 = vadd.f32 %v1307, %v1376
        %v1441 = vadd.f32 %v1308, %v1377
        %v1442 = vadd.f32 %v1309, %v1378
        %v1443 = vadd.f32 %v1310, %v1379
        %v1444 = vadd.f32 %v1311, %v1380
        %v1445 = vadd.f32 %v1312, %v1381
        %v1446 = vadd.f32 %v1313, %v1382
        %v1447 = vadd.f32 %v1314, %v1383
        %v1448 = vadd.f32 %v1315, %v1384
        %v1449 = vld [vmem:[%s1 + $0x2a] sm:$0x1]
        %v1450 = vlaneseq
        %v1451 = vshrl.u32 %v1450, 7
        %v1452 = vsub.s32 0, %v1451
        %v1453 = vrot.slane %v1449, %v1452
        %v1454 = vmul.f32 %v575, %v1453
        %v1455 = vmul.f32 %v576, %v1453
        %v1456 = vmul.f32 %v577, %v1453
        %v1457 = vmul.f32 %v578, %v1453
        %v1458 = vmul.f32 %v579, %v1453
        %v1459 = vmul.f32 %v580, %v1453
        %v1460 = vmul.f32 %v581, %v1453
        %v1461 = vmul.f32 %v582, %v1453
        %v1462 = vmul.f32 %v583, %v1453
        %v1463 = vmul.f32 %v584, %v1453
        %v1464 = vmul.f32 %v585, %v1453
        %v1465 = vmul.f32 %v586, %v1453
        %v1466 = vmul.f32 %v587, %v1453
        %v1467 = vmul.f32 %v588, %v1453
        %v1468 = vmul.f32 %v589, %v1453
        %v1469 = vmul.f32 %v590, %v1453
        %v1470 = vmul.f32 %v591, %v1453
        %v1471 = vmul.f32 %v592, %v1453
        %v1472 = vmul.f32 %v593, %v1453
        %v1473 = vmul.f32 %v594, %v1453
        %v1474 = vmul.f32 %v595, %v1453
        %v1475 = vmul.f32 %v596, %v1453
        %v1476 = vmul.f32 %v597, %v1453
        %v1477 = vmul.f32 %v598, %v1453
        %v1478 = vmul.f32 %v599, %v1453
        %v1479 = vmul.f32 %v600, %v1453
        %v1480 = vmul.f32 %v601, %v1453
        %v1481 = vmul.f32 %v602, %v1453
        %v1482 = vmul.f32 %v603, %v1453
        %v1483 = vmul.f32 %v604, %v1453
        %v1484 = vmul.f32 %v605, %v1453
        %v1485 = vmul.f32 %v606, %v1453
        %v1486 = vmul.f32 %v619, %v1453
        %v1487 = vmul.f32 %v620, %v1453
        %v1488 = vmul.f32 %v621, %v1453
        %v1489 = vmul.f32 %v622, %v1453
        %v1490 = vmul.f32 %v623, %v1453
        %v1491 = vmul.f32 %v624, %v1453
        %v1492 = vmul.f32 %v625, %v1453
        %v1493 = vmul.f32 %v626, %v1453
        %v1494 = vmul.f32 %v627, %v1453
        %v1495 = vmul.f32 %v628, %v1453
        %v1496 = vmul.f32 %v629, %v1453
        %v1497 = vmul.f32 %v630, %v1453
        %v1498 = vmul.f32 %v631, %v1453
        %v1499 = vmul.f32 %v632, %v1453
        %v1500 = vmul.f32 %v633, %v1453
        %v1501 = vmul.f32 %v634, %v1453
        %v1502 = vmul.f32 %v635, %v1453
        %v1503 = vmul.f32 %v636, %v1453
        %v1504 = vmul.f32 %v637, %v1453
        %v1505 = vmul.f32 %v638, %v1453
        %v1506 = vmul.f32 %v639, %v1453
        %v1507 = vmul.f32 %v640, %v1453
        %v1508 = vmul.f32 %v641, %v1453
        %v1509 = vmul.f32 %v642, %v1453
        %v1510 = vmul.f32 %v643, %v1453
        %v1511 = vmul.f32 %v644, %v1453
        %v1512 = vmul.f32 %v645, %v1453
        %v1513 = vmul.f32 %v646, %v1453
        %v1514 = vmul.f32 %v647, %v1453
        %v1515 = vmul.f32 %v648, %v1453
        %v1516 = vmul.f32 %v649, %v1453
        %v1517 = vmul.f32 %v650, %v1453
        %v1518 = vadd.f32 %v1385, %v1454
        %v1519 = vadd.f32 %v1386, %v1455
        %v1520 = vadd.f32 %v1387, %v1456
        %v1521 = vadd.f32 %v1388, %v1457
        %v1522 = vadd.f32 %v1389, %v1458
        %v1523 = vadd.f32 %v1390, %v1459
        %v1524 = vadd.f32 %v1391, %v1460
        %v1525 = vadd.f32 %v1392, %v1461
        %v1526 = vadd.f32 %v1393, %v1462
        %v1527 = vadd.f32 %v1394, %v1463
        %v1528 = vadd.f32 %v1395, %v1464
        %v1529 = vadd.f32 %v1396, %v1465
        %v1530 = vadd.f32 %v1397, %v1466
        %v1531 = vadd.f32 %v1398, %v1467
        %v1532 = vadd.f32 %v1399, %v1468
        %v1533 = vadd.f32 %v1400, %v1469
        %v1534 = vadd.f32 %v1401, %v1470
        %v1535 = vadd.f32 %v1402, %v1471
        %v1536 = vadd.f32 %v1403, %v1472
        %v1537 = vadd.f32 %v1404, %v1473
        %v1538 = vadd.f32 %v1405, %v1474
        %v1539 = vadd.f32 %v1406, %v1475
        %v1540 = vadd.f32 %v1407, %v1476
        %v1541 = vadd.f32 %v1408, %v1477
        %v1542 = vadd.f32 %v1409, %v1478
        %v1543 = vadd.f32 %v1410, %v1479
        %v1544 = vadd.f32 %v1411, %v1480
        %v1545 = vadd.f32 %v1412, %v1481
        %v1546 = vadd.f32 %v1413, %v1482
        %v1547 = vadd.f32 %v1414, %v1483
        %v1548 = vadd.f32 %v1415, %v1484
        %v1549 = vadd.f32 %v1416, %v1485
        %v1550 = vadd.f32 %v1417, %v1486
        %v1551 = vadd.f32 %v1418, %v1487
        %v1552 = vadd.f32 %v1419, %v1488
        %v1553 = vadd.f32 %v1420, %v1489
        %v1554 = vadd.f32 %v1421, %v1490
        %v1555 = vadd.f32 %v1422, %v1491
        %v1556 = vadd.f32 %v1423, %v1492
        %v1557 = vadd.f32 %v1424, %v1493
        %v1558 = vadd.f32 %v1425, %v1494
        %v1559 = vadd.f32 %v1426, %v1495
        %v1560 = vadd.f32 %v1427, %v1496
        %v1561 = vadd.f32 %v1428, %v1497
        %v1562 = vadd.f32 %v1429, %v1498
        %v1563 = vadd.f32 %v1430, %v1499
        %v1564 = vadd.f32 %v1431, %v1500
        %v1565 = vadd.f32 %v1432, %v1501
        %v1566 = vadd.f32 %v1433, %v1502
        %v1567 = vadd.f32 %v1434, %v1503
        %v1568 = vadd.f32 %v1435, %v1504
        %v1569 = vadd.f32 %v1436, %v1505
        %v1570 = vadd.f32 %v1437, %v1506
        %v1571 = vadd.f32 %v1438, %v1507
        %v1572 = vadd.f32 %v1439, %v1508
        %v1573 = vadd.f32 %v1440, %v1509
        %v1574 = vadd.f32 %v1441, %v1510
        %v1575 = vadd.f32 %v1442, %v1511
        %v1576 = vadd.f32 %v1443, %v1512
        %v1577 = vadd.f32 %v1444, %v1513
        %v1578 = vadd.f32 %v1445, %v1514
        %v1579 = vadd.f32 %v1446, %v1515
        %v1580 = vadd.f32 %v1447, %v1516
        %v1581 = vadd.f32 %v1448, %v1517
        %v1582 = vld [vmem:[#allocation2 + $0x1] sm:$0xff]
        %v1583 = vld [vmem:[#allocation2 + $0x9] sm:$0xff]
        %v1584 = vld [vmem:[#allocation2 + $0x19] sm:$0xff]
        %v1585 = vld [vmem:[#allocation2 + $0x21] sm:$0xff]
        %v1586 = vld [vmem:[#allocation2 + $0x31] sm:$0xff]
        %v1587 = vld [vmem:[#allocation2 + $0x39] sm:$0xff]
        %v1588 = vld [vmem:[#allocation2 + $0x49] sm:$0xff]
        %v1589 = vld [vmem:[#allocation2 + $0x51] sm:$0xff]
        %v1590 = vld [vmem:[#allocation2 + $0x61] sm:$0xff]
        %v1591 = vld [vmem:[#allocation2 + $0x69] sm:$0xff]
        %v1592 = vld [vmem:[#allocation2 + $0x79] sm:$0xff]
        %v1593 = vld [vmem:[#allocation2 + $0x81] sm:$0xff]
        %v1594 = vld [vmem:[#allocation2 + $0x91] sm:$0xff]
        %v1595 = vld [vmem:[#allocation2 + $0x99] sm:$0xff]
        %v1596 = vld [vmem:[#allocation2 + $0xa9] sm:$0xff]
        %v1597 = vld [vmem:[#allocation2 + $0xb1] sm:$0xff]
        %v1598 = vld [vmem:[#allocation2 + $0xc1] sm:$0xff]
        %v1599 = vld [vmem:[#allocation2 + $0xc9] sm:$0xff]
        %v1600 = vld [vmem:[#allocation2 + $0xd9] sm:$0xff]
        %v1601 = vld [vmem:[#allocation2 + $0xe1] sm:$0xff]
        %v1602 = vld [vmem:[#allocation2 + $0xf1] sm:$0xff]
        %v1603 = vld [vmem:[#allocation2 + $0xf9] sm:$0xff]
        %v1604 = vld [vmem:[#allocation2 + $0x109] sm:$0xff]
        %v1605 = vld [vmem:[#allocation2 + $0x111] sm:$0xff]
        %v1606 = vld [vmem:[#allocation2 + $0x121] sm:$0xff]
        %v1607 = vld [vmem:[#allocation2 + $0x129] sm:$0xff]
        %v1608 = vld [vmem:[#allocation2 + $0x139] sm:$0xff]
        %v1609 = vld [vmem:[#allocation2 + $0x141] sm:$0xff]
        %v1610 = vld [vmem:[#allocation2 + $0x151] sm:$0xff]
        %v1611 = vld [vmem:[#allocation2 + $0x159] sm:$0xff]
        %v1612 = vld [vmem:[#allocation2 + $0x169] sm:$0xff]
        %v1613 = vld [vmem:[#allocation2 + $0x171] sm:$0xff]
        %v1614 = vld [vmem:[#allocation2 + $0x181] sm:$0xff]
        %v1615 = vld [vmem:[#allocation2 + $0x189] sm:$0xff]
        %v1616 = vld [vmem:[#allocation2 + $0x199] sm:$0xff]
        %v1617 = vld [vmem:[#allocation2 + $0x1a1] sm:$0xff]
        %v1618 = vld [vmem:[#allocation2 + $0x1b1] sm:$0xff]
        %v1619 = vld [vmem:[#allocation2 + $0x1b9] sm:$0xff]
        %v1620 = vld [vmem:[#allocation2 + $0x1c9] sm:$0xff]
        %v1621 = vld [vmem:[#allocation2 + $0x1d1] sm:$0xff]
        %v1622 = vld [vmem:[#allocation2 + $0x1e1] sm:$0xff]
        %v1623 = vld [vmem:[#allocation2 + $0x1e9] sm:$0xff]
        %v1624 = vld [vmem:[#allocation2 + $0x1f9] sm:$0xff]
        %v1625 = vld [vmem:[#allocation2 + $0x201] sm:$0xff]
        %v1626 = vld [vmem:[#allocation2 + $0x211] sm:$0xff]
        %v1627 = vld [vmem:[#allocation2 + $0x219] sm:$0xff]
        %v1628 = vld [vmem:[#allocation2 + $0x229] sm:$0xff]
        %v1629 = vld [vmem:[#allocation2 + $0x231] sm:$0xff]
        %v1630 = vld [vmem:[#allocation2 + $0x241] sm:$0xff]
        %v1631 = vld [vmem:[#allocation2 + $0x249] sm:$0xff]
        %v1632 = vld [vmem:[#allocation2 + $0x259] sm:$0xff]
        %v1633 = vld [vmem:[#allocation2 + $0x261] sm:$0xff]
        %v1634 = vld [vmem:[#allocation2 + $0x271] sm:$0xff]
        %v1635 = vld [vmem:[#allocation2 + $0x279] sm:$0xff]
        %v1636 = vld [vmem:[#allocation2 + $0x289] sm:$0xff]
        %v1637 = vld [vmem:[#allocation2 + $0x291] sm:$0xff]
        %v1638 = vld [vmem:[#allocation2 + $0x2a1] sm:$0xff]
        %v1639 = vld [vmem:[#allocation2 + $0x2a9] sm:$0xff]
        %v1640 = vld [vmem:[#allocation2 + $0x2b9] sm:$0xff]
        %v1641 = vld [vmem:[#allocation2 + $0x2c1] sm:$0xff]
        %v1642 = vld [vmem:[#allocation2 + $0x2d1] sm:$0xff]
        %v1643 = vld [vmem:[#allocation2 + $0x2d9] sm:$0xff]
        %v1644 = vld [vmem:[#allocation2 + $0x2e9] sm:$0xff]
        %v1645 = vld [vmem:[#allocation2 + $0x2f1] sm:$0xff]
        %v1646 = vld [vmem:[#allocation2 + $0x301] sm:$0xff]
        %v1647 = vld [vmem:[#allocation2 + $0x309] sm:$0xff]
        %v1648 = vld [vmem:[#allocation2 + $0x319] sm:$0xff]
        %v1649 = vld [vmem:[#allocation2 + $0x321] sm:$0xff]
        %v1650 = vld [vmem:[#allocation2 + $0x331] sm:$0xff]
        %v1651 = vld [vmem:[#allocation2 + $0x339] sm:$0xff]
        %v1652 = vld [vmem:[#allocation2 + $0x349] sm:$0xff]
        %v1653 = vld [vmem:[#allocation2 + $0x351] sm:$0xff]
        %v1654 = vld [vmem:[#allocation2 + $0x361] sm:$0xff]
        %v1655 = vld [vmem:[#allocation2 + $0x369] sm:$0xff]
        %v1656 = vld [vmem:[#allocation2 + $0x379] sm:$0xff]
        %v1657 = vld [vmem:[#allocation2 + $0x381] sm:$0xff]
        %v1658 = vld [vmem:[#allocation2 + $0x391] sm:$0xff]
        %v1659 = vld [vmem:[#allocation2 + $0x399] sm:$0xff]
        %v1660 = vld [vmem:[#allocation2 + $0x3a9] sm:$0xff]
        %v1661 = vld [vmem:[#allocation2 + $0x3b1] sm:$0xff]
        %v1662 = vld [vmem:[#allocation2 + $0x3c1] sm:$0xff]
        %v1663 = vld [vmem:[#allocation2 + $0x3c9] sm:$0xff]
        %v1664 = vld [vmem:[#allocation2 + $0x3d9] sm:$0xff]
        %v1665 = vld [vmem:[#allocation2 + $0x3e1] sm:$0xff]
        %v1666 = vld [vmem:[#allocation2 + $0x3f1] sm:$0xff]
        %v1667 = vld [vmem:[#allocation2 + $0x3f9] sm:$0xff]
        %v1668 = vld [vmem:[#allocation2 + $0x409] sm:$0xff]
        %v1669 = vld [vmem:[#allocation2 + $0x411] sm:$0xff]
        %v1670 = vld [vmem:[%s1 + $0x1] sm:$0x1]
        %v1671 = vlaneseq
        %v1672 = vshrl.u32 %v1671, 7
        %v1673 = vsub.s32 0, %v1672
        %v1674 = vrot.slane %v1670, %v1673
        %v1675 = vmul.f32 %v1582, %v1674
        %v1676 = vmul.f32 %v1583, %v1674
        %v1677 = vmul.f32 %v1584, %v1674
        %v1678 = vmul.f32 %v1585, %v1674
        %v1679 = vmul.f32 %v1586, %v1674
        %v1680 = vmul.f32 %v1587, %v1674
        %v1681 = vmul.f32 %v1588, %v1674
        %v1682 = vmul.f32 %v1589, %v1674
        %v1683 = vmul.f32 %v1590, %v1674
        %v1684 = vmul.f32 %v1591, %v1674
        %v1685 = vmul.f32 %v1592, %v1674
        %v1686 = vmul.f32 %v1593, %v1674
        %v1687 = vmul.f32 %v1594, %v1674
        %v1688 = vmul.f32 %v1595, %v1674
        %v1689 = vmul.f32 %v1596, %v1674
        %v1690 = vmul.f32 %v1597, %v1674
        %v1691 = vmul.f32 %v1598, %v1674
        %v1692 = vmul.f32 %v1599, %v1674
        %v1693 = vmul.f32 %v1600, %v1674
        %v1694 = vmul.f32 %v1601, %v1674
        %v1695 = vmul.f32 %v1602, %v1674
        %v1696 = vmul.f32 %v1603, %v1674
        %v1697 = vmul.f32 %v1604, %v1674
        %v1698 = vmul.f32 %v1605, %v1674
        %v1699 = vmul.f32 %v1606, %v1674
        %v1700 = vmul.f32 %v1607, %v1674
        %v1701 = vmul.f32 %v1608, %v1674
        %v1702 = vmul.f32 %v1609, %v1674
        %v1703 = vmul.f32 %v1610, %v1674
        %v1704 = vmul.f32 %v1611, %v1674
        %v1705 = vmul.f32 %v1612, %v1674
        %v1706 = vmul.f32 %v1613, %v1674
        %v1707 = vmul.f32 %v1626, %v1674
        %v1708 = vmul.f32 %v1627, %v1674
        %v1709 = vmul.f32 %v1628, %v1674
        %v1710 = vmul.f32 %v1629, %v1674
        %v1711 = vmul.f32 %v1630, %v1674
        %v1712 = vmul.f32 %v1631, %v1674
        %v1713 = vmul.f32 %v1632, %v1674
        %v1714 = vmul.f32 %v1633, %v1674
        %v1715 = vmul.f32 %v1634, %v1674
        %v1716 = vmul.f32 %v1635, %v1674
        %v1717 = vmul.f32 %v1636, %v1674
        %v1718 = vmul.f32 %v1637, %v1674
        %v1719 = vmul.f32 %v1638, %v1674
        %v1720 = vmul.f32 %v1639, %v1674
        %v1721 = vmul.f32 %v1640, %v1674
        %v1722 = vmul.f32 %v1641, %v1674
        %v1723 = vmul.f32 %v1642, %v1674
        %v1724 = vmul.f32 %v1643, %v1674
        %v1725 = vmul.f32 %v1644, %v1674
        %v1726 = vmul.f32 %v1645, %v1674
        %v1727 = vmul.f32 %v1646, %v1674
        %v1728 = vmul.f32 %v1647, %v1674
        %v1729 = vmul.f32 %v1648, %v1674
        %v1730 = vmul.f32 %v1649, %v1674
        %v1731 = vmul.f32 %v1650, %v1674
        %v1732 = vmul.f32 %v1651, %v1674
        %v1733 = vmul.f32 %v1652, %v1674
        %v1734 = vmul.f32 %v1653, %v1674
        %v1735 = vmul.f32 %v1654, %v1674
        %v1736 = vmul.f32 %v1655, %v1674
        %v1737 = vmul.f32 %v1656, %v1674
        %v1738 = vmul.f32 %v1657, %v1674
        %v1739 = vadd.f32 %v1518, %v1675
        %v1740 = vadd.f32 %v1519, %v1676
        %v1741 = vadd.f32 %v1520, %v1677
        %v1742 = vadd.f32 %v1521, %v1678
        %v1743 = vadd.f32 %v1522, %v1679
        %v1744 = vadd.f32 %v1523, %v1680
        %v1745 = vadd.f32 %v1524, %v1681
        %v1746 = vadd.f32 %v1525, %v1682
        %v1747 = vadd.f32 %v1526, %v1683
        %v1748 = vadd.f32 %v1527, %v1684
        %v1749 = vadd.f32 %v1528, %v1685
        %v1750 = vadd.f32 %v1529, %v1686
        %v1751 = vadd.f32 %v1530, %v1687
        %v1752 = vadd.f32 %v1531, %v1688
        %v1753 = vadd.f32 %v1532, %v1689
        %v1754 = vadd.f32 %v1533, %v1690
        %v1755 = vadd.f32 %v1534, %v1691
        %v1756 = vadd.f32 %v1535, %v1692
        %v1757 = vadd.f32 %v1536, %v1693
        %v1758 = vadd.f32 %v1537, %v1694
        %v1759 = vadd.f32 %v1538, %v1695
        %v1760 = vadd.f32 %v1539, %v1696
        %v1761 = vadd.f32 %v1540, %v1697
        %v1762 = vadd.f32 %v1541, %v1698
        %v1763 = vadd.f32 %v1542, %v1699
        %v1764 = vadd.f32 %v1543, %v1700
        %v1765 = vadd.f32 %v1544, %v1701
        %v1766 = vadd.f32 %v1545, %v1702
        %v1767 = vadd.f32 %v1546, %v1703
        %v1768 = vadd.f32 %v1547, %v1704
        %v1769 = vadd.f32 %v1548, %v1705
        %v1770 = vadd.f32 %v1549, %v1706
        %v1771 = vadd.f32 %v1550, %v1707
        %v1772 = vadd.f32 %v1551, %v1708
        %v1773 = vadd.f32 %v1552, %v1709
        %v1774 = vadd.f32 %v1553, %v1710
        %v1775 = vadd.f32 %v1554, %v1711
        %v1776 = vadd.f32 %v1555, %v1712
        %v1777 = vadd.f32 %v1556, %v1713
        %v1778 = vadd.f32 %v1557, %v1714
        %v1779 = vadd.f32 %v1558, %v1715
        %v1780 = vadd.f32 %v1559, %v1716
        %v1781 = vadd.f32 %v1560, %v1717
        %v1782 = vadd.f32 %v1561, %v1718
        %v1783 = vadd.f32 %v1562, %v1719
        %v1784 = vadd.f32 %v1563, %v1720
        %v1785 = vadd.f32 %v1564, %v1721
        %v1786 = vadd.f32 %v1565, %v1722
        %v1787 = vadd.f32 %v1566, %v1723
        %v1788 = vadd.f32 %v1567, %v1724
        %v1789 = vadd.f32 %v1568, %v1725
        %v1790 = vadd.f32 %v1569, %v1726
        %v1791 = vadd.f32 %v1570, %v1727
        %v1792 = vadd.f32 %v1571, %v1728
        %v1793 = vadd.f32 %v1572, %v1729
        %v1794 = vadd.f32 %v1573, %v1730
        %v1795 = vadd.f32 %v1574, %v1731
        %v1796 = vadd.f32 %v1575, %v1732
        %v1797 = vadd.f32 %v1576, %v1733
        %v1798 = vadd.f32 %v1577, %v1734
        %v1799 = vadd.f32 %v1578, %v1735
        %v1800 = vadd.f32 %v1579, %v1736
        %v1801 = vadd.f32 %v1580, %v1737
        %v1802 = vadd.f32 %v1581, %v1738
        %v1803 = vld [vmem:[%s1 + $0x8] sm:$0x1]
        %v1804 = vlaneseq
        %v1805 = vshrl.u32 %v1804, 7
        %v1806 = vsub.s32 0, %v1805
        %v1807 = vrot.slane %v1803, %v1806
        %v1808 = vmul.f32 %v1584, %v1807
        %v1809 = vmul.f32 %v1585, %v1807
        %v1810 = vmul.f32 %v1586, %v1807
        %v1811 = vmul.f32 %v1587, %v1807
        %v1812 = vmul.f32 %v1588, %v1807
        %v1813 = vmul.f32 %v1589, %v1807
        %v1814 = vmul.f32 %v1590, %v1807
        %v1815 = vmul.f32 %v1591, %v1807
        %v1816 = vmul.f32 %v1592, %v1807
        %v1817 = vmul.f32 %v1593, %v1807
        %v1818 = vmul.f32 %v1594, %v1807
        %v1819 = vmul.f32 %v1595, %v1807
        %v1820 = vmul.f32 %v1596, %v1807
        %v1821 = vmul.f32 %v1597, %v1807
        %v1822 = vmul.f32 %v1598, %v1807
        %v1823 = vmul.f32 %v1599, %v1807
        %v1824 = vmul.f32 %v1600, %v1807
        %v1825 = vmul.f32 %v1601, %v1807
        %v1826 = vmul.f32 %v1602, %v1807
        %v1827 = vmul.f32 %v1603, %v1807
        %v1828 = vmul.f32 %v1604, %v1807
        %v1829 = vmul.f32 %v1605, %v1807
        %v1830 = vmul.f32 %v1606, %v1807
        %v1831 = vmul.f32 %v1607, %v1807
        %v1832 = vmul.f32 %v1608, %v1807
        %v1833 = vmul.f32 %v1609, %v1807
        %v1834 = vmul.f32 %v1610, %v1807
        %v1835 = vmul.f32 %v1611, %v1807
        %v1836 = vmul.f32 %v1612, %v1807
        %v1837 = vmul.f32 %v1613, %v1807
        %v1838 = vmul.f32 %v1614, %v1807
        %v1839 = vmul.f32 %v1615, %v1807
        %v1840 = vmul.f32 %v1628, %v1807
        %v1841 = vmul.f32 %v1629, %v1807
        %v1842 = vmul.f32 %v1630, %v1807
        %v1843 = vmul.f32 %v1631, %v1807
        %v1844 = vmul.f32 %v1632, %v1807
        %v1845 = vmul.f32 %v1633, %v1807
        %v1846 = vmul.f32 %v1634, %v1807
        %v1847 = vmul.f32 %v1635, %v1807
        %v1848 = vmul.f32 %v1636, %v1807
        %v1849 = vmul.f32 %v1637, %v1807
        %v1850 = vmul.f32 %v1638, %v1807
        %v1851 = vmul.f32 %v1639, %v1807
        %v1852 = vmul.f32 %v1640, %v1807
        %v1853 = vmul.f32 %v1641, %v1807
        %v1854 = vmul.f32 %v1642, %v1807
        %v1855 = vmul.f32 %v1643, %v1807
        %v1856 = vmul.f32 %v1644, %v1807
        %v1857 = vmul.f32 %v1645, %v1807
        %v1858 = vmul.f32 %v1646, %v1807
        %v1859 = vmul.f32 %v1647, %v1807
        %v1860 = vmul.f32 %v1648, %v1807
        %v1861 = vmul.f32 %v1649, %v1807
        %v1862 = vmul.f32 %v1650, %v1807
        %v1863 = vmul.f32 %v1651, %v1807
        %v1864 = vmul.f32 %v1652, %v1807
        %v1865 = vmul.f32 %v1653, %v1807
        %v1866 = vmul.f32 %v1654, %v1807
        %v1867 = vmul.f32 %v1655, %v1807
        %v1868 = vmul.f32 %v1656, %v1807
        %v1869 = vmul.f32 %v1657, %v1807
        %v1870 = vmul.f32 %v1658, %v1807
        %v1871 = vmul.f32 %v1659, %v1807
        %v1872 = vadd.f32 %v1739, %v1808
        %v1873 = vadd.f32 %v1740, %v1809
        %v1874 = vadd.f32 %v1741, %v1810
        %v1875 = vadd.f32 %v1742, %v1811
        %v1876 = vadd.f32 %v1743, %v1812
        %v1877 = vadd.f32 %v1744, %v1813
        %v1878 = vadd.f32 %v1745, %v1814
        %v1879 = vadd.f32 %v1746, %v1815
        %v1880 = vadd.f32 %v1747, %v1816
        %v1881 = vadd.f32 %v1748, %v1817
        %v1882 = vadd.f32 %v1749, %v1818
        %v1883 = vadd.f32 %v1750, %v1819
        %v1884 = vadd.f32 %v1751, %v1820
        %v1885 = vadd.f32 %v1752, %v1821
        %v1886 = vadd.f32 %v1753, %v1822
        %v1887 = vadd.f32 %v1754, %v1823
        %v1888 = vadd.f32 %v1755, %v1824
        %v1889 = vadd.f32 %v1756, %v1825
        %v1890 = vadd.f32 %v1757, %v1826
        %v1891 = vadd.f32 %v1758, %v1827
        %v1892 = vadd.f32 %v1759, %v1828
        %v1893 = vadd.f32 %v1760, %v1829
        %v1894 = vadd.f32 %v1761, %v1830
        %v1895 = vadd.f32 %v1762, %v1831
        %v1896 = vadd.f32 %v1763, %v1832
        %v1897 = vadd.f32 %v1764, %v1833
        %v1898 = vadd.f32 %v1765, %v1834
        %v1899 = vadd.f32 %v1766, %v1835
        %v1900 = vadd.f32 %v1767, %v1836
        %v1901 = vadd.f32 %v1768, %v1837
        %v1902 = vadd.f32 %v1769, %v1838
        %v1903 = vadd.f32 %v1770, %v1839
        %v1904 = vadd.f32 %v1771, %v1840
        %v1905 = vadd.f32 %v1772, %v1841
        %v1906 = vadd.f32 %v1773, %v1842
        %v1907 = vadd.f32 %v1774, %v1843
        %v1908 = vadd.f32 %v1775, %v1844
        %v1909 = vadd.f32 %v1776, %v1845
        %v1910 = vadd.f32 %v1777, %v1846
        %v1911 = vadd.f32 %v1778, %v1847
        %v1912 = vadd.f32 %v1779, %v1848
        %v1913 = vadd.f32 %v1780, %v1849
        %v1914 = vadd.f32 %v1781, %v1850
        %v1915 = vadd.f32 %v1782, %v1851
        %v1916 = vadd.f32 %v1783, %v1852
        %v1917 = vadd.f32 %v1784, %v1853
        %v1918 = vadd.f32 %v1785, %v1854
        %v1919 = vadd.f32 %v1786, %v1855
        %v1920 = vadd.f32 %v1787, %v1856
        %v1921 = vadd.f32 %v1788, %v1857
        %v1922 = vadd.f32 %v1789, %v1858
        %v1923 = vadd.f32 %v1790, %v1859
        %v1924 = vadd.f32 %v1791, %v1860
        %v1925 = vadd.f32 %v1792, %v1861
        %v1926 = vadd.f32 %v1793, %v1862
        %v1927 = vadd.f32 %v1794, %v1863
        %v1928 = vadd.f32 %v1795, %v1864
        %v1929 = vadd.f32 %v1796, %v1865
        %v1930 = vadd.f32 %v1797, %v1866
        %v1931 = vadd.f32 %v1798, %v1867
        %v1932 = vadd.f32 %v1799, %v1868
        %v1933 = vadd.f32 %v1800, %v1869
        %v1934 = vadd.f32 %v1801, %v1870
        %v1935 = vadd.f32 %v1802, %v1871
        %v1936 = vld [vmem:[%s1 + $0xf] sm:$0x1]
        %v1937 = vlaneseq
        %v1938 = vshrl.u32 %v1937, 7
        %v1939 = vsub.s32 0, %v1938
        %v1940 = vrot.slane %v1936, %v1939
        %v1941 = vmul.f32 %v1586, %v1940
        %v1942 = vmul.f32 %v1587, %v1940
        %v1943 = vmul.f32 %v1588, %v1940
        %v1944 = vmul.f32 %v1589, %v1940
        %v1945 = vmul.f32 %v1590, %v1940
        %v1946 = vmul.f32 %v1591, %v1940
        %v1947 = vmul.f32 %v1592, %v1940
        %v1948 = vmul.f32 %v1593, %v1940
        %v1949 = vmul.f32 %v1594, %v1940
        %v1950 = vmul.f32 %v1595, %v1940
        %v1951 = vmul.f32 %v1596, %v1940
        %v1952 = vmul.f32 %v1597, %v1940
        %v1953 = vmul.f32 %v1598, %v1940
        %v1954 = vmul.f32 %v1599, %v1940
        %v1955 = vmul.f32 %v1600, %v1940
        %v1956 = vmul.f32 %v1601, %v1940
        %v1957 = vmul.f32 %v1602, %v1940
        %v1958 = vmul.f32 %v1603, %v1940
        %v1959 = vmul.f32 %v1604, %v1940
        %v1960 = vmul.f32 %v1605, %v1940
        %v1961 = vmul.f32 %v1606, %v1940
        %v1962 = vmul.f32 %v1607, %v1940
        %v1963 = vmul.f32 %v1608, %v1940
        %v1964 = vmul.f32 %v1609, %v1940
        %v1965 = vmul.f32 %v1610, %v1940
        %v1966 = vmul.f32 %v1611, %v1940
        %v1967 = vmul.f32 %v1612, %v1940
        %v1968 = vmul.f32 %v1613, %v1940
        %v1969 = vmul.f32 %v1614, %v1940
        %v1970 = vmul.f32 %v1615, %v1940
        %v1971 = vmul.f32 %v1616, %v1940
        %v1972 = vmul.f32 %v1617, %v1940
        %v1973 = vmul.f32 %v1630, %v1940
        %v1974 = vmul.f32 %v1631, %v1940
        %v1975 = vmul.f32 %v1632, %v1940
        %v1976 = vmul.f32 %v1633, %v1940
        %v1977 = vmul.f32 %v1634, %v1940
        %v1978 = vmul.f32 %v1635, %v1940
        %v1979 = vmul.f32 %v1636, %v1940
        %v1980 = vmul.f32 %v1637, %v1940
        %v1981 = vmul.f32 %v1638, %v1940
        %v1982 = vmul.f32 %v1639, %v1940
        %v1983 = vmul.f32 %v1640, %v1940
        %v1984 = vmul.f32 %v1641, %v1940
        %v1985 = vmul.f32 %v1642, %v1940
        %v1986 = vmul.f32 %v1643, %v1940
        %v1987 = vmul.f32 %v1644, %v1940
        %v1988 = vmul.f32 %v1645, %v1940
        %v1989 = vmul.f32 %v1646, %v1940
        %v1990 = vmul.f32 %v1647, %v1940
        %v1991 = vmul.f32 %v1648, %v1940
        %v1992 = vmul.f32 %v1649, %v1940
        %v1993 = vmul.f32 %v1650, %v1940
        %v1994 = vmul.f32 %v1651, %v1940
        %v1995 = vmul.f32 %v1652, %v1940
        %v1996 = vmul.f32 %v1653, %v1940
        %v1997 = vmul.f32 %v1654, %v1940
        %v1998 = vmul.f32 %v1655, %v1940
        %v1999 = vmul.f32 %v1656, %v1940
        %v2000 = vmul.f32 %v1657, %v1940
        %v2001 = vmul.f32 %v1658, %v1940
        %v2002 = vmul.f32 %v1659, %v1940
        %v2003 = vmul.f32 %v1660, %v1940
        %v2004 = vmul.f32 %v1661, %v1940
        %v2005 = vadd.f32 %v1872, %v1941
        %v2006 = vadd.f32 %v1873, %v1942
        %v2007 = vadd.f32 %v1874, %v1943
        %v2008 = vadd.f32 %v1875, %v1944
        %v2009 = vadd.f32 %v1876, %v1945
        %v2010 = vadd.f32 %v1877, %v1946
        %v2011 = vadd.f32 %v1878, %v1947
        %v2012 = vadd.f32 %v1879, %v1948
        %v2013 = vadd.f32 %v1880, %v1949
        %v2014 = vadd.f32 %v1881, %v1950
        %v2015 = vadd.f32 %v1882, %v1951
        %v2016 = vadd.f32 %v1883, %v1952
        %v2017 = vadd.f32 %v1884, %v1953
        %v2018 = vadd.f32 %v1885, %v1954
        %v2019 = vadd.f32 %v1886, %v1955
        %v2020 = vadd.f32 %v1887, %v1956
        %v2021 = vadd.f32 %v1888, %v1957
        %v2022 = vadd.f32 %v1889, %v1958
        %v2023 = vadd.f32 %v1890, %v1959
        %v2024 = vadd.f32 %v1891, %v1960
        %v2025 = vadd.f32 %v1892, %v1961
        %v2026 = vadd.f32 %v1893, %v1962
        %v2027 = vadd.f32 %v1894, %v1963
        %v2028 = vadd.f32 %v1895, %v1964
        %v2029 = vadd.f32 %v1896, %v1965
        %v2030 = vadd.f32 %v1897, %v1966
        %v2031 = vadd.f32 %v1898, %v1967
        %v2032 = vadd.f32 %v1899, %v1968
        %v2033 = vadd.f32 %v1900, %v1969
        %v2034 = vadd.f32 %v1901, %v1970
        %v2035 = vadd.f32 %v1902, %v1971
        %v2036 = vadd.f32 %v1903, %v1972
        %v2037 = vadd.f32 %v1904, %v1973
        %v2038 = vadd.f32 %v1905, %v1974
        %v2039 = vadd.f32 %v1906, %v1975
        %v2040 = vadd.f32 %v1907, %v1976
        %v2041 = vadd.f32 %v1908, %v1977
        %v2042 = vadd.f32 %v1909, %v1978
        %v2043 = vadd.f32 %v1910, %v1979
        %v2044 = vadd.f32 %v1911, %v1980
        %v2045 = vadd.f32 %v1912, %v1981
        %v2046 = vadd.f32 %v1913, %v1982
        %v2047 = vadd.f32 %v1914, %v1983
        %v2048 = vadd.f32 %v1915, %v1984
        %v2049 = vadd.f32 %v1916, %v1985
        %v2050 = vadd.f32 %v1917, %v1986
        %v2051 = vadd.f32 %v1918, %v1987
        %v2052 = vadd.f32 %v1919, %v1988
        %v2053 = vadd.f32 %v1920, %v1989
        %v2054 = vadd.f32 %v1921, %v1990
        %v2055 = vadd.f32 %v1922, %v1991
        %v2056 = vadd.f32 %v1923, %v1992
        %v2057 = vadd.f32 %v1924, %v1993
        %v2058 = vadd.f32 %v1925, %v1994
        %v2059 = vadd.f32 %v1926, %v1995
        %v2060 = vadd.f32 %v1927, %v1996
        %v2061 = vadd.f32 %v1928, %v1997
        %v2062 = vadd.f32 %v1929, %v1998
        %v2063 = vadd.f32 %v1930, %v1999
        %v2064 = vadd.f32 %v1931, %v2000
        %v2065 = vadd.f32 %v1932, %v2001
        %v2066 = vadd.f32 %v1933, %v2002
        %v2067 = vadd.f32 %v1934, %v2003
        %v2068 = vadd.f32 %v1935, %v2004
        %v2069 = vld [vmem:[%s1 + $0x16] sm:$0x1]
        %v2070 = vlaneseq
        %v2071 = vshrl.u32 %v2070, 7
        %v2072 = vsub.s32 0, %v2071
        %v2073 = vrot.slane %v2069, %v2072
        %v2074 = vmul.f32 %v1588, %v2073
        %v2075 = vmul.f32 %v1589, %v2073
        %v2076 = vmul.f32 %v1590, %v2073
        %v2077 = vmul.f32 %v1591, %v2073
        %v2078 = vmul.f32 %v1592, %v2073
        %v2079 = vmul.f32 %v1593, %v2073
        %v2080 = vmul.f32 %v1594, %v2073
        %v2081 = vmul.f32 %v1595, %v2073
        %v2082 = vmul.f32 %v1596, %v2073
        %v2083 = vmul.f32 %v1597, %v2073
        %v2084 = vmul.f32 %v1598, %v2073
        %v2085 = vmul.f32 %v1599, %v2073
        %v2086 = vmul.f32 %v1600, %v2073
        %v2087 = vmul.f32 %v1601, %v2073
        %v2088 = vmul.f32 %v1602, %v2073
        %v2089 = vmul.f32 %v1603, %v2073
        %v2090 = vmul.f32 %v1604, %v2073
        %v2091 = vmul.f32 %v1605, %v2073
        %v2092 = vmul.f32 %v1606, %v2073
        %v2093 = vmul.f32 %v1607, %v2073
        %v2094 = vmul.f32 %v1608, %v2073
        %v2095 = vmul.f32 %v1609, %v2073
        %v2096 = vmul.f32 %v1610, %v2073
        %v2097 = vmul.f32 %v1611, %v2073
        %v2098 = vmul.f32 %v1612, %v2073
        %v2099 = vmul.f32 %v1613, %v2073
        %v2100 = vmul.f32 %v1614, %v2073
        %v2101 = vmul.f32 %v1615, %v2073
        %v2102 = vmul.f32 %v1616, %v2073
        %v2103 = vmul.f32 %v1617, %v2073
        %v2104 = vmul.f32 %v1618, %v2073
        %v2105 = vmul.f32 %v1619, %v2073
        %v2106 = vmul.f32 %v1632, %v2073
        %v2107 = vmul.f32 %v1633, %v2073
        %v2108 = vmul.f32 %v1634, %v2073
        %v2109 = vmul.f32 %v1635, %v2073
        %v2110 = vmul.f32 %v1636, %v2073
        %v2111 = vmul.f32 %v1637, %v2073
        %v2112 = vmul.f32 %v1638, %v2073
        %v2113 = vmul.f32 %v1639, %v2073
        %v2114 = vmul.f32 %v1640, %v2073
        %v2115 = vmul.f32 %v1641, %v2073
        %v2116 = vmul.f32 %v1642, %v2073
        %v2117 = vmul.f32 %v1643, %v2073
        %v2118 = vmul.f32 %v1644, %v2073
        %v2119 = vmul.f32 %v1645, %v2073
        %v2120 = vmul.f32 %v1646, %v2073
        %v2121 = vmul.f32 %v1647, %v2073
        %v2122 = vmul.f32 %v1648, %v2073
        %v2123 = vmul.f32 %v1649, %v2073
        %v2124 = vmul.f32 %v1650, %v2073
        %v2125 = vmul.f32 %v1651, %v2073
        %v2126 = vmul.f32 %v1652, %v2073
        %v2127 = vmul.f32 %v1653, %v2073
        %v2128 = vmul.f32 %v1654, %v2073
        %v2129 = vmul.f32 %v1655, %v2073
        %v2130 = vmul.f32 %v1656, %v2073
        %v2131 = vmul.f32 %v1657, %v2073
        %v2132 = vmul.f32 %v1658, %v2073
        %v2133 = vmul.f32 %v1659, %v2073
        %v2134 = vmul.f32 %v1660, %v2073
        %v2135 = vmul.f32 %v1661, %v2073
        %v2136 = vmul.f32 %v1662, %v2073
        %v2137 = vmul.f32 %v1663, %v2073
        %v2138 = vadd.f32 %v2005, %v2074
        %v2139 = vadd.f32 %v2006, %v2075
        %v2140 = vadd.f32 %v2007, %v2076
        %v2141 = vadd.f32 %v2008, %v2077
        %v2142 = vadd.f32 %v2009, %v2078
        %v2143 = vadd.f32 %v2010, %v2079
        %v2144 = vadd.f32 %v2011, %v2080
        %v2145 = vadd.f32 %v2012, %v2081
        %v2146 = vadd.f32 %v2013, %v2082
        %v2147 = vadd.f32 %v2014, %v2083
        %v2148 = vadd.f32 %v2015, %v2084
        %v2149 = vadd.f32 %v2016, %v2085
        %v2150 = vadd.f32 %v2017, %v2086
        %v2151 = vadd.f32 %v2018, %v2087
        %v2152 = vadd.f32 %v2019, %v2088
        %v2153 = vadd.f32 %v2020, %v2089
        %v2154 = vadd.f32 %v2021, %v2090
        %v2155 = vadd.f32 %v2022, %v2091
        %v2156 = vadd.f32 %v2023, %v2092
        %v2157 = vadd.f32 %v2024, %v2093
        %v2158 = vadd.f32 %v2025, %v2094
        %v2159 = vadd.f32 %v2026, %v2095
        %v2160 = vadd.f32 %v2027, %v2096
        %v2161 = vadd.f32 %v2028, %v2097
        %v2162 = vadd.f32 %v2029, %v2098
        %v2163 = vadd.f32 %v2030, %v2099
        %v2164 = vadd.f32 %v2031, %v2100
        %v2165 = vadd.f32 %v2032, %v2101
        %v2166 = vadd.f32 %v2033, %v2102
        %v2167 = vadd.f32 %v2034, %v2103
        %v2168 = vadd.f32 %v2035, %v2104
        %v2169 = vadd.f32 %v2036, %v2105
        %v2170 = vadd.f32 %v2037, %v2106
        %v2171 = vadd.f32 %v2038, %v2107
        %v2172 = vadd.f32 %v2039, %v2108
        %v2173 = vadd.f32 %v2040, %v2109
        %v2174 = vadd.f32 %v2041, %v2110
        %v2175 = vadd.f32 %v2042, %v2111
        %v2176 = vadd.f32 %v2043, %v2112
        %v2177 = vadd.f32 %v2044, %v2113
        %v2178 = vadd.f32 %v2045, %v2114
        %v2179 = vadd.f32 %v2046, %v2115
        %v2180 = vadd.f32 %v2047, %v2116
        %v2181 = vadd.f32 %v2048, %v2117
        %v2182 = vadd.f32 %v2049, %v2118
        %v2183 = vadd.f32 %v2050, %v2119
        %v2184 = vadd.f32 %v2051, %v2120
        %v2185 = vadd.f32 %v2052, %v2121
        %v2186 = vadd.f32 %v2053, %v2122
        %v2187 = vadd.f32 %v2054, %v2123
        %v2188 = vadd.f32 %v2055, %v2124
        %v2189 = vadd.f32 %v2056, %v2125
        %v2190 = vadd.f32 %v2057, %v2126
        %v2191 = vadd.f32 %v2058, %v2127
        %v2192 = vadd.f32 %v2059, %v2128
        %v2193 = vadd.f32 %v2060, %v2129
        %v2194 = vadd.f32 %v2061, %v2130
        %v2195 = vadd.f32 %v2062, %v2131
        %v2196 = vadd.f32 %v2063, %v2132
        %v2197 = vadd.f32 %v2064, %v2133
        %v2198 = vadd.f32 %v2065, %v2134
        %v2199 = vadd.f32 %v2066, %v2135
        %v2200 = vadd.f32 %v2067, %v2136
        %v2201 = vadd.f32 %v2068, %v2137
        %v2202 = vld [vmem:[%s1 + $0x1d] sm:$0x1]
        %v2203 = vlaneseq
        %v2204 = vshrl.u32 %v2203, 7
        %v2205 = vsub.s32 0, %v2204
        %v2206 = vrot.slane %v2202, %v2205
        %v2207 = vmul.f32 %v1590, %v2206
        %v2208 = vmul.f32 %v1591, %v2206
        %v2209 = vmul.f32 %v1592, %v2206
        %v2210 = vmul.f32 %v1593, %v2206
        %v2211 = vmul.f32 %v1594, %v2206
        %v2212 = vmul.f32 %v1595, %v2206
        %v2213 = vmul.f32 %v1596, %v2206
        %v2214 = vmul.f32 %v1597, %v2206
        %v2215 = vmul.f32 %v1598, %v2206
        %v2216 = vmul.f32 %v1599, %v2206
        %v2217 = vmul.f32 %v1600, %v2206
        %v2218 = vmul.f32 %v1601, %v2206
        %v2219 = vmul.f32 %v1602, %v2206
        %v2220 = vmul.f32 %v1603, %v2206
        %v2221 = vmul.f32 %v1604, %v2206
        %v2222 = vmul.f32 %v1605, %v2206
        %v2223 = vmul.f32 %v1606, %v2206
        %v2224 = vmul.f32 %v1607, %v2206
        %v2225 = vmul.f32 %v1608, %v2206
        %v2226 = vmul.f32 %v1609, %v2206
        %v2227 = vmul.f32 %v1610, %v2206
        %v2228 = vmul.f32 %v1611, %v2206
        %v2229 = vmul.f32 %v1612, %v2206
        %v2230 = vmul.f32 %v1613, %v2206
        %v2231 = vmul.f32 %v1614, %v2206
        %v2232 = vmul.f32 %v1615, %v2206
        %v2233 = vmul.f32 %v1616, %v2206
        %v2234 = vmul.f32 %v1617, %v2206
        %v2235 = vmul.f32 %v1618, %v2206
        %v2236 = vmul.f32 %v1619, %v2206
        %v2237 = vmul.f32 %v1620, %v2206
        %v2238 = vmul.f32 %v1621, %v2206
        %v2239 = vmul.f32 %v1634, %v2206
        %v2240 = vmul.f32 %v1635, %v2206
        %v2241 = vmul.f32 %v1636, %v2206
        %v2242 = vmul.f32 %v1637, %v2206
        %v2243 = vmul.f32 %v1638, %v2206
        %v2244 = vmul.f32 %v1639, %v2206
        %v2245 = vmul.f32 %v1640, %v2206
        %v2246 = vmul.f32 %v1641, %v2206
        %v2247 = vmul.f32 %v1642, %v2206
        %v2248 = vmul.f32 %v1643, %v2206
        %v2249 = vmul.f32 %v1644, %v2206
        %v2250 = vmul.f32 %v1645, %v2206
        %v2251 = vmul.f32 %v1646, %v2206
        %v2252 = vmul.f32 %v1647, %v2206
        %v2253 = vmul.f32 %v1648, %v2206
        %v2254 = vmul.f32 %v1649, %v2206
        %v2255 = vmul.f32 %v1650, %v2206
        %v2256 = vmul.f32 %v1651, %v2206
        %v2257 = vmul.f32 %v1652, %v2206
        %v2258 = vmul.f32 %v1653, %v2206
        %v2259 = vmul.f32 %v1654, %v2206
        %v2260 = vmul.f32 %v1655, %v2206
        %v2261 = vmul.f32 %v1656, %v2206
        %v2262 = vmul.f32 %v1657, %v2206
        %v2263 = vmul.f32 %v1658, %v2206
        %v2264 = vmul.f32 %v1659, %v2206
        %v2265 = vmul.f32 %v1660, %v2206
        %v2266 = vmul.f32 %v1661, %v2206
        %v2267 = vmul.f32 %v1662, %v2206
        %v2268 = vmul.f32 %v1663, %v2206
        %v2269 = vmul.f32 %v1664, %v2206
        %v2270 = vmul.f32 %v1665, %v2206
        %v2271 = vadd.f32 %v2138, %v2207
        %v2272 = vadd.f32 %v2139, %v2208
        %v2273 = vadd.f32 %v2140, %v2209
        %v2274 = vadd.f32 %v2141, %v2210
        %v2275 = vadd.f32 %v2142, %v2211
        %v2276 = vadd.f32 %v2143, %v2212
        %v2277 = vadd.f32 %v2144, %v2213
        %v2278 = vadd.f32 %v2145, %v2214
        %v2279 = vadd.f32 %v2146, %v2215
        %v2280 = vadd.f32 %v2147, %v2216
        %v2281 = vadd.f32 %v2148, %v2217
        %v2282 = vadd.f32 %v2149, %v2218
        %v2283 = vadd.f32 %v2150, %v2219
        %v2284 = vadd.f32 %v2151, %v2220
        %v2285 = vadd.f32 %v2152, %v2221
        %v2286 = vadd.f32 %v2153, %v2222
        %v2287 = vadd.f32 %v2154, %v2223
        %v2288 = vadd.f32 %v2155, %v2224
        %v2289 = vadd.f32 %v2156, %v2225
        %v2290 = vadd.f32 %v2157, %v2226
        %v2291 = vadd.f32 %v2158, %v2227
        %v2292 = vadd.f32 %v2159, %v2228
        %v2293 = vadd.f32 %v2160, %v2229
        %v2294 = vadd.f32 %v2161, %v2230
        %v2295 = vadd.f32 %v2162, %v2231
        %v2296 = vadd.f32 %v2163, %v2232
        %v2297 = vadd.f32 %v2164, %v2233
        %v2298 = vadd.f32 %v2165, %v2234
        %v2299 = vadd.f32 %v2166, %v2235
        %v2300 = vadd.f32 %v2167, %v2236
        %v2301 = vadd.f32 %v2168, %v2237
        %v2302 = vadd.f32 %v2169, %v2238
        %v2303 = vadd.f32 %v2170, %v2239
        %v2304 = vadd.f32 %v2171, %v2240
        %v2305 = vadd.f32 %v2172, %v2241
        %v2306 = vadd.f32 %v2173, %v2242
        %v2307 = vadd.f32 %v2174, %v2243
        %v2308 = vadd.f32 %v2175, %v2244
        %v2309 = vadd.f32 %v2176, %v2245
        %v2310 = vadd.f32 %v2177, %v2246
        %v2311 = vadd.f32 %v2178, %v2247
        %v2312 = vadd.f32 %v2179, %v2248
        %v2313 = vadd.f32 %v2180, %v2249
        %v2314 = vadd.f32 %v2181, %v2250
        %v2315 = vadd.f32 %v2182, %v2251
        %v2316 = vadd.f32 %v2183, %v2252
        %v2317 = vadd.f32 %v2184, %v2253
        %v2318 = vadd.f32 %v2185, %v2254
        %v2319 = vadd.f32 %v2186, %v2255
        %v2320 = vadd.f32 %v2187, %v2256
        %v2321 = vadd.f32 %v2188, %v2257
        %v2322 = vadd.f32 %v2189, %v2258
        %v2323 = vadd.f32 %v2190, %v2259
        %v2324 = vadd.f32 %v2191, %v2260
        %v2325 = vadd.f32 %v2192, %v2261
        %v2326 = vadd.f32 %v2193, %v2262
        %v2327 = vadd.f32 %v2194, %v2263
        %v2328 = vadd.f32 %v2195, %v2264
        %v2329 = vadd.f32 %v2196, %v2265
        %v2330 = vadd.f32 %v2197, %v2266
        %v2331 = vadd.f32 %v2198, %v2267
        %v2332 = vadd.f32 %v2199, %v2268
        %v2333 = vadd.f32 %v2200, %v2269
        %v2334 = vadd.f32 %v2201, %v2270
        %v2335 = vld [vmem:[%s1 + $0x24] sm:$0x1]
        %v2336 = vlaneseq
        %v2337 = vshrl.u32 %v2336, 7
        %v2338 = vsub.s32 0, %v2337
        %v2339 = vrot.slane %v2335, %v2338
        %v2340 = vmul.f32 %v1592, %v2339
        %v2341 = vmul.f32 %v1593, %v2339
        %v2342 = vmul.f32 %v1594, %v2339
        %v2343 = vmul.f32 %v1595, %v2339
        %v2344 = vmul.f32 %v1596, %v2339
        %v2345 = vmul.f32 %v1597, %v2339
        %v2346 = vmul.f32 %v1598, %v2339
        %v2347 = vmul.f32 %v1599, %v2339
        %v2348 = vmul.f32 %v1600, %v2339
        %v2349 = vmul.f32 %v1601, %v2339
        %v2350 = vmul.f32 %v1602, %v2339
        %v2351 = vmul.f32 %v1603, %v2339
        %v2352 = vmul.f32 %v1604, %v2339
        %v2353 = vmul.f32 %v1605, %v2339
        %v2354 = vmul.f32 %v1606, %v2339
        %v2355 = vmul.f32 %v1607, %v2339
        %v2356 = vmul.f32 %v1608, %v2339
        %v2357 = vmul.f32 %v1609, %v2339
        %v2358 = vmul.f32 %v1610, %v2339
        %v2359 = vmul.f32 %v1611, %v2339
        %v2360 = vmul.f32 %v1612, %v2339
        %v2361 = vmul.f32 %v1613, %v2339
        %v2362 = vmul.f32 %v1614, %v2339
        %v2363 = vmul.f32 %v1615, %v2339
        %v2364 = vmul.f32 %v1616, %v2339
        %v2365 = vmul.f32 %v1617, %v2339
        %v2366 = vmul.f32 %v1618, %v2339
        %v2367 = vmul.f32 %v1619, %v2339
        %v2368 = vmul.f32 %v1620, %v2339
        %v2369 = vmul.f32 %v1621, %v2339
        %v2370 = vmul.f32 %v1622, %v2339
        %v2371 = vmul.f32 %v1623, %v2339
        %v2372 = vmul.f32 %v1636, %v2339
        %v2373 = vmul.f32 %v1637, %v2339
        %v2374 = vmul.f32 %v1638, %v2339
        %v2375 = vmul.f32 %v1639, %v2339
        %v2376 = vmul.f32 %v1640, %v2339
        %v2377 = vmul.f32 %v1641, %v2339
        %v2378 = vmul.f32 %v1642, %v2339
        %v2379 = vmul.f32 %v1643, %v2339
        %v2380 = vmul.f32 %v1644, %v2339
        %v2381 = vmul.f32 %v1645, %v2339
        %v2382 = vmul.f32 %v1646, %v2339
        %v2383 = vmul.f32 %v1647, %v2339
        %v2384 = vmul.f32 %v1648, %v2339
        %v2385 = vmul.f32 %v1649, %v2339
        %v2386 = vmul.f32 %v1650, %v2339
        %v2387 = vmul.f32 %v1651, %v2339
        %v2388 = vmul.f32 %v1652, %v2339
        %v2389 = vmul.f32 %v1653, %v2339
        %v2390 = vmul.f32 %v1654, %v2339
        %v2391 = vmul.f32 %v1655, %v2339
        %v2392 = vmul.f32 %v1656, %v2339
        %v2393 = vmul.f32 %v1657, %v2339
        %v2394 = vmul.f32 %v1658, %v2339
        %v2395 = vmul.f32 %v1659, %v2339
        %v2396 = vmul.f32 %v1660, %v2339
        %v2397 = vmul.f32 %v1661, %v2339
        %v2398 = vmul.f32 %v1662, %v2339
        %v2399 = vmul.f32 %v1663, %v2339
        %v2400 = vmul.f32 %v1664, %v2339
        %v2401 = vmul.f32 %v1665, %v2339
        %v2402 = vmul.f32 %v1666, %v2339
        %v2403 = vmul.f32 %v1667, %v2339
        %v2404 = vadd.f32 %v2271, %v2340
        %v2405 = vadd.f32 %v2272, %v2341
        %v2406 = vadd.f32 %v2273, %v2342
        %v2407 = vadd.f32 %v2274, %v2343
        %v2408 = vadd.f32 %v2275, %v2344
        %v2409 = vadd.f32 %v2276, %v2345
        %v2410 = vadd.f32 %v2277, %v2346
        %v2411 = vadd.f32 %v2278, %v2347
        %v2412 = vadd.f32 %v2279, %v2348
        %v2413 = vadd.f32 %v2280, %v2349
        %v2414 = vadd.f32 %v2281, %v2350
        %v2415 = vadd.f32 %v2282, %v2351
        %v2416 = vadd.f32 %v2283, %v2352
        %v2417 = vadd.f32 %v2284, %v2353
        %v2418 = vadd.f32 %v2285, %v2354
        %v2419 = vadd.f32 %v2286, %v2355
        %v2420 = vadd.f32 %v2287, %v2356
        %v2421 = vadd.f32 %v2288, %v2357
        %v2422 = vadd.f32 %v2289, %v2358
        %v2423 = vadd.f32 %v2290, %v2359
        %v2424 = vadd.f32 %v2291, %v2360
        %v2425 = vadd.f32 %v2292, %v2361
        %v2426 = vadd.f32 %v2293, %v2362
        %v2427 = vadd.f32 %v2294, %v2363
        %v2428 = vadd.f32 %v2295, %v2364
        %v2429 = vadd.f32 %v2296, %v2365
        %v2430 = vadd.f32 %v2297, %v2366
        %v2431 = vadd.f32 %v2298, %v2367
        %v2432 = vadd.f32 %v2299, %v2368
        %v2433 = vadd.f32 %v2300, %v2369
        %v2434 = vadd.f32 %v2301, %v2370
        %v2435 = vadd.f32 %v2302, %v2371
        %v2436 = vadd.f32 %v2303, %v2372
        %v2437 = vadd.f32 %v2304, %v2373
        %v2438 = vadd.f32 %v2305, %v2374
        %v2439 = vadd.f32 %v2306, %v2375
        %v2440 = vadd.f32 %v2307, %v2376
        %v2441 = vadd.f32 %v2308, %v2377
        %v2442 = vadd.f32 %v2309, %v2378
        %v2443 = vadd.f32 %v2310, %v2379
        %v2444 = vadd.f32 %v2311, %v2380
        %v2445 = vadd.f32 %v2312, %v2381
        %v2446 = vadd.f32 %v2313, %v2382
        %v2447 = vadd.f32 %v2314, %v2383
        %v2448 = vadd.f32 %v2315, %v2384
        %v2449 = vadd.f32 %v2316, %v2385
        %v2450 = vadd.f32 %v2317, %v2386
        %v2451 = vadd.f32 %v2318, %v2387
        %v2452 = vadd.f32 %v2319, %v2388
        %v2453 = vadd.f32 %v2320, %v2389
        %v2454 = vadd.f32 %v2321, %v2390
        %v2455 = vadd.f32 %v2322, %v2391
        %v2456 = vadd.f32 %v2323, %v2392
        %v2457 = vadd.f32 %v2324, %v2393
        %v2458 = vadd.f32 %v2325, %v2394
        %v2459 = vadd.f32 %v2326, %v2395
        %v2460 = vadd.f32 %v2327, %v2396
        %v2461 = vadd.f32 %v2328, %v2397
        %v2462 = vadd.f32 %v2329, %v2398
        %v2463 = vadd.f32 %v2330, %v2399
        %v2464 = vadd.f32 %v2331, %v2400
        %v2465 = vadd.f32 %v2332, %v2401
        %v2466 = vadd.f32 %v2333, %v2402
        %v2467 = vadd.f32 %v2334, %v2403
        %v2468 = vld [vmem:[%s1 + $0x2b] sm:$0x1]
        %v2469 = vlaneseq
        %v2470 = vshrl.u32 %v2469, 7
        %v2471 = vsub.s32 0, %v2470
        %v2472 = vrot.slane %v2468, %v2471
        %v2473 = vmul.f32 %v1594, %v2472
        %v2474 = vmul.f32 %v1595, %v2472
        %v2475 = vmul.f32 %v1596, %v2472
        %v2476 = vmul.f32 %v1597, %v2472
        %v2477 = vmul.f32 %v1598, %v2472
        %v2478 = vmul.f32 %v1599, %v2472
        %v2479 = vmul.f32 %v1600, %v2472
        %v2480 = vmul.f32 %v1601, %v2472
        %v2481 = vmul.f32 %v1602, %v2472
        %v2482 = vmul.f32 %v1603, %v2472
        %v2483 = vmul.f32 %v1604, %v2472
        %v2484 = vmul.f32 %v1605, %v2472
        %v2485 = vmul.f32 %v1606, %v2472
        %v2486 = vmul.f32 %v1607, %v2472
        %v2487 = vmul.f32 %v1608, %v2472
        %v2488 = vmul.f32 %v1609, %v2472
        %v2489 = vmul.f32 %v1610, %v2472
        %v2490 = vmul.f32 %v1611, %v2472
        %v2491 = vmul.f32 %v1612, %v2472
        %v2492 = vmul.f32 %v1613, %v2472
        %v2493 = vmul.f32 %v1614, %v2472
        %v2494 = vmul.f32 %v1615, %v2472
        %v2495 = vmul.f32 %v1616, %v2472
        %v2496 = vmul.f32 %v1617, %v2472
        %v2497 = vmul.f32 %v1618, %v2472
        %v2498 = vmul.f32 %v1619, %v2472
        %v2499 = vmul.f32 %v1620, %v2472
        %v2500 = vmul.f32 %v1621, %v2472
        %v2501 = vmul.f32 %v1622, %v2472
        %v2502 = vmul.f32 %v1623, %v2472
        %v2503 = vmul.f32 %v1624, %v2472
        %v2504 = vmul.f32 %v1625, %v2472
        %v2505 = vmul.f32 %v1638, %v2472
        %v2506 = vmul.f32 %v1639, %v2472
        %v2507 = vmul.f32 %v1640, %v2472
        %v2508 = vmul.f32 %v1641, %v2472
        %v2509 = vmul.f32 %v1642, %v2472
        %v2510 = vmul.f32 %v1643, %v2472
        %v2511 = vmul.f32 %v1644, %v2472
        %v2512 = vmul.f32 %v1645, %v2472
        %v2513 = vmul.f32 %v1646, %v2472
        %v2514 = vmul.f32 %v1647, %v2472
        %v2515 = vmul.f32 %v1648, %v2472
        %v2516 = vmul.f32 %v1649, %v2472
        %v2517 = vmul.f32 %v1650, %v2472
        %v2518 = vmul.f32 %v1651, %v2472
        %v2519 = vmul.f32 %v1652, %v2472
        %v2520 = vmul.f32 %v1653, %v2472
        %v2521 = vmul.f32 %v1654, %v2472
        %v2522 = vmul.f32 %v1655, %v2472
        %v2523 = vmul.f32 %v1656, %v2472
        %v2524 = vmul.f32 %v1657, %v2472
        %v2525 = vmul.f32 %v1658, %v2472
        %v2526 = vmul.f32 %v1659, %v2472
        %v2527 = vmul.f32 %v1660, %v2472
        %v2528 = vmul.f32 %v1661, %v2472
        %v2529 = vmul.f32 %v1662, %v2472
        %v2530 = vmul.f32 %v1663, %v2472
        %v2531 = vmul.f32 %v1664, %v2472
        %v2532 = vmul.f32 %v1665, %v2472
        %v2533 = vmul.f32 %v1666, %v2472
        %v2534 = vmul.f32 %v1667, %v2472
        %v2535 = vmul.f32 %v1668, %v2472
        %v2536 = vmul.f32 %v1669, %v2472
        %v2537 = vadd.f32 %v2404, %v2473
        %v2538 = vadd.f32 %v2405, %v2474
        %v2539 = vadd.f32 %v2406, %v2475
        %v2540 = vadd.f32 %v2407, %v2476
        %v2541 = vadd.f32 %v2408, %v2477
        %v2542 = vadd.f32 %v2409, %v2478
        %v2543 = vadd.f32 %v2410, %v2479
        %v2544 = vadd.f32 %v2411, %v2480
        %v2545 = vadd.f32 %v2412, %v2481
        %v2546 = vadd.f32 %v2413, %v2482
        %v2547 = vadd.f32 %v2414, %v2483
        %v2548 = vadd.f32 %v2415, %v2484
        %v2549 = vadd.f32 %v2416, %v2485
        %v2550 = vadd.f32 %v2417, %v2486
        %v2551 = vadd.f32 %v2418, %v2487
        %v2552 = vadd.f32 %v2419, %v2488
        %v2553 = vadd.f32 %v2420, %v2489
        %v2554 = vadd.f32 %v2421, %v2490
        %v2555 = vadd.f32 %v2422, %v2491
        %v2556 = vadd.f32 %v2423, %v2492
        %v2557 = vadd.f32 %v2424, %v2493
        %v2558 = vadd.f32 %v2425, %v2494
        %v2559 = vadd.f32 %v2426, %v2495
        %v2560 = vadd.f32 %v2427, %v2496
        %v2561 = vadd.f32 %v2428, %v2497
        %v2562 = vadd.f32 %v2429, %v2498
        %v2563 = vadd.f32 %v2430, %v2499
        %v2564 = vadd.f32 %v2431, %v2500
        %v2565 = vadd.f32 %v2432, %v2501
        %v2566 = vadd.f32 %v2433, %v2502
        %v2567 = vadd.f32 %v2434, %v2503
        %v2568 = vadd.f32 %v2435, %v2504
        %v2569 = vadd.f32 %v2436, %v2505
        %v2570 = vadd.f32 %v2437, %v2506
        %v2571 = vadd.f32 %v2438, %v2507
        %v2572 = vadd.f32 %v2439, %v2508
        %v2573 = vadd.f32 %v2440, %v2509
        %v2574 = vadd.f32 %v2441, %v2510
        %v2575 = vadd.f32 %v2442, %v2511
        %v2576 = vadd.f32 %v2443, %v2512
        %v2577 = vadd.f32 %v2444, %v2513
        %v2578 = vadd.f32 %v2445, %v2514
        %v2579 = vadd.f32 %v2446, %v2515
        %v2580 = vadd.f32 %v2447, %v2516
        %v2581 = vadd.f32 %v2448, %v2517
        %v2582 = vadd.f32 %v2449, %v2518
        %v2583 = vadd.f32 %v2450, %v2519
        %v2584 = vadd.f32 %v2451, %v2520
        %v2585 = vadd.f32 %v2452, %v2521
        %v2586 = vadd.f32 %v2453, %v2522
        %v2587 = vadd.f32 %v2454, %v2523
        %v2588 = vadd.f32 %v2455, %v2524
        %v2589 = vadd.f32 %v2456, %v2525
        %v2590 = vadd.f32 %v2457, %v2526
        %v2591 = vadd.f32 %v2458, %v2527
        %v2592 = vadd.f32 %v2459, %v2528
        %v2593 = vadd.f32 %v2460, %v2529
        %v2594 = vadd.f32 %v2461, %v2530
        %v2595 = vadd.f32 %v2462, %v2531
        %v2596 = vadd.f32 %v2463, %v2532
        %v2597 = vadd.f32 %v2464, %v2533
        %v2598 = vadd.f32 %v2465, %v2534
        %v2599 = vadd.f32 %v2466, %v2535
        %v2600 = vadd.f32 %v2467, %v2536
        %v2601 = vld [vmem:[#allocation2 + $0x2] sm:$0xff]
        %v2602 = vld [vmem:[#allocation2 + $0xa] sm:$0xff]
        %v2603 = vld [vmem:[#allocation2 + $0x1a] sm:$0xff]
        %v2604 = vld [vmem:[#allocation2 + $0x22] sm:$0xff]
        %v2605 = vld [vmem:[#allocation2 + $0x32] sm:$0xff]
        %v2606 = vld [vmem:[#allocation2 + $0x3a] sm:$0xff]
        %v2607 = vld [vmem:[#allocation2 + $0x4a] sm:$0xff]
        %v2608 = vld [vmem:[#allocation2 + $0x52] sm:$0xff]
        %v2609 = vld [vmem:[#allocation2 + $0x62] sm:$0xff]
        %v2610 = vld [vmem:[#allocation2 + $0x6a] sm:$0xff]
        %v2611 = vld [vmem:[#allocation2 + $0x7a] sm:$0xff]
        %v2612 = vld [vmem:[#allocation2 + $0x82] sm:$0xff]
        %v2613 = vld [vmem:[#allocation2 + $0x92] sm:$0xff]
        %v2614 = vld [vmem:[#allocation2 + $0x9a] sm:$0xff]
        %v2615 = vld [vmem:[#allocation2 + $0xaa] sm:$0xff]
        %v2616 = vld [vmem:[#allocation2 + $0xb2] sm:$0xff]
        %v2617 = vld [vmem:[#allocation2 + $0xc2] sm:$0xff]
        %v2618 = vld [vmem:[#allocation2 + $0xca] sm:$0xff]
        %v2619 = vld [vmem:[#allocation2 + $0xda] sm:$0xff]
        %v2620 = vld [vmem:[#allocation2 + $0xe2] sm:$0xff]
        %v2621 = vld [vmem:[#allocation2 + $0xf2] sm:$0xff]
        %v2622 = vld [vmem:[#allocation2 + $0xfa] sm:$0xff]
        %v2623 = vld [vmem:[#allocation2 + $0x10a] sm:$0xff]
        %v2624 = vld [vmem:[#allocation2 + $0x112] sm:$0xff]
        %v2625 = vld [vmem:[#allocation2 + $0x122] sm:$0xff]
        %v2626 = vld [vmem:[#allocation2 + $0x12a] sm:$0xff]
        %v2627 = vld [vmem:[#allocation2 + $0x13a] sm:$0xff]
        %v2628 = vld [vmem:[#allocation2 + $0x142] sm:$0xff]
        %v2629 = vld [vmem:[#allocation2 + $0x152] sm:$0xff]
        %v2630 = vld [vmem:[#allocation2 + $0x15a] sm:$0xff]
        %v2631 = vld [vmem:[#allocation2 + $0x16a] sm:$0xff]
        %v2632 = vld [vmem:[#allocation2 + $0x172] sm:$0xff]
        %v2633 = vld [vmem:[#allocation2 + $0x182] sm:$0xff]
        %v2634 = vld [vmem:[#allocation2 + $0x18a] sm:$0xff]
        %v2635 = vld [vmem:[#allocation2 + $0x19a] sm:$0xff]
        %v2636 = vld [vmem:[#allocation2 + $0x1a2] sm:$0xff]
        %v2637 = vld [vmem:[#allocation2 + $0x1b2] sm:$0xff]
        %v2638 = vld [vmem:[#allocation2 + $0x1ba] sm:$0xff]
        %v2639 = vld [vmem:[#allocation2 + $0x1ca] sm:$0xff]
        %v2640 = vld [vmem:[#allocation2 + $0x1d2] sm:$0xff]
        %v2641 = vld [vmem:[#allocation2 + $0x1e2] sm:$0xff]
        %v2642 = vld [vmem:[#allocation2 + $0x1ea] sm:$0xff]
        %v2643 = vld [vmem:[#allocation2 + $0x1fa] sm:$0xff]
        %v2644 = vld [vmem:[#allocation2 + $0x202] sm:$0xff]
        %v2645 = vld [vmem:[#allocation2 + $0x212] sm:$0xff]
        %v2646 = vld [vmem:[#allocation2 + $0x21a] sm:$0xff]
        %v2647 = vld [vmem:[#allocation2 + $0x22a] sm:$0xff]
        %v2648 = vld [vmem:[#allocation2 + $0x232] sm:$0xff]
        %v2649 = vld [vmem:[#allocation2 + $0x242] sm:$0xff]
        %v2650 = vld [vmem:[#allocation2 + $0x24a] sm:$0xff]
        %v2651 = vld [vmem:[#allocation2 + $0x25a] sm:$0xff]
        %v2652 = vld [vmem:[#allocation2 + $0x262] sm:$0xff]
        %v2653 = vld [vmem:[#allocation2 + $0x272] sm:$0xff]
        %v2654 = vld [vmem:[#allocation2 + $0x27a] sm:$0xff]
        %v2655 = vld [vmem:[#allocation2 + $0x28a] sm:$0xff]
        %v2656 = vld [vmem:[#allocation2 + $0x292] sm:$0xff]
        %v2657 = vld [vmem:[#allocation2 + $0x2a2] sm:$0xff]
        %v2658 = vld [vmem:[#allocation2 + $0x2aa] sm:$0xff]
        %v2659 = vld [vmem:[#allocation2 + $0x2ba] sm:$0xff]
        %v2660 = vld [vmem:[#allocation2 + $0x2c2] sm:$0xff]
        %v2661 = vld [vmem:[#allocation2 + $0x2d2] sm:$0xff]
        %v2662 = vld [vmem:[#allocation2 + $0x2da] sm:$0xff]
        %v2663 = vld [vmem:[#allocation2 + $0x2ea] sm:$0xff]
        %v2664 = vld [vmem:[#allocation2 + $0x2f2] sm:$0xff]
        %v2665 = vld [vmem:[#allocation2 + $0x302] sm:$0xff]
        %v2666 = vld [vmem:[#allocation2 + $0x30a] sm:$0xff]
        %v2667 = vld [vmem:[#allocation2 + $0x31a] sm:$0xff]
        %v2668 = vld [vmem:[#allocation2 + $0x322] sm:$0xff]
        %v2669 = vld [vmem:[#allocation2 + $0x332] sm:$0xff]
        %v2670 = vld [vmem:[#allocation2 + $0x33a] sm:$0xff]
        %v2671 = vld [vmem:[#allocation2 + $0x34a] sm:$0xff]
        %v2672 = vld [vmem:[#allocation2 + $0x352] sm:$0xff]
        %v2673 = vld [vmem:[#allocation2 + $0x362] sm:$0xff]
        %v2674 = vld [vmem:[#allocation2 + $0x36a] sm:$0xff]
        %v2675 = vld [vmem:[#allocation2 + $0x37a] sm:$0xff]
        %v2676 = vld [vmem:[#allocation2 + $0x382] sm:$0xff]
        %v2677 = vld [vmem:[#allocation2 + $0x392] sm:$0xff]
        %v2678 = vld [vmem:[#allocation2 + $0x39a] sm:$0xff]
        %v2679 = vld [vmem:[#allocation2 + $0x3aa] sm:$0xff]
        %v2680 = vld [vmem:[#allocation2 + $0x3b2] sm:$0xff]
        %v2681 = vld [vmem:[#allocation2 + $0x3c2] sm:$0xff]
        %v2682 = vld [vmem:[#allocation2 + $0x3ca] sm:$0xff]
        %v2683 = vld [vmem:[#allocation2 + $0x3da] sm:$0xff]
        %v2684 = vld [vmem:[#allocation2 + $0x3e2] sm:$0xff]
        %v2685 = vld [vmem:[#allocation2 + $0x3f2] sm:$0xff]
        %v2686 = vld [vmem:[#allocation2 + $0x3fa] sm:$0xff]
        %v2687 = vld [vmem:[#allocation2 + $0x40a] sm:$0xff]
        %v2688 = vld [vmem:[#allocation2 + $0x412] sm:$0xff]
        %v2689 = vld [vmem:[%s1 + $0x2] sm:$0x1]
        %v2690 = vlaneseq
        %v2691 = vshrl.u32 %v2690, 7
        %v2692 = vsub.s32 0, %v2691
        %v2693 = vrot.slane %v2689, %v2692
        %v2694 = vmul.f32 %v2601, %v2693
        %v2695 = vmul.f32 %v2602, %v2693
        %v2696 = vmul.f32 %v2603, %v2693
        %v2697 = vmul.f32 %v2604, %v2693
        %v2698 = vmul.f32 %v2605, %v2693
        %v2699 = vmul.f32 %v2606, %v2693
        %v2700 = vmul.f32 %v2607, %v2693
        %v2701 = vmul.f32 %v2608, %v2693
        %v2702 = vmul.f32 %v2609, %v2693
        %v2703 = vmul.f32 %v2610, %v2693
        %v2704 = vmul.f32 %v2611, %v2693
        %v2705 = vmul.f32 %v2612, %v2693
        %v2706 = vmul.f32 %v2613, %v2693
        %v2707 = vmul.f32 %v2614, %v2693
        %v2708 = vmul.f32 %v2615, %v2693
        %v2709 = vmul.f32 %v2616, %v2693
        %v2710 = vmul.f32 %v2617, %v2693
        %v2711 = vmul.f32 %v2618, %v2693
        %v2712 = vmul.f32 %v2619, %v2693
        %v2713 = vmul.f32 %v2620, %v2693
        %v2714 = vmul.f32 %v2621, %v2693
        %v2715 = vmul.f32 %v2622, %v2693
        %v2716 = vmul.f32 %v2623, %v2693
        %v2717 = vmul.f32 %v2624, %v2693
        %v2718 = vmul.f32 %v2625, %v2693
        %v2719 = vmul.f32 %v2626, %v2693
        %v2720 = vmul.f32 %v2627, %v2693
        %v2721 = vmul.f32 %v2628, %v2693
        %v2722 = vmul.f32 %v2629, %v2693
        %v2723 = vmul.f32 %v2630, %v2693
        %v2724 = vmul.f32 %v2631, %v2693
        %v2725 = vmul.f32 %v2632, %v2693
        %v2726 = vmul.f32 %v2645, %v2693
        %v2727 = vmul.f32 %v2646, %v2693
        %v2728 = vmul.f32 %v2647, %v2693
        %v2729 = vmul.f32 %v2648, %v2693
        %v2730 = vmul.f32 %v2649, %v2693
        %v2731 = vmul.f32 %v2650, %v2693
        %v2732 = vmul.f32 %v2651, %v2693
        %v2733 = vmul.f32 %v2652, %v2693
        %v2734 = vmul.f32 %v2653, %v2693
        %v2735 = vmul.f32 %v2654, %v2693
        %v2736 = vmul.f32 %v2655, %v2693
        %v2737 = vmul.f32 %v2656, %v2693
        %v2738 = vmul.f32 %v2657, %v2693
        %v2739 = vmul.f32 %v2658, %v2693
        %v2740 = vmul.f32 %v2659, %v2693
        %v2741 = vmul.f32 %v2660, %v2693
        %v2742 = vmul.f32 %v2661, %v2693
        %v2743 = vmul.f32 %v2662, %v2693
        %v2744 = vmul.f32 %v2663, %v2693
        %v2745 = vmul.f32 %v2664, %v2693
        %v2746 = vmul.f32 %v2665, %v2693
        %v2747 = vmul.f32 %v2666, %v2693
        %v2748 = vmul.f32 %v2667, %v2693
        %v2749 = vmul.f32 %v2668, %v2693
        %v2750 = vmul.f32 %v2669, %v2693
        %v2751 = vmul.f32 %v2670, %v2693
        %v2752 = vmul.f32 %v2671, %v2693
        %v2753 = vmul.f32 %v2672, %v2693
        %v2754 = vmul.f32 %v2673, %v2693
        %v2755 = vmul.f32 %v2674, %v2693
        %v2756 = vmul.f32 %v2675, %v2693
        %v2757 = vmul.f32 %v2676, %v2693
        %v2758 = vadd.f32 %v2537, %v2694
        %v2759 = vadd.f32 %v2538, %v2695
        %v2760 = vadd.f32 %v2539, %v2696
        %v2761 = vadd.f32 %v2540, %v2697
        %v2762 = vadd.f32 %v2541, %v2698
        %v2763 = vadd.f32 %v2542, %v2699
        %v2764 = vadd.f32 %v2543, %v2700
        %v2765 = vadd.f32 %v2544, %v2701
        %v2766 = vadd.f32 %v2545, %v2702
        %v2767 = vadd.f32 %v2546, %v2703
        %v2768 = vadd.f32 %v2547, %v2704
        %v2769 = vadd.f32 %v2548, %v2705
        %v2770 = vadd.f32 %v2549, %v2706
        %v2771 = vadd.f32 %v2550, %v2707
        %v2772 = vadd.f32 %v2551, %v2708
        %v2773 = vadd.f32 %v2552, %v2709
        %v2774 = vadd.f32 %v2553, %v2710
        %v2775 = vadd.f32 %v2554, %v2711
        %v2776 = vadd.f32 %v2555, %v2712
        %v2777 = vadd.f32 %v2556, %v2713
        %v2778 = vadd.f32 %v2557, %v2714
        %v2779 = vadd.f32 %v2558, %v2715
        %v2780 = vadd.f32 %v2559, %v2716
        %v2781 = vadd.f32 %v2560, %v2717
        %v2782 = vadd.f32 %v2561, %v2718
        %v2783 = vadd.f32 %v2562, %v2719
        %v2784 = vadd.f32 %v2563, %v2720
        %v2785 = vadd.f32 %v2564, %v2721
        %v2786 = vadd.f32 %v2565, %v2722
        %v2787 = vadd.f32 %v2566, %v2723
        %v2788 = vadd.f32 %v2567, %v2724
        %v2789 = vadd.f32 %v2568, %v2725
        %v2790 = vadd.f32 %v2569, %v2726
        %v2791 = vadd.f32 %v2570, %v2727
        %v2792 = vadd.f32 %v2571, %v2728
        %v2793 = vadd.f32 %v2572, %v2729
        %v2794 = vadd.f32 %v2573, %v2730
        %v2795 = vadd.f32 %v2574, %v2731
        %v2796 = vadd.f32 %v2575, %v2732
        %v2797 = vadd.f32 %v2576, %v2733
        %v2798 = vadd.f32 %v2577, %v2734
        %v2799 = vadd.f32 %v2578, %v2735
        %v2800 = vadd.f32 %v2579, %v2736
        %v2801 = vadd.f32 %v2580, %v2737
        %v2802 = vadd.f32 %v2581, %v2738
        %v2803 = vadd.f32 %v2582, %v2739
        %v2804 = vadd.f32 %v2583, %v2740
        %v2805 = vadd.f32 %v2584, %v2741
        %v2806 = vadd.f32 %v2585, %v2742
        %v2807 = vadd.f32 %v2586, %v2743
        %v2808 = vadd.f32 %v2587, %v2744
        %v2809 = vadd.f32 %v2588, %v2745
        %v2810 = vadd.f32 %v2589, %v2746
        %v2811 = vadd.f32 %v2590, %v2747
        %v2812 = vadd.f32 %v2591, %v2748
        %v2813 = vadd.f32 %v2592, %v2749
        %v2814 = vadd.f32 %v2593, %v2750
        %v2815 = vadd.f32 %v2594, %v2751
        %v2816 = vadd.f32 %v2595, %v2752
        %v2817 = vadd.f32 %v2596, %v2753
        %v2818 = vadd.f32 %v2597, %v2754
        %v2819 = vadd.f32 %v2598, %v2755
        %v2820 = vadd.f32 %v2599, %v2756
        %v2821 = vadd.f32 %v2600, %v2757
        %v2822 = vld [vmem:[%s1 + $0x9] sm:$0x1]
        %v2823 = vlaneseq
        %v2824 = vshrl.u32 %v2823, 7
        %v2825 = vsub.s32 0, %v2824
        %v2826 = vrot.slane %v2822, %v2825
        %v2827 = vmul.f32 %v2603, %v2826
        %v2828 = vmul.f32 %v2604, %v2826
        %v2829 = vmul.f32 %v2605, %v2826
        %v2830 = vmul.f32 %v2606, %v2826
        %v2831 = vmul.f32 %v2607, %v2826
        %v2832 = vmul.f32 %v2608, %v2826
        %v2833 = vmul.f32 %v2609, %v2826
        %v2834 = vmul.f32 %v2610, %v2826
        %v2835 = vmul.f32 %v2611, %v2826
        %v2836 = vmul.f32 %v2612, %v2826
        %v2837 = vmul.f32 %v2613, %v2826
        %v2838 = vmul.f32 %v2614, %v2826
        %v2839 = vmul.f32 %v2615, %v2826
        %v2840 = vmul.f32 %v2616, %v2826
        %v2841 = vmul.f32 %v2617, %v2826
        %v2842 = vmul.f32 %v2618, %v2826
        %v2843 = vmul.f32 %v2619, %v2826
        %v2844 = vmul.f32 %v2620, %v2826
        %v2845 = vmul.f32 %v2621, %v2826
        %v2846 = vmul.f32 %v2622, %v2826
        %v2847 = vmul.f32 %v2623, %v2826
        %v2848 = vmul.f32 %v2624, %v2826
        %v2849 = vmul.f32 %v2625, %v2826
        %v2850 = vmul.f32 %v2626, %v2826
        %v2851 = vmul.f32 %v2627, %v2826
        %v2852 = vmul.f32 %v2628, %v2826
        %v2853 = vmul.f32 %v2629, %v2826
        %v2854 = vmul.f32 %v2630, %v2826
        %v2855 = vmul.f32 %v2631, %v2826
        %v2856 = vmul.f32 %v2632, %v2826
        %v2857 = vmul.f32 %v2633, %v2826
        %v2858 = vmul.f32 %v2634, %v2826
        %v2859 = vmul.f32 %v2647, %v2826
        %v2860 = vmul.f32 %v2648, %v2826
        %v2861 = vmul.f32 %v2649, %v2826
        %v2862 = vmul.f32 %v2650, %v2826
        %v2863 = vmul.f32 %v2651, %v2826
        %v2864 = vmul.f32 %v2652, %v2826
        %v2865 = vmul.f32 %v2653, %v2826
        %v2866 = vmul.f32 %v2654, %v2826
        %v2867 = vmul.f32 %v2655, %v2826
        %v2868 = vmul.f32 %v2656, %v2826
        %v2869 = vmul.f32 %v2657, %v2826
        %v2870 = vmul.f32 %v2658, %v2826
        %v2871 = vmul.f32 %v2659, %v2826
        %v2872 = vmul.f32 %v2660, %v2826
        %v2873 = vmul.f32 %v2661, %v2826
        %v2874 = vmul.f32 %v2662, %v2826
        %v2875 = vmul.f32 %v2663, %v2826
        %v2876 = vmul.f32 %v2664, %v2826
        %v2877 = vmul.f32 %v2665, %v2826
        %v2878 = vmul.f32 %v2666, %v2826
        %v2879 = vmul.f32 %v2667, %v2826
        %v2880 = vmul.f32 %v2668, %v2826
        %v2881 = vmul.f32 %v2669, %v2826
        %v2882 = vmul.f32 %v2670, %v2826
        %v2883 = vmul.f32 %v2671, %v2826
        %v2884 = vmul.f32 %v2672, %v2826
        %v2885 = vmul.f32 %v2673, %v2826
        %v2886 = vmul.f32 %v2674, %v2826
        %v2887 = vmul.f32 %v2675, %v2826
        %v2888 = vmul.f32 %v2676, %v2826
        %v2889 = vmul.f32 %v2677, %v2826
        %v2890 = vmul.f32 %v2678, %v2826
        %v2891 = vadd.f32 %v2758, %v2827
        %v2892 = vadd.f32 %v2759, %v2828
        %v2893 = vadd.f32 %v2760, %v2829
        %v2894 = vadd.f32 %v2761, %v2830
        %v2895 = vadd.f32 %v2762, %v2831
        %v2896 = vadd.f32 %v2763, %v2832
        %v2897 = vadd.f32 %v2764, %v2833
        %v2898 = vadd.f32 %v2765, %v2834
        %v2899 = vadd.f32 %v2766, %v2835
        %v2900 = vadd.f32 %v2767, %v2836
        %v2901 = vadd.f32 %v2768, %v2837
        %v2902 = vadd.f32 %v2769, %v2838
        %v2903 = vadd.f32 %v2770, %v2839
        %v2904 = vadd.f32 %v2771, %v2840
        %v2905 = vadd.f32 %v2772, %v2841
        %v2906 = vadd.f32 %v2773, %v2842
        %v2907 = vadd.f32 %v2774, %v2843
        %v2908 = vadd.f32 %v2775, %v2844
        %v2909 = vadd.f32 %v2776, %v2845
        %v2910 = vadd.f32 %v2777, %v2846
        %v2911 = vadd.f32 %v2778, %v2847
        %v2912 = vadd.f32 %v2779, %v2848
        %v2913 = vadd.f32 %v2780, %v2849
        %v2914 = vadd.f32 %v2781, %v2850
        %v2915 = vadd.f32 %v2782, %v2851
        %v2916 = vadd.f32 %v2783, %v2852
        %v2917 = vadd.f32 %v2784, %v2853
        %v2918 = vadd.f32 %v2785, %v2854
        %v2919 = vadd.f32 %v2786, %v2855
        %v2920 = vadd.f32 %v2787, %v2856
        %v2921 = vadd.f32 %v2788, %v2857
        %v2922 = vadd.f32 %v2789, %v2858
        %v2923 = vadd.f32 %v2790, %v2859
        %v2924 = vadd.f32 %v2791, %v2860
        %v2925 = vadd.f32 %v2792, %v2861
        %v2926 = vadd.f32 %v2793, %v2862
        %v2927 = vadd.f32 %v2794, %v2863
        %v2928 = vadd.f32 %v2795, %v2864
        %v2929 = vadd.f32 %v2796, %v2865
        %v2930 = vadd.f32 %v2797, %v2866
        %v2931 = vadd.f32 %v2798, %v2867
        %v2932 = vadd.f32 %v2799, %v2868
        %v2933 = vadd.f32 %v2800, %v2869
        %v2934 = vadd.f32 %v2801, %v2870
        %v2935 = vadd.f32 %v2802, %v2871
        %v2936 = vadd.f32 %v2803, %v2872
        %v2937 = vadd.f32 %v2804, %v2873
        %v2938 = vadd.f32 %v2805, %v2874
        %v2939 = vadd.f32 %v2806, %v2875
        %v2940 = vadd.f32 %v2807, %v2876
        %v2941 = vadd.f32 %v2808, %v2877
        %v2942 = vadd.f32 %v2809, %v2878
        %v2943 = vadd.f32 %v2810, %v2879
        %v2944 = vadd.f32 %v2811, %v2880
        %v2945 = vadd.f32 %v2812, %v2881
        %v2946 = vadd.f32 %v2813, %v2882
        %v2947 = vadd.f32 %v2814, %v2883
        %v2948 = vadd.f32 %v2815, %v2884
        %v2949 = vadd.f32 %v2816, %v2885
        %v2950 = vadd.f32 %v2817, %v2886
        %v2951 = vadd.f32 %v2818, %v2887
        %v2952 = vadd.f32 %v2819, %v2888
        %v2953 = vadd.f32 %v2820, %v2889
        %v2954 = vadd.f32 %v2821, %v2890
        %v2955 = vld [vmem:[%s1 + $0x10] sm:$0x1]
        %v2956 = vlaneseq
        %v2957 = vshrl.u32 %v2956, 7
        %v2958 = vsub.s32 0, %v2957
        %v2959 = vrot.slane %v2955, %v2958
        %v2960 = vmul.f32 %v2605, %v2959
        %v2961 = vmul.f32 %v2606, %v2959
        %v2962 = vmul.f32 %v2607, %v2959
        %v2963 = vmul.f32 %v2608, %v2959
        %v2964 = vmul.f32 %v2609, %v2959
        %v2965 = vmul.f32 %v2610, %v2959
        %v2966 = vmul.f32 %v2611, %v2959
        %v2967 = vmul.f32 %v2612, %v2959
        %v2968 = vmul.f32 %v2613, %v2959
        %v2969 = vmul.f32 %v2614, %v2959
        %v2970 = vmul.f32 %v2615, %v2959
        %v2971 = vmul.f32 %v2616, %v2959
        %v2972 = vmul.f32 %v2617, %v2959
        %v2973 = vmul.f32 %v2618, %v2959
        %v2974 = vmul.f32 %v2619, %v2959
        %v2975 = vmul.f32 %v2620, %v2959
        %v2976 = vmul.f32 %v2621, %v2959
        %v2977 = vmul.f32 %v2622, %v2959
        %v2978 = vmul.f32 %v2623, %v2959
        %v2979 = vmul.f32 %v2624, %v2959
        %v2980 = vmul.f32 %v2625, %v2959
        %v2981 = vmul.f32 %v2626, %v2959
        %v2982 = vmul.f32 %v2627, %v2959
        %v2983 = vmul.f32 %v2628, %v2959
        %v2984 = vmul.f32 %v2629, %v2959
        %v2985 = vmul.f32 %v2630, %v2959
        %v2986 = vmul.f32 %v2631, %v2959
        %v2987 = vmul.f32 %v2632, %v2959
        %v2988 = vmul.f32 %v2633, %v2959
        %v2989 = vmul.f32 %v2634, %v2959
        %v2990 = vmul.f32 %v2635, %v2959
        %v2991 = vmul.f32 %v2636, %v2959
        %v2992 = vmul.f32 %v2649, %v2959
        %v2993 = vmul.f32 %v2650, %v2959
        %v2994 = vmul.f32 %v2651, %v2959
        %v2995 = vmul.f32 %v2652, %v2959
        %v2996 = vmul.f32 %v2653, %v2959
        %v2997 = vmul.f32 %v2654, %v2959
        %v2998 = vmul.f32 %v2655, %v2959
        %v2999 = vmul.f32 %v2656, %v2959
        %v3000 = vmul.f32 %v2657, %v2959
        %v3001 = vmul.f32 %v2658, %v2959
        %v3002 = vmul.f32 %v2659, %v2959
        %v3003 = vmul.f32 %v2660, %v2959
        %v3004 = vmul.f32 %v2661, %v2959
        %v3005 = vmul.f32 %v2662, %v2959
        %v3006 = vmul.f32 %v2663, %v2959
        %v3007 = vmul.f32 %v2664, %v2959
        %v3008 = vmul.f32 %v2665, %v2959
        %v3009 = vmul.f32 %v2666, %v2959
        %v3010 = vmul.f32 %v2667, %v2959
        %v3011 = vmul.f32 %v2668, %v2959
        %v3012 = vmul.f32 %v2669, %v2959
        %v3013 = vmul.f32 %v2670, %v2959
        %v3014 = vmul.f32 %v2671, %v2959
        %v3015 = vmul.f32 %v2672, %v2959
        %v3016 = vmul.f32 %v2673, %v2959
        %v3017 = vmul.f32 %v2674, %v2959
        %v3018 = vmul.f32 %v2675, %v2959
        %v3019 = vmul.f32 %v2676, %v2959
        %v3020 = vmul.f32 %v2677, %v2959
        %v3021 = vmul.f32 %v2678, %v2959
        %v3022 = vmul.f32 %v2679, %v2959
        %v3023 = vmul.f32 %v2680, %v2959
        %v3024 = vadd.f32 %v2891, %v2960
        %v3025 = vadd.f32 %v2892, %v2961
        %v3026 = vadd.f32 %v2893, %v2962
        %v3027 = vadd.f32 %v2894, %v2963
        %v3028 = vadd.f32 %v2895, %v2964
        %v3029 = vadd.f32 %v2896, %v2965
        %v3030 = vadd.f32 %v2897, %v2966
        %v3031 = vadd.f32 %v2898, %v2967
        %v3032 = vadd.f32 %v2899, %v2968
        %v3033 = vadd.f32 %v2900, %v2969
        %v3034 = vadd.f32 %v2901, %v2970
        %v3035 = vadd.f32 %v2902, %v2971
        %v3036 = vadd.f32 %v2903, %v2972
        %v3037 = vadd.f32 %v2904, %v2973
        %v3038 = vadd.f32 %v2905, %v2974
        %v3039 = vadd.f32 %v2906, %v2975
        %v3040 = vadd.f32 %v2907, %v2976
        %v3041 = vadd.f32 %v2908, %v2977
        %v3042 = vadd.f32 %v2909, %v2978
        %v3043 = vadd.f32 %v2910, %v2979
        %v3044 = vadd.f32 %v2911, %v2980
        %v3045 = vadd.f32 %v2912, %v2981
        %v3046 = vadd.f32 %v2913, %v2982
        %v3047 = vadd.f32 %v2914, %v2983
        %v3048 = vadd.f32 %v2915, %v2984
        %v3049 = vadd.f32 %v2916, %v2985
        %v3050 = vadd.f32 %v2917, %v2986
        %v3051 = vadd.f32 %v2918, %v2987
        %v3052 = vadd.f32 %v2919, %v2988
        %v3053 = vadd.f32 %v2920, %v2989
        %v3054 = vadd.f32 %v2921, %v2990
        %v3055 = vadd.f32 %v2922, %v2991
        %v3056 = vadd.f32 %v2923, %v2992
        %v3057 = vadd.f32 %v2924, %v2993
        %v3058 = vadd.f32 %v2925, %v2994
        %v3059 = vadd.f32 %v2926, %v2995
        %v3060 = vadd.f32 %v2927, %v2996
        %v3061 = vadd.f32 %v2928, %v2997
        %v3062 = vadd.f32 %v2929, %v2998
        %v3063 = vadd.f32 %v2930, %v2999
        %v3064 = vadd.f32 %v2931, %v3000
        %v3065 = vadd.f32 %v2932, %v3001
        %v3066 = vadd.f32 %v2933, %v3002
        %v3067 = vadd.f32 %v2934, %v3003
        %v3068 = vadd.f32 %v2935, %v3004
        %v3069 = vadd.f32 %v2936, %v3005
        %v3070 = vadd.f32 %v2937, %v3006
        %v3071 = vadd.f32 %v2938, %v3007
        %v3072 = vadd.f32 %v2939, %v3008
        %v3073 = vadd.f32 %v2940, %v3009
        %v3074 = vadd.f32 %v2941, %v3010
        %v3075 = vadd.f32 %v2942, %v3011
        %v3076 = vadd.f32 %v2943, %v3012
        %v3077 = vadd.f32 %v2944, %v3013
        %v3078 = vadd.f32 %v2945, %v3014
        %v3079 = vadd.f32 %v2946, %v3015
        %v3080 = vadd.f32 %v2947, %v3016
        %v3081 = vadd.f32 %v2948, %v3017
        %v3082 = vadd.f32 %v2949, %v3018
        %v3083 = vadd.f32 %v2950, %v3019
        %v3084 = vadd.f32 %v2951, %v3020
        %v3085 = vadd.f32 %v2952, %v3021
        %v3086 = vadd.f32 %v2953, %v3022
        %v3087 = vadd.f32 %v2954, %v3023
        %v3088 = vld [vmem:[%s1 + $0x17] sm:$0x1]
        %v3089 = vlaneseq
        %v3090 = vshrl.u32 %v3089, 7
        %v3091 = vsub.s32 0, %v3090
        %v3092 = vrot.slane %v3088, %v3091
        %v3093 = vmul.f32 %v2607, %v3092
        %v3094 = vmul.f32 %v2608, %v3092
        %v3095 = vmul.f32 %v2609, %v3092
        %v3096 = vmul.f32 %v2610, %v3092
        %v3097 = vmul.f32 %v2611, %v3092
        %v3098 = vmul.f32 %v2612, %v3092
        %v3099 = vmul.f32 %v2613, %v3092
        %v3100 = vmul.f32 %v2614, %v3092
        %v3101 = vmul.f32 %v2615, %v3092
        %v3102 = vmul.f32 %v2616, %v3092
        %v3103 = vmul.f32 %v2617, %v3092
        %v3104 = vmul.f32 %v2618, %v3092
        %v3105 = vmul.f32 %v2619, %v3092
        %v3106 = vmul.f32 %v2620, %v3092
        %v3107 = vmul.f32 %v2621, %v3092
        %v3108 = vmul.f32 %v2622, %v3092
        %v3109 = vmul.f32 %v2623, %v3092
        %v3110 = vmul.f32 %v2624, %v3092
        %v3111 = vmul.f32 %v2625, %v3092
        %v3112 = vmul.f32 %v2626, %v3092
        %v3113 = vmul.f32 %v2627, %v3092
        %v3114 = vmul.f32 %v2628, %v3092
        %v3115 = vmul.f32 %v2629, %v3092
        %v3116 = vmul.f32 %v2630, %v3092
        %v3117 = vmul.f32 %v2631, %v3092
        %v3118 = vmul.f32 %v2632, %v3092
        %v3119 = vmul.f32 %v2633, %v3092
        %v3120 = vmul.f32 %v2634, %v3092
        %v3121 = vmul.f32 %v2635, %v3092
        %v3122 = vmul.f32 %v2636, %v3092
        %v3123 = vmul.f32 %v2637, %v3092
        %v3124 = vmul.f32 %v2638, %v3092
        %v3125 = vmul.f32 %v2651, %v3092
        %v3126 = vmul.f32 %v2652, %v3092
        %v3127 = vmul.f32 %v2653, %v3092
        %v3128 = vmul.f32 %v2654, %v3092
        %v3129 = vmul.f32 %v2655, %v3092
        %v3130 = vmul.f32 %v2656, %v3092
        %v3131 = vmul.f32 %v2657, %v3092
        %v3132 = vmul.f32 %v2658, %v3092
        %v3133 = vmul.f32 %v2659, %v3092
        %v3134 = vmul.f32 %v2660, %v3092
        %v3135 = vmul.f32 %v2661, %v3092
        %v3136 = vmul.f32 %v2662, %v3092
        %v3137 = vmul.f32 %v2663, %v3092
        %v3138 = vmul.f32 %v2664, %v3092
        %v3139 = vmul.f32 %v2665, %v3092
        %v3140 = vmul.f32 %v2666, %v3092
        %v3141 = vmul.f32 %v2667, %v3092
        %v3142 = vmul.f32 %v2668, %v3092
        %v3143 = vmul.f32 %v2669, %v3092
        %v3144 = vmul.f32 %v2670, %v3092
        %v3145 = vmul.f32 %v2671, %v3092
        %v3146 = vmul.f32 %v2672, %v3092
        %v3147 = vmul.f32 %v2673, %v3092
        %v3148 = vmul.f32 %v2674, %v3092
        %v3149 = vmul.f32 %v2675, %v3092
        %v3150 = vmul.f32 %v2676, %v3092
        %v3151 = vmul.f32 %v2677, %v3092
        %v3152 = vmul.f32 %v2678, %v3092
        %v3153 = vmul.f32 %v2679, %v3092
        %v3154 = vmul.f32 %v2680, %v3092
        %v3155 = vmul.f32 %v2681, %v3092
        %v3156 = vmul.f32 %v2682, %v3092
        %v3157 = vadd.f32 %v3024, %v3093
        %v3158 = vadd.f32 %v3025, %v3094
        %v3159 = vadd.f32 %v3026, %v3095
        %v3160 = vadd.f32 %v3027, %v3096
        %v3161 = vadd.f32 %v3028, %v3097
        %v3162 = vadd.f32 %v3029, %v3098
        %v3163 = vadd.f32 %v3030, %v3099
        %v3164 = vadd.f32 %v3031, %v3100
        %v3165 = vadd.f32 %v3032, %v3101
        %v3166 = vadd.f32 %v3033, %v3102
        %v3167 = vadd.f32 %v3034, %v3103
        %v3168 = vadd.f32 %v3035, %v3104
        %v3169 = vadd.f32 %v3036, %v3105
        %v3170 = vadd.f32 %v3037, %v3106
        %v3171 = vadd.f32 %v3038, %v3107
        %v3172 = vadd.f32 %v3039, %v3108
        %v3173 = vadd.f32 %v3040, %v3109
        %v3174 = vadd.f32 %v3041, %v3110
        %v3175 = vadd.f32 %v3042, %v3111
        %v3176 = vadd.f32 %v3043, %v3112
        %v3177 = vadd.f32 %v3044, %v3113
        %v3178 = vadd.f32 %v3045, %v3114
        %v3179 = vadd.f32 %v3046, %v3115
        %v3180 = vadd.f32 %v3047, %v3116
        %v3181 = vadd.f32 %v3048, %v3117
        %v3182 = vadd.f32 %v3049, %v3118
        %v3183 = vadd.f32 %v3050, %v3119
        %v3184 = vadd.f32 %v3051, %v3120
        %v3185 = vadd.f32 %v3052, %v3121
        %v3186 = vadd.f32 %v3053, %v3122
        %v3187 = vadd.f32 %v3054, %v3123
        %v3188 = vadd.f32 %v3055, %v3124
        %v3189 = vadd.f32 %v3056, %v3125
        %v3190 = vadd.f32 %v3057, %v3126
        %v3191 = vadd.f32 %v3058, %v3127
        %v3192 = vadd.f32 %v3059, %v3128
        %v3193 = vadd.f32 %v3060, %v3129
        %v3194 = vadd.f32 %v3061, %v3130
        %v3195 = vadd.f32 %v3062, %v3131
        %v3196 = vadd.f32 %v3063, %v3132
        %v3197 = vadd.f32 %v3064, %v3133
        %v3198 = vadd.f32 %v3065, %v3134
        %v3199 = vadd.f32 %v3066, %v3135
        %v3200 = vadd.f32 %v3067, %v3136
        %v3201 = vadd.f32 %v3068, %v3137
        %v3202 = vadd.f32 %v3069, %v3138
        %v3203 = vadd.f32 %v3070, %v3139
        %v3204 = vadd.f32 %v3071, %v3140
        %v3205 = vadd.f32 %v3072, %v3141
        %v3206 = vadd.f32 %v3073, %v3142
        %v3207 = vadd.f32 %v3074, %v3143
        %v3208 = vadd.f32 %v3075, %v3144
        %v3209 = vadd.f32 %v3076, %v3145
        %v3210 = vadd.f32 %v3077, %v3146
        %v3211 = vadd.f32 %v3078, %v3147
        %v3212 = vadd.f32 %v3079, %v3148
        %v3213 = vadd.f32 %v3080, %v3149
        %v3214 = vadd.f32 %v3081, %v3150
        %v3215 = vadd.f32 %v3082, %v3151
        %v3216 = vadd.f32 %v3083, %v3152
        %v3217 = vadd.f32 %v3084, %v3153
        %v3218 = vadd.f32 %v3085, %v3154
        %v3219 = vadd.f32 %v3086, %v3155
        %v3220 = vadd.f32 %v3087, %v3156
        %v3221 = vld [vmem:[%s1 + $0x1e] sm:$0x1]
        %v3222 = vlaneseq
        %v3223 = vshrl.u32 %v3222, 7
        %v3224 = vsub.s32 0, %v3223
        %v3225 = vrot.slane %v3221, %v3224
        %v3226 = vmul.f32 %v2609, %v3225
        %v3227 = vmul.f32 %v2610, %v3225
        %v3228 = vmul.f32 %v2611, %v3225
        %v3229 = vmul.f32 %v2612, %v3225
        %v3230 = vmul.f32 %v2613, %v3225
        %v3231 = vmul.f32 %v2614, %v3225
        %v3232 = vmul.f32 %v2615, %v3225
        %v3233 = vmul.f32 %v2616, %v3225
        %v3234 = vmul.f32 %v2617, %v3225
        %v3235 = vmul.f32 %v2618, %v3225
        %v3236 = vmul.f32 %v2619, %v3225
        %v3237 = vmul.f32 %v2620, %v3225
        %v3238 = vmul.f32 %v2621, %v3225
        %v3239 = vmul.f32 %v2622, %v3225
        %v3240 = vmul.f32 %v2623, %v3225
        %v3241 = vmul.f32 %v2624, %v3225
        %v3242 = vmul.f32 %v2625, %v3225
        %v3243 = vmul.f32 %v2626, %v3225
        %v3244 = vmul.f32 %v2627, %v3225
        %v3245 = vmul.f32 %v2628, %v3225
        %v3246 = vmul.f32 %v2629, %v3225
        %v3247 = vmul.f32 %v2630, %v3225
        %v3248 = vmul.f32 %v2631, %v3225
        %v3249 = vmul.f32 %v2632, %v3225
        %v3250 = vmul.f32 %v2633, %v3225
        %v3251 = vmul.f32 %v2634, %v3225
        %v3252 = vmul.f32 %v2635, %v3225
        %v3253 = vmul.f32 %v2636, %v3225
        %v3254 = vmul.f32 %v2637, %v3225
        %v3255 = vmul.f32 %v2638, %v3225
        %v3256 = vmul.f32 %v2639, %v3225
        %v3257 = vmul.f32 %v2640, %v3225
        %v3258 = vmul.f32 %v2653, %v3225
        %v3259 = vmul.f32 %v2654, %v3225
        %v3260 = vmul.f32 %v2655, %v3225
        %v3261 = vmul.f32 %v2656, %v3225
        %v3262 = vmul.f32 %v2657, %v3225
        %v3263 = vmul.f32 %v2658, %v3225
        %v3264 = vmul.f32 %v2659, %v3225
        %v3265 = vmul.f32 %v2660, %v3225
        %v3266 = vmul.f32 %v2661, %v3225
        %v3267 = vmul.f32 %v2662, %v3225
        %v3268 = vmul.f32 %v2663, %v3225
        %v3269 = vmul.f32 %v2664, %v3225
        %v3270 = vmul.f32 %v2665, %v3225
        %v3271 = vmul.f32 %v2666, %v3225
        %v3272 = vmul.f32 %v2667, %v3225
        %v3273 = vmul.f32 %v2668, %v3225
        %v3274 = vmul.f32 %v2669, %v3225
        %v3275 = vmul.f32 %v2670, %v3225
        %v3276 = vmul.f32 %v2671, %v3225
        %v3277 = vmul.f32 %v2672, %v3225
        %v3278 = vmul.f32 %v2673, %v3225
        %v3279 = vmul.f32 %v2674, %v3225
        %v3280 = vmul.f32 %v2675, %v3225
        %v3281 = vmul.f32 %v2676, %v3225
        %v3282 = vmul.f32 %v2677, %v3225
        %v3283 = vmul.f32 %v2678, %v3225
        %v3284 = vmul.f32 %v2679, %v3225
        %v3285 = vmul.f32 %v2680, %v3225
        %v3286 = vmul.f32 %v2681, %v3225
        %v3287 = vmul.f32 %v2682, %v3225
        %v3288 = vmul.f32 %v2683, %v3225
        %v3289 = vmul.f32 %v2684, %v3225
        %v3290 = vadd.f32 %v3157, %v3226
        %v3291 = vadd.f32 %v3158, %v3227
        %v3292 = vadd.f32 %v3159, %v3228
        %v3293 = vadd.f32 %v3160, %v3229
        %v3294 = vadd.f32 %v3161, %v3230
        %v3295 = vadd.f32 %v3162, %v3231
        %v3296 = vadd.f32 %v3163, %v3232
        %v3297 = vadd.f32 %v3164, %v3233
        %v3298 = vadd.f32 %v3165, %v3234
        %v3299 = vadd.f32 %v3166, %v3235
        %v3300 = vadd.f32 %v3167, %v3236
        %v3301 = vadd.f32 %v3168, %v3237
        %v3302 = vadd.f32 %v3169, %v3238
        %v3303 = vadd.f32 %v3170, %v3239
        %v3304 = vadd.f32 %v3171, %v3240
        %v3305 = vadd.f32 %v3172, %v3241
        %v3306 = vadd.f32 %v3173, %v3242
        %v3307 = vadd.f32 %v3174, %v3243
        %v3308 = vadd.f32 %v3175, %v3244
        %v3309 = vadd.f32 %v3176, %v3245
        %v3310 = vadd.f32 %v3177, %v3246
        %v3311 = vadd.f32 %v3178, %v3247
        %v3312 = vadd.f32 %v3179, %v3248
        %v3313 = vadd.f32 %v3180, %v3249
        %v3314 = vadd.f32 %v3181, %v3250
        %v3315 = vadd.f32 %v3182, %v3251
        %v3316 = vadd.f32 %v3183, %v3252
        %v3317 = vadd.f32 %v3184, %v3253
        %v3318 = vadd.f32 %v3185, %v3254
        %v3319 = vadd.f32 %v3186, %v3255
        %v3320 = vadd.f32 %v3187, %v3256
        %v3321 = vadd.f32 %v3188, %v3257
        %v3322 = vadd.f32 %v3189, %v3258
        %v3323 = vadd.f32 %v3190, %v3259
        %v3324 = vadd.f32 %v3191, %v3260
        %v3325 = vadd.f32 %v3192, %v3261
        %v3326 = vadd.f32 %v3193, %v3262
        %v3327 = vadd.f32 %v3194, %v3263
        %v3328 = vadd.f32 %v3195, %v3264
        %v3329 = vadd.f32 %v3196, %v3265
        %v3330 = vadd.f32 %v3197, %v3266
        %v3331 = vadd.f32 %v3198, %v3267
        %v3332 = vadd.f32 %v3199, %v3268
        %v3333 = vadd.f32 %v3200, %v3269
        %v3334 = vadd.f32 %v3201, %v3270
        %v3335 = vadd.f32 %v3202, %v3271
        %v3336 = vadd.f32 %v3203, %v3272
        %v3337 = vadd.f32 %v3204, %v3273
        %v3338 = vadd.f32 %v3205, %v3274
        %v3339 = vadd.f32 %v3206, %v3275
        %v3340 = vadd.f32 %v3207, %v3276
        %v3341 = vadd.f32 %v3208, %v3277
        %v3342 = vadd.f32 %v3209, %v3278
        %v3343 = vadd.f32 %v3210, %v3279
        %v3344 = vadd.f32 %v3211, %v3280
        %v3345 = vadd.f32 %v3212, %v3281
        %v3346 = vadd.f32 %v3213, %v3282
        %v3347 = vadd.f32 %v3214, %v3283
        %v3348 = vadd.f32 %v3215, %v3284
        %v3349 = vadd.f32 %v3216, %v3285
        %v3350 = vadd.f32 %v3217, %v3286
        %v3351 = vadd.f32 %v3218, %v3287
        %v3352 = vadd.f32 %v3219, %v3288
        %v3353 = vadd.f32 %v3220, %v3289
        %v3354 = vld [vmem:[%s1 + $0x25] sm:$0x1]
        %v3355 = vlaneseq
        %v3356 = vshrl.u32 %v3355, 7
        %v3357 = vsub.s32 0, %v3356
        %v3358 = vrot.slane %v3354, %v3357
        %v3359 = vmul.f32 %v2611, %v3358
        %v3360 = vmul.f32 %v2612, %v3358
        %v3361 = vmul.f32 %v2613, %v3358
        %v3362 = vmul.f32 %v2614, %v3358
        %v3363 = vmul.f32 %v2615, %v3358
        %v3364 = vmul.f32 %v2616, %v3358
        %v3365 = vmul.f32 %v2617, %v3358
        %v3366 = vmul.f32 %v2618, %v3358
        %v3367 = vmul.f32 %v2619, %v3358
        %v3368 = vmul.f32 %v2620, %v3358
        %v3369 = vmul.f32 %v2621, %v3358
        %v3370 = vmul.f32 %v2622, %v3358
        %v3371 = vmul.f32 %v2623, %v3358
        %v3372 = vmul.f32 %v2624, %v3358
        %v3373 = vmul.f32 %v2625, %v3358
        %v3374 = vmul.f32 %v2626, %v3358
        %v3375 = vmul.f32 %v2627, %v3358
        %v3376 = vmul.f32 %v2628, %v3358
        %v3377 = vmul.f32 %v2629, %v3358
        %v3378 = vmul.f32 %v2630, %v3358
        %v3379 = vmul.f32 %v2631, %v3358
        %v3380 = vmul.f32 %v2632, %v3358
        %v3381 = vmul.f32 %v2633, %v3358
        %v3382 = vmul.f32 %v2634, %v3358
        %v3383 = vmul.f32 %v2635, %v3358
        %v3384 = vmul.f32 %v2636, %v3358
        %v3385 = vmul.f32 %v2637, %v3358
        %v3386 = vmul.f32 %v2638, %v3358
        %v3387 = vmul.f32 %v2639, %v3358
        %v3388 = vmul.f32 %v2640, %v3358
        %v3389 = vmul.f32 %v2641, %v3358
        %v3390 = vmul.f32 %v2642, %v3358
        %v3391 = vmul.f32 %v2655, %v3358
        %v3392 = vmul.f32 %v2656, %v3358
        %v3393 = vmul.f32 %v2657, %v3358
        %v3394 = vmul.f32 %v2658, %v3358
        %v3395 = vmul.f32 %v2659, %v3358
        %v3396 = vmul.f32 %v2660, %v3358
        %v3397 = vmul.f32 %v2661, %v3358
        %v3398 = vmul.f32 %v2662, %v3358
        %v3399 = vmul.f32 %v2663, %v3358
        %v3400 = vmul.f32 %v2664, %v3358
        %v3401 = vmul.f32 %v2665, %v3358
        %v3402 = vmul.f32 %v2666, %v3358
        %v3403 = vmul.f32 %v2667, %v3358
        %v3404 = vmul.f32 %v2668, %v3358
        %v3405 = vmul.f32 %v2669, %v3358
        %v3406 = vmul.f32 %v2670, %v3358
        %v3407 = vmul.f32 %v2671, %v3358
        %v3408 = vmul.f32 %v2672, %v3358
        %v3409 = vmul.f32 %v2673, %v3358
        %v3410 = vmul.f32 %v2674, %v3358
        %v3411 = vmul.f32 %v2675, %v3358
        %v3412 = vmul.f32 %v2676, %v3358
        %v3413 = vmul.f32 %v2677, %v3358
        %v3414 = vmul.f32 %v2678, %v3358
        %v3415 = vmul.f32 %v2679, %v3358
        %v3416 = vmul.f32 %v2680, %v3358
        %v3417 = vmul.f32 %v2681, %v3358
        %v3418 = vmul.f32 %v2682, %v3358
        %v3419 = vmul.f32 %v2683, %v3358
        %v3420 = vmul.f32 %v2684, %v3358
        %v3421 = vmul.f32 %v2685, %v3358
        %v3422 = vmul.f32 %v2686, %v3358
        %v3423 = vadd.f32 %v3290, %v3359
        %v3424 = vadd.f32 %v3291, %v3360
        %v3425 = vadd.f32 %v3292, %v3361
        %v3426 = vadd.f32 %v3293, %v3362
        %v3427 = vadd.f32 %v3294, %v3363
        %v3428 = vadd.f32 %v3295, %v3364
        %v3429 = vadd.f32 %v3296, %v3365
        %v3430 = vadd.f32 %v3297, %v3366
        %v3431 = vadd.f32 %v3298, %v3367
        %v3432 = vadd.f32 %v3299, %v3368
        %v3433 = vadd.f32 %v3300, %v3369
        %v3434 = vadd.f32 %v3301, %v3370
        %v3435 = vadd.f32 %v3302, %v3371
        %v3436 = vadd.f32 %v3303, %v3372
        %v3437 = vadd.f32 %v3304, %v3373
        %v3438 = vadd.f32 %v3305, %v3374
        %v3439 = vadd.f32 %v3306, %v3375
        %v3440 = vadd.f32 %v3307, %v3376
        %v3441 = vadd.f32 %v3308, %v3377
        %v3442 = vadd.f32 %v3309, %v3378
        %v3443 = vadd.f32 %v3310, %v3379
        %v3444 = vadd.f32 %v3311, %v3380
        %v3445 = vadd.f32 %v3312, %v3381
        %v3446 = vadd.f32 %v3313, %v3382
        %v3447 = vadd.f32 %v3314, %v3383
        %v3448 = vadd.f32 %v3315, %v3384
        %v3449 = vadd.f32 %v3316, %v3385
        %v3450 = vadd.f32 %v3317, %v3386
        %v3451 = vadd.f32 %v3318, %v3387
        %v3452 = vadd.f32 %v3319, %v3388
        %v3453 = vadd.f32 %v3320, %v3389
        %v3454 = vadd.f32 %v3321, %v3390
        %v3455 = vadd.f32 %v3322, %v3391
        %v3456 = vadd.f32 %v3323, %v3392
        %v3457 = vadd.f32 %v3324, %v3393
        %v3458 = vadd.f32 %v3325, %v3394
        %v3459 = vadd.f32 %v3326, %v3395
        %v3460 = vadd.f32 %v3327, %v3396
        %v3461 = vadd.f32 %v3328, %v3397
        %v3462 = vadd.f32 %v3329, %v3398
        %v3463 = vadd.f32 %v3330, %v3399
        %v3464 = vadd.f32 %v3331, %v3400
        %v3465 = vadd.f32 %v3332, %v3401
        %v3466 = vadd.f32 %v3333, %v3402
        %v3467 = vadd.f32 %v3334, %v3403
        %v3468 = vadd.f32 %v3335, %v3404
        %v3469 = vadd.f32 %v3336, %v3405
        %v3470 = vadd.f32 %v3337, %v3406
        %v3471 = vadd.f32 %v3338, %v3407
        %v3472 = vadd.f32 %v3339, %v3408
        %v3473 = vadd.f32 %v3340, %v3409
        %v3474 = vadd.f32 %v3341, %v3410
        %v3475 = vadd.f32 %v3342, %v3411
        %v3476 = vadd.f32 %v3343, %v3412
        %v3477 = vadd.f32 %v3344, %v3413
        %v3478 = vadd.f32 %v3345, %v3414
        %v3479 = vadd.f32 %v3346, %v3415
        %v3480 = vadd.f32 %v3347, %v3416
        %v3481 = vadd.f32 %v3348, %v3417
        %v3482 = vadd.f32 %v3349, %v3418
        %v3483 = vadd.f32 %v3350, %v3419
        %v3484 = vadd.f32 %v3351, %v3420
        %v3485 = vadd.f32 %v3352, %v3421
        %v3486 = vadd.f32 %v3353, %v3422
        %v3487 = vld [vmem:[%s1 + $0x2c] sm:$0x1]
        %v3488 = vlaneseq
        %v3489 = vshrl.u32 %v3488, 7
        %v3490 = vsub.s32 0, %v3489
        %v3491 = vrot.slane %v3487, %v3490
        %v3492 = vmul.f32 %v2613, %v3491
        %v3493 = vmul.f32 %v2614, %v3491
        %v3494 = vmul.f32 %v2615, %v3491
        %v3495 = vmul.f32 %v2616, %v3491
        %v3496 = vmul.f32 %v2617, %v3491
        %v3497 = vmul.f32 %v2618, %v3491
        %v3498 = vmul.f32 %v2619, %v3491
        %v3499 = vmul.f32 %v2620, %v3491
        %v3500 = vmul.f32 %v2621, %v3491
        %v3501 = vmul.f32 %v2622, %v3491
        %v3502 = vmul.f32 %v2623, %v3491
        %v3503 = vmul.f32 %v2624, %v3491
        %v3504 = vmul.f32 %v2625, %v3491
        %v3505 = vmul.f32 %v2626, %v3491
        %v3506 = vmul.f32 %v2627, %v3491
        %v3507 = vmul.f32 %v2628, %v3491
        %v3508 = vmul.f32 %v2629, %v3491
        %v3509 = vmul.f32 %v2630, %v3491
        %v3510 = vmul.f32 %v2631, %v3491
        %v3511 = vmul.f32 %v2632, %v3491
        %v3512 = vmul.f32 %v2633, %v3491
        %v3513 = vmul.f32 %v2634, %v3491
        %v3514 = vmul.f32 %v2635, %v3491
        %v3515 = vmul.f32 %v2636, %v3491
        %v3516 = vmul.f32 %v2637, %v3491
        %v3517 = vmul.f32 %v2638, %v3491
        %v3518 = vmul.f32 %v2639, %v3491
        %v3519 = vmul.f32 %v2640, %v3491
        %v3520 = vmul.f32 %v2641, %v3491
        %v3521 = vmul.f32 %v2642, %v3491
        %v3522 = vmul.f32 %v2643, %v3491
        %v3523 = vmul.f32 %v2644, %v3491
        %v3524 = vmul.f32 %v2657, %v3491
        %v3525 = vmul.f32 %v2658, %v3491
        %v3526 = vmul.f32 %v2659, %v3491
        %v3527 = vmul.f32 %v2660, %v3491
        %v3528 = vmul.f32 %v2661, %v3491
        %v3529 = vmul.f32 %v2662, %v3491
        %v3530 = vmul.f32 %v2663, %v3491
        %v3531 = vmul.f32 %v2664, %v3491
        %v3532 = vmul.f32 %v2665, %v3491
        %v3533 = vmul.f32 %v2666, %v3491
        %v3534 = vmul.f32 %v2667, %v3491
        %v3535 = vmul.f32 %v2668, %v3491
        %v3536 = vmul.f32 %v2669, %v3491
        %v3537 = vmul.f32 %v2670, %v3491
        %v3538 = vmul.f32 %v2671, %v3491
        %v3539 = vmul.f32 %v2672, %v3491
        %v3540 = vmul.f32 %v2673, %v3491
        %v3541 = vmul.f32 %v2674, %v3491
        %v3542 = vmul.f32 %v2675, %v3491
        %v3543 = vmul.f32 %v2676, %v3491
        %v3544 = vmul.f32 %v2677, %v3491
        %v3545 = vmul.f32 %v2678, %v3491
        %v3546 = vmul.f32 %v2679, %v3491
        %v3547 = vmul.f32 %v2680, %v3491
        %v3548 = vmul.f32 %v2681, %v3491
        %v3549 = vmul.f32 %v2682, %v3491
        %v3550 = vmul.f32 %v2683, %v3491
        %v3551 = vmul.f32 %v2684, %v3491
        %v3552 = vmul.f32 %v2685, %v3491
        %v3553 = vmul.f32 %v2686, %v3491
        %v3554 = vmul.f32 %v2687, %v3491
        %v3555 = vmul.f32 %v2688, %v3491
        %v3556 = vadd.f32 %v3423, %v3492
        %v3557 = vadd.f32 %v3424, %v3493
        %v3558 = vadd.f32 %v3425, %v3494
        %v3559 = vadd.f32 %v3426, %v3495
        %v3560 = vadd.f32 %v3427, %v3496
        %v3561 = vadd.f32 %v3428, %v3497
        %v3562 = vadd.f32 %v3429, %v3498
        %v3563 = vadd.f32 %v3430, %v3499
        %v3564 = vadd.f32 %v3431, %v3500
        %v3565 = vadd.f32 %v3432, %v3501
        %v3566 = vadd.f32 %v3433, %v3502
        %v3567 = vadd.f32 %v3434, %v3503
        %v3568 = vadd.f32 %v3435, %v3504
        %v3569 = vadd.f32 %v3436, %v3505
        %v3570 = vadd.f32 %v3437, %v3506
        %v3571 = vadd.f32 %v3438, %v3507
        %v3572 = vadd.f32 %v3439, %v3508
        %v3573 = vadd.f32 %v3440, %v3509
        %v3574 = vadd.f32 %v3441, %v3510
        %v3575 = vadd.f32 %v3442, %v3511
        %v3576 = vadd.f32 %v3443, %v3512
        %v3577 = vadd.f32 %v3444, %v3513
        %v3578 = vadd.f32 %v3445, %v3514
        %v3579 = vadd.f32 %v3446, %v3515
        %v3580 = vadd.f32 %v3447, %v3516
        %v3581 = vadd.f32 %v3448, %v3517
        %v3582 = vadd.f32 %v3449, %v3518
        %v3583 = vadd.f32 %v3450, %v3519
        %v3584 = vadd.f32 %v3451, %v3520
        %v3585 = vadd.f32 %v3452, %v3521
        %v3586 = vadd.f32 %v3453, %v3522
        %v3587 = vadd.f32 %v3454, %v3523
        %v3588 = vadd.f32 %v3455, %v3524
        %v3589 = vadd.f32 %v3456, %v3525
        %v3590 = vadd.f32 %v3457, %v3526
        %v3591 = vadd.f32 %v3458, %v3527
        %v3592 = vadd.f32 %v3459, %v3528
        %v3593 = vadd.f32 %v3460, %v3529
        %v3594 = vadd.f32 %v3461, %v3530
        %v3595 = vadd.f32 %v3462, %v3531
        %v3596 = vadd.f32 %v3463, %v3532
        %v3597 = vadd.f32 %v3464, %v3533
        %v3598 = vadd.f32 %v3465, %v3534
        %v3599 = vadd.f32 %v3466, %v3535
        %v3600 = vadd.f32 %v3467, %v3536
        %v3601 = vadd.f32 %v3468, %v3537
        %v3602 = vadd.f32 %v3469, %v3538
        %v3603 = vadd.f32 %v3470, %v3539
        %v3604 = vadd.f32 %v3471, %v3540
        %v3605 = vadd.f32 %v3472, %v3541
        %v3606 = vadd.f32 %v3473, %v3542
        %v3607 = vadd.f32 %v3474, %v3543
        %v3608 = vadd.f32 %v3475, %v3544
        %v3609 = vadd.f32 %v3476, %v3545
        %v3610 = vadd.f32 %v3477, %v3546
        %v3611 = vadd.f32 %v3478, %v3547
        %v3612 = vadd.f32 %v3479, %v3548
        %v3613 = vadd.f32 %v3480, %v3549
        %v3614 = vadd.f32 %v3481, %v3550
        %v3615 = vadd.f32 %v3482, %v3551
        %v3616 = vadd.f32 %v3483, %v3552
        %v3617 = vadd.f32 %v3484, %v3553
        %v3618 = vadd.f32 %v3485, %v3554
        %v3619 = vadd.f32 %v3486, %v3555
        %v3620 = vld [vmem:[#allocation2 + $0x3] sm:$0xff]
        %v3621 = vld [vmem:[#allocation2 + $0xb] sm:$0xff]
        %v3622 = vld [vmem:[#allocation2 + $0x1b] sm:$0xff]
        %v3623 = vld [vmem:[#allocation2 + $0x23] sm:$0xff]
        %v3624 = vld [vmem:[#allocation2 + $0x33] sm:$0xff]
        %v3625 = vld [vmem:[#allocation2 + $0x3b] sm:$0xff]
        %v3626 = vld [vmem:[#allocation2 + $0x4b] sm:$0xff]
        %v3627 = vld [vmem:[#allocation2 + $0x53] sm:$0xff]
        %v3628 = vld [vmem:[#allocation2 + $0x63] sm:$0xff]
        %v3629 = vld [vmem:[#allocation2 + $0x6b] sm:$0xff]
        %v3630 = vld [vmem:[#allocation2 + $0x7b] sm:$0xff]
        %v3631 = vld [vmem:[#allocation2 + $0x83] sm:$0xff]
        %v3632 = vld [vmem:[#allocation2 + $0x93] sm:$0xff]
        %v3633 = vld [vmem:[#allocation2 + $0x9b] sm:$0xff]
        %v3634 = vld [vmem:[#allocation2 + $0xab] sm:$0xff]
        %v3635 = vld [vmem:[#allocation2 + $0xb3] sm:$0xff]
        %v3636 = vld [vmem:[#allocation2 + $0xc3] sm:$0xff]
        %v3637 = vld [vmem:[#allocation2 + $0xcb] sm:$0xff]
        %v3638 = vld [vmem:[#allocation2 + $0xdb] sm:$0xff]
        %v3639 = vld [vmem:[#allocation2 + $0xe3] sm:$0xff]
        %v3640 = vld [vmem:[#allocation2 + $0xf3] sm:$0xff]
        %v3641 = vld [vmem:[#allocation2 + $0xfb] sm:$0xff]
        %v3642 = vld [vmem:[#allocation2 + $0x10b] sm:$0xff]
        %v3643 = vld [vmem:[#allocation2 + $0x113] sm:$0xff]
        %v3644 = vld [vmem:[#allocation2 + $0x123] sm:$0xff]
        %v3645 = vld [vmem:[#allocation2 + $0x12b] sm:$0xff]
        %v3646 = vld [vmem:[#allocation2 + $0x13b] sm:$0xff]
        %v3647 = vld [vmem:[#allocation2 + $0x143] sm:$0xff]
        %v3648 = vld [vmem:[#allocation2 + $0x153] sm:$0xff]
        %v3649 = vld [vmem:[#allocation2 + $0x15b] sm:$0xff]
        %v3650 = vld [vmem:[#allocation2 + $0x16b] sm:$0xff]
        %v3651 = vld [vmem:[#allocation2 + $0x173] sm:$0xff]
        %v3652 = vld [vmem:[#allocation2 + $0x183] sm:$0xff]
        %v3653 = vld [vmem:[#allocation2 + $0x18b] sm:$0xff]
        %v3654 = vld [vmem:[#allocation2 + $0x19b] sm:$0xff]
        %v3655 = vld [vmem:[#allocation2 + $0x1a3] sm:$0xff]
        %v3656 = vld [vmem:[#allocation2 + $0x1b3] sm:$0xff]
        %v3657 = vld [vmem:[#allocation2 + $0x1bb] sm:$0xff]
        %v3658 = vld [vmem:[#allocation2 + $0x1cb] sm:$0xff]
        %v3659 = vld [vmem:[#allocation2 + $0x1d3] sm:$0xff]
        %v3660 = vld [vmem:[#allocation2 + $0x1e3] sm:$0xff]
        %v3661 = vld [vmem:[#allocation2 + $0x1eb] sm:$0xff]
        %v3662 = vld [vmem:[#allocation2 + $0x1fb] sm:$0xff]
        %v3663 = vld [vmem:[#allocation2 + $0x203] sm:$0xff]
        %v3664 = vld [vmem:[#allocation2 + $0x213] sm:$0xff]
        %v3665 = vld [vmem:[#allocation2 + $0x21b] sm:$0xff]
        %v3666 = vld [vmem:[#allocation2 + $0x22b] sm:$0xff]
        %v3667 = vld [vmem:[#allocation2 + $0x233] sm:$0xff]
        %v3668 = vld [vmem:[#allocation2 + $0x243] sm:$0xff]
        %v3669 = vld [vmem:[#allocation2 + $0x24b] sm:$0xff]
        %v3670 = vld [vmem:[#allocation2 + $0x25b] sm:$0xff]
        %v3671 = vld [vmem:[#allocation2 + $0x263] sm:$0xff]
        %v3672 = vld [vmem:[#allocation2 + $0x273] sm:$0xff]
        %v3673 = vld [vmem:[#allocation2 + $0x27b] sm:$0xff]
        %v3674 = vld [vmem:[#allocation2 + $0x28b] sm:$0xff]
        %v3675 = vld [vmem:[#allocation2 + $0x293] sm:$0xff]
        %v3676 = vld [vmem:[#allocation2 + $0x2a3] sm:$0xff]
        %v3677 = vld [vmem:[#allocation2 + $0x2ab] sm:$0xff]
        %v3678 = vld [vmem:[#allocation2 + $0x2bb] sm:$0xff]
        %v3679 = vld [vmem:[#allocation2 + $0x2c3] sm:$0xff]
        %v3680 = vld [vmem:[#allocation2 + $0x2d3] sm:$0xff]
        %v3681 = vld [vmem:[#allocation2 + $0x2db] sm:$0xff]
        %v3682 = vld [vmem:[#allocation2 + $0x2eb] sm:$0xff]
        %v3683 = vld [vmem:[#allocation2 + $0x2f3] sm:$0xff]
        %v3684 = vld [vmem:[#allocation2 + $0x303] sm:$0xff]
        %v3685 = vld [vmem:[#allocation2 + $0x30b] sm:$0xff]
        %v3686 = vld [vmem:[#allocation2 + $0x31b] sm:$0xff]
        %v3687 = vld [vmem:[#allocation2 + $0x323] sm:$0xff]
        %v3688 = vld [vmem:[#allocation2 + $0x333] sm:$0xff]
        %v3689 = vld [vmem:[#allocation2 + $0x33b] sm:$0xff]
        %v3690 = vld [vmem:[#allocation2 + $0x34b] sm:$0xff]
        %v3691 = vld [vmem:[#allocation2 + $0x353] sm:$0xff]
        %v3692 = vld [vmem:[#allocation2 + $0x363] sm:$0xff]
        %v3693 = vld [vmem:[#allocation2 + $0x36b] sm:$0xff]
        %v3694 = vld [vmem:[#allocation2 + $0x37b] sm:$0xff]
        %v3695 = vld [vmem:[#allocation2 + $0x383] sm:$0xff]
        %v3696 = vld [vmem:[#allocation2 + $0x393] sm:$0xff]
        %v3697 = vld [vmem:[#allocation2 + $0x39b] sm:$0xff]
        %v3698 = vld [vmem:[#allocation2 + $0x3ab] sm:$0xff]
        %v3699 = vld [vmem:[#allocation2 + $0x3b3] sm:$0xff]
        %v3700 = vld [vmem:[#allocation2 + $0x3c3] sm:$0xff]
        %v3701 = vld [vmem:[#allocation2 + $0x3cb] sm:$0xff]
        %v3702 = vld [vmem:[#allocation2 + $0x3db] sm:$0xff]
        %v3703 = vld [vmem:[#allocation2 + $0x3e3] sm:$0xff]
        %v3704 = vld [vmem:[#allocation2 + $0x3f3] sm:$0xff]
        %v3705 = vld [vmem:[#allocation2 + $0x3fb] sm:$0xff]
        %v3706 = vld [vmem:[#allocation2 + $0x40b] sm:$0xff]
        %v3707 = vld [vmem:[#allocation2 + $0x413] sm:$0xff]
        %v3708 = vld [vmem:[%s1 + $0x3] sm:$0x1]
        %v3709 = vlaneseq
        %v3710 = vshrl.u32 %v3709, 7
        %v3711 = vsub.s32 0, %v3710
        %v3712 = vrot.slane %v3708, %v3711
        %v3713 = vmul.f32 %v3620, %v3712
        %v3714 = vmul.f32 %v3621, %v3712
        %v3715 = vmul.f32 %v3622, %v3712
        %v3716 = vmul.f32 %v3623, %v3712
        %v3717 = vmul.f32 %v3624, %v3712
        %v3718 = vmul.f32 %v3625, %v3712
        %v3719 = vmul.f32 %v3626, %v3712
        %v3720 = vmul.f32 %v3627, %v3712
        %v3721 = vmul.f32 %v3628, %v3712
        %v3722 = vmul.f32 %v3629, %v3712
        %v3723 = vmul.f32 %v3630, %v3712
        %v3724 = vmul.f32 %v3631, %v3712
        %v3725 = vmul.f32 %v3632, %v3712
        %v3726 = vmul.f32 %v3633, %v3712
        %v3727 = vmul.f32 %v3634, %v3712
        %v3728 = vmul.f32 %v3635, %v3712
        %v3729 = vmul.f32 %v3636, %v3712
        %v3730 = vmul.f32 %v3637, %v3712
        %v3731 = vmul.f32 %v3638, %v3712
        %v3732 = vmul.f32 %v3639, %v3712
        %v3733 = vmul.f32 %v3640, %v3712
        %v3734 = vmul.f32 %v3641, %v3712
        %v3735 = vmul.f32 %v3642, %v3712
        %v3736 = vmul.f32 %v3643, %v3712
        %v3737 = vmul.f32 %v3644, %v3712
        %v3738 = vmul.f32 %v3645, %v3712
        %v3739 = vmul.f32 %v3646, %v3712
        %v3740 = vmul.f32 %v3647, %v3712
        %v3741 = vmul.f32 %v3648, %v3712
        %v3742 = vmul.f32 %v3649, %v3712
        %v3743 = vmul.f32 %v3650, %v3712
        %v3744 = vmul.f32 %v3651, %v3712
        %v3745 = vmul.f32 %v3664, %v3712
        %v3746 = vmul.f32 %v3665, %v3712
        %v3747 = vmul.f32 %v3666, %v3712
        %v3748 = vmul.f32 %v3667, %v3712
        %v3749 = vmul.f32 %v3668, %v3712
        %v3750 = vmul.f32 %v3669, %v3712
        %v3751 = vmul.f32 %v3670, %v3712
        %v3752 = vmul.f32 %v3671, %v3712
        %v3753 = vmul.f32 %v3672, %v3712
        %v3754 = vmul.f32 %v3673, %v3712
        %v3755 = vmul.f32 %v3674, %v3712
        %v3756 = vmul.f32 %v3675, %v3712
        %v3757 = vmul.f32 %v3676, %v3712
        %v3758 = vmul.f32 %v3677, %v3712
        %v3759 = vmul.f32 %v3678, %v3712
        %v3760 = vmul.f32 %v3679, %v3712
        %v3761 = vmul.f32 %v3680, %v3712
        %v3762 = vmul.f32 %v3681, %v3712
        %v3763 = vmul.f32 %v3682, %v3712
        %v3764 = vmul.f32 %v3683, %v3712
        %v3765 = vmul.f32 %v3684, %v3712
        %v3766 = vmul.f32 %v3685, %v3712
        %v3767 = vmul.f32 %v3686, %v3712
        %v3768 = vmul.f32 %v3687, %v3712
        %v3769 = vmul.f32 %v3688, %v3712
        %v3770 = vmul.f32 %v3689, %v3712
        %v3771 = vmul.f32 %v3690, %v3712
        %v3772 = vmul.f32 %v3691, %v3712
        %v3773 = vmul.f32 %v3692, %v3712
        %v3774 = vmul.f32 %v3693, %v3712
        %v3775 = vmul.f32 %v3694, %v3712
        %v3776 = vmul.f32 %v3695, %v3712
        %v3777 = vadd.f32 %v3556, %v3713
        %v3778 = vadd.f32 %v3557, %v3714
        %v3779 = vadd.f32 %v3558, %v3715
        %v3780 = vadd.f32 %v3559, %v3716
        %v3781 = vadd.f32 %v3560, %v3717
        %v3782 = vadd.f32 %v3561, %v3718
        %v3783 = vadd.f32 %v3562, %v3719
        %v3784 = vadd.f32 %v3563, %v3720
        %v3785 = vadd.f32 %v3564, %v3721
        %v3786 = vadd.f32 %v3565, %v3722
        %v3787 = vadd.f32 %v3566, %v3723
        %v3788 = vadd.f32 %v3567, %v3724
        %v3789 = vadd.f32 %v3568, %v3725
        %v3790 = vadd.f32 %v3569, %v3726
        %v3791 = vadd.f32 %v3570, %v3727
        %v3792 = vadd.f32 %v3571, %v3728
        %v3793 = vadd.f32 %v3572, %v3729
        %v3794 = vadd.f32 %v3573, %v3730
        %v3795 = vadd.f32 %v3574, %v3731
        %v3796 = vadd.f32 %v3575, %v3732
        %v3797 = vadd.f32 %v3576, %v3733
        %v3798 = vadd.f32 %v3577, %v3734
        %v3799 = vadd.f32 %v3578, %v3735
        %v3800 = vadd.f32 %v3579, %v3736
        %v3801 = vadd.f32 %v3580, %v3737
        %v3802 = vadd.f32 %v3581, %v3738
        %v3803 = vadd.f32 %v3582, %v3739
        %v3804 = vadd.f32 %v3583, %v3740
        %v3805 = vadd.f32 %v3584, %v3741
        %v3806 = vadd.f32 %v3585, %v3742
        %v3807 = vadd.f32 %v3586, %v3743
        %v3808 = vadd.f32 %v3587, %v3744
        %v3809 = vadd.f32 %v3588, %v3745
        %v3810 = vadd.f32 %v3589, %v3746
        %v3811 = vadd.f32 %v3590, %v3747
        %v3812 = vadd.f32 %v3591, %v3748
        %v3813 = vadd.f32 %v3592, %v3749
        %v3814 = vadd.f32 %v3593, %v3750
        %v3815 = vadd.f32 %v3594, %v3751
        %v3816 = vadd.f32 %v3595, %v3752
        %v3817 = vadd.f32 %v3596, %v3753
        %v3818 = vadd.f32 %v3597, %v3754
        %v3819 = vadd.f32 %v3598, %v3755
        %v3820 = vadd.f32 %v3599, %v3756
        %v3821 = vadd.f32 %v3600, %v3757
        %v3822 = vadd.f32 %v3601, %v3758
        %v3823 = vadd.f32 %v3602, %v3759
        %v3824 = vadd.f32 %v3603, %v3760
        %v3825 = vadd.f32 %v3604, %v3761
        %v3826 = vadd.f32 %v3605, %v3762
        %v3827 = vadd.f32 %v3606, %v3763
        %v3828 = vadd.f32 %v3607, %v3764
        %v3829 = vadd.f32 %v3608, %v3765
        %v3830 = vadd.f32 %v3609, %v3766
        %v3831 = vadd.f32 %v3610, %v3767
        %v3832 = vadd.f32 %v3611, %v3768
        %v3833 = vadd.f32 %v3612, %v3769
        %v3834 = vadd.f32 %v3613, %v3770
        %v3835 = vadd.f32 %v3614, %v3771
        %v3836 = vadd.f32 %v3615, %v3772
        %v3837 = vadd.f32 %v3616, %v3773
        %v3838 = vadd.f32 %v3617, %v3774
        %v3839 = vadd.f32 %v3618, %v3775
        %v3840 = vadd.f32 %v3619, %v3776
        %v3841 = vld [vmem:[%s1 + $0xa] sm:$0x1]
        %v3842 = vlaneseq
        %v3843 = vshrl.u32 %v3842, 7
        %v3844 = vsub.s32 0, %v3843
        %v3845 = vrot.slane %v3841, %v3844
        %v3846 = vmul.f32 %v3622, %v3845
        %v3847 = vmul.f32 %v3623, %v3845
        %v3848 = vmul.f32 %v3624, %v3845
        %v3849 = vmul.f32 %v3625, %v3845
        %v3850 = vmul.f32 %v3626, %v3845
        %v3851 = vmul.f32 %v3627, %v3845
        %v3852 = vmul.f32 %v3628, %v3845
        %v3853 = vmul.f32 %v3629, %v3845
        %v3854 = vmul.f32 %v3630, %v3845
        %v3855 = vmul.f32 %v3631, %v3845
        %v3856 = vmul.f32 %v3632, %v3845
        %v3857 = vmul.f32 %v3633, %v3845
        %v3858 = vmul.f32 %v3634, %v3845
        %v3859 = vmul.f32 %v3635, %v3845
        %v3860 = vmul.f32 %v3636, %v3845
        %v3861 = vmul.f32 %v3637, %v3845
        %v3862 = vmul.f32 %v3638, %v3845
        %v3863 = vmul.f32 %v3639, %v3845
        %v3864 = vmul.f32 %v3640, %v3845
        %v3865 = vmul.f32 %v3641, %v3845
        %v3866 = vmul.f32 %v3642, %v3845
        %v3867 = vmul.f32 %v3643, %v3845
        %v3868 = vmul.f32 %v3644, %v3845
        %v3869 = vmul.f32 %v3645, %v3845
        %v3870 = vmul.f32 %v3646, %v3845
        %v3871 = vmul.f32 %v3647, %v3845
        %v3872 = vmul.f32 %v3648, %v3845
        %v3873 = vmul.f32 %v3649, %v3845
        %v3874 = vmul.f32 %v3650, %v3845
        %v3875 = vmul.f32 %v3651, %v3845
        %v3876 = vmul.f32 %v3652, %v3845
        %v3877 = vmul.f32 %v3653, %v3845
        %v3878 = vmul.f32 %v3666, %v3845
        %v3879 = vmul.f32 %v3667, %v3845
        %v3880 = vmul.f32 %v3668, %v3845
        %v3881 = vmul.f32 %v3669, %v3845
        %v3882 = vmul.f32 %v3670, %v3845
        %v3883 = vmul.f32 %v3671, %v3845
        %v3884 = vmul.f32 %v3672, %v3845
        %v3885 = vmul.f32 %v3673, %v3845
        %v3886 = vmul.f32 %v3674, %v3845
        %v3887 = vmul.f32 %v3675, %v3845
        %v3888 = vmul.f32 %v3676, %v3845
        %v3889 = vmul.f32 %v3677, %v3845
        %v3890 = vmul.f32 %v3678, %v3845
        %v3891 = vmul.f32 %v3679, %v3845
        %v3892 = vmul.f32 %v3680, %v3845
        %v3893 = vmul.f32 %v3681, %v3845
        %v3894 = vmul.f32 %v3682, %v3845
        %v3895 = vmul.f32 %v3683, %v3845
        %v3896 = vmul.f32 %v3684, %v3845
        %v3897 = vmul.f32 %v3685, %v3845
        %v3898 = vmul.f32 %v3686, %v3845
        %v3899 = vmul.f32 %v3687, %v3845
        %v3900 = vmul.f32 %v3688, %v3845
        %v3901 = vmul.f32 %v3689, %v3845
        %v3902 = vmul.f32 %v3690, %v3845
        %v3903 = vmul.f32 %v3691, %v3845
        %v3904 = vmul.f32 %v3692, %v3845
        %v3905 = vmul.f32 %v3693, %v3845
        %v3906 = vmul.f32 %v3694, %v3845
        %v3907 = vmul.f32 %v3695, %v3845
        %v3908 = vmul.f32 %v3696, %v3845
        %v3909 = vmul.f32 %v3697, %v3845
        %v3910 = vadd.f32 %v3777, %v3846
        %v3911 = vadd.f32 %v3778, %v3847
        %v3912 = vadd.f32 %v3779, %v3848
        %v3913 = vadd.f32 %v3780, %v3849
        %v3914 = vadd.f32 %v3781, %v3850
        %v3915 = vadd.f32 %v3782, %v3851
        %v3916 = vadd.f32 %v3783, %v3852
        %v3917 = vadd.f32 %v3784, %v3853
        %v3918 = vadd.f32 %v3785, %v3854
        %v3919 = vadd.f32 %v3786, %v3855
        %v3920 = vadd.f32 %v3787, %v3856
        %v3921 = vadd.f32 %v3788, %v3857
        %v3922 = vadd.f32 %v3789, %v3858
        %v3923 = vadd.f32 %v3790, %v3859
        %v3924 = vadd.f32 %v3791, %v3860
        %v3925 = vadd.f32 %v3792, %v3861
        %v3926 = vadd.f32 %v3793, %v3862
        %v3927 = vadd.f32 %v3794, %v3863
        %v3928 = vadd.f32 %v3795, %v3864
        %v3929 = vadd.f32 %v3796, %v3865
        %v3930 = vadd.f32 %v3797, %v3866
        %v3931 = vadd.f32 %v3798, %v3867
        %v3932 = vadd.f32 %v3799, %v3868
        %v3933 = vadd.f32 %v3800, %v3869
        %v3934 = vadd.f32 %v3801, %v3870
        %v3935 = vadd.f32 %v3802, %v3871
        %v3936 = vadd.f32 %v3803, %v3872
        %v3937 = vadd.f32 %v3804, %v3873
        %v3938 = vadd.f32 %v3805, %v3874
        %v3939 = vadd.f32 %v3806, %v3875
        %v3940 = vadd.f32 %v3807, %v3876
        %v3941 = vadd.f32 %v3808, %v3877
        %v3942 = vadd.f32 %v3809, %v3878
        %v3943 = vadd.f32 %v3810, %v3879
        %v3944 = vadd.f32 %v3811, %v3880
        %v3945 = vadd.f32 %v3812, %v3881
        %v3946 = vadd.f32 %v3813, %v3882
        %v3947 = vadd.f32 %v3814, %v3883
        %v3948 = vadd.f32 %v3815, %v3884
        %v3949 = vadd.f32 %v3816, %v3885
        %v3950 = vadd.f32 %v3817, %v3886
        %v3951 = vadd.f32 %v3818, %v3887
        %v3952 = vadd.f32 %v3819, %v3888
        %v3953 = vadd.f32 %v3820, %v3889
        %v3954 = vadd.f32 %v3821, %v3890
        %v3955 = vadd.f32 %v3822, %v3891
        %v3956 = vadd.f32 %v3823, %v3892
        %v3957 = vadd.f32 %v3824, %v3893
        %v3958 = vadd.f32 %v3825, %v3894
        %v3959 = vadd.f32 %v3826, %v3895
        %v3960 = vadd.f32 %v3827, %v3896
        %v3961 = vadd.f32 %v3828, %v3897
        %v3962 = vadd.f32 %v3829, %v3898
        %v3963 = vadd.f32 %v3830, %v3899
        %v3964 = vadd.f32 %v3831, %v3900
        %v3965 = vadd.f32 %v3832, %v3901
        %v3966 = vadd.f32 %v3833, %v3902
        %v3967 = vadd.f32 %v3834, %v3903
        %v3968 = vadd.f32 %v3835, %v3904
        %v3969 = vadd.f32 %v3836, %v3905
        %v3970 = vadd.f32 %v3837, %v3906
        %v3971 = vadd.f32 %v3838, %v3907
        %v3972 = vadd.f32 %v3839, %v3908
        %v3973 = vadd.f32 %v3840, %v3909
        %v3974 = vld [vmem:[%s1 + $0x11] sm:$0x1]
        %v3975 = vlaneseq
        %v3976 = vshrl.u32 %v3975, 7
        %v3977 = vsub.s32 0, %v3976
        %v3978 = vrot.slane %v3974, %v3977
        %v3979 = vmul.f32 %v3624, %v3978
        %v3980 = vmul.f32 %v3625, %v3978
        %v3981 = vmul.f32 %v3626, %v3978
        %v3982 = vmul.f32 %v3627, %v3978
        %v3983 = vmul.f32 %v3628, %v3978
        %v3984 = vmul.f32 %v3629, %v3978
        %v3985 = vmul.f32 %v3630, %v3978
        %v3986 = vmul.f32 %v3631, %v3978
        %v3987 = vmul.f32 %v3632, %v3978
        %v3988 = vmul.f32 %v3633, %v3978
        %v3989 = vmul.f32 %v3634, %v3978
        %v3990 = vmul.f32 %v3635, %v3978
        %v3991 = vmul.f32 %v3636, %v3978
        %v3992 = vmul.f32 %v3637, %v3978
        %v3993 = vmul.f32 %v3638, %v3978
        %v3994 = vmul.f32 %v3639, %v3978
        %v3995 = vmul.f32 %v3640, %v3978
        %v3996 = vmul.f32 %v3641, %v3978
        %v3997 = vmul.f32 %v3642, %v3978
        %v3998 = vmul.f32 %v3643, %v3978
        %v3999 = vmul.f32 %v3644, %v3978
        %v4000 = vmul.f32 %v3645, %v3978
        %v4001 = vmul.f32 %v3646, %v3978
        %v4002 = vmul.f32 %v3647, %v3978
        %v4003 = vmul.f32 %v3648, %v3978
        %v4004 = vmul.f32 %v3649, %v3978
        %v4005 = vmul.f32 %v3650, %v3978
        %v4006 = vmul.f32 %v3651, %v3978
        %v4007 = vmul.f32 %v3652, %v3978
        %v4008 = vmul.f32 %v3653, %v3978
        %v4009 = vmul.f32 %v3654, %v3978
        %v4010 = vmul.f32 %v3655, %v3978
        %v4011 = vmul.f32 %v3668, %v3978
        %v4012 = vmul.f32 %v3669, %v3978
        %v4013 = vmul.f32 %v3670, %v3978
        %v4014 = vmul.f32 %v3671, %v3978
        %v4015 = vmul.f32 %v3672, %v3978
        %v4016 = vmul.f32 %v3673, %v3978
        %v4017 = vmul.f32 %v3674, %v3978
        %v4018 = vmul.f32 %v3675, %v3978
        %v4019 = vmul.f32 %v3676, %v3978
        %v4020 = vmul.f32 %v3677, %v3978
        %v4021 = vmul.f32 %v3678, %v3978
        %v4022 = vmul.f32 %v3679, %v3978
        %v4023 = vmul.f32 %v3680, %v3978
        %v4024 = vmul.f32 %v3681, %v3978
        %v4025 = vmul.f32 %v3682, %v3978
        %v4026 = vmul.f32 %v3683, %v3978
        %v4027 = vmul.f32 %v3684, %v3978
        %v4028 = vmul.f32 %v3685, %v3978
        %v4029 = vmul.f32 %v3686, %v3978
        %v4030 = vmul.f32 %v3687, %v3978
        %v4031 = vmul.f32 %v3688, %v3978
        %v4032 = vmul.f32 %v3689, %v3978
        %v4033 = vmul.f32 %v3690, %v3978
        %v4034 = vmul.f32 %v3691, %v3978
        %v4035 = vmul.f32 %v3692, %v3978
        %v4036 = vmul.f32 %v3693, %v3978
        %v4037 = vmul.f32 %v3694, %v3978
        %v4038 = vmul.f32 %v3695, %v3978
        %v4039 = vmul.f32 %v3696, %v3978
        %v4040 = vmul.f32 %v3697, %v3978
        %v4041 = vmul.f32 %v3698, %v3978
        %v4042 = vmul.f32 %v3699, %v3978
        %v4043 = vadd.f32 %v3910, %v3979
        %v4044 = vadd.f32 %v3911, %v3980
        %v4045 = vadd.f32 %v3912, %v3981
        %v4046 = vadd.f32 %v3913, %v3982
        %v4047 = vadd.f32 %v3914, %v3983
        %v4048 = vadd.f32 %v3915, %v3984
        %v4049 = vadd.f32 %v3916, %v3985
        %v4050 = vadd.f32 %v3917, %v3986
        %v4051 = vadd.f32 %v3918, %v3987
        %v4052 = vadd.f32 %v3919, %v3988
        %v4053 = vadd.f32 %v3920, %v3989
        %v4054 = vadd.f32 %v3921, %v3990
        %v4055 = vadd.f32 %v3922, %v3991
        %v4056 = vadd.f32 %v3923, %v3992
        %v4057 = vadd.f32 %v3924, %v3993
        %v4058 = vadd.f32 %v3925, %v3994
        %v4059 = vadd.f32 %v3926, %v3995
        %v4060 = vadd.f32 %v3927, %v3996
        %v4061 = vadd.f32 %v3928, %v3997
        %v4062 = vadd.f32 %v3929, %v3998
        %v4063 = vadd.f32 %v3930, %v3999
        %v4064 = vadd.f32 %v3931, %v4000
        %v4065 = vadd.f32 %v3932, %v4001
        %v4066 = vadd.f32 %v3933, %v4002
        %v4067 = vadd.f32 %v3934, %v4003
        %v4068 = vadd.f32 %v3935, %v4004
        %v4069 = vadd.f32 %v3936, %v4005
        %v4070 = vadd.f32 %v3937, %v4006
        %v4071 = vadd.f32 %v3938, %v4007
        %v4072 = vadd.f32 %v3939, %v4008
        %v4073 = vadd.f32 %v3940, %v4009
        %v4074 = vadd.f32 %v3941, %v4010
        %v4075 = vadd.f32 %v3942, %v4011
        %v4076 = vadd.f32 %v3943, %v4012
        %v4077 = vadd.f32 %v3944, %v4013
        %v4078 = vadd.f32 %v3945, %v4014
        %v4079 = vadd.f32 %v3946, %v4015
        %v4080 = vadd.f32 %v3947, %v4016
        %v4081 = vadd.f32 %v3948, %v4017
        %v4082 = vadd.f32 %v3949, %v4018
        %v4083 = vadd.f32 %v3950, %v4019
        %v4084 = vadd.f32 %v3951, %v4020
        %v4085 = vadd.f32 %v3952, %v4021
        %v4086 = vadd.f32 %v3953, %v4022
        %v4087 = vadd.f32 %v3954, %v4023
        %v4088 = vadd.f32 %v3955, %v4024
        %v4089 = vadd.f32 %v3956, %v4025
        %v4090 = vadd.f32 %v3957, %v4026
        %v4091 = vadd.f32 %v3958, %v4027
        %v4092 = vadd.f32 %v3959, %v4028
        %v4093 = vadd.f32 %v3960, %v4029
        %v4094 = vadd.f32 %v3961, %v4030
        %v4095 = vadd.f32 %v3962, %v4031
        %v4096 = vadd.f32 %v3963, %v4032
        %v4097 = vadd.f32 %v3964, %v4033
        %v4098 = vadd.f32 %v3965, %v4034
        %v4099 = vadd.f32 %v3966, %v4035
        %v4100 = vadd.f32 %v3967, %v4036
        %v4101 = vadd.f32 %v3968, %v4037
        %v4102 = vadd.f32 %v3969, %v4038
        %v4103 = vadd.f32 %v3970, %v4039
        %v4104 = vadd.f32 %v3971, %v4040
        %v4105 = vadd.f32 %v3972, %v4041
        %v4106 = vadd.f32 %v3973, %v4042
        %v4107 = vld [vmem:[%s1 + $0x18] sm:$0x1]
        %v4108 = vlaneseq
        %v4109 = vshrl.u32 %v4108, 7
        %v4110 = vsub.s32 0, %v4109
        %v4111 = vrot.slane %v4107, %v4110
        %v4112 = vmul.f32 %v3626, %v4111
        %v4113 = vmul.f32 %v3627, %v4111
        %v4114 = vmul.f32 %v3628, %v4111
        %v4115 = vmul.f32 %v3629, %v4111
        %v4116 = vmul.f32 %v3630, %v4111
        %v4117 = vmul.f32 %v3631, %v4111
        %v4118 = vmul.f32 %v3632, %v4111
        %v4119 = vmul.f32 %v3633, %v4111
        %v4120 = vmul.f32 %v3634, %v4111
        %v4121 = vmul.f32 %v3635, %v4111
        %v4122 = vmul.f32 %v3636, %v4111
        %v4123 = vmul.f32 %v3637, %v4111
        %v4124 = vmul.f32 %v3638, %v4111
        %v4125 = vmul.f32 %v3639, %v4111
        %v4126 = vmul.f32 %v3640, %v4111
        %v4127 = vmul.f32 %v3641, %v4111
        %v4128 = vmul.f32 %v3642, %v4111
        %v4129 = vmul.f32 %v3643, %v4111
        %v4130 = vmul.f32 %v3644, %v4111
        %v4131 = vmul.f32 %v3645, %v4111
        %v4132 = vmul.f32 %v3646, %v4111
        %v4133 = vmul.f32 %v3647, %v4111
        %v4134 = vmul.f32 %v3648, %v4111
        %v4135 = vmul.f32 %v3649, %v4111
        %v4136 = vmul.f32 %v3650, %v4111
        %v4137 = vmul.f32 %v3651, %v4111
        %v4138 = vmul.f32 %v3652, %v4111
        %v4139 = vmul.f32 %v3653, %v4111
        %v4140 = vmul.f32 %v3654, %v4111
        %v4141 = vmul.f32 %v3655, %v4111
        %v4142 = vmul.f32 %v3656, %v4111
        %v4143 = vmul.f32 %v3657, %v4111
        %v4144 = vmul.f32 %v3670, %v4111
        %v4145 = vmul.f32 %v3671, %v4111
        %v4146 = vmul.f32 %v3672, %v4111
        %v4147 = vmul.f32 %v3673, %v4111
        %v4148 = vmul.f32 %v3674, %v4111
        %v4149 = vmul.f32 %v3675, %v4111
        %v4150 = vmul.f32 %v3676, %v4111
        %v4151 = vmul.f32 %v3677, %v4111
        %v4152 = vmul.f32 %v3678, %v4111
        %v4153 = vmul.f32 %v3679, %v4111
        %v4154 = vmul.f32 %v3680, %v4111
        %v4155 = vmul.f32 %v3681, %v4111
        %v4156 = vmul.f32 %v3682, %v4111
        %v4157 = vmul.f32 %v3683, %v4111
        %v4158 = vmul.f32 %v3684, %v4111
        %v4159 = vmul.f32 %v3685, %v4111
        %v4160 = vmul.f32 %v3686, %v4111
        %v4161 = vmul.f32 %v3687, %v4111
        %v4162 = vmul.f32 %v3688, %v4111
        %v4163 = vmul.f32 %v3689, %v4111
        %v4164 = vmul.f32 %v3690, %v4111
        %v4165 = vmul.f32 %v3691, %v4111
        %v4166 = vmul.f32 %v3692, %v4111
        %v4167 = vmul.f32 %v3693, %v4111
        %v4168 = vmul.f32 %v3694, %v4111
        %v4169 = vmul.f32 %v3695, %v4111
        %v4170 = vmul.f32 %v3696, %v4111
        %v4171 = vmul.f32 %v3697, %v4111
        %v4172 = vmul.f32 %v3698, %v4111
        %v4173 = vmul.f32 %v3699, %v4111
        %v4174 = vmul.f32 %v3700, %v4111
        %v4175 = vmul.f32 %v3701, %v4111
        %v4176 = vadd.f32 %v4043, %v4112
        %v4177 = vadd.f32 %v4044, %v4113
        %v4178 = vadd.f32 %v4045, %v4114
        %v4179 = vadd.f32 %v4046, %v4115
        %v4180 = vadd.f32 %v4047, %v4116
        %v4181 = vadd.f32 %v4048, %v4117
        %v4182 = vadd.f32 %v4049, %v4118
        %v4183 = vadd.f32 %v4050, %v4119
        %v4184 = vadd.f32 %v4051, %v4120
        %v4185 = vadd.f32 %v4052, %v4121
        %v4186 = vadd.f32 %v4053, %v4122
        %v4187 = vadd.f32 %v4054, %v4123
        %v4188 = vadd.f32 %v4055, %v4124
        %v4189 = vadd.f32 %v4056, %v4125
        %v4190 = vadd.f32 %v4057, %v4126
        %v4191 = vadd.f32 %v4058, %v4127
        %v4192 = vadd.f32 %v4059, %v4128
        %v4193 = vadd.f32 %v4060, %v4129
        %v4194 = vadd.f32 %v4061, %v4130
        %v4195 = vadd.f32 %v4062, %v4131
        %v4196 = vadd.f32 %v4063, %v4132
        %v4197 = vadd.f32 %v4064, %v4133
        %v4198 = vadd.f32 %v4065, %v4134
        %v4199 = vadd.f32 %v4066, %v4135
        %v4200 = vadd.f32 %v4067, %v4136
        %v4201 = vadd.f32 %v4068, %v4137
        %v4202 = vadd.f32 %v4069, %v4138
        %v4203 = vadd.f32 %v4070, %v4139
        %v4204 = vadd.f32 %v4071, %v4140
        %v4205 = vadd.f32 %v4072, %v4141
        %v4206 = vadd.f32 %v4073, %v4142
        %v4207 = vadd.f32 %v4074, %v4143
        %v4208 = vadd.f32 %v4075, %v4144
        %v4209 = vadd.f32 %v4076, %v4145
        %v4210 = vadd.f32 %v4077, %v4146
        %v4211 = vadd.f32 %v4078, %v4147
        %v4212 = vadd.f32 %v4079, %v4148
        %v4213 = vadd.f32 %v4080, %v4149
        %v4214 = vadd.f32 %v4081, %v4150
        %v4215 = vadd.f32 %v4082, %v4151
        %v4216 = vadd.f32 %v4083, %v4152
        %v4217 = vadd.f32 %v4084, %v4153
        %v4218 = vadd.f32 %v4085, %v4154
        %v4219 = vadd.f32 %v4086, %v4155
        %v4220 = vadd.f32 %v4087, %v4156
        %v4221 = vadd.f32 %v4088, %v4157
        %v4222 = vadd.f32 %v4089, %v4158
        %v4223 = vadd.f32 %v4090, %v4159
        %v4224 = vadd.f32 %v4091, %v4160
        %v4225 = vadd.f32 %v4092, %v4161
        %v4226 = vadd.f32 %v4093, %v4162
        %v4227 = vadd.f32 %v4094, %v4163
        %v4228 = vadd.f32 %v4095, %v4164
        %v4229 = vadd.f32 %v4096, %v4165
        %v4230 = vadd.f32 %v4097, %v4166
        %v4231 = vadd.f32 %v4098, %v4167
        %v4232 = vadd.f32 %v4099, %v4168
        %v4233 = vadd.f32 %v4100, %v4169
        %v4234 = vadd.f32 %v4101, %v4170
        %v4235 = vadd.f32 %v4102, %v4171
        %v4236 = vadd.f32 %v4103, %v4172
        %v4237 = vadd.f32 %v4104, %v4173
        %v4238 = vadd.f32 %v4105, %v4174
        %v4239 = vadd.f32 %v4106, %v4175
        %v4240 = vld [vmem:[%s1 + $0x1f] sm:$0x1]
        %v4241 = vlaneseq
        %v4242 = vshrl.u32 %v4241, 7
        %v4243 = vsub.s32 0, %v4242
        %v4244 = vrot.slane %v4240, %v4243
        %v4245 = vmul.f32 %v3628, %v4244
        %v4246 = vmul.f32 %v3629, %v4244
        %v4247 = vmul.f32 %v3630, %v4244
        %v4248 = vmul.f32 %v3631, %v4244
        %v4249 = vmul.f32 %v3632, %v4244
        %v4250 = vmul.f32 %v3633, %v4244
        %v4251 = vmul.f32 %v3634, %v4244
        %v4252 = vmul.f32 %v3635, %v4244
        %v4253 = vmul.f32 %v3636, %v4244
        %v4254 = vmul.f32 %v3637, %v4244
        %v4255 = vmul.f32 %v3638, %v4244
        %v4256 = vmul.f32 %v3639, %v4244
        %v4257 = vmul.f32 %v3640, %v4244
        %v4258 = vmul.f32 %v3641, %v4244
        %v4259 = vmul.f32 %v3642, %v4244
        %v4260 = vmul.f32 %v3643, %v4244
        %v4261 = vmul.f32 %v3644, %v4244
        %v4262 = vmul.f32 %v3645, %v4244
        %v4263 = vmul.f32 %v3646, %v4244
        %v4264 = vmul.f32 %v3647, %v4244
        %v4265 = vmul.f32 %v3648, %v4244
        %v4266 = vmul.f32 %v3649, %v4244
        %v4267 = vmul.f32 %v3650, %v4244
        %v4268 = vmul.f32 %v3651, %v4244
        %v4269 = vmul.f32 %v3652, %v4244
        %v4270 = vmul.f32 %v3653, %v4244
        %v4271 = vmul.f32 %v3654, %v4244
        %v4272 = vmul.f32 %v3655, %v4244
        %v4273 = vmul.f32 %v3656, %v4244
        %v4274 = vmul.f32 %v3657, %v4244
        %v4275 = vmul.f32 %v3658, %v4244
        %v4276 = vmul.f32 %v3659, %v4244
        %v4277 = vmul.f32 %v3672, %v4244
        %v4278 = vmul.f32 %v3673, %v4244
        %v4279 = vmul.f32 %v3674, %v4244
        %v4280 = vmul.f32 %v3675, %v4244
        %v4281 = vmul.f32 %v3676, %v4244
        %v4282 = vmul.f32 %v3677, %v4244
        %v4283 = vmul.f32 %v3678, %v4244
        %v4284 = vmul.f32 %v3679, %v4244
        %v4285 = vmul.f32 %v3680, %v4244
        %v4286 = vmul.f32 %v3681, %v4244
        %v4287 = vmul.f32 %v3682, %v4244
        %v4288 = vmul.f32 %v3683, %v4244
        %v4289 = vmul.f32 %v3684, %v4244
        %v4290 = vmul.f32 %v3685, %v4244
        %v4291 = vmul.f32 %v3686, %v4244
        %v4292 = vmul.f32 %v3687, %v4244
        %v4293 = vmul.f32 %v3688, %v4244
        %v4294 = vmul.f32 %v3689, %v4244
        %v4295 = vmul.f32 %v3690, %v4244
        %v4296 = vmul.f32 %v3691, %v4244
        %v4297 = vmul.f32 %v3692, %v4244
        %v4298 = vmul.f32 %v3693, %v4244
        %v4299 = vmul.f32 %v3694, %v4244
        %v4300 = vmul.f32 %v3695, %v4244
        %v4301 = vmul.f32 %v3696, %v4244
        %v4302 = vmul.f32 %v3697, %v4244
        %v4303 = vmul.f32 %v3698, %v4244
        %v4304 = vmul.f32 %v3699, %v4244
        %v4305 = vmul.f32 %v3700, %v4244
        %v4306 = vmul.f32 %v3701, %v4244
        %v4307 = vmul.f32 %v3702, %v4244
        %v4308 = vmul.f32 %v3703, %v4244
        %v4309 = vadd.f32 %v4176, %v4245
        %v4310 = vadd.f32 %v4177, %v4246
        %v4311 = vadd.f32 %v4178, %v4247
        %v4312 = vadd.f32 %v4179, %v4248
        %v4313 = vadd.f32 %v4180, %v4249
        %v4314 = vadd.f32 %v4181, %v4250
        %v4315 = vadd.f32 %v4182, %v4251
        %v4316 = vadd.f32 %v4183, %v4252
        %v4317 = vadd.f32 %v4184, %v4253
        %v4318 = vadd.f32 %v4185, %v4254
        %v4319 = vadd.f32 %v4186, %v4255
        %v4320 = vadd.f32 %v4187, %v4256
        %v4321 = vadd.f32 %v4188, %v4257
        %v4322 = vadd.f32 %v4189, %v4258
        %v4323 = vadd.f32 %v4190, %v4259
        %v4324 = vadd.f32 %v4191, %v4260
        %v4325 = vadd.f32 %v4192, %v4261
        %v4326 = vadd.f32 %v4193, %v4262
        %v4327 = vadd.f32 %v4194, %v4263
        %v4328 = vadd.f32 %v4195, %v4264
        %v4329 = vadd.f32 %v4196, %v4265
        %v4330 = vadd.f32 %v4197, %v4266
        %v4331 = vadd.f32 %v4198, %v4267
        %v4332 = vadd.f32 %v4199, %v4268
        %v4333 = vadd.f32 %v4200, %v4269
        %v4334 = vadd.f32 %v4201, %v4270
        %v4335 = vadd.f32 %v4202, %v4271
        %v4336 = vadd.f32 %v4203, %v4272
        %v4337 = vadd.f32 %v4204, %v4273
        %v4338 = vadd.f32 %v4205, %v4274
        %v4339 = vadd.f32 %v4206, %v4275
        %v4340 = vadd.f32 %v4207, %v4276
        %v4341 = vadd.f32 %v4208, %v4277
        %v4342 = vadd.f32 %v4209, %v4278
        %v4343 = vadd.f32 %v4210, %v4279
        %v4344 = vadd.f32 %v4211, %v4280
        %v4345 = vadd.f32 %v4212, %v4281
        %v4346 = vadd.f32 %v4213, %v4282
        %v4347 = vadd.f32 %v4214, %v4283
        %v4348 = vadd.f32 %v4215, %v4284
        %v4349 = vadd.f32 %v4216, %v4285
        %v4350 = vadd.f32 %v4217, %v4286
        %v4351 = vadd.f32 %v4218, %v4287
        %v4352 = vadd.f32 %v4219, %v4288
        %v4353 = vadd.f32 %v4220, %v4289
        %v4354 = vadd.f32 %v4221, %v4290
        %v4355 = vadd.f32 %v4222, %v4291
        %v4356 = vadd.f32 %v4223, %v4292
        %v4357 = vadd.f32 %v4224, %v4293
        %v4358 = vadd.f32 %v4225, %v4294
        %v4359 = vadd.f32 %v4226, %v4295
        %v4360 = vadd.f32 %v4227, %v4296
        %v4361 = vadd.f32 %v4228, %v4297
        %v4362 = vadd.f32 %v4229, %v4298
        %v4363 = vadd.f32 %v4230, %v4299
        %v4364 = vadd.f32 %v4231, %v4300
        %v4365 = vadd.f32 %v4232, %v4301
        %v4366 = vadd.f32 %v4233, %v4302
        %v4367 = vadd.f32 %v4234, %v4303
        %v4368 = vadd.f32 %v4235, %v4304
        %v4369 = vadd.f32 %v4236, %v4305
        %v4370 = vadd.f32 %v4237, %v4306
        %v4371 = vadd.f32 %v4238, %v4307
        %v4372 = vadd.f32 %v4239, %v4308
        %v4373 = vld [vmem:[%s1 + $0x26] sm:$0x1]
        %v4374 = vlaneseq
        %v4375 = vshrl.u32 %v4374, 7
        %v4376 = vsub.s32 0, %v4375
        %v4377 = vrot.slane %v4373, %v4376
        %v4378 = vmul.f32 %v3630, %v4377
        %v4379 = vmul.f32 %v3631, %v4377
        %v4380 = vmul.f32 %v3632, %v4377
        %v4381 = vmul.f32 %v3633, %v4377
        %v4382 = vmul.f32 %v3634, %v4377
        %v4383 = vmul.f32 %v3635, %v4377
        %v4384 = vmul.f32 %v3636, %v4377
        %v4385 = vmul.f32 %v3637, %v4377
        %v4386 = vmul.f32 %v3638, %v4377
        %v4387 = vmul.f32 %v3639, %v4377
        %v4388 = vmul.f32 %v3640, %v4377
        %v4389 = vmul.f32 %v3641, %v4377
        %v4390 = vmul.f32 %v3642, %v4377
        %v4391 = vmul.f32 %v3643, %v4377
        %v4392 = vmul.f32 %v3644, %v4377
        %v4393 = vmul.f32 %v3645, %v4377
        %v4394 = vmul.f32 %v3646, %v4377
        %v4395 = vmul.f32 %v3647, %v4377
        %v4396 = vmul.f32 %v3648, %v4377
        %v4397 = vmul.f32 %v3649, %v4377
        %v4398 = vmul.f32 %v3650, %v4377
        %v4399 = vmul.f32 %v3651, %v4377
        %v4400 = vmul.f32 %v3652, %v4377
        %v4401 = vmul.f32 %v3653, %v4377
        %v4402 = vmul.f32 %v3654, %v4377
        %v4403 = vmul.f32 %v3655, %v4377
        %v4404 = vmul.f32 %v3656, %v4377
        %v4405 = vmul.f32 %v3657, %v4377
        %v4406 = vmul.f32 %v3658, %v4377
        %v4407 = vmul.f32 %v3659, %v4377
        %v4408 = vmul.f32 %v3660, %v4377
        %v4409 = vmul.f32 %v3661, %v4377
        %v4410 = vmul.f32 %v3674, %v4377
        %v4411 = vmul.f32 %v3675, %v4377
        %v4412 = vmul.f32 %v3676, %v4377
        %v4413 = vmul.f32 %v3677, %v4377
        %v4414 = vmul.f32 %v3678, %v4377
        %v4415 = vmul.f32 %v3679, %v4377
        %v4416 = vmul.f32 %v3680, %v4377
        %v4417 = vmul.f32 %v3681, %v4377
        %v4418 = vmul.f32 %v3682, %v4377
        %v4419 = vmul.f32 %v3683, %v4377
        %v4420 = vmul.f32 %v3684, %v4377
        %v4421 = vmul.f32 %v3685, %v4377
        %v4422 = vmul.f32 %v3686, %v4377
        %v4423 = vmul.f32 %v3687, %v4377
        %v4424 = vmul.f32 %v3688, %v4377
        %v4425 = vmul.f32 %v3689, %v4377
        %v4426 = vmul.f32 %v3690, %v4377
        %v4427 = vmul.f32 %v3691, %v4377
        %v4428 = vmul.f32 %v3692, %v4377
        %v4429 = vmul.f32 %v3693, %v4377
        %v4430 = vmul.f32 %v3694, %v4377
        %v4431 = vmul.f32 %v3695, %v4377
        %v4432 = vmul.f32 %v3696, %v4377
        %v4433 = vmul.f32 %v3697, %v4377
        %v4434 = vmul.f32 %v3698, %v4377
        %v4435 = vmul.f32 %v3699, %v4377
        %v4436 = vmul.f32 %v3700, %v4377
        %v4437 = vmul.f32 %v3701, %v4377
        %v4438 = vmul.f32 %v3702, %v4377
        %v4439 = vmul.f32 %v3703, %v4377
        %v4440 = vmul.f32 %v3704, %v4377
        %v4441 = vmul.f32 %v3705, %v4377
        %v4442 = vadd.f32 %v4309, %v4378
        %v4443 = vadd.f32 %v4310, %v4379
        %v4444 = vadd.f32 %v4311, %v4380
        %v4445 = vadd.f32 %v4312, %v4381
        %v4446 = vadd.f32 %v4313, %v4382
        %v4447 = vadd.f32 %v4314, %v4383
        %v4448 = vadd.f32 %v4315, %v4384
        %v4449 = vadd.f32 %v4316, %v4385
        %v4450 = vadd.f32 %v4317, %v4386
        %v4451 = vadd.f32 %v4318, %v4387
        %v4452 = vadd.f32 %v4319, %v4388
        %v4453 = vadd.f32 %v4320, %v4389
        %v4454 = vadd.f32 %v4321, %v4390
        %v4455 = vadd.f32 %v4322, %v4391
        %v4456 = vadd.f32 %v4323, %v4392
        %v4457 = vadd.f32 %v4324, %v4393
        %v4458 = vadd.f32 %v4325, %v4394
        %v4459 = vadd.f32 %v4326, %v4395
        %v4460 = vadd.f32 %v4327, %v4396
        %v4461 = vadd.f32 %v4328, %v4397
        %v4462 = vadd.f32 %v4329, %v4398
        %v4463 = vadd.f32 %v4330, %v4399
        %v4464 = vadd.f32 %v4331, %v4400
        %v4465 = vadd.f32 %v4332, %v4401
        %v4466 = vadd.f32 %v4333, %v4402
        %v4467 = vadd.f32 %v4334, %v4403
        %v4468 = vadd.f32 %v4335, %v4404
        %v4469 = vadd.f32 %v4336, %v4405
        %v4470 = vadd.f32 %v4337, %v4406
        %v4471 = vadd.f32 %v4338, %v4407
        %v4472 = vadd.f32 %v4339, %v4408
        %v4473 = vadd.f32 %v4340, %v4409
        %v4474 = vadd.f32 %v4341, %v4410
        %v4475 = vadd.f32 %v4342, %v4411
        %v4476 = vadd.f32 %v4343, %v4412
        %v4477 = vadd.f32 %v4344, %v4413
        %v4478 = vadd.f32 %v4345, %v4414
        %v4479 = vadd.f32 %v4346, %v4415
        %v4480 = vadd.f32 %v4347, %v4416
        %v4481 = vadd.f32 %v4348, %v4417
        %v4482 = vadd.f32 %v4349, %v4418
        %v4483 = vadd.f32 %v4350, %v4419
        %v4484 = vadd.f32 %v4351, %v4420
        %v4485 = vadd.f32 %v4352, %v4421
        %v4486 = vadd.f32 %v4353, %v4422
        %v4487 = vadd.f32 %v4354, %v4423
        %v4488 = vadd.f32 %v4355, %v4424
        %v4489 = vadd.f32 %v4356, %v4425
        %v4490 = vadd.f32 %v4357, %v4426
        %v4491 = vadd.f32 %v4358, %v4427
        %v4492 = vadd.f32 %v4359, %v4428
        %v4493 = vadd.f32 %v4360, %v4429
        %v4494 = vadd.f32 %v4361, %v4430
        %v4495 = vadd.f32 %v4362, %v4431
        %v4496 = vadd.f32 %v4363, %v4432
        %v4497 = vadd.f32 %v4364, %v4433
        %v4498 = vadd.f32 %v4365, %v4434
        %v4499 = vadd.f32 %v4366, %v4435
        %v4500 = vadd.f32 %v4367, %v4436
        %v4501 = vadd.f32 %v4368, %v4437
        %v4502 = vadd.f32 %v4369, %v4438
        %v4503 = vadd.f32 %v4370, %v4439
        %v4504 = vadd.f32 %v4371, %v4440
        %v4505 = vadd.f32 %v4372, %v4441
        %v4506 = vld [vmem:[%s1 + $0x2d] sm:$0x1]
        %v4507 = vlaneseq
        %v4508 = vshrl.u32 %v4507, 7
        %v4509 = vsub.s32 0, %v4508
        %v4510 = vrot.slane %v4506, %v4509
        %v4511 = vmul.f32 %v3632, %v4510
        %v4512 = vmul.f32 %v3633, %v4510
        %v4513 = vmul.f32 %v3634, %v4510
        %v4514 = vmul.f32 %v3635, %v4510
        %v4515 = vmul.f32 %v3636, %v4510
        %v4516 = vmul.f32 %v3637, %v4510
        %v4517 = vmul.f32 %v3638, %v4510
        %v4518 = vmul.f32 %v3639, %v4510
        %v4519 = vmul.f32 %v3640, %v4510
        %v4520 = vmul.f32 %v3641, %v4510
        %v4521 = vmul.f32 %v3642, %v4510
        %v4522 = vmul.f32 %v3643, %v4510
        %v4523 = vmul.f32 %v3644, %v4510
        %v4524 = vmul.f32 %v3645, %v4510
        %v4525 = vmul.f32 %v3646, %v4510
        %v4526 = vmul.f32 %v3647, %v4510
        %v4527 = vmul.f32 %v3648, %v4510
        %v4528 = vmul.f32 %v3649, %v4510
        %v4529 = vmul.f32 %v3650, %v4510
        %v4530 = vmul.f32 %v3651, %v4510
        %v4531 = vmul.f32 %v3652, %v4510
        %v4532 = vmul.f32 %v3653, %v4510
        %v4533 = vmul.f32 %v3654, %v4510
        %v4534 = vmul.f32 %v3655, %v4510
        %v4535 = vmul.f32 %v3656, %v4510
        %v4536 = vmul.f32 %v3657, %v4510
        %v4537 = vmul.f32 %v3658, %v4510
        %v4538 = vmul.f32 %v3659, %v4510
        %v4539 = vmul.f32 %v3660, %v4510
        %v4540 = vmul.f32 %v3661, %v4510
        %v4541 = vmul.f32 %v3662, %v4510
        %v4542 = vmul.f32 %v3663, %v4510
        %v4543 = vmul.f32 %v3676, %v4510
        %v4544 = vmul.f32 %v3677, %v4510
        %v4545 = vmul.f32 %v3678, %v4510
        %v4546 = vmul.f32 %v3679, %v4510
        %v4547 = vmul.f32 %v3680, %v4510
        %v4548 = vmul.f32 %v3681, %v4510
        %v4549 = vmul.f32 %v3682, %v4510
        %v4550 = vmul.f32 %v3683, %v4510
        %v4551 = vmul.f32 %v3684, %v4510
        %v4552 = vmul.f32 %v3685, %v4510
        %v4553 = vmul.f32 %v3686, %v4510
        %v4554 = vmul.f32 %v3687, %v4510
        %v4555 = vmul.f32 %v3688, %v4510
        %v4556 = vmul.f32 %v3689, %v4510
        %v4557 = vmul.f32 %v3690, %v4510
        %v4558 = vmul.f32 %v3691, %v4510
        %v4559 = vmul.f32 %v3692, %v4510
        %v4560 = vmul.f32 %v3693, %v4510
        %v4561 = vmul.f32 %v3694, %v4510
        %v4562 = vmul.f32 %v3695, %v4510
        %v4563 = vmul.f32 %v3696, %v4510
        %v4564 = vmul.f32 %v3697, %v4510
        %v4565 = vmul.f32 %v3698, %v4510
        %v4566 = vmul.f32 %v3699, %v4510
        %v4567 = vmul.f32 %v3700, %v4510
        %v4568 = vmul.f32 %v3701, %v4510
        %v4569 = vmul.f32 %v3702, %v4510
        %v4570 = vmul.f32 %v3703, %v4510
        %v4571 = vmul.f32 %v3704, %v4510
        %v4572 = vmul.f32 %v3705, %v4510
        %v4573 = vmul.f32 %v3706, %v4510
        %v4574 = vmul.f32 %v3707, %v4510
        %v4575 = vadd.f32 %v4442, %v4511
        %v4576 = vadd.f32 %v4443, %v4512
        %v4577 = vadd.f32 %v4444, %v4513
        %v4578 = vadd.f32 %v4445, %v4514
        %v4579 = vadd.f32 %v4446, %v4515
        %v4580 = vadd.f32 %v4447, %v4516
        %v4581 = vadd.f32 %v4448, %v4517
        %v4582 = vadd.f32 %v4449, %v4518
        %v4583 = vadd.f32 %v4450, %v4519
        %v4584 = vadd.f32 %v4451, %v4520
        %v4585 = vadd.f32 %v4452, %v4521
        %v4586 = vadd.f32 %v4453, %v4522
        %v4587 = vadd.f32 %v4454, %v4523
        %v4588 = vadd.f32 %v4455, %v4524
        %v4589 = vadd.f32 %v4456, %v4525
        %v4590 = vadd.f32 %v4457, %v4526
        %v4591 = vadd.f32 %v4458, %v4527
        %v4592 = vadd.f32 %v4459, %v4528
        %v4593 = vadd.f32 %v4460, %v4529
        %v4594 = vadd.f32 %v4461, %v4530
        %v4595 = vadd.f32 %v4462, %v4531
        %v4596 = vadd.f32 %v4463, %v4532
        %v4597 = vadd.f32 %v4464, %v4533
        %v4598 = vadd.f32 %v4465, %v4534
        %v4599 = vadd.f32 %v4466, %v4535
        %v4600 = vadd.f32 %v4467, %v4536
        %v4601 = vadd.f32 %v4468, %v4537
        %v4602 = vadd.f32 %v4469, %v4538
        %v4603 = vadd.f32 %v4470, %v4539
        %v4604 = vadd.f32 %v4471, %v4540
        %v4605 = vadd.f32 %v4472, %v4541
        %v4606 = vadd.f32 %v4473, %v4542
        %v4607 = vadd.f32 %v4474, %v4543
        %v4608 = vadd.f32 %v4475, %v4544
        %v4609 = vadd.f32 %v4476, %v4545
        %v4610 = vadd.f32 %v4477, %v4546
        %v4611 = vadd.f32 %v4478, %v4547
        %v4612 = vadd.f32 %v4479, %v4548
        %v4613 = vadd.f32 %v4480, %v4549
        %v4614 = vadd.f32 %v4481, %v4550
        %v4615 = vadd.f32 %v4482, %v4551
        %v4616 = vadd.f32 %v4483, %v4552
        %v4617 = vadd.f32 %v4484, %v4553
        %v4618 = vadd.f32 %v4485, %v4554
        %v4619 = vadd.f32 %v4486, %v4555
        %v4620 = vadd.f32 %v4487, %v4556
        %v4621 = vadd.f32 %v4488, %v4557
        %v4622 = vadd.f32 %v4489, %v4558
        %v4623 = vadd.f32 %v4490, %v4559
        %v4624 = vadd.f32 %v4491, %v4560
        %v4625 = vadd.f32 %v4492, %v4561
        %v4626 = vadd.f32 %v4493, %v4562
        %v4627 = vadd.f32 %v4494, %v4563
        %v4628 = vadd.f32 %v4495, %v4564
        %v4629 = vadd.f32 %v4496, %v4565
        %v4630 = vadd.f32 %v4497, %v4566
        %v4631 = vadd.f32 %v4498, %v4567
        %v4632 = vadd.f32 %v4499, %v4568
        %v4633 = vadd.f32 %v4500, %v4569
        %v4634 = vadd.f32 %v4501, %v4570
        %v4635 = vadd.f32 %v4502, %v4571
        %v4636 = vadd.f32 %v4503, %v4572
        %v4637 = vadd.f32 %v4504, %v4573
        %v4638 = vadd.f32 %v4505, %v4574
        %v4639 = vld [vmem:[#allocation2 + $0x4] sm:$0xff]
        %v4640 = vld [vmem:[#allocation2 + $0xc] sm:$0xff]
        %v4641 = vld [vmem:[#allocation2 + $0x1c] sm:$0xff]
        %v4642 = vld [vmem:[#allocation2 + $0x24] sm:$0xff]
        %v4643 = vld [vmem:[#allocation2 + $0x34] sm:$0xff]
        %v4644 = vld [vmem:[#allocation2 + $0x3c] sm:$0xff]
        %v4645 = vld [vmem:[#allocation2 + $0x4c] sm:$0xff]
        %v4646 = vld [vmem:[#allocation2 + $0x54] sm:$0xff]
        %v4647 = vld [vmem:[#allocation2 + $0x64] sm:$0xff]
        %v4648 = vld [vmem:[#allocation2 + $0x6c] sm:$0xff]
        %v4649 = vld [vmem:[#allocation2 + $0x7c] sm:$0xff]
        %v4650 = vld [vmem:[#allocation2 + $0x84] sm:$0xff]
        %v4651 = vld [vmem:[#allocation2 + $0x94] sm:$0xff]
        %v4652 = vld [vmem:[#allocation2 + $0x9c] sm:$0xff]
        %v4653 = vld [vmem:[#allocation2 + $0xac] sm:$0xff]
        %v4654 = vld [vmem:[#allocation2 + $0xb4] sm:$0xff]
        %v4655 = vld [vmem:[#allocation2 + $0xc4] sm:$0xff]
        %v4656 = vld [vmem:[#allocation2 + $0xcc] sm:$0xff]
        %v4657 = vld [vmem:[#allocation2 + $0xdc] sm:$0xff]
        %v4658 = vld [vmem:[#allocation2 + $0xe4] sm:$0xff]
        %v4659 = vld [vmem:[#allocation2 + $0xf4] sm:$0xff]
        %v4660 = vld [vmem:[#allocation2 + $0xfc] sm:$0xff]
        %v4661 = vld [vmem:[#allocation2 + $0x10c] sm:$0xff]
        %v4662 = vld [vmem:[#allocation2 + $0x114] sm:$0xff]
        %v4663 = vld [vmem:[#allocation2 + $0x124] sm:$0xff]
        %v4664 = vld [vmem:[#allocation2 + $0x12c] sm:$0xff]
        %v4665 = vld [vmem:[#allocation2 + $0x13c] sm:$0xff]
        %v4666 = vld [vmem:[#allocation2 + $0x144] sm:$0xff]
        %v4667 = vld [vmem:[#allocation2 + $0x154] sm:$0xff]
        %v4668 = vld [vmem:[#allocation2 + $0x15c] sm:$0xff]
        %v4669 = vld [vmem:[#allocation2 + $0x16c] sm:$0xff]
        %v4670 = vld [vmem:[#allocation2 + $0x174] sm:$0xff]
        %v4671 = vld [vmem:[#allocation2 + $0x184] sm:$0xff]
        %v4672 = vld [vmem:[#allocation2 + $0x18c] sm:$0xff]
        %v4673 = vld [vmem:[#allocation2 + $0x19c] sm:$0xff]
        %v4674 = vld [vmem:[#allocation2 + $0x1a4] sm:$0xff]
        %v4675 = vld [vmem:[#allocation2 + $0x1b4] sm:$0xff]
        %v4676 = vld [vmem:[#allocation2 + $0x1bc] sm:$0xff]
        %v4677 = vld [vmem:[#allocation2 + $0x1cc] sm:$0xff]
        %v4678 = vld [vmem:[#allocation2 + $0x1d4] sm:$0xff]
        %v4679 = vld [vmem:[#allocation2 + $0x1e4] sm:$0xff]
        %v4680 = vld [vmem:[#allocation2 + $0x1ec] sm:$0xff]
        %v4681 = vld [vmem:[#allocation2 + $0x1fc] sm:$0xff]
        %v4682 = vld [vmem:[#allocation2 + $0x204] sm:$0xff]
        %v4683 = vld [vmem:[#allocation2 + $0x214] sm:$0xff]
        %v4684 = vld [vmem:[#allocation2 + $0x21c] sm:$0xff]
        %v4685 = vld [vmem:[#allocation2 + $0x22c] sm:$0xff]
        %v4686 = vld [vmem:[#allocation2 + $0x234] sm:$0xff]
        %v4687 = vld [vmem:[#allocation2 + $0x244] sm:$0xff]
        %v4688 = vld [vmem:[#allocation2 + $0x24c] sm:$0xff]
        %v4689 = vld [vmem:[#allocation2 + $0x25c] sm:$0xff]
        %v4690 = vld [vmem:[#allocation2 + $0x264] sm:$0xff]
        %v4691 = vld [vmem:[#allocation2 + $0x274] sm:$0xff]
        %v4692 = vld [vmem:[#allocation2 + $0x27c] sm:$0xff]
        %v4693 = vld [vmem:[#allocation2 + $0x28c] sm:$0xff]
        %v4694 = vld [vmem:[#allocation2 + $0x294] sm:$0xff]
        %v4695 = vld [vmem:[#allocation2 + $0x2a4] sm:$0xff]
        %v4696 = vld [vmem:[#allocation2 + $0x2ac] sm:$0xff]
        %v4697 = vld [vmem:[#allocation2 + $0x2bc] sm:$0xff]
        %v4698 = vld [vmem:[#allocation2 + $0x2c4] sm:$0xff]
        %v4699 = vld [vmem:[#allocation2 + $0x2d4] sm:$0xff]
        %v4700 = vld [vmem:[#allocation2 + $0x2dc] sm:$0xff]
        %v4701 = vld [vmem:[#allocation2 + $0x2ec] sm:$0xff]
        %v4702 = vld [vmem:[#allocation2 + $0x2f4] sm:$0xff]
        %v4703 = vld [vmem:[#allocation2 + $0x304] sm:$0xff]
        %v4704 = vld [vmem:[#allocation2 + $0x30c] sm:$0xff]
        %v4705 = vld [vmem:[#allocation2 + $0x31c] sm:$0xff]
        %v4706 = vld [vmem:[#allocation2 + $0x324] sm:$0xff]
        %v4707 = vld [vmem:[#allocation2 + $0x334] sm:$0xff]
        %v4708 = vld [vmem:[#allocation2 + $0x33c] sm:$0xff]
        %v4709 = vld [vmem:[#allocation2 + $0x34c] sm:$0xff]
        %v4710 = vld [vmem:[#allocation2 + $0x354] sm:$0xff]
        %v4711 = vld [vmem:[#allocation2 + $0x364] sm:$0xff]
        %v4712 = vld [vmem:[#allocation2 + $0x36c] sm:$0xff]
        %v4713 = vld [vmem:[#allocation2 + $0x37c] sm:$0xff]
        %v4714 = vld [vmem:[#allocation2 + $0x384] sm:$0xff]
        %v4715 = vld [vmem:[#allocation2 + $0x394] sm:$0xff]
        %v4716 = vld [vmem:[#allocation2 + $0x39c] sm:$0xff]
        %v4717 = vld [vmem:[#allocation2 + $0x3ac] sm:$0xff]
        %v4718 = vld [vmem:[#allocation2 + $0x3b4] sm:$0xff]
        %v4719 = vld [vmem:[#allocation2 + $0x3c4] sm:$0xff]
        %v4720 = vld [vmem:[#allocation2 + $0x3cc] sm:$0xff]
        %v4721 = vld [vmem:[#allocation2 + $0x3dc] sm:$0xff]
        %v4722 = vld [vmem:[#allocation2 + $0x3e4] sm:$0xff]
        %v4723 = vld [vmem:[#allocation2 + $0x3f4] sm:$0xff]
        %v4724 = vld [vmem:[#allocation2 + $0x3fc] sm:$0xff]
        %v4725 = vld [vmem:[#allocation2 + $0x40c] sm:$0xff]
        %v4726 = vld [vmem:[#allocation2 + $0x414] sm:$0xff]
        %v4727 = vld [vmem:[%s1 + $0x4] sm:$0x1]
        %v4728 = vlaneseq
        %v4729 = vshrl.u32 %v4728, 7
        %v4730 = vsub.s32 0, %v4729
        %v4731 = vrot.slane %v4727, %v4730
        %v4732 = vmul.f32 %v4639, %v4731
        %v4733 = vmul.f32 %v4640, %v4731
        %v4734 = vmul.f32 %v4641, %v4731
        %v4735 = vmul.f32 %v4642, %v4731
        %v4736 = vmul.f32 %v4643, %v4731
        %v4737 = vmul.f32 %v4644, %v4731
        %v4738 = vmul.f32 %v4645, %v4731
        %v4739 = vmul.f32 %v4646, %v4731
        %v4740 = vmul.f32 %v4647, %v4731
        %v4741 = vmul.f32 %v4648, %v4731
        %v4742 = vmul.f32 %v4649, %v4731
        %v4743 = vmul.f32 %v4650, %v4731
        %v4744 = vmul.f32 %v4651, %v4731
        %v4745 = vmul.f32 %v4652, %v4731
        %v4746 = vmul.f32 %v4653, %v4731
        %v4747 = vmul.f32 %v4654, %v4731
        %v4748 = vmul.f32 %v4655, %v4731
        %v4749 = vmul.f32 %v4656, %v4731
        %v4750 = vmul.f32 %v4657, %v4731
        %v4751 = vmul.f32 %v4658, %v4731
        %v4752 = vmul.f32 %v4659, %v4731
        %v4753 = vmul.f32 %v4660, %v4731
        %v4754 = vmul.f32 %v4661, %v4731
        %v4755 = vmul.f32 %v4662, %v4731
        %v4756 = vmul.f32 %v4663, %v4731
        %v4757 = vmul.f32 %v4664, %v4731
        %v4758 = vmul.f32 %v4665, %v4731
        %v4759 = vmul.f32 %v4666, %v4731
        %v4760 = vmul.f32 %v4667, %v4731
        %v4761 = vmul.f32 %v4668, %v4731
        %v4762 = vmul.f32 %v4669, %v4731
        %v4763 = vmul.f32 %v4670, %v4731
        %v4764 = vmul.f32 %v4683, %v4731
        %v4765 = vmul.f32 %v4684, %v4731
        %v4766 = vmul.f32 %v4685, %v4731
        %v4767 = vmul.f32 %v4686, %v4731
        %v4768 = vmul.f32 %v4687, %v4731
        %v4769 = vmul.f32 %v4688, %v4731
        %v4770 = vmul.f32 %v4689, %v4731
        %v4771 = vmul.f32 %v4690, %v4731
        %v4772 = vmul.f32 %v4691, %v4731
        %v4773 = vmul.f32 %v4692, %v4731
        %v4774 = vmul.f32 %v4693, %v4731
        %v4775 = vmul.f32 %v4694, %v4731
        %v4776 = vmul.f32 %v4695, %v4731
        %v4777 = vmul.f32 %v4696, %v4731
        %v4778 = vmul.f32 %v4697, %v4731
        %v4779 = vmul.f32 %v4698, %v4731
        %v4780 = vmul.f32 %v4699, %v4731
        %v4781 = vmul.f32 %v4700, %v4731
        %v4782 = vmul.f32 %v4701, %v4731
        %v4783 = vmul.f32 %v4702, %v4731
        %v4784 = vmul.f32 %v4703, %v4731
        %v4785 = vmul.f32 %v4704, %v4731
        %v4786 = vmul.f32 %v4705, %v4731
        %v4787 = vmul.f32 %v4706, %v4731
        %v4788 = vmul.f32 %v4707, %v4731
        %v4789 = vmul.f32 %v4708, %v4731
        %v4790 = vmul.f32 %v4709, %v4731
        %v4791 = vmul.f32 %v4710, %v4731
        %v4792 = vmul.f32 %v4711, %v4731
        %v4793 = vmul.f32 %v4712, %v4731
        %v4794 = vmul.f32 %v4713, %v4731
        %v4795 = vmul.f32 %v4714, %v4731
        %v4796 = vadd.f32 %v4575, %v4732
        %v4797 = vadd.f32 %v4576, %v4733
        %v4798 = vadd.f32 %v4577, %v4734
        %v4799 = vadd.f32 %v4578, %v4735
        %v4800 = vadd.f32 %v4579, %v4736
        %v4801 = vadd.f32 %v4580, %v4737
        %v4802 = vadd.f32 %v4581, %v4738
        %v4803 = vadd.f32 %v4582, %v4739
        %v4804 = vadd.f32 %v4583, %v4740
        %v4805 = vadd.f32 %v4584, %v4741
        %v4806 = vadd.f32 %v4585, %v4742
        %v4807 = vadd.f32 %v4586, %v4743
        %v4808 = vadd.f32 %v4587, %v4744
        %v4809 = vadd.f32 %v4588, %v4745
        %v4810 = vadd.f32 %v4589, %v4746
        %v4811 = vadd.f32 %v4590, %v4747
        %v4812 = vadd.f32 %v4591, %v4748
        %v4813 = vadd.f32 %v4592, %v4749
        %v4814 = vadd.f32 %v4593, %v4750
        %v4815 = vadd.f32 %v4594, %v4751
        %v4816 = vadd.f32 %v4595, %v4752
        %v4817 = vadd.f32 %v4596, %v4753
        %v4818 = vadd.f32 %v4597, %v4754
        %v4819 = vadd.f32 %v4598, %v4755
        %v4820 = vadd.f32 %v4599, %v4756
        %v4821 = vadd.f32 %v4600, %v4757
        %v4822 = vadd.f32 %v4601, %v4758
        %v4823 = vadd.f32 %v4602, %v4759
        %v4824 = vadd.f32 %v4603, %v4760
        %v4825 = vadd.f32 %v4604, %v4761
        %v4826 = vadd.f32 %v4605, %v4762
        %v4827 = vadd.f32 %v4606, %v4763
        %v4828 = vadd.f32 %v4607, %v4764
        %v4829 = vadd.f32 %v4608, %v4765
        %v4830 = vadd.f32 %v4609, %v4766
        %v4831 = vadd.f32 %v4610, %v4767
        %v4832 = vadd.f32 %v4611, %v4768
        %v4833 = vadd.f32 %v4612, %v4769
        %v4834 = vadd.f32 %v4613, %v4770
        %v4835 = vadd.f32 %v4614, %v4771
        %v4836 = vadd.f32 %v4615, %v4772
        %v4837 = vadd.f32 %v4616, %v4773
        %v4838 = vadd.f32 %v4617, %v4774
        %v4839 = vadd.f32 %v4618, %v4775
        %v4840 = vadd.f32 %v4619, %v4776
        %v4841 = vadd.f32 %v4620, %v4777
        %v4842 = vadd.f32 %v4621, %v4778
        %v4843 = vadd.f32 %v4622, %v4779
        %v4844 = vadd.f32 %v4623, %v4780
        %v4845 = vadd.f32 %v4624, %v4781
        %v4846 = vadd.f32 %v4625, %v4782
        %v4847 = vadd.f32 %v4626, %v4783
        %v4848 = vadd.f32 %v4627, %v4784
        %v4849 = vadd.f32 %v4628, %v4785
        %v4850 = vadd.f32 %v4629, %v4786
        %v4851 = vadd.f32 %v4630, %v4787
        %v4852 = vadd.f32 %v4631, %v4788
        %v4853 = vadd.f32 %v4632, %v4789
        %v4854 = vadd.f32 %v4633, %v4790
        %v4855 = vadd.f32 %v4634, %v4791
        %v4856 = vadd.f32 %v4635, %v4792
        %v4857 = vadd.f32 %v4636, %v4793
        %v4858 = vadd.f32 %v4637, %v4794
        %v4859 = vadd.f32 %v4638, %v4795
        %v4860 = vld [vmem:[%s1 + $0xb] sm:$0x1]
        %v4861 = vlaneseq
        %v4862 = vshrl.u32 %v4861, 7
        %v4863 = vsub.s32 0, %v4862
        %v4864 = vrot.slane %v4860, %v4863
        %v4865 = vmul.f32 %v4641, %v4864
        %v4866 = vmul.f32 %v4642, %v4864
        %v4867 = vmul.f32 %v4643, %v4864
        %v4868 = vmul.f32 %v4644, %v4864
        %v4869 = vmul.f32 %v4645, %v4864
        %v4870 = vmul.f32 %v4646, %v4864
        %v4871 = vmul.f32 %v4647, %v4864
        %v4872 = vmul.f32 %v4648, %v4864
        %v4873 = vmul.f32 %v4649, %v4864
        %v4874 = vmul.f32 %v4650, %v4864
        %v4875 = vmul.f32 %v4651, %v4864
        %v4876 = vmul.f32 %v4652, %v4864
        %v4877 = vmul.f32 %v4653, %v4864
        %v4878 = vmul.f32 %v4654, %v4864
        %v4879 = vmul.f32 %v4655, %v4864
        %v4880 = vmul.f32 %v4656, %v4864
        %v4881 = vmul.f32 %v4657, %v4864
        %v4882 = vmul.f32 %v4658, %v4864
        %v4883 = vmul.f32 %v4659, %v4864
        %v4884 = vmul.f32 %v4660, %v4864
        %v4885 = vmul.f32 %v4661, %v4864
        %v4886 = vmul.f32 %v4662, %v4864
        %v4887 = vmul.f32 %v4663, %v4864
        %v4888 = vmul.f32 %v4664, %v4864
        %v4889 = vmul.f32 %v4665, %v4864
        %v4890 = vmul.f32 %v4666, %v4864
        %v4891 = vmul.f32 %v4667, %v4864
        %v4892 = vmul.f32 %v4668, %v4864
        %v4893 = vmul.f32 %v4669, %v4864
        %v4894 = vmul.f32 %v4670, %v4864
        %v4895 = vmul.f32 %v4671, %v4864
        %v4896 = vmul.f32 %v4672, %v4864
        %v4897 = vmul.f32 %v4685, %v4864
        %v4898 = vmul.f32 %v4686, %v4864
        %v4899 = vmul.f32 %v4687, %v4864
        %v4900 = vmul.f32 %v4688, %v4864
        %v4901 = vmul.f32 %v4689, %v4864
        %v4902 = vmul.f32 %v4690, %v4864
        %v4903 = vmul.f32 %v4691, %v4864
        %v4904 = vmul.f32 %v4692, %v4864
        %v4905 = vmul.f32 %v4693, %v4864
        %v4906 = vmul.f32 %v4694, %v4864
        %v4907 = vmul.f32 %v4695, %v4864
        %v4908 = vmul.f32 %v4696, %v4864
        %v4909 = vmul.f32 %v4697, %v4864
        %v4910 = vmul.f32 %v4698, %v4864
        %v4911 = vmul.f32 %v4699, %v4864
        %v4912 = vmul.f32 %v4700, %v4864
        %v4913 = vmul.f32 %v4701, %v4864
        %v4914 = vmul.f32 %v4702, %v4864
        %v4915 = vmul.f32 %v4703, %v4864
        %v4916 = vmul.f32 %v4704, %v4864
        %v4917 = vmul.f32 %v4705, %v4864
        %v4918 = vmul.f32 %v4706, %v4864
        %v4919 = vmul.f32 %v4707, %v4864
        %v4920 = vmul.f32 %v4708, %v4864
        %v4921 = vmul.f32 %v4709, %v4864
        %v4922 = vmul.f32 %v4710, %v4864
        %v4923 = vmul.f32 %v4711, %v4864
        %v4924 = vmul.f32 %v4712, %v4864
        %v4925 = vmul.f32 %v4713, %v4864
        %v4926 = vmul.f32 %v4714, %v4864
        %v4927 = vmul.f32 %v4715, %v4864
        %v4928 = vmul.f32 %v4716, %v4864
        %v4929 = vadd.f32 %v4796, %v4865
        %v4930 = vadd.f32 %v4797, %v4866
        %v4931 = vadd.f32 %v4798, %v4867
        %v4932 = vadd.f32 %v4799, %v4868
        %v4933 = vadd.f32 %v4800, %v4869
        %v4934 = vadd.f32 %v4801, %v4870
        %v4935 = vadd.f32 %v4802, %v4871
        %v4936 = vadd.f32 %v4803, %v4872
        %v4937 = vadd.f32 %v4804, %v4873
        %v4938 = vadd.f32 %v4805, %v4874
        %v4939 = vadd.f32 %v4806, %v4875
        %v4940 = vadd.f32 %v4807, %v4876
        %v4941 = vadd.f32 %v4808, %v4877
        %v4942 = vadd.f32 %v4809, %v4878
        %v4943 = vadd.f32 %v4810, %v4879
        %v4944 = vadd.f32 %v4811, %v4880
        %v4945 = vadd.f32 %v4812, %v4881
        %v4946 = vadd.f32 %v4813, %v4882
        %v4947 = vadd.f32 %v4814, %v4883
        %v4948 = vadd.f32 %v4815, %v4884
        %v4949 = vadd.f32 %v4816, %v4885
        %v4950 = vadd.f32 %v4817, %v4886
        %v4951 = vadd.f32 %v4818, %v4887
        %v4952 = vadd.f32 %v4819, %v4888
        %v4953 = vadd.f32 %v4820, %v4889
        %v4954 = vadd.f32 %v4821, %v4890
        %v4955 = vadd.f32 %v4822, %v4891
        %v4956 = vadd.f32 %v4823, %v4892
        %v4957 = vadd.f32 %v4824, %v4893
        %v4958 = vadd.f32 %v4825, %v4894
        %v4959 = vadd.f32 %v4826, %v4895
        %v4960 = vadd.f32 %v4827, %v4896
        %v4961 = vadd.f32 %v4828, %v4897
        %v4962 = vadd.f32 %v4829, %v4898
        %v4963 = vadd.f32 %v4830, %v4899
        %v4964 = vadd.f32 %v4831, %v4900
        %v4965 = vadd.f32 %v4832, %v4901
        %v4966 = vadd.f32 %v4833, %v4902
        %v4967 = vadd.f32 %v4834, %v4903
        %v4968 = vadd.f32 %v4835, %v4904
        %v4969 = vadd.f32 %v4836, %v4905
        %v4970 = vadd.f32 %v4837, %v4906
        %v4971 = vadd.f32 %v4838, %v4907
        %v4972 = vadd.f32 %v4839, %v4908
        %v4973 = vadd.f32 %v4840, %v4909
        %v4974 = vadd.f32 %v4841, %v4910
        %v4975 = vadd.f32 %v4842, %v4911
        %v4976 = vadd.f32 %v4843, %v4912
        %v4977 = vadd.f32 %v4844, %v4913
        %v4978 = vadd.f32 %v4845, %v4914
        %v4979 = vadd.f32 %v4846, %v4915
        %v4980 = vadd.f32 %v4847, %v4916
        %v4981 = vadd.f32 %v4848, %v4917
        %v4982 = vadd.f32 %v4849, %v4918
        %v4983 = vadd.f32 %v4850, %v4919
        %v4984 = vadd.f32 %v4851, %v4920
        %v4985 = vadd.f32 %v4852, %v4921
        %v4986 = vadd.f32 %v4853, %v4922
        %v4987 = vadd.f32 %v4854, %v4923
        %v4988 = vadd.f32 %v4855, %v4924
        %v4989 = vadd.f32 %v4856, %v4925
        %v4990 = vadd.f32 %v4857, %v4926
        %v4991 = vadd.f32 %v4858, %v4927
        %v4992 = vadd.f32 %v4859, %v4928
        %v4993 = vld [vmem:[%s1 + $0x12] sm:$0x1]
        %v4994 = vlaneseq
        %v4995 = vshrl.u32 %v4994, 7
        %v4996 = vsub.s32 0, %v4995
        %v4997 = vrot.slane %v4993, %v4996
        %v4998 = vmul.f32 %v4643, %v4997
        %v4999 = vmul.f32 %v4644, %v4997
        %v5000 = vmul.f32 %v4645, %v4997
        %v5001 = vmul.f32 %v4646, %v4997
        %v5002 = vmul.f32 %v4647, %v4997
        %v5003 = vmul.f32 %v4648, %v4997
        %v5004 = vmul.f32 %v4649, %v4997
        %v5005 = vmul.f32 %v4650, %v4997
        %v5006 = vmul.f32 %v4651, %v4997
        %v5007 = vmul.f32 %v4652, %v4997
        %v5008 = vmul.f32 %v4653, %v4997
        %v5009 = vmul.f32 %v4654, %v4997
        %v5010 = vmul.f32 %v4655, %v4997
        %v5011 = vmul.f32 %v4656, %v4997
        %v5012 = vmul.f32 %v4657, %v4997
        %v5013 = vmul.f32 %v4658, %v4997
        %v5014 = vmul.f32 %v4659, %v4997
        %v5015 = vmul.f32 %v4660, %v4997
        %v5016 = vmul.f32 %v4661, %v4997
        %v5017 = vmul.f32 %v4662, %v4997
        %v5018 = vmul.f32 %v4663, %v4997
        %v5019 = vmul.f32 %v4664, %v4997
        %v5020 = vmul.f32 %v4665, %v4997
        %v5021 = vmul.f32 %v4666, %v4997
        %v5022 = vmul.f32 %v4667, %v4997
        %v5023 = vmul.f32 %v4668, %v4997
        %v5024 = vmul.f32 %v4669, %v4997
        %v5025 = vmul.f32 %v4670, %v4997
        %v5026 = vmul.f32 %v4671, %v4997
        %v5027 = vmul.f32 %v4672, %v4997
        %v5028 = vmul.f32 %v4673, %v4997
        %v5029 = vmul.f32 %v4674, %v4997
        %v5030 = vmul.f32 %v4687, %v4997
        %v5031 = vmul.f32 %v4688, %v4997
        %v5032 = vmul.f32 %v4689, %v4997
        %v5033 = vmul.f32 %v4690, %v4997
        %v5034 = vmul.f32 %v4691, %v4997
        %v5035 = vmul.f32 %v4692, %v4997
        %v5036 = vmul.f32 %v4693, %v4997
        %v5037 = vmul.f32 %v4694, %v4997
        %v5038 = vmul.f32 %v4695, %v4997
        %v5039 = vmul.f32 %v4696, %v4997
        %v5040 = vmul.f32 %v4697, %v4997
        %v5041 = vmul.f32 %v4698, %v4997
        %v5042 = vmul.f32 %v4699, %v4997
        %v5043 = vmul.f32 %v4700, %v4997
        %v5044 = vmul.f32 %v4701, %v4997
        %v5045 = vmul.f32 %v4702, %v4997
        %v5046 = vmul.f32 %v4703, %v4997
        %v5047 = vmul.f32 %v4704, %v4997
        %v5048 = vmul.f32 %v4705, %v4997
        %v5049 = vmul.f32 %v4706, %v4997
        %v5050 = vmul.f32 %v4707, %v4997
        %v5051 = vmul.f32 %v4708, %v4997
        %v5052 = vmul.f32 %v4709, %v4997
        %v5053 = vmul.f32 %v4710, %v4997
        %v5054 = vmul.f32 %v4711, %v4997
        %v5055 = vmul.f32 %v4712, %v4997
        %v5056 = vmul.f32 %v4713, %v4997
        %v5057 = vmul.f32 %v4714, %v4997
        %v5058 = vmul.f32 %v4715, %v4997
        %v5059 = vmul.f32 %v4716, %v4997
        %v5060 = vmul.f32 %v4717, %v4997
        %v5061 = vmul.f32 %v4718, %v4997
        %v5062 = vadd.f32 %v4929, %v4998
        %v5063 = vadd.f32 %v4930, %v4999
        %v5064 = vadd.f32 %v4931, %v5000
        %v5065 = vadd.f32 %v4932, %v5001
        %v5066 = vadd.f32 %v4933, %v5002
        %v5067 = vadd.f32 %v4934, %v5003
        %v5068 = vadd.f32 %v4935, %v5004
        %v5069 = vadd.f32 %v4936, %v5005
        %v5070 = vadd.f32 %v4937, %v5006
        %v5071 = vadd.f32 %v4938, %v5007
        %v5072 = vadd.f32 %v4939, %v5008
        %v5073 = vadd.f32 %v4940, %v5009
        %v5074 = vadd.f32 %v4941, %v5010
        %v5075 = vadd.f32 %v4942, %v5011
        %v5076 = vadd.f32 %v4943, %v5012
        %v5077 = vadd.f32 %v4944, %v5013
        %v5078 = vadd.f32 %v4945, %v5014
        %v5079 = vadd.f32 %v4946, %v5015
        %v5080 = vadd.f32 %v4947, %v5016
        %v5081 = vadd.f32 %v4948, %v5017
        %v5082 = vadd.f32 %v4949, %v5018
        %v5083 = vadd.f32 %v4950, %v5019
        %v5084 = vadd.f32 %v4951, %v5020
        %v5085 = vadd.f32 %v4952, %v5021
        %v5086 = vadd.f32 %v4953, %v5022
        %v5087 = vadd.f32 %v4954, %v5023
        %v5088 = vadd.f32 %v4955, %v5024
        %v5089 = vadd.f32 %v4956, %v5025
        %v5090 = vadd.f32 %v4957, %v5026
        %v5091 = vadd.f32 %v4958, %v5027
        %v5092 = vadd.f32 %v4959, %v5028
        %v5093 = vadd.f32 %v4960, %v5029
        %v5094 = vadd.f32 %v4961, %v5030
        %v5095 = vadd.f32 %v4962, %v5031
        %v5096 = vadd.f32 %v4963, %v5032
        %v5097 = vadd.f32 %v4964, %v5033
        %v5098 = vadd.f32 %v4965, %v5034
        %v5099 = vadd.f32 %v4966, %v5035
        %v5100 = vadd.f32 %v4967, %v5036
        %v5101 = vadd.f32 %v4968, %v5037
        %v5102 = vadd.f32 %v4969, %v5038
        %v5103 = vadd.f32 %v4970, %v5039
        %v5104 = vadd.f32 %v4971, %v5040
        %v5105 = vadd.f32 %v4972, %v5041
        %v5106 = vadd.f32 %v4973, %v5042
        %v5107 = vadd.f32 %v4974, %v5043
        %v5108 = vadd.f32 %v4975, %v5044
        %v5109 = vadd.f32 %v4976, %v5045
        %v5110 = vadd.f32 %v4977, %v5046
        %v5111 = vadd.f32 %v4978, %v5047
        %v5112 = vadd.f32 %v4979, %v5048
        %v5113 = vadd.f32 %v4980, %v5049
        %v5114 = vadd.f32 %v4981, %v5050
        %v5115 = vadd.f32 %v4982, %v5051
        %v5116 = vadd.f32 %v4983, %v5052
        %v5117 = vadd.f32 %v4984, %v5053
        %v5118 = vadd.f32 %v4985, %v5054
        %v5119 = vadd.f32 %v4986, %v5055
        %v5120 = vadd.f32 %v4987, %v5056
        %v5121 = vadd.f32 %v4988, %v5057
        %v5122 = vadd.f32 %v4989, %v5058
        %v5123 = vadd.f32 %v4990, %v5059
        %v5124 = vadd.f32 %v4991, %v5060
        %v5125 = vadd.f32 %v4992, %v5061
        %v5126 = vld [vmem:[%s1 + $0x19] sm:$0x1]
        %v5127 = vlaneseq
        %v5128 = vshrl.u32 %v5127, 7
        %v5129 = vsub.s32 0, %v5128
        %v5130 = vrot.slane %v5126, %v5129
        %v5131 = vmul.f32 %v4645, %v5130
        %v5132 = vmul.f32 %v4646, %v5130
        %v5133 = vmul.f32 %v4647, %v5130
        %v5134 = vmul.f32 %v4648, %v5130
        %v5135 = vmul.f32 %v4649, %v5130
        %v5136 = vmul.f32 %v4650, %v5130
        %v5137 = vmul.f32 %v4651, %v5130
        %v5138 = vmul.f32 %v4652, %v5130
        %v5139 = vmul.f32 %v4653, %v5130
        %v5140 = vmul.f32 %v4654, %v5130
        %v5141 = vmul.f32 %v4655, %v5130
        %v5142 = vmul.f32 %v4656, %v5130
        %v5143 = vmul.f32 %v4657, %v5130
        %v5144 = vmul.f32 %v4658, %v5130
        %v5145 = vmul.f32 %v4659, %v5130
        %v5146 = vmul.f32 %v4660, %v5130
        %v5147 = vmul.f32 %v4661, %v5130
        %v5148 = vmul.f32 %v4662, %v5130
        %v5149 = vmul.f32 %v4663, %v5130
        %v5150 = vmul.f32 %v4664, %v5130
        %v5151 = vmul.f32 %v4665, %v5130
        %v5152 = vmul.f32 %v4666, %v5130
        %v5153 = vmul.f32 %v4667, %v5130
        %v5154 = vmul.f32 %v4668, %v5130
        %v5155 = vmul.f32 %v4669, %v5130
        %v5156 = vmul.f32 %v4670, %v5130
        %v5157 = vmul.f32 %v4671, %v5130
        %v5158 = vmul.f32 %v4672, %v5130
        %v5159 = vmul.f32 %v4673, %v5130
        %v5160 = vmul.f32 %v4674, %v5130
        %v5161 = vmul.f32 %v4675, %v5130
        %v5162 = vmul.f32 %v4676, %v5130
        %v5163 = vmul.f32 %v4689, %v5130
        %v5164 = vmul.f32 %v4690, %v5130
        %v5165 = vmul.f32 %v4691, %v5130
        %v5166 = vmul.f32 %v4692, %v5130
        %v5167 = vmul.f32 %v4693, %v5130
        %v5168 = vmul.f32 %v4694, %v5130
        %v5169 = vmul.f32 %v4695, %v5130
        %v5170 = vmul.f32 %v4696, %v5130
        %v5171 = vmul.f32 %v4697, %v5130
        %v5172 = vmul.f32 %v4698, %v5130
        %v5173 = vmul.f32 %v4699, %v5130
        %v5174 = vmul.f32 %v4700, %v5130
        %v5175 = vmul.f32 %v4701, %v5130
        %v5176 = vmul.f32 %v4702, %v5130
        %v5177 = vmul.f32 %v4703, %v5130
        %v5178 = vmul.f32 %v4704, %v5130
        %v5179 = vmul.f32 %v4705, %v5130
        %v5180 = vmul.f32 %v4706, %v5130
        %v5181 = vmul.f32 %v4707, %v5130
        %v5182 = vmul.f32 %v4708, %v5130
        %v5183 = vmul.f32 %v4709, %v5130
        %v5184 = vmul.f32 %v4710, %v5130
        %v5185 = vmul.f32 %v4711, %v5130
        %v5186 = vmul.f32 %v4712, %v5130
        %v5187 = vmul.f32 %v4713, %v5130
        %v5188 = vmul.f32 %v4714, %v5130
        %v5189 = vmul.f32 %v4715, %v5130
        %v5190 = vmul.f32 %v4716, %v5130
        %v5191 = vmul.f32 %v4717, %v5130
        %v5192 = vmul.f32 %v4718, %v5130
        %v5193 = vmul.f32 %v4719, %v5130
        %v5194 = vmul.f32 %v4720, %v5130
        %v5195 = vadd.f32 %v5062, %v5131
        %v5196 = vadd.f32 %v5063, %v5132
        %v5197 = vadd.f32 %v5064, %v5133
        %v5198 = vadd.f32 %v5065, %v5134
        %v5199 = vadd.f32 %v5066, %v5135
        %v5200 = vadd.f32 %v5067, %v5136
        %v5201 = vadd.f32 %v5068, %v5137
        %v5202 = vadd.f32 %v5069, %v5138
        %v5203 = vadd.f32 %v5070, %v5139
        %v5204 = vadd.f32 %v5071, %v5140
        %v5205 = vadd.f32 %v5072, %v5141
        %v5206 = vadd.f32 %v5073, %v5142
        %v5207 = vadd.f32 %v5074, %v5143
        %v5208 = vadd.f32 %v5075, %v5144
        %v5209 = vadd.f32 %v5076, %v5145
        %v5210 = vadd.f32 %v5077, %v5146
        %v5211 = vadd.f32 %v5078, %v5147
        %v5212 = vadd.f32 %v5079, %v5148
        %v5213 = vadd.f32 %v5080, %v5149
        %v5214 = vadd.f32 %v5081, %v5150
        %v5215 = vadd.f32 %v5082, %v5151
        %v5216 = vadd.f32 %v5083, %v5152
        %v5217 = vadd.f32 %v5084, %v5153
        %v5218 = vadd.f32 %v5085, %v5154
        %v5219 = vadd.f32 %v5086, %v5155
        %v5220 = vadd.f32 %v5087, %v5156
        %v5221 = vadd.f32 %v5088, %v5157
        %v5222 = vadd.f32 %v5089, %v5158
        %v5223 = vadd.f32 %v5090, %v5159
        %v5224 = vadd.f32 %v5091, %v5160
        %v5225 = vadd.f32 %v5092, %v5161
        %v5226 = vadd.f32 %v5093, %v5162
        %v5227 = vadd.f32 %v5094, %v5163
        %v5228 = vadd.f32 %v5095, %v5164
        %v5229 = vadd.f32 %v5096, %v5165
        %v5230 = vadd.f32 %v5097, %v5166
        %v5231 = vadd.f32 %v5098, %v5167
        %v5232 = vadd.f32 %v5099, %v5168
        %v5233 = vadd.f32 %v5100, %v5169
        %v5234 = vadd.f32 %v5101, %v5170
        %v5235 = vadd.f32 %v5102, %v5171
        %v5236 = vadd.f32 %v5103, %v5172
        %v5237 = vadd.f32 %v5104, %v5173
        %v5238 = vadd.f32 %v5105, %v5174
        %v5239 = vadd.f32 %v5106, %v5175
        %v5240 = vadd.f32 %v5107, %v5176
        %v5241 = vadd.f32 %v5108, %v5177
        %v5242 = vadd.f32 %v5109, %v5178
        %v5243 = vadd.f32 %v5110, %v5179
        %v5244 = vadd.f32 %v5111, %v5180
        %v5245 = vadd.f32 %v5112, %v5181
        %v5246 = vadd.f32 %v5113, %v5182
        %v5247 = vadd.f32 %v5114, %v5183
        %v5248 = vadd.f32 %v5115, %v5184
        %v5249 = vadd.f32 %v5116, %v5185
        %v5250 = vadd.f32 %v5117, %v5186
        %v5251 = vadd.f32 %v5118, %v5187
        %v5252 = vadd.f32 %v5119, %v5188
        %v5253 = vadd.f32 %v5120, %v5189
        %v5254 = vadd.f32 %v5121, %v5190
        %v5255 = vadd.f32 %v5122, %v5191
        %v5256 = vadd.f32 %v5123, %v5192
        %v5257 = vadd.f32 %v5124, %v5193
        %v5258 = vadd.f32 %v5125, %v5194
        %v5259 = vld [vmem:[%s1 + $0x20] sm:$0x1]
        %v5260 = vlaneseq
        %v5261 = vshrl.u32 %v5260, 7
        %v5262 = vsub.s32 0, %v5261
        %v5263 = vrot.slane %v5259, %v5262
        %v5264 = vmul.f32 %v4647, %v5263
        %v5265 = vmul.f32 %v4648, %v5263
        %v5266 = vmul.f32 %v4649, %v5263
        %v5267 = vmul.f32 %v4650, %v5263
        %v5268 = vmul.f32 %v4651, %v5263
        %v5269 = vmul.f32 %v4652, %v5263
        %v5270 = vmul.f32 %v4653, %v5263
        %v5271 = vmul.f32 %v4654, %v5263
        %v5272 = vmul.f32 %v4655, %v5263
        %v5273 = vmul.f32 %v4656, %v5263
        %v5274 = vmul.f32 %v4657, %v5263
        %v5275 = vmul.f32 %v4658, %v5263
        %v5276 = vmul.f32 %v4659, %v5263
        %v5277 = vmul.f32 %v4660, %v5263
        %v5278 = vmul.f32 %v4661, %v5263
        %v5279 = vmul.f32 %v4662, %v5263
        %v5280 = vmul.f32 %v4663, %v5263
        %v5281 = vmul.f32 %v4664, %v5263
        %v5282 = vmul.f32 %v4665, %v5263
        %v5283 = vmul.f32 %v4666, %v5263
        %v5284 = vmul.f32 %v4667, %v5263
        %v5285 = vmul.f32 %v4668, %v5263
        %v5286 = vmul.f32 %v4669, %v5263
        %v5287 = vmul.f32 %v4670, %v5263
        %v5288 = vmul.f32 %v4671, %v5263
        %v5289 = vmul.f32 %v4672, %v5263
        %v5290 = vmul.f32 %v4673, %v5263
        %v5291 = vmul.f32 %v4674, %v5263
        %v5292 = vmul.f32 %v4675, %v5263
        %v5293 = vmul.f32 %v4676, %v5263
        %v5294 = vmul.f32 %v4677, %v5263
        %v5295 = vmul.f32 %v4678, %v5263
        %v5296 = vmul.f32 %v4691, %v5263
        %v5297 = vmul.f32 %v4692, %v5263
        %v5298 = vmul.f32 %v4693, %v5263
        %v5299 = vmul.f32 %v4694, %v5263
        %v5300 = vmul.f32 %v4695, %v5263
        %v5301 = vmul.f32 %v4696, %v5263
        %v5302 = vmul.f32 %v4697, %v5263
        %v5303 = vmul.f32 %v4698, %v5263
        %v5304 = vmul.f32 %v4699, %v5263
        %v5305 = vmul.f32 %v4700, %v5263
        %v5306 = vmul.f32 %v4701, %v5263
        %v5307 = vmul.f32 %v4702, %v5263
        %v5308 = vmul.f32 %v4703, %v5263
        %v5309 = vmul.f32 %v4704, %v5263
        %v5310 = vmul.f32 %v4705, %v5263
        %v5311 = vmul.f32 %v4706, %v5263
        %v5312 = vmul.f32 %v4707, %v5263
        %v5313 = vmul.f32 %v4708, %v5263
        %v5314 = vmul.f32 %v4709, %v5263
        %v5315 = vmul.f32 %v4710, %v5263
        %v5316 = vmul.f32 %v4711, %v5263
        %v5317 = vmul.f32 %v4712, %v5263
        %v5318 = vmul.f32 %v4713, %v5263
        %v5319 = vmul.f32 %v4714, %v5263
        %v5320 = vmul.f32 %v4715, %v5263
        %v5321 = vmul.f32 %v4716, %v5263
        %v5322 = vmul.f32 %v4717, %v5263
        %v5323 = vmul.f32 %v4718, %v5263
        %v5324 = vmul.f32 %v4719, %v5263
        %v5325 = vmul.f32 %v4720, %v5263
        %v5326 = vmul.f32 %v4721, %v5263
        %v5327 = vmul.f32 %v4722, %v5263
        %v5328 = vadd.f32 %v5195, %v5264
        %v5329 = vadd.f32 %v5196, %v5265
        %v5330 = vadd.f32 %v5197, %v5266
        %v5331 = vadd.f32 %v5198, %v5267
        %v5332 = vadd.f32 %v5199, %v5268
        %v5333 = vadd.f32 %v5200, %v5269
        %v5334 = vadd.f32 %v5201, %v5270
        %v5335 = vadd.f32 %v5202, %v5271
        %v5336 = vadd.f32 %v5203, %v5272
        %v5337 = vadd.f32 %v5204, %v5273
        %v5338 = vadd.f32 %v5205, %v5274
        %v5339 = vadd.f32 %v5206, %v5275
        %v5340 = vadd.f32 %v5207, %v5276
        %v5341 = vadd.f32 %v5208, %v5277
        %v5342 = vadd.f32 %v5209, %v5278
        %v5343 = vadd.f32 %v5210, %v5279
        %v5344 = vadd.f32 %v5211, %v5280
        %v5345 = vadd.f32 %v5212, %v5281
        %v5346 = vadd.f32 %v5213, %v5282
        %v5347 = vadd.f32 %v5214, %v5283
        %v5348 = vadd.f32 %v5215, %v5284
        %v5349 = vadd.f32 %v5216, %v5285
        %v5350 = vadd.f32 %v5217, %v5286
        %v5351 = vadd.f32 %v5218, %v5287
        %v5352 = vadd.f32 %v5219, %v5288
        %v5353 = vadd.f32 %v5220, %v5289
        %v5354 = vadd.f32 %v5221, %v5290
        %v5355 = vadd.f32 %v5222, %v5291
        %v5356 = vadd.f32 %v5223, %v5292
        %v5357 = vadd.f32 %v5224, %v5293
        %v5358 = vadd.f32 %v5225, %v5294
        %v5359 = vadd.f32 %v5226, %v5295
        %v5360 = vadd.f32 %v5227, %v5296
        %v5361 = vadd.f32 %v5228, %v5297
        %v5362 = vadd.f32 %v5229, %v5298
        %v5363 = vadd.f32 %v5230, %v5299
        %v5364 = vadd.f32 %v5231, %v5300
        %v5365 = vadd.f32 %v5232, %v5301
        %v5366 = vadd.f32 %v5233, %v5302
        %v5367 = vadd.f32 %v5234, %v5303
        %v5368 = vadd.f32 %v5235, %v5304
        %v5369 = vadd.f32 %v5236, %v5305
        %v5370 = vadd.f32 %v5237, %v5306
        %v5371 = vadd.f32 %v5238, %v5307
        %v5372 = vadd.f32 %v5239, %v5308
        %v5373 = vadd.f32 %v5240, %v5309
        %v5374 = vadd.f32 %v5241, %v5310
        %v5375 = vadd.f32 %v5242, %v5311
        %v5376 = vadd.f32 %v5243, %v5312
        %v5377 = vadd.f32 %v5244, %v5313
        %v5378 = vadd.f32 %v5245, %v5314
        %v5379 = vadd.f32 %v5246, %v5315
        %v5380 = vadd.f32 %v5247, %v5316
        %v5381 = vadd.f32 %v5248, %v5317
        %v5382 = vadd.f32 %v5249, %v5318
        %v5383 = vadd.f32 %v5250, %v5319
        %v5384 = vadd.f32 %v5251, %v5320
        %v5385 = vadd.f32 %v5252, %v5321
        %v5386 = vadd.f32 %v5253, %v5322
        %v5387 = vadd.f32 %v5254, %v5323
        %v5388 = vadd.f32 %v5255, %v5324
        %v5389 = vadd.f32 %v5256, %v5325
        %v5390 = vadd.f32 %v5257, %v5326
        %v5391 = vadd.f32 %v5258, %v5327
        %v5392 = vld [vmem:[%s1 + $0x27] sm:$0x1]
        %v5393 = vlaneseq
        %v5394 = vshrl.u32 %v5393, 7
        %v5395 = vsub.s32 0, %v5394
        %v5396 = vrot.slane %v5392, %v5395
        %v5397 = vmul.f32 %v4649, %v5396
        %v5398 = vmul.f32 %v4650, %v5396
        %v5399 = vmul.f32 %v4651, %v5396
        %v5400 = vmul.f32 %v4652, %v5396
        %v5401 = vmul.f32 %v4653, %v5396
        %v5402 = vmul.f32 %v4654, %v5396
        %v5403 = vmul.f32 %v4655, %v5396
        %v5404 = vmul.f32 %v4656, %v5396
        %v5405 = vmul.f32 %v4657, %v5396
        %v5406 = vmul.f32 %v4658, %v5396
        %v5407 = vmul.f32 %v4659, %v5396
        %v5408 = vmul.f32 %v4660, %v5396
        %v5409 = vmul.f32 %v4661, %v5396
        %v5410 = vmul.f32 %v4662, %v5396
        %v5411 = vmul.f32 %v4663, %v5396
        %v5412 = vmul.f32 %v4664, %v5396
        %v5413 = vmul.f32 %v4665, %v5396
        %v5414 = vmul.f32 %v4666, %v5396
        %v5415 = vmul.f32 %v4667, %v5396
        %v5416 = vmul.f32 %v4668, %v5396
        %v5417 = vmul.f32 %v4669, %v5396
        %v5418 = vmul.f32 %v4670, %v5396
        %v5419 = vmul.f32 %v4671, %v5396
        %v5420 = vmul.f32 %v4672, %v5396
        %v5421 = vmul.f32 %v4673, %v5396
        %v5422 = vmul.f32 %v4674, %v5396
        %v5423 = vmul.f32 %v4675, %v5396
        %v5424 = vmul.f32 %v4676, %v5396
        %v5425 = vmul.f32 %v4677, %v5396
        %v5426 = vmul.f32 %v4678, %v5396
        %v5427 = vmul.f32 %v4679, %v5396
        %v5428 = vmul.f32 %v4680, %v5396
        %v5429 = vmul.f32 %v4693, %v5396
        %v5430 = vmul.f32 %v4694, %v5396
        %v5431 = vmul.f32 %v4695, %v5396
        %v5432 = vmul.f32 %v4696, %v5396
        %v5433 = vmul.f32 %v4697, %v5396
        %v5434 = vmul.f32 %v4698, %v5396
        %v5435 = vmul.f32 %v4699, %v5396
        %v5436 = vmul.f32 %v4700, %v5396
        %v5437 = vmul.f32 %v4701, %v5396
        %v5438 = vmul.f32 %v4702, %v5396
        %v5439 = vmul.f32 %v4703, %v5396
        %v5440 = vmul.f32 %v4704, %v5396
        %v5441 = vmul.f32 %v4705, %v5396
        %v5442 = vmul.f32 %v4706, %v5396
        %v5443 = vmul.f32 %v4707, %v5396
        %v5444 = vmul.f32 %v4708, %v5396
        %v5445 = vmul.f32 %v4709, %v5396
        %v5446 = vmul.f32 %v4710, %v5396
        %v5447 = vmul.f32 %v4711, %v5396
        %v5448 = vmul.f32 %v4712, %v5396
        %v5449 = vmul.f32 %v4713, %v5396
        %v5450 = vmul.f32 %v4714, %v5396
        %v5451 = vmul.f32 %v4715, %v5396
        %v5452 = vmul.f32 %v4716, %v5396
        %v5453 = vmul.f32 %v4717, %v5396
        %v5454 = vmul.f32 %v4718, %v5396
        %v5455 = vmul.f32 %v4719, %v5396
        %v5456 = vmul.f32 %v4720, %v5396
        %v5457 = vmul.f32 %v4721, %v5396
        %v5458 = vmul.f32 %v4722, %v5396
        %v5459 = vmul.f32 %v4723, %v5396
        %v5460 = vmul.f32 %v4724, %v5396
        %v5461 = vadd.f32 %v5328, %v5397
        %v5462 = vadd.f32 %v5329, %v5398
        %v5463 = vadd.f32 %v5330, %v5399
        %v5464 = vadd.f32 %v5331, %v5400
        %v5465 = vadd.f32 %v5332, %v5401
        %v5466 = vadd.f32 %v5333, %v5402
        %v5467 = vadd.f32 %v5334, %v5403
        %v5468 = vadd.f32 %v5335, %v5404
        %v5469 = vadd.f32 %v5336, %v5405
        %v5470 = vadd.f32 %v5337, %v5406
        %v5471 = vadd.f32 %v5338, %v5407
        %v5472 = vadd.f32 %v5339, %v5408
        %v5473 = vadd.f32 %v5340, %v5409
        %v5474 = vadd.f32 %v5341, %v5410
        %v5475 = vadd.f32 %v5342, %v5411
        %v5476 = vadd.f32 %v5343, %v5412
        %v5477 = vadd.f32 %v5344, %v5413
        %v5478 = vadd.f32 %v5345, %v5414
        %v5479 = vadd.f32 %v5346, %v5415
        %v5480 = vadd.f32 %v5347, %v5416
        %v5481 = vadd.f32 %v5348, %v5417
        %v5482 = vadd.f32 %v5349, %v5418
        %v5483 = vadd.f32 %v5350, %v5419
        %v5484 = vadd.f32 %v5351, %v5420
        %v5485 = vadd.f32 %v5352, %v5421
        %v5486 = vadd.f32 %v5353, %v5422
        %v5487 = vadd.f32 %v5354, %v5423
        %v5488 = vadd.f32 %v5355, %v5424
        %v5489 = vadd.f32 %v5356, %v5425
        %v5490 = vadd.f32 %v5357, %v5426
        %v5491 = vadd.f32 %v5358, %v5427
        %v5492 = vadd.f32 %v5359, %v5428
        %v5493 = vadd.f32 %v5360, %v5429
        %v5494 = vadd.f32 %v5361, %v5430
        %v5495 = vadd.f32 %v5362, %v5431
        %v5496 = vadd.f32 %v5363, %v5432
        %v5497 = vadd.f32 %v5364, %v5433
        %v5498 = vadd.f32 %v5365, %v5434
        %v5499 = vadd.f32 %v5366, %v5435
        %v5500 = vadd.f32 %v5367, %v5436
        %v5501 = vadd.f32 %v5368, %v5437
        %v5502 = vadd.f32 %v5369, %v5438
        %v5503 = vadd.f32 %v5370, %v5439
        %v5504 = vadd.f32 %v5371, %v5440
        %v5505 = vadd.f32 %v5372, %v5441
        %v5506 = vadd.f32 %v5373, %v5442
        %v5507 = vadd.f32 %v5374, %v5443
        %v5508 = vadd.f32 %v5375, %v5444
        %v5509 = vadd.f32 %v5376, %v5445
        %v5510 = vadd.f32 %v5377, %v5446
        %v5511 = vadd.f32 %v5378, %v5447
        %v5512 = vadd.f32 %v5379, %v5448
        %v5513 = vadd.f32 %v5380, %v5449
        %v5514 = vadd.f32 %v5381, %v5450
        %v5515 = vadd.f32 %v5382, %v5451
        %v5516 = vadd.f32 %v5383, %v5452
        %v5517 = vadd.f32 %v5384, %v5453
        %v5518 = vadd.f32 %v5385, %v5454
        %v5519 = vadd.f32 %v5386, %v5455
        %v5520 = vadd.f32 %v5387, %v5456
        %v5521 = vadd.f32 %v5388, %v5457
        %v5522 = vadd.f32 %v5389, %v5458
        %v5523 = vadd.f32 %v5390, %v5459
        %v5524 = vadd.f32 %v5391, %v5460
        %v5525 = vld [vmem:[%s1 + $0x2e] sm:$0x1]
        %v5526 = vlaneseq
        %v5527 = vshrl.u32 %v5526, 7
        %v5528 = vsub.s32 0, %v5527
        %v5529 = vrot.slane %v5525, %v5528
        %v5530 = vmul.f32 %v4651, %v5529
        %v5531 = vmul.f32 %v4652, %v5529
        %v5532 = vmul.f32 %v4653, %v5529
        %v5533 = vmul.f32 %v4654, %v5529
        %v5534 = vmul.f32 %v4655, %v5529
        %v5535 = vmul.f32 %v4656, %v5529
        %v5536 = vmul.f32 %v4657, %v5529
        %v5537 = vmul.f32 %v4658, %v5529
        %v5538 = vmul.f32 %v4659, %v5529
        %v5539 = vmul.f32 %v4660, %v5529
        %v5540 = vmul.f32 %v4661, %v5529
        %v5541 = vmul.f32 %v4662, %v5529
        %v5542 = vmul.f32 %v4663, %v5529
        %v5543 = vmul.f32 %v4664, %v5529
        %v5544 = vmul.f32 %v4665, %v5529
        %v5545 = vmul.f32 %v4666, %v5529
        %v5546 = vmul.f32 %v4667, %v5529
        %v5547 = vmul.f32 %v4668, %v5529
        %v5548 = vmul.f32 %v4669, %v5529
        %v5549 = vmul.f32 %v4670, %v5529
        %v5550 = vmul.f32 %v4671, %v5529
        %v5551 = vmul.f32 %v4672, %v5529
        %v5552 = vmul.f32 %v4673, %v5529
        %v5553 = vmul.f32 %v4674, %v5529
        %v5554 = vmul.f32 %v4675, %v5529
        %v5555 = vmul.f32 %v4676, %v5529
        %v5556 = vmul.f32 %v4677, %v5529
        %v5557 = vmul.f32 %v4678, %v5529
        %v5558 = vmul.f32 %v4679, %v5529
        %v5559 = vmul.f32 %v4680, %v5529
        %v5560 = vmul.f32 %v4681, %v5529
        %v5561 = vmul.f32 %v4682, %v5529
        %v5562 = vmul.f32 %v4695, %v5529
        %v5563 = vmul.f32 %v4696, %v5529
        %v5564 = vmul.f32 %v4697, %v5529
        %v5565 = vmul.f32 %v4698, %v5529
        %v5566 = vmul.f32 %v4699, %v5529
        %v5567 = vmul.f32 %v4700, %v5529
        %v5568 = vmul.f32 %v4701, %v5529
        %v5569 = vmul.f32 %v4702, %v5529
        %v5570 = vmul.f32 %v4703, %v5529
        %v5571 = vmul.f32 %v4704, %v5529
        %v5572 = vmul.f32 %v4705, %v5529
        %v5573 = vmul.f32 %v4706, %v5529
        %v5574 = vmul.f32 %v4707, %v5529
        %v5575 = vmul.f32 %v4708, %v5529
        %v5576 = vmul.f32 %v4709, %v5529
        %v5577 = vmul.f32 %v4710, %v5529
        %v5578 = vmul.f32 %v4711, %v5529
        %v5579 = vmul.f32 %v4712, %v5529
        %v5580 = vmul.f32 %v4713, %v5529
        %v5581 = vmul.f32 %v4714, %v5529
        %v5582 = vmul.f32 %v4715, %v5529
        %v5583 = vmul.f32 %v4716, %v5529
        %v5584 = vmul.f32 %v4717, %v5529
        %v5585 = vmul.f32 %v4718, %v5529
        %v5586 = vmul.f32 %v4719, %v5529
        %v5587 = vmul.f32 %v4720, %v5529
        %v5588 = vmul.f32 %v4721, %v5529
        %v5589 = vmul.f32 %v4722, %v5529
        %v5590 = vmul.f32 %v4723, %v5529
        %v5591 = vmul.f32 %v4724, %v5529
        %v5592 = vmul.f32 %v4725, %v5529
        %v5593 = vmul.f32 %v4726, %v5529
        %v5594 = vadd.f32 %v5461, %v5530
        %v5595 = vadd.f32 %v5462, %v5531
        %v5596 = vadd.f32 %v5463, %v5532
        %v5597 = vadd.f32 %v5464, %v5533
        %v5598 = vadd.f32 %v5465, %v5534
        %v5599 = vadd.f32 %v5466, %v5535
        %v5600 = vadd.f32 %v5467, %v5536
        %v5601 = vadd.f32 %v5468, %v5537
        %v5602 = vadd.f32 %v5469, %v5538
        %v5603 = vadd.f32 %v5470, %v5539
        %v5604 = vadd.f32 %v5471, %v5540
        %v5605 = vadd.f32 %v5472, %v5541
        %v5606 = vadd.f32 %v5473, %v5542
        %v5607 = vadd.f32 %v5474, %v5543
        %v5608 = vadd.f32 %v5475, %v5544
        %v5609 = vadd.f32 %v5476, %v5545
        %v5610 = vadd.f32 %v5477, %v5546
        %v5611 = vadd.f32 %v5478, %v5547
        %v5612 = vadd.f32 %v5479, %v5548
        %v5613 = vadd.f32 %v5480, %v5549
        %v5614 = vadd.f32 %v5481, %v5550
        %v5615 = vadd.f32 %v5482, %v5551
        %v5616 = vadd.f32 %v5483, %v5552
        %v5617 = vadd.f32 %v5484, %v5553
        %v5618 = vadd.f32 %v5485, %v5554
        %v5619 = vadd.f32 %v5486, %v5555
        %v5620 = vadd.f32 %v5487, %v5556
        %v5621 = vadd.f32 %v5488, %v5557
        %v5622 = vadd.f32 %v5489, %v5558
        %v5623 = vadd.f32 %v5490, %v5559
        %v5624 = vadd.f32 %v5491, %v5560
        %v5625 = vadd.f32 %v5492, %v5561
        %v5626 = vadd.f32 %v5493, %v5562
        %v5627 = vadd.f32 %v5494, %v5563
        %v5628 = vadd.f32 %v5495, %v5564
        %v5629 = vadd.f32 %v5496, %v5565
        %v5630 = vadd.f32 %v5497, %v5566
        %v5631 = vadd.f32 %v5498, %v5567
        %v5632 = vadd.f32 %v5499, %v5568
        %v5633 = vadd.f32 %v5500, %v5569
        %v5634 = vadd.f32 %v5501, %v5570
        %v5635 = vadd.f32 %v5502, %v5571
        %v5636 = vadd.f32 %v5503, %v5572
        %v5637 = vadd.f32 %v5504, %v5573
        %v5638 = vadd.f32 %v5505, %v5574
        %v5639 = vadd.f32 %v5506, %v5575
        %v5640 = vadd.f32 %v5507, %v5576
        %v5641 = vadd.f32 %v5508, %v5577
        %v5642 = vadd.f32 %v5509, %v5578
        %v5643 = vadd.f32 %v5510, %v5579
        %v5644 = vadd.f32 %v5511, %v5580
        %v5645 = vadd.f32 %v5512, %v5581
        %v5646 = vadd.f32 %v5513, %v5582
        %v5647 = vadd.f32 %v5514, %v5583
        %v5648 = vadd.f32 %v5515, %v5584
        %v5649 = vadd.f32 %v5516, %v5585
        %v5650 = vadd.f32 %v5517, %v5586
        %v5651 = vadd.f32 %v5518, %v5587
        %v5652 = vadd.f32 %v5519, %v5588
        %v5653 = vadd.f32 %v5520, %v5589
        %v5654 = vadd.f32 %v5521, %v5590
        %v5655 = vadd.f32 %v5522, %v5591
        %v5656 = vadd.f32 %v5523, %v5592
        %v5657 = vadd.f32 %v5524, %v5593
        %v5658 = vld [vmem:[#allocation2 + $0x5] sm:$0xff]
        %v5659 = vld [vmem:[#allocation2 + $0xd] sm:$0xff]
        %v5660 = vld [vmem:[#allocation2 + $0x1d] sm:$0xff]
        %v5661 = vld [vmem:[#allocation2 + $0x25] sm:$0xff]
        %v5662 = vld [vmem:[#allocation2 + $0x35] sm:$0xff]
        %v5663 = vld [vmem:[#allocation2 + $0x3d] sm:$0xff]
        %v5664 = vld [vmem:[#allocation2 + $0x4d] sm:$0xff]
        %v5665 = vld [vmem:[#allocation2 + $0x55] sm:$0xff]
        %v5666 = vld [vmem:[#allocation2 + $0x65] sm:$0xff]
        %v5667 = vld [vmem:[#allocation2 + $0x6d] sm:$0xff]
        %v5668 = vld [vmem:[#allocation2 + $0x7d] sm:$0xff]
        %v5669 = vld [vmem:[#allocation2 + $0x85] sm:$0xff]
        %v5670 = vld [vmem:[#allocation2 + $0x95] sm:$0xff]
        %v5671 = vld [vmem:[#allocation2 + $0x9d] sm:$0xff]
        %v5672 = vld [vmem:[#allocation2 + $0xad] sm:$0xff]
        %v5673 = vld [vmem:[#allocation2 + $0xb5] sm:$0xff]
        %v5674 = vld [vmem:[#allocation2 + $0xc5] sm:$0xff]
        %v5675 = vld [vmem:[#allocation2 + $0xcd] sm:$0xff]
        %v5676 = vld [vmem:[#allocation2 + $0xdd] sm:$0xff]
        %v5677 = vld [vmem:[#allocation2 + $0xe5] sm:$0xff]
        %v5678 = vld [vmem:[#allocation2 + $0xf5] sm:$0xff]
        %v5679 = vld [vmem:[#allocation2 + $0xfd] sm:$0xff]
        %v5680 = vld [vmem:[#allocation2 + $0x10d] sm:$0xff]
        %v5681 = vld [vmem:[#allocation2 + $0x115] sm:$0xff]
        %v5682 = vld [vmem:[#allocation2 + $0x125] sm:$0xff]
        %v5683 = vld [vmem:[#allocation2 + $0x12d] sm:$0xff]
        %v5684 = vld [vmem:[#allocation2 + $0x13d] sm:$0xff]
        %v5685 = vld [vmem:[#allocation2 + $0x145] sm:$0xff]
        %v5686 = vld [vmem:[#allocation2 + $0x155] sm:$0xff]
        %v5687 = vld [vmem:[#allocation2 + $0x15d] sm:$0xff]
        %v5688 = vld [vmem:[#allocation2 + $0x16d] sm:$0xff]
        %v5689 = vld [vmem:[#allocation2 + $0x175] sm:$0xff]
        %v5690 = vld [vmem:[#allocation2 + $0x185] sm:$0xff]
        %v5691 = vld [vmem:[#allocation2 + $0x18d] sm:$0xff]
        %v5692 = vld [vmem:[#allocation2 + $0x19d] sm:$0xff]
        %v5693 = vld [vmem:[#allocation2 + $0x1a5] sm:$0xff]
        %v5694 = vld [vmem:[#allocation2 + $0x1b5] sm:$0xff]
        %v5695 = vld [vmem:[#allocation2 + $0x1bd] sm:$0xff]
        %v5696 = vld [vmem:[#allocation2 + $0x1cd] sm:$0xff]
        %v5697 = vld [vmem:[#allocation2 + $0x1d5] sm:$0xff]
        %v5698 = vld [vmem:[#allocation2 + $0x1e5] sm:$0xff]
        %v5699 = vld [vmem:[#allocation2 + $0x1ed] sm:$0xff]
        %v5700 = vld [vmem:[#allocation2 + $0x1fd] sm:$0xff]
        %v5701 = vld [vmem:[#allocation2 + $0x205] sm:$0xff]
        %v5702 = vld [vmem:[#allocation2 + $0x215] sm:$0xff]
        %v5703 = vld [vmem:[#allocation2 + $0x21d] sm:$0xff]
        %v5704 = vld [vmem:[#allocation2 + $0x22d] sm:$0xff]
        %v5705 = vld [vmem:[#allocation2 + $0x235] sm:$0xff]
        %v5706 = vld [vmem:[#allocation2 + $0x245] sm:$0xff]
        %v5707 = vld [vmem:[#allocation2 + $0x24d] sm:$0xff]
        %v5708 = vld [vmem:[#allocation2 + $0x25d] sm:$0xff]
        %v5709 = vld [vmem:[#allocation2 + $0x265] sm:$0xff]
        %v5710 = vld [vmem:[#allocation2 + $0x275] sm:$0xff]
        %v5711 = vld [vmem:[#allocation2 + $0x27d] sm:$0xff]
        %v5712 = vld [vmem:[#allocation2 + $0x28d] sm:$0xff]
        %v5713 = vld [vmem:[#allocation2 + $0x295] sm:$0xff]
        %v5714 = vld [vmem:[#allocation2 + $0x2a5] sm:$0xff]
        %v5715 = vld [vmem:[#allocation2 + $0x2ad] sm:$0xff]
        %v5716 = vld [vmem:[#allocation2 + $0x2bd] sm:$0xff]
        %v5717 = vld [vmem:[#allocation2 + $0x2c5] sm:$0xff]
        %v5718 = vld [vmem:[#allocation2 + $0x2d5] sm:$0xff]
        %v5719 = vld [vmem:[#allocation2 + $0x2dd] sm:$0xff]
        %v5720 = vld [vmem:[#allocation2 + $0x2ed] sm:$0xff]
        %v5721 = vld [vmem:[#allocation2 + $0x2f5] sm:$0xff]
        %v5722 = vld [vmem:[#allocation2 + $0x305] sm:$0xff]
        %v5723 = vld [vmem:[#allocation2 + $0x30d] sm:$0xff]
        %v5724 = vld [vmem:[#allocation2 + $0x31d] sm:$0xff]
        %v5725 = vld [vmem:[#allocation2 + $0x325] sm:$0xff]
        %v5726 = vld [vmem:[#allocation2 + $0x335] sm:$0xff]
        %v5727 = vld [vmem:[#allocation2 + $0x33d] sm:$0xff]
        %v5728 = vld [vmem:[#allocation2 + $0x34d] sm:$0xff]
        %v5729 = vld [vmem:[#allocation2 + $0x355] sm:$0xff]
        %v5730 = vld [vmem:[#allocation2 + $0x365] sm:$0xff]
        %v5731 = vld [vmem:[#allocation2 + $0x36d] sm:$0xff]
        %v5732 = vld [vmem:[#allocation2 + $0x37d] sm:$0xff]
        %v5733 = vld [vmem:[#allocation2 + $0x385] sm:$0xff]
        %v5734 = vld [vmem:[#allocation2 + $0x395] sm:$0xff]
        %v5735 = vld [vmem:[#allocation2 + $0x39d] sm:$0xff]
        %v5736 = vld [vmem:[#allocation2 + $0x3ad] sm:$0xff]
        %v5737 = vld [vmem:[#allocation2 + $0x3b5] sm:$0xff]
        %v5738 = vld [vmem:[#allocation2 + $0x3c5] sm:$0xff]
        %v5739 = vld [vmem:[#allocation2 + $0x3cd] sm:$0xff]
        %v5740 = vld [vmem:[#allocation2 + $0x3dd] sm:$0xff]
        %v5741 = vld [vmem:[#allocation2 + $0x3e5] sm:$0xff]
        %v5742 = vld [vmem:[#allocation2 + $0x3f5] sm:$0xff]
        %v5743 = vld [vmem:[#allocation2 + $0x3fd] sm:$0xff]
        %v5744 = vld [vmem:[#allocation2 + $0x40d] sm:$0xff]
        %v5745 = vld [vmem:[#allocation2 + $0x415] sm:$0xff]
        %v5746 = vld [vmem:[%s1 + $0x5] sm:$0x1]
        %v5747 = vlaneseq
        %v5748 = vshrl.u32 %v5747, 7
        %v5749 = vsub.s32 0, %v5748
        %v5750 = vrot.slane %v5746, %v5749
        %v5751 = vmul.f32 %v5658, %v5750
        %v5752 = vmul.f32 %v5659, %v5750
        %v5753 = vmul.f32 %v5660, %v5750
        %v5754 = vmul.f32 %v5661, %v5750
        %v5755 = vmul.f32 %v5662, %v5750
        %v5756 = vmul.f32 %v5663, %v5750
        %v5757 = vmul.f32 %v5664, %v5750
        %v5758 = vmul.f32 %v5665, %v5750
        %v5759 = vmul.f32 %v5666, %v5750
        %v5760 = vmul.f32 %v5667, %v5750
        %v5761 = vmul.f32 %v5668, %v5750
        %v5762 = vmul.f32 %v5669, %v5750
        %v5763 = vmul.f32 %v5670, %v5750
        %v5764 = vmul.f32 %v5671, %v5750
        %v5765 = vmul.f32 %v5672, %v5750
        %v5766 = vmul.f32 %v5673, %v5750
        %v5767 = vmul.f32 %v5674, %v5750
        %v5768 = vmul.f32 %v5675, %v5750
        %v5769 = vmul.f32 %v5676, %v5750
        %v5770 = vmul.f32 %v5677, %v5750
        %v5771 = vmul.f32 %v5678, %v5750
        %v5772 = vmul.f32 %v5679, %v5750
        %v5773 = vmul.f32 %v5680, %v5750
        %v5774 = vmul.f32 %v5681, %v5750
        %v5775 = vmul.f32 %v5682, %v5750
        %v5776 = vmul.f32 %v5683, %v5750
        %v5777 = vmul.f32 %v5684, %v5750
        %v5778 = vmul.f32 %v5685, %v5750
        %v5779 = vmul.f32 %v5686, %v5750
        %v5780 = vmul.f32 %v5687, %v5750
        %v5781 = vmul.f32 %v5688, %v5750
        %v5782 = vmul.f32 %v5689, %v5750
        %v5783 = vmul.f32 %v5702, %v5750
        %v5784 = vmul.f32 %v5703, %v5750
        %v5785 = vmul.f32 %v5704, %v5750
        %v5786 = vmul.f32 %v5705, %v5750
        %v5787 = vmul.f32 %v5706, %v5750
        %v5788 = vmul.f32 %v5707, %v5750
        %v5789 = vmul.f32 %v5708, %v5750
        %v5790 = vmul.f32 %v5709, %v5750
        %v5791 = vmul.f32 %v5710, %v5750
        %v5792 = vmul.f32 %v5711, %v5750
        %v5793 = vmul.f32 %v5712, %v5750
        %v5794 = vmul.f32 %v5713, %v5750
        %v5795 = vmul.f32 %v5714, %v5750
        %v5796 = vmul.f32 %v5715, %v5750
        %v5797 = vmul.f32 %v5716, %v5750
        %v5798 = vmul.f32 %v5717, %v5750
        %v5799 = vmul.f32 %v5718, %v5750
        %v5800 = vmul.f32 %v5719, %v5750
        %v5801 = vmul.f32 %v5720, %v5750
        %v5802 = vmul.f32 %v5721, %v5750
        %v5803 = vmul.f32 %v5722, %v5750
        %v5804 = vmul.f32 %v5723, %v5750
        %v5805 = vmul.f32 %v5724, %v5750
        %v5806 = vmul.f32 %v5725, %v5750
        %v5807 = vmul.f32 %v5726, %v5750
        %v5808 = vmul.f32 %v5727, %v5750
        %v5809 = vmul.f32 %v5728, %v5750
        %v5810 = vmul.f32 %v5729, %v5750
        %v5811 = vmul.f32 %v5730, %v5750
        %v5812 = vmul.f32 %v5731, %v5750
        %v5813 = vmul.f32 %v5732, %v5750
        %v5814 = vmul.f32 %v5733, %v5750
        %v5815 = vadd.f32 %v5594, %v5751
        %v5816 = vadd.f32 %v5595, %v5752
        %v5817 = vadd.f32 %v5596, %v5753
        %v5818 = vadd.f32 %v5597, %v5754
        %v5819 = vadd.f32 %v5598, %v5755
        %v5820 = vadd.f32 %v5599, %v5756
        %v5821 = vadd.f32 %v5600, %v5757
        %v5822 = vadd.f32 %v5601, %v5758
        %v5823 = vadd.f32 %v5602, %v5759
        %v5824 = vadd.f32 %v5603, %v5760
        %v5825 = vadd.f32 %v5604, %v5761
        %v5826 = vadd.f32 %v5605, %v5762
        %v5827 = vadd.f32 %v5606, %v5763
        %v5828 = vadd.f32 %v5607, %v5764
        %v5829 = vadd.f32 %v5608, %v5765
        %v5830 = vadd.f32 %v5609, %v5766
        %v5831 = vadd.f32 %v5610, %v5767
        %v5832 = vadd.f32 %v5611, %v5768
        %v5833 = vadd.f32 %v5612, %v5769
        %v5834 = vadd.f32 %v5613, %v5770
        %v5835 = vadd.f32 %v5614, %v5771
        %v5836 = vadd.f32 %v5615, %v5772
        %v5837 = vadd.f32 %v5616, %v5773
        %v5838 = vadd.f32 %v5617, %v5774
        %v5839 = vadd.f32 %v5618, %v5775
        %v5840 = vadd.f32 %v5619, %v5776
        %v5841 = vadd.f32 %v5620, %v5777
        %v5842 = vadd.f32 %v5621, %v5778
        %v5843 = vadd.f32 %v5622, %v5779
        %v5844 = vadd.f32 %v5623, %v5780
        %v5845 = vadd.f32 %v5624, %v5781
        %v5846 = vadd.f32 %v5625, %v5782
        %v5847 = vadd.f32 %v5626, %v5783
        %v5848 = vadd.f32 %v5627, %v5784
        %v5849 = vadd.f32 %v5628, %v5785
        %v5850 = vadd.f32 %v5629, %v5786
        %v5851 = vadd.f32 %v5630, %v5787
        %v5852 = vadd.f32 %v5631, %v5788
        %v5853 = vadd.f32 %v5632, %v5789
        %v5854 = vadd.f32 %v5633, %v5790
        %v5855 = vadd.f32 %v5634, %v5791
        %v5856 = vadd.f32 %v5635, %v5792
        %v5857 = vadd.f32 %v5636, %v5793
        %v5858 = vadd.f32 %v5637, %v5794
        %v5859 = vadd.f32 %v5638, %v5795
        %v5860 = vadd.f32 %v5639, %v5796
        %v5861 = vadd.f32 %v5640, %v5797
        %v5862 = vadd.f32 %v5641, %v5798
        %v5863 = vadd.f32 %v5642, %v5799
        %v5864 = vadd.f32 %v5643, %v5800
        %v5865 = vadd.f32 %v5644, %v5801
        %v5866 = vadd.f32 %v5645, %v5802
        %v5867 = vadd.f32 %v5646, %v5803
        %v5868 = vadd.f32 %v5647, %v5804
        %v5869 = vadd.f32 %v5648, %v5805
        %v5870 = vadd.f32 %v5649, %v5806
        %v5871 = vadd.f32 %v5650, %v5807
        %v5872 = vadd.f32 %v5651, %v5808
        %v5873 = vadd.f32 %v5652, %v5809
        %v5874 = vadd.f32 %v5653, %v5810
        %v5875 = vadd.f32 %v5654, %v5811
        %v5876 = vadd.f32 %v5655, %v5812
        %v5877 = vadd.f32 %v5656, %v5813
        %v5878 = vadd.f32 %v5657, %v5814
        %v5879 = vld [vmem:[%s1 + $0xc] sm:$0x1]
        %v5880 = vlaneseq
        %v5881 = vshrl.u32 %v5880, 7
        %v5882 = vsub.s32 0, %v5881
        %v5883 = vrot.slane %v5879, %v5882
        %v5884 = vmul.f32 %v5660, %v5883
        %v5885 = vmul.f32 %v5661, %v5883
        %v5886 = vmul.f32 %v5662, %v5883
        %v5887 = vmul.f32 %v5663, %v5883
        %v5888 = vmul.f32 %v5664, %v5883
        %v5889 = vmul.f32 %v5665, %v5883
        %v5890 = vmul.f32 %v5666, %v5883
        %v5891 = vmul.f32 %v5667, %v5883
        %v5892 = vmul.f32 %v5668, %v5883
        %v5893 = vmul.f32 %v5669, %v5883
        %v5894 = vmul.f32 %v5670, %v5883
        %v5895 = vmul.f32 %v5671, %v5883
        %v5896 = vmul.f32 %v5672, %v5883
        %v5897 = vmul.f32 %v5673, %v5883
        %v5898 = vmul.f32 %v5674, %v5883
        %v5899 = vmul.f32 %v5675, %v5883
        %v5900 = vmul.f32 %v5676, %v5883
        %v5901 = vmul.f32 %v5677, %v5883
        %v5902 = vmul.f32 %v5678, %v5883
        %v5903 = vmul.f32 %v5679, %v5883
        %v5904 = vmul.f32 %v5680, %v5883
        %v5905 = vmul.f32 %v5681, %v5883
        %v5906 = vmul.f32 %v5682, %v5883
        %v5907 = vmul.f32 %v5683, %v5883
        %v5908 = vmul.f32 %v5684, %v5883
        %v5909 = vmul.f32 %v5685, %v5883
        %v5910 = vmul.f32 %v5686, %v5883
        %v5911 = vmul.f32 %v5687, %v5883
        %v5912 = vmul.f32 %v5688, %v5883
        %v5913 = vmul.f32 %v5689, %v5883
        %v5914 = vmul.f32 %v5690, %v5883
        %v5915 = vmul.f32 %v5691, %v5883
        %v5916 = vmul.f32 %v5704, %v5883
        %v5917 = vmul.f32 %v5705, %v5883
        %v5918 = vmul.f32 %v5706, %v5883
        %v5919 = vmul.f32 %v5707, %v5883
        %v5920 = vmul.f32 %v5708, %v5883
        %v5921 = vmul.f32 %v5709, %v5883
        %v5922 = vmul.f32 %v5710, %v5883
        %v5923 = vmul.f32 %v5711, %v5883
        %v5924 = vmul.f32 %v5712, %v5883
        %v5925 = vmul.f32 %v5713, %v5883
        %v5926 = vmul.f32 %v5714, %v5883
        %v5927 = vmul.f32 %v5715, %v5883
        %v5928 = vmul.f32 %v5716, %v5883
        %v5929 = vmul.f32 %v5717, %v5883
        %v5930 = vmul.f32 %v5718, %v5883
        %v5931 = vmul.f32 %v5719, %v5883
        %v5932 = vmul.f32 %v5720, %v5883
        %v5933 = vmul.f32 %v5721, %v5883
        %v5934 = vmul.f32 %v5722, %v5883
        %v5935 = vmul.f32 %v5723, %v5883
        %v5936 = vmul.f32 %v5724, %v5883
        %v5937 = vmul.f32 %v5725, %v5883
        %v5938 = vmul.f32 %v5726, %v5883
        %v5939 = vmul.f32 %v5727, %v5883
        %v5940 = vmul.f32 %v5728, %v5883
        %v5941 = vmul.f32 %v5729, %v5883
        %v5942 = vmul.f32 %v5730, %v5883
        %v5943 = vmul.f32 %v5731, %v5883
        %v5944 = vmul.f32 %v5732, %v5883
        %v5945 = vmul.f32 %v5733, %v5883
        %v5946 = vmul.f32 %v5734, %v5883
        %v5947 = vmul.f32 %v5735, %v5883
        %v5948 = vadd.f32 %v5815, %v5884
        %v5949 = vadd.f32 %v5816, %v5885
        %v5950 = vadd.f32 %v5817, %v5886
        %v5951 = vadd.f32 %v5818, %v5887
        %v5952 = vadd.f32 %v5819, %v5888
        %v5953 = vadd.f32 %v5820, %v5889
        %v5954 = vadd.f32 %v5821, %v5890
        %v5955 = vadd.f32 %v5822, %v5891
        %v5956 = vadd.f32 %v5823, %v5892
        %v5957 = vadd.f32 %v5824, %v5893
        %v5958 = vadd.f32 %v5825, %v5894
        %v5959 = vadd.f32 %v5826, %v5895
        %v5960 = vadd.f32 %v5827, %v5896
        %v5961 = vadd.f32 %v5828, %v5897
        %v5962 = vadd.f32 %v5829, %v5898
        %v5963 = vadd.f32 %v5830, %v5899
        %v5964 = vadd.f32 %v5831, %v5900
        %v5965 = vadd.f32 %v5832, %v5901
        %v5966 = vadd.f32 %v5833, %v5902
        %v5967 = vadd.f32 %v5834, %v5903
        %v5968 = vadd.f32 %v5835, %v5904
        %v5969 = vadd.f32 %v5836, %v5905
        %v5970 = vadd.f32 %v5837, %v5906
        %v5971 = vadd.f32 %v5838, %v5907
        %v5972 = vadd.f32 %v5839, %v5908
        %v5973 = vadd.f32 %v5840, %v5909
        %v5974 = vadd.f32 %v5841, %v5910
        %v5975 = vadd.f32 %v5842, %v5911
        %v5976 = vadd.f32 %v5843, %v5912
        %v5977 = vadd.f32 %v5844, %v5913
        %v5978 = vadd.f32 %v5845, %v5914
        %v5979 = vadd.f32 %v5846, %v5915
        %v5980 = vadd.f32 %v5847, %v5916
        %v5981 = vadd.f32 %v5848, %v5917
        %v5982 = vadd.f32 %v5849, %v5918
        %v5983 = vadd.f32 %v5850, %v5919
        %v5984 = vadd.f32 %v5851, %v5920
        %v5985 = vadd.f32 %v5852, %v5921
        %v5986 = vadd.f32 %v5853, %v5922
        %v5987 = vadd.f32 %v5854, %v5923
        %v5988 = vadd.f32 %v5855, %v5924
        %v5989 = vadd.f32 %v5856, %v5925
        %v5990 = vadd.f32 %v5857, %v5926
        %v5991 = vadd.f32 %v5858, %v5927
        %v5992 = vadd.f32 %v5859, %v5928
        %v5993 = vadd.f32 %v5860, %v5929
        %v5994 = vadd.f32 %v5861, %v5930
        %v5995 = vadd.f32 %v5862, %v5931
        %v5996 = vadd.f32 %v5863, %v5932
        %v5997 = vadd.f32 %v5864, %v5933
        %v5998 = vadd.f32 %v5865, %v5934
        %v5999 = vadd.f32 %v5866, %v5935
        %v6000 = vadd.f32 %v5867, %v5936
        %v6001 = vadd.f32 %v5868, %v5937
        %v6002 = vadd.f32 %v5869, %v5938
        %v6003 = vadd.f32 %v5870, %v5939
        %v6004 = vadd.f32 %v5871, %v5940
        %v6005 = vadd.f32 %v5872, %v5941
        %v6006 = vadd.f32 %v5873, %v5942
        %v6007 = vadd.f32 %v5874, %v5943
        %v6008 = vadd.f32 %v5875, %v5944
        %v6009 = vadd.f32 %v5876, %v5945
        %v6010 = vadd.f32 %v5877, %v5946
        %v6011 = vadd.f32 %v5878, %v5947
        %v6012 = vld [vmem:[%s1 + $0x13] sm:$0x1]
        %v6013 = vlaneseq
        %v6014 = vshrl.u32 %v6013, 7
        %v6015 = vsub.s32 0, %v6014
        %v6016 = vrot.slane %v6012, %v6015
        %v6017 = vmul.f32 %v5662, %v6016
        %v6018 = vmul.f32 %v5663, %v6016
        %v6019 = vmul.f32 %v5664, %v6016
        %v6020 = vmul.f32 %v5665, %v6016
        %v6021 = vmul.f32 %v5666, %v6016
        %v6022 = vmul.f32 %v5667, %v6016
        %v6023 = vmul.f32 %v5668, %v6016
        %v6024 = vmul.f32 %v5669, %v6016
        %v6025 = vmul.f32 %v5670, %v6016
        %v6026 = vmul.f32 %v5671, %v6016
        %v6027 = vmul.f32 %v5672, %v6016
        %v6028 = vmul.f32 %v5673, %v6016
        %v6029 = vmul.f32 %v5674, %v6016
        %v6030 = vmul.f32 %v5675, %v6016
        %v6031 = vmul.f32 %v5676, %v6016
        %v6032 = vmul.f32 %v5677, %v6016
        %v6033 = vmul.f32 %v5678, %v6016
        %v6034 = vmul.f32 %v5679, %v6016
        %v6035 = vmul.f32 %v5680, %v6016
        %v6036 = vmul.f32 %v5681, %v6016
        %v6037 = vmul.f32 %v5682, %v6016
        %v6038 = vmul.f32 %v5683, %v6016
        %v6039 = vmul.f32 %v5684, %v6016
        %v6040 = vmul.f32 %v5685, %v6016
        %v6041 = vmul.f32 %v5686, %v6016
        %v6042 = vmul.f32 %v5687, %v6016
        %v6043 = vmul.f32 %v5688, %v6016
        %v6044 = vmul.f32 %v5689, %v6016
        %v6045 = vmul.f32 %v5690, %v6016
        %v6046 = vmul.f32 %v5691, %v6016
        %v6047 = vmul.f32 %v5692, %v6016
        %v6048 = vmul.f32 %v5693, %v6016
        %v6049 = vmul.f32 %v5706, %v6016
        %v6050 = vmul.f32 %v5707, %v6016
        %v6051 = vmul.f32 %v5708, %v6016
        %v6052 = vmul.f32 %v5709, %v6016
        %v6053 = vmul.f32 %v5710, %v6016
        %v6054 = vmul.f32 %v5711, %v6016
        %v6055 = vmul.f32 %v5712, %v6016
        %v6056 = vmul.f32 %v5713, %v6016
        %v6057 = vmul.f32 %v5714, %v6016
        %v6058 = vmul.f32 %v5715, %v6016
        %v6059 = vmul.f32 %v5716, %v6016
        %v6060 = vmul.f32 %v5717, %v6016
        %v6061 = vmul.f32 %v5718, %v6016
        %v6062 = vmul.f32 %v5719, %v6016
        %v6063 = vmul.f32 %v5720, %v6016
        %v6064 = vmul.f32 %v5721, %v6016
        %v6065 = vmul.f32 %v5722, %v6016
        %v6066 = vmul.f32 %v5723, %v6016
        %v6067 = vmul.f32 %v5724, %v6016
        %v6068 = vmul.f32 %v5725, %v6016
        %v6069 = vmul.f32 %v5726, %v6016
        %v6070 = vmul.f32 %v5727, %v6016
        %v6071 = vmul.f32 %v5728, %v6016
        %v6072 = vmul.f32 %v5729, %v6016
        %v6073 = vmul.f32 %v5730, %v6016
        %v6074 = vmul.f32 %v5731, %v6016
        %v6075 = vmul.f32 %v5732, %v6016
        %v6076 = vmul.f32 %v5733, %v6016
        %v6077 = vmul.f32 %v5734, %v6016
        %v6078 = vmul.f32 %v5735, %v6016
        %v6079 = vmul.f32 %v5736, %v6016
        %v6080 = vmul.f32 %v5737, %v6016
        %v6081 = vadd.f32 %v5948, %v6017
        %v6082 = vadd.f32 %v5949, %v6018
        %v6083 = vadd.f32 %v5950, %v6019
        %v6084 = vadd.f32 %v5951, %v6020
        %v6085 = vadd.f32 %v5952, %v6021
        %v6086 = vadd.f32 %v5953, %v6022
        %v6087 = vadd.f32 %v5954, %v6023
        %v6088 = vadd.f32 %v5955, %v6024
        %v6089 = vadd.f32 %v5956, %v6025
        %v6090 = vadd.f32 %v5957, %v6026
        %v6091 = vadd.f32 %v5958, %v6027
        %v6092 = vadd.f32 %v5959, %v6028
        %v6093 = vadd.f32 %v5960, %v6029
        %v6094 = vadd.f32 %v5961, %v6030
        %v6095 = vadd.f32 %v5962, %v6031
        %v6096 = vadd.f32 %v5963, %v6032
        %v6097 = vadd.f32 %v5964, %v6033
        %v6098 = vadd.f32 %v5965, %v6034
        %v6099 = vadd.f32 %v5966, %v6035
        %v6100 = vadd.f32 %v5967, %v6036
        %v6101 = vadd.f32 %v5968, %v6037
        %v6102 = vadd.f32 %v5969, %v6038
        %v6103 = vadd.f32 %v5970, %v6039
        %v6104 = vadd.f32 %v5971, %v6040
        %v6105 = vadd.f32 %v5972, %v6041
        %v6106 = vadd.f32 %v5973, %v6042
        %v6107 = vadd.f32 %v5974, %v6043
        %v6108 = vadd.f32 %v5975, %v6044
        %v6109 = vadd.f32 %v5976, %v6045
        %v6110 = vadd.f32 %v5977, %v6046
        %v6111 = vadd.f32 %v5978, %v6047
        %v6112 = vadd.f32 %v5979, %v6048
        %v6113 = vadd.f32 %v5980, %v6049
        %v6114 = vadd.f32 %v5981, %v6050
        %v6115 = vadd.f32 %v5982, %v6051
        %v6116 = vadd.f32 %v5983, %v6052
        %v6117 = vadd.f32 %v5984, %v6053
        %v6118 = vadd.f32 %v5985, %v6054
        %v6119 = vadd.f32 %v5986, %v6055
        %v6120 = vadd.f32 %v5987, %v6056
        %v6121 = vadd.f32 %v5988, %v6057
        %v6122 = vadd.f32 %v5989, %v6058
        %v6123 = vadd.f32 %v5990, %v6059
        %v6124 = vadd.f32 %v5991, %v6060
        %v6125 = vadd.f32 %v5992, %v6061
        %v6126 = vadd.f32 %v5993, %v6062
        %v6127 = vadd.f32 %v5994, %v6063
        %v6128 = vadd.f32 %v5995, %v6064
        %v6129 = vadd.f32 %v5996, %v6065
        %v6130 = vadd.f32 %v5997, %v6066
        %v6131 = vadd.f32 %v5998, %v6067
        %v6132 = vadd.f32 %v5999, %v6068
        %v6133 = vadd.f32 %v6000, %v6069
        %v6134 = vadd.f32 %v6001, %v6070
        %v6135 = vadd.f32 %v6002, %v6071
        %v6136 = vadd.f32 %v6003, %v6072
        %v6137 = vadd.f32 %v6004, %v6073
        %v6138 = vadd.f32 %v6005, %v6074
        %v6139 = vadd.f32 %v6006, %v6075
        %v6140 = vadd.f32 %v6007, %v6076
        %v6141 = vadd.f32 %v6008, %v6077
        %v6142 = vadd.f32 %v6009, %v6078
        %v6143 = vadd.f32 %v6010, %v6079
        %v6144 = vadd.f32 %v6011, %v6080
        %v6145 = vld [vmem:[%s1 + $0x1a] sm:$0x1]
        %v6146 = vlaneseq
        %v6147 = vshrl.u32 %v6146, 7
        %v6148 = vsub.s32 0, %v6147
        %v6149 = vrot.slane %v6145, %v6148
        %v6150 = vmul.f32 %v5664, %v6149
        %v6151 = vmul.f32 %v5665, %v6149
        %v6152 = vmul.f32 %v5666, %v6149
        %v6153 = vmul.f32 %v5667, %v6149
        %v6154 = vmul.f32 %v5668, %v6149
        %v6155 = vmul.f32 %v5669, %v6149
        %v6156 = vmul.f32 %v5670, %v6149
        %v6157 = vmul.f32 %v5671, %v6149
        %v6158 = vmul.f32 %v5672, %v6149
        %v6159 = vmul.f32 %v5673, %v6149
        %v6160 = vmul.f32 %v5674, %v6149
        %v6161 = vmul.f32 %v5675, %v6149
        %v6162 = vmul.f32 %v5676, %v6149
        %v6163 = vmul.f32 %v5677, %v6149
        %v6164 = vmul.f32 %v5678, %v6149
        %v6165 = vmul.f32 %v5679, %v6149
        %v6166 = vmul.f32 %v5680, %v6149
        %v6167 = vmul.f32 %v5681, %v6149
        %v6168 = vmul.f32 %v5682, %v6149
        %v6169 = vmul.f32 %v5683, %v6149
        %v6170 = vmul.f32 %v5684, %v6149
        %v6171 = vmul.f32 %v5685, %v6149
        %v6172 = vmul.f32 %v5686, %v6149
        %v6173 = vmul.f32 %v5687, %v6149
        %v6174 = vmul.f32 %v5688, %v6149
        %v6175 = vmul.f32 %v5689, %v6149
        %v6176 = vmul.f32 %v5690, %v6149
        %v6177 = vmul.f32 %v5691, %v6149
        %v6178 = vmul.f32 %v5692, %v6149
        %v6179 = vmul.f32 %v5693, %v6149
        %v6180 = vmul.f32 %v5694, %v6149
        %v6181 = vmul.f32 %v5695, %v6149
        %v6182 = vmul.f32 %v5708, %v6149
        %v6183 = vmul.f32 %v5709, %v6149
        %v6184 = vmul.f32 %v5710, %v6149
        %v6185 = vmul.f32 %v5711, %v6149
        %v6186 = vmul.f32 %v5712, %v6149
        %v6187 = vmul.f32 %v5713, %v6149
        %v6188 = vmul.f32 %v5714, %v6149
        %v6189 = vmul.f32 %v5715, %v6149
        %v6190 = vmul.f32 %v5716, %v6149
        %v6191 = vmul.f32 %v5717, %v6149
        %v6192 = vmul.f32 %v5718, %v6149
        %v6193 = vmul.f32 %v5719, %v6149
        %v6194 = vmul.f32 %v5720, %v6149
        %v6195 = vmul.f32 %v5721, %v6149
        %v6196 = vmul.f32 %v5722, %v6149
        %v6197 = vmul.f32 %v5723, %v6149
        %v6198 = vmul.f32 %v5724, %v6149
        %v6199 = vmul.f32 %v5725, %v6149
        %v6200 = vmul.f32 %v5726, %v6149
        %v6201 = vmul.f32 %v5727, %v6149
        %v6202 = vmul.f32 %v5728, %v6149
        %v6203 = vmul.f32 %v5729, %v6149
        %v6204 = vmul.f32 %v5730, %v6149
        %v6205 = vmul.f32 %v5731, %v6149
        %v6206 = vmul.f32 %v5732, %v6149
        %v6207 = vmul.f32 %v5733, %v6149
        %v6208 = vmul.f32 %v5734, %v6149
        %v6209 = vmul.f32 %v5735, %v6149
        %v6210 = vmul.f32 %v5736, %v6149
        %v6211 = vmul.f32 %v5737, %v6149
        %v6212 = vmul.f32 %v5738, %v6149
        %v6213 = vmul.f32 %v5739, %v6149
        %v6214 = vadd.f32 %v6081, %v6150
        %v6215 = vadd.f32 %v6082, %v6151
        %v6216 = vadd.f32 %v6083, %v6152
        %v6217 = vadd.f32 %v6084, %v6153
        %v6218 = vadd.f32 %v6085, %v6154
        %v6219 = vadd.f32 %v6086, %v6155
        %v6220 = vadd.f32 %v6087, %v6156
        %v6221 = vadd.f32 %v6088, %v6157
        %v6222 = vadd.f32 %v6089, %v6158
        %v6223 = vadd.f32 %v6090, %v6159
        %v6224 = vadd.f32 %v6091, %v6160
        %v6225 = vadd.f32 %v6092, %v6161
        %v6226 = vadd.f32 %v6093, %v6162
        %v6227 = vadd.f32 %v6094, %v6163
        %v6228 = vadd.f32 %v6095, %v6164
        %v6229 = vadd.f32 %v6096, %v6165
        %v6230 = vadd.f32 %v6097, %v6166
        %v6231 = vadd.f32 %v6098, %v6167
        %v6232 = vadd.f32 %v6099, %v6168
        %v6233 = vadd.f32 %v6100, %v6169
        %v6234 = vadd.f32 %v6101, %v6170
        %v6235 = vadd.f32 %v6102, %v6171
        %v6236 = vadd.f32 %v6103, %v6172
        %v6237 = vadd.f32 %v6104, %v6173
        %v6238 = vadd.f32 %v6105, %v6174
        %v6239 = vadd.f32 %v6106, %v6175
        %v6240 = vadd.f32 %v6107, %v6176
        %v6241 = vadd.f32 %v6108, %v6177
        %v6242 = vadd.f32 %v6109, %v6178
        %v6243 = vadd.f32 %v6110, %v6179
        %v6244 = vadd.f32 %v6111, %v6180
        %v6245 = vadd.f32 %v6112, %v6181
        %v6246 = vadd.f32 %v6113, %v6182
        %v6247 = vadd.f32 %v6114, %v6183
        %v6248 = vadd.f32 %v6115, %v6184
        %v6249 = vadd.f32 %v6116, %v6185
        %v6250 = vadd.f32 %v6117, %v6186
        %v6251 = vadd.f32 %v6118, %v6187
        %v6252 = vadd.f32 %v6119, %v6188
        %v6253 = vadd.f32 %v6120, %v6189
        %v6254 = vadd.f32 %v6121, %v6190
        %v6255 = vadd.f32 %v6122, %v6191
        %v6256 = vadd.f32 %v6123, %v6192
        %v6257 = vadd.f32 %v6124, %v6193
        %v6258 = vadd.f32 %v6125, %v6194
        %v6259 = vadd.f32 %v6126, %v6195
        %v6260 = vadd.f32 %v6127, %v6196
        %v6261 = vadd.f32 %v6128, %v6197
        %v6262 = vadd.f32 %v6129, %v6198
        %v6263 = vadd.f32 %v6130, %v6199
        %v6264 = vadd.f32 %v6131, %v6200
        %v6265 = vadd.f32 %v6132, %v6201
        %v6266 = vadd.f32 %v6133, %v6202
        %v6267 = vadd.f32 %v6134, %v6203
        %v6268 = vadd.f32 %v6135, %v6204
        %v6269 = vadd.f32 %v6136, %v6205
        %v6270 = vadd.f32 %v6137, %v6206
        %v6271 = vadd.f32 %v6138, %v6207
        %v6272 = vadd.f32 %v6139, %v6208
        %v6273 = vadd.f32 %v6140, %v6209
        %v6274 = vadd.f32 %v6141, %v6210
        %v6275 = vadd.f32 %v6142, %v6211
        %v6276 = vadd.f32 %v6143, %v6212
        %v6277 = vadd.f32 %v6144, %v6213
        %v6278 = vld [vmem:[%s1 + $0x21] sm:$0x1]
        %v6279 = vlaneseq
        %v6280 = vshrl.u32 %v6279, 7
        %v6281 = vsub.s32 0, %v6280
        %v6282 = vrot.slane %v6278, %v6281
        %v6283 = vmul.f32 %v5666, %v6282
        %v6284 = vmul.f32 %v5667, %v6282
        %v6285 = vmul.f32 %v5668, %v6282
        %v6286 = vmul.f32 %v5669, %v6282
        %v6287 = vmul.f32 %v5670, %v6282
        %v6288 = vmul.f32 %v5671, %v6282
        %v6289 = vmul.f32 %v5672, %v6282
        %v6290 = vmul.f32 %v5673, %v6282
        %v6291 = vmul.f32 %v5674, %v6282
        %v6292 = vmul.f32 %v5675, %v6282
        %v6293 = vmul.f32 %v5676, %v6282
        %v6294 = vmul.f32 %v5677, %v6282
        %v6295 = vmul.f32 %v5678, %v6282
        %v6296 = vmul.f32 %v5679, %v6282
        %v6297 = vmul.f32 %v5680, %v6282
        %v6298 = vmul.f32 %v5681, %v6282
        %v6299 = vmul.f32 %v5682, %v6282
        %v6300 = vmul.f32 %v5683, %v6282
        %v6301 = vmul.f32 %v5684, %v6282
        %v6302 = vmul.f32 %v5685, %v6282
        %v6303 = vmul.f32 %v5686, %v6282
        %v6304 = vmul.f32 %v5687, %v6282
        %v6305 = vmul.f32 %v5688, %v6282
        %v6306 = vmul.f32 %v5689, %v6282
        %v6307 = vmul.f32 %v5690, %v6282
        %v6308 = vmul.f32 %v5691, %v6282
        %v6309 = vmul.f32 %v5692, %v6282
        %v6310 = vmul.f32 %v5693, %v6282
        %v6311 = vmul.f32 %v5694, %v6282
        %v6312 = vmul.f32 %v5695, %v6282
        %v6313 = vmul.f32 %v5696, %v6282
        %v6314 = vmul.f32 %v5697, %v6282
        %v6315 = vmul.f32 %v5710, %v6282
        %v6316 = vmul.f32 %v5711, %v6282
        %v6317 = vmul.f32 %v5712, %v6282
        %v6318 = vmul.f32 %v5713, %v6282
        %v6319 = vmul.f32 %v5714, %v6282
        %v6320 = vmul.f32 %v5715, %v6282
        %v6321 = vmul.f32 %v5716, %v6282
        %v6322 = vmul.f32 %v5717, %v6282
        %v6323 = vmul.f32 %v5718, %v6282
        %v6324 = vmul.f32 %v5719, %v6282
        %v6325 = vmul.f32 %v5720, %v6282
        %v6326 = vmul.f32 %v5721, %v6282
        %v6327 = vmul.f32 %v5722, %v6282
        %v6328 = vmul.f32 %v5723, %v6282
        %v6329 = vmul.f32 %v5724, %v6282
        %v6330 = vmul.f32 %v5725, %v6282
        %v6331 = vmul.f32 %v5726, %v6282
        %v6332 = vmul.f32 %v5727, %v6282
        %v6333 = vmul.f32 %v5728, %v6282
        %v6334 = vmul.f32 %v5729, %v6282
        %v6335 = vmul.f32 %v5730, %v6282
        %v6336 = vmul.f32 %v5731, %v6282
        %v6337 = vmul.f32 %v5732, %v6282
        %v6338 = vmul.f32 %v5733, %v6282
        %v6339 = vmul.f32 %v5734, %v6282
        %v6340 = vmul.f32 %v5735, %v6282
        %v6341 = vmul.f32 %v5736, %v6282
        %v6342 = vmul.f32 %v5737, %v6282
        %v6343 = vmul.f32 %v5738, %v6282
        %v6344 = vmul.f32 %v5739, %v6282
        %v6345 = vmul.f32 %v5740, %v6282
        %v6346 = vmul.f32 %v5741, %v6282
        %v6347 = vadd.f32 %v6214, %v6283
        %v6348 = vadd.f32 %v6215, %v6284
        %v6349 = vadd.f32 %v6216, %v6285
        %v6350 = vadd.f32 %v6217, %v6286
        %v6351 = vadd.f32 %v6218, %v6287
        %v6352 = vadd.f32 %v6219, %v6288
        %v6353 = vadd.f32 %v6220, %v6289
        %v6354 = vadd.f32 %v6221, %v6290
        %v6355 = vadd.f32 %v6222, %v6291
        %v6356 = vadd.f32 %v6223, %v6292
        %v6357 = vadd.f32 %v6224, %v6293
        %v6358 = vadd.f32 %v6225, %v6294
        %v6359 = vadd.f32 %v6226, %v6295
        %v6360 = vadd.f32 %v6227, %v6296
        %v6361 = vadd.f32 %v6228, %v6297
        %v6362 = vadd.f32 %v6229, %v6298
        %v6363 = vadd.f32 %v6230, %v6299
        %v6364 = vadd.f32 %v6231, %v6300
        %v6365 = vadd.f32 %v6232, %v6301
        %v6366 = vadd.f32 %v6233, %v6302
        %v6367 = vadd.f32 %v6234, %v6303
        %v6368 = vadd.f32 %v6235, %v6304
        %v6369 = vadd.f32 %v6236, %v6305
        %v6370 = vadd.f32 %v6237, %v6306
        %v6371 = vadd.f32 %v6238, %v6307
        %v6372 = vadd.f32 %v6239, %v6308
        %v6373 = vadd.f32 %v6240, %v6309
        %v6374 = vadd.f32 %v6241, %v6310
        %v6375 = vadd.f32 %v6242, %v6311
        %v6376 = vadd.f32 %v6243, %v6312
        %v6377 = vadd.f32 %v6244, %v6313
        %v6378 = vadd.f32 %v6245, %v6314
        %v6379 = vadd.f32 %v6246, %v6315
        %v6380 = vadd.f32 %v6247, %v6316
        %v6381 = vadd.f32 %v6248, %v6317
        %v6382 = vadd.f32 %v6249, %v6318
        %v6383 = vadd.f32 %v6250, %v6319
        %v6384 = vadd.f32 %v6251, %v6320
        %v6385 = vadd.f32 %v6252, %v6321
        %v6386 = vadd.f32 %v6253, %v6322
        %v6387 = vadd.f32 %v6254, %v6323
        %v6388 = vadd.f32 %v6255, %v6324
        %v6389 = vadd.f32 %v6256, %v6325
        %v6390 = vadd.f32 %v6257, %v6326
        %v6391 = vadd.f32 %v6258, %v6327
        %v6392 = vadd.f32 %v6259, %v6328
        %v6393 = vadd.f32 %v6260, %v6329
        %v6394 = vadd.f32 %v6261, %v6330
        %v6395 = vadd.f32 %v6262, %v6331
        %v6396 = vadd.f32 %v6263, %v6332
        %v6397 = vadd.f32 %v6264, %v6333
        %v6398 = vadd.f32 %v6265, %v6334
        %v6399 = vadd.f32 %v6266, %v6335
        %v6400 = vadd.f32 %v6267, %v6336
        %v6401 = vadd.f32 %v6268, %v6337
        %v6402 = vadd.f32 %v6269, %v6338
        %v6403 = vadd.f32 %v6270, %v6339
        %v6404 = vadd.f32 %v6271, %v6340
        %v6405 = vadd.f32 %v6272, %v6341
        %v6406 = vadd.f32 %v6273, %v6342
        %v6407 = vadd.f32 %v6274, %v6343
        %v6408 = vadd.f32 %v6275, %v6344
        %v6409 = vadd.f32 %v6276, %v6345
        %v6410 = vadd.f32 %v6277, %v6346
        %v6411 = vld [vmem:[%s1 + $0x28] sm:$0x1]
        %v6412 = vlaneseq
        %v6413 = vshrl.u32 %v6412, 7
        %v6414 = vsub.s32 0, %v6413
        %v6415 = vrot.slane %v6411, %v6414
        %v6416 = vmul.f32 %v5668, %v6415
        %v6417 = vmul.f32 %v5669, %v6415
        %v6418 = vmul.f32 %v5670, %v6415
        %v6419 = vmul.f32 %v5671, %v6415
        %v6420 = vmul.f32 %v5672, %v6415
        %v6421 = vmul.f32 %v5673, %v6415
        %v6422 = vmul.f32 %v5674, %v6415
        %v6423 = vmul.f32 %v5675, %v6415
        %v6424 = vmul.f32 %v5676, %v6415
        %v6425 = vmul.f32 %v5677, %v6415
        %v6426 = vmul.f32 %v5678, %v6415
        %v6427 = vmul.f32 %v5679, %v6415
        %v6428 = vmul.f32 %v5680, %v6415
        %v6429 = vmul.f32 %v5681, %v6415
        %v6430 = vmul.f32 %v5682, %v6415
        %v6431 = vmul.f32 %v5683, %v6415
        %v6432 = vmul.f32 %v5684, %v6415
        %v6433 = vmul.f32 %v5685, %v6415
        %v6434 = vmul.f32 %v5686, %v6415
        %v6435 = vmul.f32 %v5687, %v6415
        %v6436 = vmul.f32 %v5688, %v6415
        %v6437 = vmul.f32 %v5689, %v6415
        %v6438 = vmul.f32 %v5690, %v6415
        %v6439 = vmul.f32 %v5691, %v6415
        %v6440 = vmul.f32 %v5692, %v6415
        %v6441 = vmul.f32 %v5693, %v6415
        %v6442 = vmul.f32 %v5694, %v6415
        %v6443 = vmul.f32 %v5695, %v6415
        %v6444 = vmul.f32 %v5696, %v6415
        %v6445 = vmul.f32 %v5697, %v6415
        %v6446 = vmul.f32 %v5698, %v6415
        %v6447 = vmul.f32 %v5699, %v6415
        %v6448 = vmul.f32 %v5712, %v6415
        %v6449 = vmul.f32 %v5713, %v6415
        %v6450 = vmul.f32 %v5714, %v6415
        %v6451 = vmul.f32 %v5715, %v6415
        %v6452 = vmul.f32 %v5716, %v6415
        %v6453 = vmul.f32 %v5717, %v6415
        %v6454 = vmul.f32 %v5718, %v6415
        %v6455 = vmul.f32 %v5719, %v6415
        %v6456 = vmul.f32 %v5720, %v6415
        %v6457 = vmul.f32 %v5721, %v6415
        %v6458 = vmul.f32 %v5722, %v6415
        %v6459 = vmul.f32 %v5723, %v6415
        %v6460 = vmul.f32 %v5724, %v6415
        %v6461 = vmul.f32 %v5725, %v6415
        %v6462 = vmul.f32 %v5726, %v6415
        %v6463 = vmul.f32 %v5727, %v6415
        %v6464 = vmul.f32 %v5728, %v6415
        %v6465 = vmul.f32 %v5729, %v6415
        %v6466 = vmul.f32 %v5730, %v6415
        %v6467 = vmul.f32 %v5731, %v6415
        %v6468 = vmul.f32 %v5732, %v6415
        %v6469 = vmul.f32 %v5733, %v6415
        %v6470 = vmul.f32 %v5734, %v6415
        %v6471 = vmul.f32 %v5735, %v6415
        %v6472 = vmul.f32 %v5736, %v6415
        %v6473 = vmul.f32 %v5737, %v6415
        %v6474 = vmul.f32 %v5738, %v6415
        %v6475 = vmul.f32 %v5739, %v6415
        %v6476 = vmul.f32 %v5740, %v6415
        %v6477 = vmul.f32 %v5741, %v6415
        %v6478 = vmul.f32 %v5742, %v6415
        %v6479 = vmul.f32 %v5743, %v6415
        %v6480 = vadd.f32 %v6347, %v6416
        %v6481 = vadd.f32 %v6348, %v6417
        %v6482 = vadd.f32 %v6349, %v6418
        %v6483 = vadd.f32 %v6350, %v6419
        %v6484 = vadd.f32 %v6351, %v6420
        %v6485 = vadd.f32 %v6352, %v6421
        %v6486 = vadd.f32 %v6353, %v6422
        %v6487 = vadd.f32 %v6354, %v6423
        %v6488 = vadd.f32 %v6355, %v6424
        %v6489 = vadd.f32 %v6356, %v6425
        %v6490 = vadd.f32 %v6357, %v6426
        %v6491 = vadd.f32 %v6358, %v6427
        %v6492 = vadd.f32 %v6359, %v6428
        %v6493 = vadd.f32 %v6360, %v6429
        %v6494 = vadd.f32 %v6361, %v6430
        %v6495 = vadd.f32 %v6362, %v6431
        %v6496 = vadd.f32 %v6363, %v6432
        %v6497 = vadd.f32 %v6364, %v6433
        %v6498 = vadd.f32 %v6365, %v6434
        %v6499 = vadd.f32 %v6366, %v6435
        %v6500 = vadd.f32 %v6367, %v6436
        %v6501 = vadd.f32 %v6368, %v6437
        %v6502 = vadd.f32 %v6369, %v6438
        %v6503 = vadd.f32 %v6370, %v6439
        %v6504 = vadd.f32 %v6371, %v6440
        %v6505 = vadd.f32 %v6372, %v6441
        %v6506 = vadd.f32 %v6373, %v6442
        %v6507 = vadd.f32 %v6374, %v6443
        %v6508 = vadd.f32 %v6375, %v6444
        %v6509 = vadd.f32 %v6376, %v6445
        %v6510 = vadd.f32 %v6377, %v6446
        %v6511 = vadd.f32 %v6378, %v6447
        %v6512 = vadd.f32 %v6379, %v6448
        %v6513 = vadd.f32 %v6380, %v6449
        %v6514 = vadd.f32 %v6381, %v6450
        %v6515 = vadd.f32 %v6382, %v6451
        %v6516 = vadd.f32 %v6383, %v6452
        %v6517 = vadd.f32 %v6384, %v6453
        %v6518 = vadd.f32 %v6385, %v6454
        %v6519 = vadd.f32 %v6386, %v6455
        %v6520 = vadd.f32 %v6387, %v6456
        %v6521 = vadd.f32 %v6388, %v6457
        %v6522 = vadd.f32 %v6389, %v6458
        %v6523 = vadd.f32 %v6390, %v6459
        %v6524 = vadd.f32 %v6391, %v6460
        %v6525 = vadd.f32 %v6392, %v6461
        %v6526 = vadd.f32 %v6393, %v6462
        %v6527 = vadd.f32 %v6394, %v6463
        %v6528 = vadd.f32 %v6395, %v6464
        %v6529 = vadd.f32 %v6396, %v6465
        %v6530 = vadd.f32 %v6397, %v6466
        %v6531 = vadd.f32 %v6398, %v6467
        %v6532 = vadd.f32 %v6399, %v6468
        %v6533 = vadd.f32 %v6400, %v6469
        %v6534 = vadd.f32 %v6401, %v6470
        %v6535 = vadd.f32 %v6402, %v6471
        %v6536 = vadd.f32 %v6403, %v6472
        %v6537 = vadd.f32 %v6404, %v6473
        %v6538 = vadd.f32 %v6405, %v6474
        %v6539 = vadd.f32 %v6406, %v6475
        %v6540 = vadd.f32 %v6407, %v6476
        %v6541 = vadd.f32 %v6408, %v6477
        %v6542 = vadd.f32 %v6409, %v6478
        %v6543 = vadd.f32 %v6410, %v6479
        %v6544 = vld [vmem:[%s1 + $0x2f] sm:$0x1]
        %v6545 = vlaneseq
        %v6546 = vshrl.u32 %v6545, 7
        %v6547 = vsub.s32 0, %v6546
        %v6548 = vrot.slane %v6544, %v6547
        %v6549 = vmul.f32 %v5670, %v6548
        %v6550 = vmul.f32 %v5671, %v6548
        %v6551 = vmul.f32 %v5672, %v6548
        %v6552 = vmul.f32 %v5673, %v6548
        %v6553 = vmul.f32 %v5674, %v6548
        %v6554 = vmul.f32 %v5675, %v6548
        %v6555 = vmul.f32 %v5676, %v6548
        %v6556 = vmul.f32 %v5677, %v6548
        %v6557 = vmul.f32 %v5678, %v6548
        %v6558 = vmul.f32 %v5679, %v6548
        %v6559 = vmul.f32 %v5680, %v6548
        %v6560 = vmul.f32 %v5681, %v6548
        %v6561 = vmul.f32 %v5682, %v6548
        %v6562 = vmul.f32 %v5683, %v6548
        %v6563 = vmul.f32 %v5684, %v6548
        %v6564 = vmul.f32 %v5685, %v6548
        %v6565 = vmul.f32 %v5686, %v6548
        %v6566 = vmul.f32 %v5687, %v6548
        %v6567 = vmul.f32 %v5688, %v6548
        %v6568 = vmul.f32 %v5689, %v6548
        %v6569 = vmul.f32 %v5690, %v6548
        %v6570 = vmul.f32 %v5691, %v6548
        %v6571 = vmul.f32 %v5692, %v6548
        %v6572 = vmul.f32 %v5693, %v6548
        %v6573 = vmul.f32 %v5694, %v6548
        %v6574 = vmul.f32 %v5695, %v6548
        %v6575 = vmul.f32 %v5696, %v6548
        %v6576 = vmul.f32 %v5697, %v6548
        %v6577 = vmul.f32 %v5698, %v6548
        %v6578 = vmul.f32 %v5699, %v6548
        %v6579 = vmul.f32 %v5700, %v6548
        %v6580 = vmul.f32 %v5701, %v6548
        %v6581 = vmul.f32 %v5714, %v6548
        %v6582 = vmul.f32 %v5715, %v6548
        %v6583 = vmul.f32 %v5716, %v6548
        %v6584 = vmul.f32 %v5717, %v6548
        %v6585 = vmul.f32 %v5718, %v6548
        %v6586 = vmul.f32 %v5719, %v6548
        %v6587 = vmul.f32 %v5720, %v6548
        %v6588 = vmul.f32 %v5721, %v6548
        %v6589 = vmul.f32 %v5722, %v6548
        %v6590 = vmul.f32 %v5723, %v6548
        %v6591 = vmul.f32 %v5724, %v6548
        %v6592 = vmul.f32 %v5725, %v6548
        %v6593 = vmul.f32 %v5726, %v6548
        %v6594 = vmul.f32 %v5727, %v6548
        %v6595 = vmul.f32 %v5728, %v6548
        %v6596 = vmul.f32 %v5729, %v6548
        %v6597 = vmul.f32 %v5730, %v6548
        %v6598 = vmul.f32 %v5731, %v6548
        %v6599 = vmul.f32 %v5732, %v6548
        %v6600 = vmul.f32 %v5733, %v6548
        %v6601 = vmul.f32 %v5734, %v6548
        %v6602 = vmul.f32 %v5735, %v6548
        %v6603 = vmul.f32 %v5736, %v6548
        %v6604 = vmul.f32 %v5737, %v6548
        %v6605 = vmul.f32 %v5738, %v6548
        %v6606 = vmul.f32 %v5739, %v6548
        %v6607 = vmul.f32 %v5740, %v6548
        %v6608 = vmul.f32 %v5741, %v6548
        %v6609 = vmul.f32 %v5742, %v6548
        %v6610 = vmul.f32 %v5743, %v6548
        %v6611 = vmul.f32 %v5744, %v6548
        %v6612 = vmul.f32 %v5745, %v6548
        %v6613 = vadd.f32 %v6480, %v6549
        %v6614 = vadd.f32 %v6481, %v6550
        %v6615 = vadd.f32 %v6482, %v6551
        %v6616 = vadd.f32 %v6483, %v6552
        %v6617 = vadd.f32 %v6484, %v6553
        %v6618 = vadd.f32 %v6485, %v6554
        %v6619 = vadd.f32 %v6486, %v6555
        %v6620 = vadd.f32 %v6487, %v6556
        %v6621 = vadd.f32 %v6488, %v6557
        %v6622 = vadd.f32 %v6489, %v6558
        %v6623 = vadd.f32 %v6490, %v6559
        %v6624 = vadd.f32 %v6491, %v6560
        %v6625 = vadd.f32 %v6492, %v6561
        %v6626 = vadd.f32 %v6493, %v6562
        %v6627 = vadd.f32 %v6494, %v6563
        %v6628 = vadd.f32 %v6495, %v6564
        %v6629 = vadd.f32 %v6496, %v6565
        %v6630 = vadd.f32 %v6497, %v6566
        %v6631 = vadd.f32 %v6498, %v6567
        %v6632 = vadd.f32 %v6499, %v6568
        %v6633 = vadd.f32 %v6500, %v6569
        %v6634 = vadd.f32 %v6501, %v6570
        %v6635 = vadd.f32 %v6502, %v6571
        %v6636 = vadd.f32 %v6503, %v6572
        %v6637 = vadd.f32 %v6504, %v6573
        %v6638 = vadd.f32 %v6505, %v6574
        %v6639 = vadd.f32 %v6506, %v6575
        %v6640 = vadd.f32 %v6507, %v6576
        %v6641 = vadd.f32 %v6508, %v6577
        %v6642 = vadd.f32 %v6509, %v6578
        %v6643 = vadd.f32 %v6510, %v6579
        %v6644 = vadd.f32 %v6511, %v6580
        %v6645 = vadd.f32 %v6512, %v6581
        %v6646 = vadd.f32 %v6513, %v6582
        %v6647 = vadd.f32 %v6514, %v6583
        %v6648 = vadd.f32 %v6515, %v6584
        %v6649 = vadd.f32 %v6516, %v6585
        %v6650 = vadd.f32 %v6517, %v6586
        %v6651 = vadd.f32 %v6518, %v6587
        %v6652 = vadd.f32 %v6519, %v6588
        %v6653 = vadd.f32 %v6520, %v6589
        %v6654 = vadd.f32 %v6521, %v6590
        %v6655 = vadd.f32 %v6522, %v6591
        %v6656 = vadd.f32 %v6523, %v6592
        %v6657 = vadd.f32 %v6524, %v6593
        %v6658 = vadd.f32 %v6525, %v6594
        %v6659 = vadd.f32 %v6526, %v6595
        %v6660 = vadd.f32 %v6527, %v6596
        %v6661 = vadd.f32 %v6528, %v6597
        %v6662 = vadd.f32 %v6529, %v6598
        %v6663 = vadd.f32 %v6530, %v6599
        %v6664 = vadd.f32 %v6531, %v6600
        %v6665 = vadd.f32 %v6532, %v6601
        %v6666 = vadd.f32 %v6533, %v6602
        %v6667 = vadd.f32 %v6534, %v6603
        %v6668 = vadd.f32 %v6535, %v6604
        %v6669 = vadd.f32 %v6536, %v6605
        %v6670 = vadd.f32 %v6537, %v6606
        %v6671 = vadd.f32 %v6538, %v6607
        %v6672 = vadd.f32 %v6539, %v6608
        %v6673 = vadd.f32 %v6540, %v6609
        %v6674 = vadd.f32 %v6541, %v6610
        %v6675 = vadd.f32 %v6542, %v6611
        %v6676 = vadd.f32 %v6543, %v6612
        %v6677 = vld [vmem:[#allocation2 + $0x6] sm:$0xff]
        %v6678 = vld [vmem:[#allocation2 + $0xe] sm:$0xff]
        %v6679 = vld [vmem:[#allocation2 + $0x1e] sm:$0xff]
        %v6680 = vld [vmem:[#allocation2 + $0x26] sm:$0xff]
        %v6681 = vld [vmem:[#allocation2 + $0x36] sm:$0xff]
        %v6682 = vld [vmem:[#allocation2 + $0x3e] sm:$0xff]
        %v6683 = vld [vmem:[#allocation2 + $0x4e] sm:$0xff]
        %v6684 = vld [vmem:[#allocation2 + $0x56] sm:$0xff]
        %v6685 = vld [vmem:[#allocation2 + $0x66] sm:$0xff]
        %v6686 = vld [vmem:[#allocation2 + $0x6e] sm:$0xff]
        %v6687 = vld [vmem:[#allocation2 + $0x7e] sm:$0xff]
        %v6688 = vld [vmem:[#allocation2 + $0x86] sm:$0xff]
        %v6689 = vld [vmem:[#allocation2 + $0x96] sm:$0xff]
        %v6690 = vld [vmem:[#allocation2 + $0x9e] sm:$0xff]
        %v6691 = vld [vmem:[#allocation2 + $0xae] sm:$0xff]
        %v6692 = vld [vmem:[#allocation2 + $0xb6] sm:$0xff]
        %v6693 = vld [vmem:[#allocation2 + $0xc6] sm:$0xff]
        %v6694 = vld [vmem:[#allocation2 + $0xce] sm:$0xff]
        %v6695 = vld [vmem:[#allocation2 + $0xde] sm:$0xff]
        %v6696 = vld [vmem:[#allocation2 + $0xe6] sm:$0xff]
        %v6697 = vld [vmem:[#allocation2 + $0xf6] sm:$0xff]
        %v6698 = vld [vmem:[#allocation2 + $0xfe] sm:$0xff]
        %v6699 = vld [vmem:[#allocation2 + $0x10e] sm:$0xff]
        %v6700 = vld [vmem:[#allocation2 + $0x116] sm:$0xff]
        %v6701 = vld [vmem:[#allocation2 + $0x126] sm:$0xff]
        %v6702 = vld [vmem:[#allocation2 + $0x12e] sm:$0xff]
        %v6703 = vld [vmem:[#allocation2 + $0x13e] sm:$0xff]
        %v6704 = vld [vmem:[#allocation2 + $0x146] sm:$0xff]
        %v6705 = vld [vmem:[#allocation2 + $0x156] sm:$0xff]
        %v6706 = vld [vmem:[#allocation2 + $0x15e] sm:$0xff]
        %v6707 = vld [vmem:[#allocation2 + $0x16e] sm:$0xff]
        %v6708 = vld [vmem:[#allocation2 + $0x176] sm:$0xff]
        %v6709 = vld [vmem:[#allocation2 + $0x186] sm:$0xff]
        %v6710 = vld [vmem:[#allocation2 + $0x18e] sm:$0xff]
        %v6711 = vld [vmem:[#allocation2 + $0x19e] sm:$0xff]
        %v6712 = vld [vmem:[#allocation2 + $0x1a6] sm:$0xff]
        %v6713 = vld [vmem:[#allocation2 + $0x1b6] sm:$0xff]
        %v6714 = vld [vmem:[#allocation2 + $0x1be] sm:$0xff]
        %v6715 = vld [vmem:[#allocation2 + $0x1ce] sm:$0xff]
        %v6716 = vld [vmem:[#allocation2 + $0x1d6] sm:$0xff]
        %v6717 = vld [vmem:[#allocation2 + $0x1e6] sm:$0xff]
        %v6718 = vld [vmem:[#allocation2 + $0x1ee] sm:$0xff]
        %v6719 = vld [vmem:[#allocation2 + $0x1fe] sm:$0xff]
        %v6720 = vld [vmem:[#allocation2 + $0x206] sm:$0xff]
        %v6721 = vld [vmem:[#allocation2 + $0x216] sm:$0xff]
        %v6722 = vld [vmem:[#allocation2 + $0x21e] sm:$0xff]
        %v6723 = vld [vmem:[#allocation2 + $0x22e] sm:$0xff]
        %v6724 = vld [vmem:[#allocation2 + $0x236] sm:$0xff]
        %v6725 = vld [vmem:[#allocation2 + $0x246] sm:$0xff]
        %v6726 = vld [vmem:[#allocation2 + $0x24e] sm:$0xff]
        %v6727 = vld [vmem:[#allocation2 + $0x25e] sm:$0xff]
        %v6728 = vld [vmem:[#allocation2 + $0x266] sm:$0xff]
        %v6729 = vld [vmem:[#allocation2 + $0x276] sm:$0xff]
        %v6730 = vld [vmem:[#allocation2 + $0x27e] sm:$0xff]
        %v6731 = vld [vmem:[#allocation2 + $0x28e] sm:$0xff]
        %v6732 = vld [vmem:[#allocation2 + $0x296] sm:$0xff]
        %v6733 = vld [vmem:[#allocation2 + $0x2a6] sm:$0xff]
        %v6734 = vld [vmem:[#allocation2 + $0x2ae] sm:$0xff]
        %v6735 = vld [vmem:[#allocation2 + $0x2be] sm:$0xff]
        %v6736 = vld [vmem:[#allocation2 + $0x2c6] sm:$0xff]
        %v6737 = vld [vmem:[#allocation2 + $0x2d6] sm:$0xff]
        %v6738 = vld [vmem:[#allocation2 + $0x2de] sm:$0xff]
        %v6739 = vld [vmem:[#allocation2 + $0x2ee] sm:$0xff]
        %v6740 = vld [vmem:[#allocation2 + $0x2f6] sm:$0xff]
        %v6741 = vld [vmem:[#allocation2 + $0x306] sm:$0xff]
        %v6742 = vld [vmem:[#allocation2 + $0x30e] sm:$0xff]
        %v6743 = vld [vmem:[#allocation2 + $0x31e] sm:$0xff]
        %v6744 = vld [vmem:[#allocation2 + $0x326] sm:$0xff]
        %v6745 = vld [vmem:[#allocation2 + $0x336] sm:$0xff]
        %v6746 = vld [vmem:[#allocation2 + $0x33e] sm:$0xff]
        %v6747 = vld [vmem:[#allocation2 + $0x34e] sm:$0xff]
        %v6748 = vld [vmem:[#allocation2 + $0x356] sm:$0xff]
        %v6749 = vld [vmem:[#allocation2 + $0x366] sm:$0xff]
        %v6750 = vld [vmem:[#allocation2 + $0x36e] sm:$0xff]
        %v6751 = vld [vmem:[#allocation2 + $0x37e] sm:$0xff]
        %v6752 = vld [vmem:[#allocation2 + $0x386] sm:$0xff]
        %v6753 = vld [vmem:[#allocation2 + $0x396] sm:$0xff]
        %v6754 = vld [vmem:[#allocation2 + $0x39e] sm:$0xff]
        %v6755 = vld [vmem:[#allocation2 + $0x3ae] sm:$0xff]
        %v6756 = vld [vmem:[#allocation2 + $0x3b6] sm:$0xff]
        %v6757 = vld [vmem:[#allocation2 + $0x3c6] sm:$0xff]
        %v6758 = vld [vmem:[#allocation2 + $0x3ce] sm:$0xff]
        %v6759 = vld [vmem:[#allocation2 + $0x3de] sm:$0xff]
        %v6760 = vld [vmem:[#allocation2 + $0x3e6] sm:$0xff]
        %v6761 = vld [vmem:[#allocation2 + $0x3f6] sm:$0xff]
        %v6762 = vld [vmem:[#allocation2 + $0x3fe] sm:$0xff]
        %v6763 = vld [vmem:[#allocation2 + $0x40e] sm:$0xff]
        %v6764 = vld [vmem:[#allocation2 + $0x416] sm:$0xff]
        %v6765 = vld [vmem:[%s1 + $0x6] sm:$0x1]
        %v6766 = vlaneseq
        %v6767 = vshrl.u32 %v6766, 7
        %v6768 = vsub.s32 0, %v6767
        %v6769 = vrot.slane %v6765, %v6768
        %v6770 = vmul.f32 %v6677, %v6769
        %v6771 = vmul.f32 %v6678, %v6769
        %v6772 = vmul.f32 %v6679, %v6769
        %v6773 = vmul.f32 %v6680, %v6769
        %v6774 = vmul.f32 %v6681, %v6769
        %v6775 = vmul.f32 %v6682, %v6769
        %v6776 = vmul.f32 %v6683, %v6769
        %v6777 = vmul.f32 %v6684, %v6769
        %v6778 = vmul.f32 %v6685, %v6769
        %v6779 = vmul.f32 %v6686, %v6769
        %v6780 = vmul.f32 %v6687, %v6769
        %v6781 = vmul.f32 %v6688, %v6769
        %v6782 = vmul.f32 %v6689, %v6769
        %v6783 = vmul.f32 %v6690, %v6769
        %v6784 = vmul.f32 %v6691, %v6769
        %v6785 = vmul.f32 %v6692, %v6769
        %v6786 = vmul.f32 %v6693, %v6769
        %v6787 = vmul.f32 %v6694, %v6769
        %v6788 = vmul.f32 %v6695, %v6769
        %v6789 = vmul.f32 %v6696, %v6769
        %v6790 = vmul.f32 %v6697, %v6769
        %v6791 = vmul.f32 %v6698, %v6769
        %v6792 = vmul.f32 %v6699, %v6769
        %v6793 = vmul.f32 %v6700, %v6769
        %v6794 = vmul.f32 %v6701, %v6769
        %v6795 = vmul.f32 %v6702, %v6769
        %v6796 = vmul.f32 %v6703, %v6769
        %v6797 = vmul.f32 %v6704, %v6769
        %v6798 = vmul.f32 %v6705, %v6769
        %v6799 = vmul.f32 %v6706, %v6769
        %v6800 = vmul.f32 %v6707, %v6769
        %v6801 = vmul.f32 %v6708, %v6769
        %v6802 = vmul.f32 %v6721, %v6769
        %v6803 = vmul.f32 %v6722, %v6769
        %v6804 = vmul.f32 %v6723, %v6769
        %v6805 = vmul.f32 %v6724, %v6769
        %v6806 = vmul.f32 %v6725, %v6769
        %v6807 = vmul.f32 %v6726, %v6769
        %v6808 = vmul.f32 %v6727, %v6769
        %v6809 = vmul.f32 %v6728, %v6769
        %v6810 = vmul.f32 %v6729, %v6769
        %v6811 = vmul.f32 %v6730, %v6769
        %v6812 = vmul.f32 %v6731, %v6769
        %v6813 = vmul.f32 %v6732, %v6769
        %v6814 = vmul.f32 %v6733, %v6769
        %v6815 = vmul.f32 %v6734, %v6769
        %v6816 = vmul.f32 %v6735, %v6769
        %v6817 = vmul.f32 %v6736, %v6769
        %v6818 = vmul.f32 %v6737, %v6769
        %v6819 = vmul.f32 %v6738, %v6769
        %v6820 = vmul.f32 %v6739, %v6769
        %v6821 = vmul.f32 %v6740, %v6769
        %v6822 = vmul.f32 %v6741, %v6769
        %v6823 = vmul.f32 %v6742, %v6769
        %v6824 = vmul.f32 %v6743, %v6769
        %v6825 = vmul.f32 %v6744, %v6769
        %v6826 = vmul.f32 %v6745, %v6769
        %v6827 = vmul.f32 %v6746, %v6769
        %v6828 = vmul.f32 %v6747, %v6769
        %v6829 = vmul.f32 %v6748, %v6769
        %v6830 = vmul.f32 %v6749, %v6769
        %v6831 = vmul.f32 %v6750, %v6769
        %v6832 = vmul.f32 %v6751, %v6769
        %v6833 = vmul.f32 %v6752, %v6769
        %v6834 = vadd.f32 %v6613, %v6770
        %v6835 = vadd.f32 %v6614, %v6771
        %v6836 = vadd.f32 %v6615, %v6772
        %v6837 = vadd.f32 %v6616, %v6773
        %v6838 = vadd.f32 %v6617, %v6774
        %v6839 = vadd.f32 %v6618, %v6775
        %v6840 = vadd.f32 %v6619, %v6776
        %v6841 = vadd.f32 %v6620, %v6777
        %v6842 = vadd.f32 %v6621, %v6778
        %v6843 = vadd.f32 %v6622, %v6779
        %v6844 = vadd.f32 %v6623, %v6780
        %v6845 = vadd.f32 %v6624, %v6781
        %v6846 = vadd.f32 %v6625, %v6782
        %v6847 = vadd.f32 %v6626, %v6783
        %v6848 = vadd.f32 %v6627, %v6784
        %v6849 = vadd.f32 %v6628, %v6785
        %v6850 = vadd.f32 %v6629, %v6786
        %v6851 = vadd.f32 %v6630, %v6787
        %v6852 = vadd.f32 %v6631, %v6788
        %v6853 = vadd.f32 %v6632, %v6789
        %v6854 = vadd.f32 %v6633, %v6790
        %v6855 = vadd.f32 %v6634, %v6791
        %v6856 = vadd.f32 %v6635, %v6792
        %v6857 = vadd.f32 %v6636, %v6793
        %v6858 = vadd.f32 %v6637, %v6794
        %v6859 = vadd.f32 %v6638, %v6795
        %v6860 = vadd.f32 %v6639, %v6796
        %v6861 = vadd.f32 %v6640, %v6797
        %v6862 = vadd.f32 %v6641, %v6798
        %v6863 = vadd.f32 %v6642, %v6799
        %v6864 = vadd.f32 %v6643, %v6800
        %v6865 = vadd.f32 %v6644, %v6801
        %v6866 = vadd.f32 %v6645, %v6802
        %v6867 = vadd.f32 %v6646, %v6803
        %v6868 = vadd.f32 %v6647, %v6804
        %v6869 = vadd.f32 %v6648, %v6805
        %v6870 = vadd.f32 %v6649, %v6806
        %v6871 = vadd.f32 %v6650, %v6807
        %v6872 = vadd.f32 %v6651, %v6808
        %v6873 = vadd.f32 %v6652, %v6809
        %v6874 = vadd.f32 %v6653, %v6810
        %v6875 = vadd.f32 %v6654, %v6811
        %v6876 = vadd.f32 %v6655, %v6812
        %v6877 = vadd.f32 %v6656, %v6813
        %v6878 = vadd.f32 %v6657, %v6814
        %v6879 = vadd.f32 %v6658, %v6815
        %v6880 = vadd.f32 %v6659, %v6816
        %v6881 = vadd.f32 %v6660, %v6817
        %v6882 = vadd.f32 %v6661, %v6818
        %v6883 = vadd.f32 %v6662, %v6819
        %v6884 = vadd.f32 %v6663, %v6820
        %v6885 = vadd.f32 %v6664, %v6821
        %v6886 = vadd.f32 %v6665, %v6822
        %v6887 = vadd.f32 %v6666, %v6823
        %v6888 = vadd.f32 %v6667, %v6824
        %v6889 = vadd.f32 %v6668, %v6825
        %v6890 = vadd.f32 %v6669, %v6826
        %v6891 = vadd.f32 %v6670, %v6827
        %v6892 = vadd.f32 %v6671, %v6828
        %v6893 = vadd.f32 %v6672, %v6829
        %v6894 = vadd.f32 %v6673, %v6830
        %v6895 = vadd.f32 %v6674, %v6831
        %v6896 = vadd.f32 %v6675, %v6832
        %v6897 = vadd.f32 %v6676, %v6833
        %v6898 = vld [vmem:[%s1 + $0xd] sm:$0x1]
        %v6899 = vlaneseq
        %v6900 = vshrl.u32 %v6899, 7
        %v6901 = vsub.s32 0, %v6900
        %v6902 = vrot.slane %v6898, %v6901
        %v6903 = vmul.f32 %v6679, %v6902
        %v6904 = vmul.f32 %v6680, %v6902
        %v6905 = vmul.f32 %v6681, %v6902
        %v6906 = vmul.f32 %v6682, %v6902
        %v6907 = vmul.f32 %v6683, %v6902
        %v6908 = vmul.f32 %v6684, %v6902
        %v6909 = vmul.f32 %v6685, %v6902
        %v6910 = vmul.f32 %v6686, %v6902
        %v6911 = vmul.f32 %v6687, %v6902
        %v6912 = vmul.f32 %v6688, %v6902
        %v6913 = vmul.f32 %v6689, %v6902
        %v6914 = vmul.f32 %v6690, %v6902
        %v6915 = vmul.f32 %v6691, %v6902
        %v6916 = vmul.f32 %v6692, %v6902
        %v6917 = vmul.f32 %v6693, %v6902
        %v6918 = vmul.f32 %v6694, %v6902
        %v6919 = vmul.f32 %v6695, %v6902
        %v6920 = vmul.f32 %v6696, %v6902
        %v6921 = vmul.f32 %v6697, %v6902
        %v6922 = vmul.f32 %v6698, %v6902
        %v6923 = vmul.f32 %v6699, %v6902
        %v6924 = vmul.f32 %v6700, %v6902
        %v6925 = vmul.f32 %v6701, %v6902
        %v6926 = vmul.f32 %v6702, %v6902
        %v6927 = vmul.f32 %v6703, %v6902
        %v6928 = vmul.f32 %v6704, %v6902
        %v6929 = vmul.f32 %v6705, %v6902
        %v6930 = vmul.f32 %v6706, %v6902
        %v6931 = vmul.f32 %v6707, %v6902
        %v6932 = vmul.f32 %v6708, %v6902
        %v6933 = vmul.f32 %v6709, %v6902
        %v6934 = vmul.f32 %v6710, %v6902
        %v6935 = vmul.f32 %v6723, %v6902
        %v6936 = vmul.f32 %v6724, %v6902
        %v6937 = vmul.f32 %v6725, %v6902
        %v6938 = vmul.f32 %v6726, %v6902
        %v6939 = vmul.f32 %v6727, %v6902
        %v6940 = vmul.f32 %v6728, %v6902
        %v6941 = vmul.f32 %v6729, %v6902
        %v6942 = vmul.f32 %v6730, %v6902
        %v6943 = vmul.f32 %v6731, %v6902
        %v6944 = vmul.f32 %v6732, %v6902
        %v6945 = vmul.f32 %v6733, %v6902
        %v6946 = vmul.f32 %v6734, %v6902
        %v6947 = vmul.f32 %v6735, %v6902
        %v6948 = vmul.f32 %v6736, %v6902
        %v6949 = vmul.f32 %v6737, %v6902
        %v6950 = vmul.f32 %v6738, %v6902
        %v6951 = vmul.f32 %v6739, %v6902
        %v6952 = vmul.f32 %v6740, %v6902
        %v6953 = vmul.f32 %v6741, %v6902
        %v6954 = vmul.f32 %v6742, %v6902
        %v6955 = vmul.f32 %v6743, %v6902
        %v6956 = vmul.f32 %v6744, %v6902
        %v6957 = vmul.f32 %v6745, %v6902
        %v6958 = vmul.f32 %v6746, %v6902
        %v6959 = vmul.f32 %v6747, %v6902
        %v6960 = vmul.f32 %v6748, %v6902
        %v6961 = vmul.f32 %v6749, %v6902
        %v6962 = vmul.f32 %v6750, %v6902
        %v6963 = vmul.f32 %v6751, %v6902
        %v6964 = vmul.f32 %v6752, %v6902
        %v6965 = vmul.f32 %v6753, %v6902
        %v6966 = vmul.f32 %v6754, %v6902
        %v6967 = vadd.f32 %v6834, %v6903
        %v6968 = vadd.f32 %v6835, %v6904
        %v6969 = vadd.f32 %v6836, %v6905
        %v6970 = vadd.f32 %v6837, %v6906
        %v6971 = vadd.f32 %v6838, %v6907
        %v6972 = vadd.f32 %v6839, %v6908
        %v6973 = vadd.f32 %v6840, %v6909
        %v6974 = vadd.f32 %v6841, %v6910
        %v6975 = vadd.f32 %v6842, %v6911
        %v6976 = vadd.f32 %v6843, %v6912
        %v6977 = vadd.f32 %v6844, %v6913
        %v6978 = vadd.f32 %v6845, %v6914
        %v6979 = vadd.f32 %v6846, %v6915
        %v6980 = vadd.f32 %v6847, %v6916
        %v6981 = vadd.f32 %v6848, %v6917
        %v6982 = vadd.f32 %v6849, %v6918
        %v6983 = vadd.f32 %v6850, %v6919
        %v6984 = vadd.f32 %v6851, %v6920
        %v6985 = vadd.f32 %v6852, %v6921
        %v6986 = vadd.f32 %v6853, %v6922
        %v6987 = vadd.f32 %v6854, %v6923
        %v6988 = vadd.f32 %v6855, %v6924
        %v6989 = vadd.f32 %v6856, %v6925
        %v6990 = vadd.f32 %v6857, %v6926
        %v6991 = vadd.f32 %v6858, %v6927
        %v6992 = vadd.f32 %v6859, %v6928
        %v6993 = vadd.f32 %v6860, %v6929
        %v6994 = vadd.f32 %v6861, %v6930
        %v6995 = vadd.f32 %v6862, %v6931
        %v6996 = vadd.f32 %v6863, %v6932
        %v6997 = vadd.f32 %v6864, %v6933
        %v6998 = vadd.f32 %v6865, %v6934
        %v6999 = vadd.f32 %v6866, %v6935
        %v7000 = vadd.f32 %v6867, %v6936
        %v7001 = vadd.f32 %v6868, %v6937
        %v7002 = vadd.f32 %v6869, %v6938
        %v7003 = vadd.f32 %v6870, %v6939
        %v7004 = vadd.f32 %v6871, %v6940
        %v7005 = vadd.f32 %v6872, %v6941
        %v7006 = vadd.f32 %v6873, %v6942
        %v7007 = vadd.f32 %v6874, %v6943
        %v7008 = vadd.f32 %v6875, %v6944
        %v7009 = vadd.f32 %v6876, %v6945
        %v7010 = vadd.f32 %v6877, %v6946
        %v7011 = vadd.f32 %v6878, %v6947
        %v7012 = vadd.f32 %v6879, %v6948
        %v7013 = vadd.f32 %v6880, %v6949
        %v7014 = vadd.f32 %v6881, %v6950
        %v7015 = vadd.f32 %v6882, %v6951
        %v7016 = vadd.f32 %v6883, %v6952
        %v7017 = vadd.f32 %v6884, %v6953
        %v7018 = vadd.f32 %v6885, %v6954
        %v7019 = vadd.f32 %v6886, %v6955
        %v7020 = vadd.f32 %v6887, %v6956
        %v7021 = vadd.f32 %v6888, %v6957
        %v7022 = vadd.f32 %v6889, %v6958
        %v7023 = vadd.f32 %v6890, %v6959
        %v7024 = vadd.f32 %v6891, %v6960
        %v7025 = vadd.f32 %v6892, %v6961
        %v7026 = vadd.f32 %v6893, %v6962
        %v7027 = vadd.f32 %v6894, %v6963
        %v7028 = vadd.f32 %v6895, %v6964
        %v7029 = vadd.f32 %v6896, %v6965
        %v7030 = vadd.f32 %v6897, %v6966
        %v7031 = vld [vmem:[%s1 + $0x14] sm:$0x1]
        %v7032 = vlaneseq
        %v7033 = vshrl.u32 %v7032, 7
        %v7034 = vsub.s32 0, %v7033
        %v7035 = vrot.slane %v7031, %v7034
        %v7036 = vmul.f32 %v6681, %v7035
        %v7037 = vmul.f32 %v6682, %v7035
        %v7038 = vmul.f32 %v6683, %v7035
        %v7039 = vmul.f32 %v6684, %v7035
        %v7040 = vmul.f32 %v6685, %v7035
        %v7041 = vmul.f32 %v6686, %v7035
        %v7042 = vmul.f32 %v6687, %v7035
        %v7043 = vmul.f32 %v6688, %v7035
        %v7044 = vmul.f32 %v6689, %v7035
        %v7045 = vmul.f32 %v6690, %v7035
        %v7046 = vmul.f32 %v6691, %v7035
        %v7047 = vmul.f32 %v6692, %v7035
        %v7048 = vmul.f32 %v6693, %v7035
        %v7049 = vmul.f32 %v6694, %v7035
        %v7050 = vmul.f32 %v6695, %v7035
        %v7051 = vmul.f32 %v6696, %v7035
        %v7052 = vmul.f32 %v6697, %v7035
        %v7053 = vmul.f32 %v6698, %v7035
        %v7054 = vmul.f32 %v6699, %v7035
        %v7055 = vmul.f32 %v6700, %v7035
        %v7056 = vmul.f32 %v6701, %v7035
        %v7057 = vmul.f32 %v6702, %v7035
        %v7058 = vmul.f32 %v6703, %v7035
        %v7059 = vmul.f32 %v6704, %v7035
        %v7060 = vmul.f32 %v6705, %v7035
        %v7061 = vmul.f32 %v6706, %v7035
        %v7062 = vmul.f32 %v6707, %v7035
        %v7063 = vmul.f32 %v6708, %v7035
        %v7064 = vmul.f32 %v6709, %v7035
        %v7065 = vmul.f32 %v6710, %v7035
        %v7066 = vmul.f32 %v6711, %v7035
        %v7067 = vmul.f32 %v6712, %v7035
        %v7068 = vmul.f32 %v6725, %v7035
        %v7069 = vmul.f32 %v6726, %v7035
        %v7070 = vmul.f32 %v6727, %v7035
        %v7071 = vmul.f32 %v6728, %v7035
        %v7072 = vmul.f32 %v6729, %v7035
        %v7073 = vmul.f32 %v6730, %v7035
        %v7074 = vmul.f32 %v6731, %v7035
        %v7075 = vmul.f32 %v6732, %v7035
        %v7076 = vmul.f32 %v6733, %v7035
        %v7077 = vmul.f32 %v6734, %v7035
        %v7078 = vmul.f32 %v6735, %v7035
        %v7079 = vmul.f32 %v6736, %v7035
        %v7080 = vmul.f32 %v6737, %v7035
        %v7081 = vmul.f32 %v6738, %v7035
        %v7082 = vmul.f32 %v6739, %v7035
        %v7083 = vmul.f32 %v6740, %v7035
        %v7084 = vmul.f32 %v6741, %v7035
        %v7085 = vmul.f32 %v6742, %v7035
        %v7086 = vmul.f32 %v6743, %v7035
        %v7087 = vmul.f32 %v6744, %v7035
        %v7088 = vmul.f32 %v6745, %v7035
        %v7089 = vmul.f32 %v6746, %v7035
        %v7090 = vmul.f32 %v6747, %v7035
        %v7091 = vmul.f32 %v6748, %v7035
        %v7092 = vmul.f32 %v6749, %v7035
        %v7093 = vmul.f32 %v6750, %v7035
        %v7094 = vmul.f32 %v6751, %v7035
        %v7095 = vmul.f32 %v6752, %v7035
        %v7096 = vmul.f32 %v6753, %v7035
        %v7097 = vmul.f32 %v6754, %v7035
        %v7098 = vmul.f32 %v6755, %v7035
        %v7099 = vmul.f32 %v6756, %v7035
        %v7100 = vadd.f32 %v6967, %v7036
        %v7101 = vadd.f32 %v6968, %v7037
        %v7102 = vadd.f32 %v6969, %v7038
        %v7103 = vadd.f32 %v6970, %v7039
        %v7104 = vadd.f32 %v6971, %v7040
        %v7105 = vadd.f32 %v6972, %v7041
        %v7106 = vadd.f32 %v6973, %v7042
        %v7107 = vadd.f32 %v6974, %v7043
        %v7108 = vadd.f32 %v6975, %v7044
        %v7109 = vadd.f32 %v6976, %v7045
        %v7110 = vadd.f32 %v6977, %v7046
        %v7111 = vadd.f32 %v6978, %v7047
        %v7112 = vadd.f32 %v6979, %v7048
        %v7113 = vadd.f32 %v6980, %v7049
        %v7114 = vadd.f32 %v6981, %v7050
        %v7115 = vadd.f32 %v6982, %v7051
        %v7116 = vadd.f32 %v6983, %v7052
        %v7117 = vadd.f32 %v6984, %v7053
        %v7118 = vadd.f32 %v6985, %v7054
        %v7119 = vadd.f32 %v6986, %v7055
        %v7120 = vadd.f32 %v6987, %v7056
        %v7121 = vadd.f32 %v6988, %v7057
        %v7122 = vadd.f32 %v6989, %v7058
        %v7123 = vadd.f32 %v6990, %v7059
        %v7124 = vadd.f32 %v6991, %v7060
        %v7125 = vadd.f32 %v6992, %v7061
        %v7126 = vadd.f32 %v6993, %v7062
        %v7127 = vadd.f32 %v6994, %v7063
        %v7128 = vadd.f32 %v6995, %v7064
        %v7129 = vadd.f32 %v6996, %v7065
        %v7130 = vadd.f32 %v6997, %v7066
        %v7131 = vadd.f32 %v6998, %v7067
        %v7132 = vadd.f32 %v6999, %v7068
        %v7133 = vadd.f32 %v7000, %v7069
        %v7134 = vadd.f32 %v7001, %v7070
        %v7135 = vadd.f32 %v7002, %v7071
        %v7136 = vadd.f32 %v7003, %v7072
        %v7137 = vadd.f32 %v7004, %v7073
        %v7138 = vadd.f32 %v7005, %v7074
        %v7139 = vadd.f32 %v7006, %v7075
        %v7140 = vadd.f32 %v7007, %v7076
        %v7141 = vadd.f32 %v7008, %v7077
        %v7142 = vadd.f32 %v7009, %v7078
        %v7143 = vadd.f32 %v7010, %v7079
        %v7144 = vadd.f32 %v7011, %v7080
        %v7145 = vadd.f32 %v7012, %v7081
        %v7146 = vadd.f32 %v7013, %v7082
        %v7147 = vadd.f32 %v7014, %v7083
        %v7148 = vadd.f32 %v7015, %v7084
        %v7149 = vadd.f32 %v7016, %v7085
        %v7150 = vadd.f32 %v7017, %v7086
        %v7151 = vadd.f32 %v7018, %v7087
        %v7152 = vadd.f32 %v7019, %v7088
        %v7153 = vadd.f32 %v7020, %v7089
        %v7154 = vadd.f32 %v7021, %v7090
        %v7155 = vadd.f32 %v7022, %v7091
        %v7156 = vadd.f32 %v7023, %v7092
        %v7157 = vadd.f32 %v7024, %v7093
        %v7158 = vadd.f32 %v7025, %v7094
        %v7159 = vadd.f32 %v7026, %v7095
        %v7160 = vadd.f32 %v7027, %v7096
        %v7161 = vadd.f32 %v7028, %v7097
        %v7162 = vadd.f32 %v7029, %v7098
        %v7163 = vadd.f32 %v7030, %v7099
        %v7164 = vld [vmem:[%s1 + $0x1b] sm:$0x1]
        %v7165 = vlaneseq
        %v7166 = vshrl.u32 %v7165, 7
        %v7167 = vsub.s32 0, %v7166
        %v7168 = vrot.slane %v7164, %v7167
        %v7169 = vmul.f32 %v6683, %v7168
        %v7170 = vmul.f32 %v6684, %v7168
        %v7171 = vmul.f32 %v6685, %v7168
        %v7172 = vmul.f32 %v6686, %v7168
        %v7173 = vmul.f32 %v6687, %v7168
        %v7174 = vmul.f32 %v6688, %v7168
        %v7175 = vmul.f32 %v6689, %v7168
        %v7176 = vmul.f32 %v6690, %v7168
        %v7177 = vmul.f32 %v6691, %v7168
        %v7178 = vmul.f32 %v6692, %v7168
        %v7179 = vmul.f32 %v6693, %v7168
        %v7180 = vmul.f32 %v6694, %v7168
        %v7181 = vmul.f32 %v6695, %v7168
        %v7182 = vmul.f32 %v6696, %v7168
        %v7183 = vmul.f32 %v6697, %v7168
        %v7184 = vmul.f32 %v6698, %v7168
        %v7185 = vmul.f32 %v6699, %v7168
        %v7186 = vmul.f32 %v6700, %v7168
        %v7187 = vmul.f32 %v6701, %v7168
        %v7188 = vmul.f32 %v6702, %v7168
        %v7189 = vmul.f32 %v6703, %v7168
        %v7190 = vmul.f32 %v6704, %v7168
        %v7191 = vmul.f32 %v6705, %v7168
        %v7192 = vmul.f32 %v6706, %v7168
        %v7193 = vmul.f32 %v6707, %v7168
        %v7194 = vmul.f32 %v6708, %v7168
        %v7195 = vmul.f32 %v6709, %v7168
        %v7196 = vmul.f32 %v6710, %v7168
        %v7197 = vmul.f32 %v6711, %v7168
        %v7198 = vmul.f32 %v6712, %v7168
        %v7199 = vmul.f32 %v6713, %v7168
        %v7200 = vmul.f32 %v6714, %v7168
        %v7201 = vmul.f32 %v6727, %v7168
        %v7202 = vmul.f32 %v6728, %v7168
        %v7203 = vmul.f32 %v6729, %v7168
        %v7204 = vmul.f32 %v6730, %v7168
        %v7205 = vmul.f32 %v6731, %v7168
        %v7206 = vmul.f32 %v6732, %v7168
        %v7207 = vmul.f32 %v6733, %v7168
        %v7208 = vmul.f32 %v6734, %v7168
        %v7209 = vmul.f32 %v6735, %v7168
        %v7210 = vmul.f32 %v6736, %v7168
        %v7211 = vmul.f32 %v6737, %v7168
        %v7212 = vmul.f32 %v6738, %v7168
        %v7213 = vmul.f32 %v6739, %v7168
        %v7214 = vmul.f32 %v6740, %v7168
        %v7215 = vmul.f32 %v6741, %v7168
        %v7216 = vmul.f32 %v6742, %v7168
        %v7217 = vmul.f32 %v6743, %v7168
        %v7218 = vmul.f32 %v6744, %v7168
        %v7219 = vmul.f32 %v6745, %v7168
        %v7220 = vmul.f32 %v6746, %v7168
        %v7221 = vmul.f32 %v6747, %v7168
        %v7222 = vmul.f32 %v6748, %v7168
        %v7223 = vmul.f32 %v6749, %v7168
        %v7224 = vmul.f32 %v6750, %v7168
        %v7225 = vmul.f32 %v6751, %v7168
        %v7226 = vmul.f32 %v6752, %v7168
        %v7227 = vmul.f32 %v6753, %v7168
        %v7228 = vmul.f32 %v6754, %v7168
        %v7229 = vmul.f32 %v6755, %v7168
        %v7230 = vmul.f32 %v6756, %v7168
        %v7231 = vmul.f32 %v6757, %v7168
        %v7232 = vmul.f32 %v6758, %v7168
        %v7233 = vadd.f32 %v7100, %v7169
        %v7234 = vadd.f32 %v7101, %v7170
        %v7235 = vadd.f32 %v7102, %v7171
        %v7236 = vadd.f32 %v7103, %v7172
        %v7237 = vadd.f32 %v7104, %v7173
        %v7238 = vadd.f32 %v7105, %v7174
        %v7239 = vadd.f32 %v7106, %v7175
        %v7240 = vadd.f32 %v7107, %v7176
        %v7241 = vadd.f32 %v7108, %v7177
        %v7242 = vadd.f32 %v7109, %v7178
        %v7243 = vadd.f32 %v7110, %v7179
        %v7244 = vadd.f32 %v7111, %v7180
        %v7245 = vadd.f32 %v7112, %v7181
        %v7246 = vadd.f32 %v7113, %v7182
        %v7247 = vadd.f32 %v7114, %v7183
        %v7248 = vadd.f32 %v7115, %v7184
        %v7249 = vadd.f32 %v7116, %v7185
        %v7250 = vadd.f32 %v7117, %v7186
        %v7251 = vadd.f32 %v7118, %v7187
        %v7252 = vadd.f32 %v7119, %v7188
        %v7253 = vadd.f32 %v7120, %v7189
        %v7254 = vadd.f32 %v7121, %v7190
        %v7255 = vadd.f32 %v7122, %v7191
        %v7256 = vadd.f32 %v7123, %v7192
        %v7257 = vadd.f32 %v7124, %v7193
        %v7258 = vadd.f32 %v7125, %v7194
        %v7259 = vadd.f32 %v7126, %v7195
        %v7260 = vadd.f32 %v7127, %v7196
        %v7261 = vadd.f32 %v7128, %v7197
        %v7262 = vadd.f32 %v7129, %v7198
        %v7263 = vadd.f32 %v7130, %v7199
        %v7264 = vadd.f32 %v7131, %v7200
        %v7265 = vadd.f32 %v7132, %v7201
        %v7266 = vadd.f32 %v7133, %v7202
        %v7267 = vadd.f32 %v7134, %v7203
        %v7268 = vadd.f32 %v7135, %v7204
        %v7269 = vadd.f32 %v7136, %v7205
        %v7270 = vadd.f32 %v7137, %v7206
        %v7271 = vadd.f32 %v7138, %v7207
        %v7272 = vadd.f32 %v7139, %v7208
        %v7273 = vadd.f32 %v7140, %v7209
        %v7274 = vadd.f32 %v7141, %v7210
        %v7275 = vadd.f32 %v7142, %v7211
        %v7276 = vadd.f32 %v7143, %v7212
        %v7277 = vadd.f32 %v7144, %v7213
        %v7278 = vadd.f32 %v7145, %v7214
        %v7279 = vadd.f32 %v7146, %v7215
        %v7280 = vadd.f32 %v7147, %v7216
        %v7281 = vadd.f32 %v7148, %v7217
        %v7282 = vadd.f32 %v7149, %v7218
        %v7283 = vadd.f32 %v7150, %v7219
        %v7284 = vadd.f32 %v7151, %v7220
        %v7285 = vadd.f32 %v7152, %v7221
        %v7286 = vadd.f32 %v7153, %v7222
        %v7287 = vadd.f32 %v7154, %v7223
        %v7288 = vadd.f32 %v7155, %v7224
        %v7289 = vadd.f32 %v7156, %v7225
        %v7290 = vadd.f32 %v7157, %v7226
        %v7291 = vadd.f32 %v7158, %v7227
        %v7292 = vadd.f32 %v7159, %v7228
        %v7293 = vadd.f32 %v7160, %v7229
        %v7294 = vadd.f32 %v7161, %v7230
        %v7295 = vadd.f32 %v7162, %v7231
        %v7296 = vadd.f32 %v7163, %v7232
        %v7297 = vld [vmem:[%s1 + $0x22] sm:$0x1]
        %v7298 = vlaneseq
        %v7299 = vshrl.u32 %v7298, 7
        %v7300 = vsub.s32 0, %v7299
        %v7301 = vrot.slane %v7297, %v7300
        %v7302 = vmul.f32 %v6685, %v7301
        %v7303 = vmul.f32 %v6686, %v7301
        %v7304 = vmul.f32 %v6687, %v7301
        %v7305 = vmul.f32 %v6688, %v7301
        %v7306 = vmul.f32 %v6689, %v7301
        %v7307 = vmul.f32 %v6690, %v7301
        %v7308 = vmul.f32 %v6691, %v7301
        %v7309 = vmul.f32 %v6692, %v7301
        %v7310 = vmul.f32 %v6693, %v7301
        %v7311 = vmul.f32 %v6694, %v7301
        %v7312 = vmul.f32 %v6695, %v7301
        %v7313 = vmul.f32 %v6696, %v7301
        %v7314 = vmul.f32 %v6697, %v7301
        %v7315 = vmul.f32 %v6698, %v7301
        %v7316 = vmul.f32 %v6699, %v7301
        %v7317 = vmul.f32 %v6700, %v7301
        %v7318 = vmul.f32 %v6701, %v7301
        %v7319 = vmul.f32 %v6702, %v7301
        %v7320 = vmul.f32 %v6703, %v7301
        %v7321 = vmul.f32 %v6704, %v7301
        %v7322 = vmul.f32 %v6705, %v7301
        %v7323 = vmul.f32 %v6706, %v7301
        %v7324 = vmul.f32 %v6707, %v7301
        %v7325 = vmul.f32 %v6708, %v7301
        %v7326 = vmul.f32 %v6709, %v7301
        %v7327 = vmul.f32 %v6710, %v7301
        %v7328 = vmul.f32 %v6711, %v7301
        %v7329 = vmul.f32 %v6712, %v7301
        %v7330 = vmul.f32 %v6713, %v7301
        %v7331 = vmul.f32 %v6714, %v7301
        %v7332 = vmul.f32 %v6715, %v7301
        %v7333 = vmul.f32 %v6716, %v7301
        %v7334 = vmul.f32 %v6729, %v7301
        %v7335 = vmul.f32 %v6730, %v7301
        %v7336 = vmul.f32 %v6731, %v7301
        %v7337 = vmul.f32 %v6732, %v7301
        %v7338 = vmul.f32 %v6733, %v7301
        %v7339 = vmul.f32 %v6734, %v7301
        %v7340 = vmul.f32 %v6735, %v7301
        %v7341 = vmul.f32 %v6736, %v7301
        %v7342 = vmul.f32 %v6737, %v7301
        %v7343 = vmul.f32 %v6738, %v7301
        %v7344 = vmul.f32 %v6739, %v7301
        %v7345 = vmul.f32 %v6740, %v7301
        %v7346 = vmul.f32 %v6741, %v7301
        %v7347 = vmul.f32 %v6742, %v7301
        %v7348 = vmul.f32 %v6743, %v7301
        %v7349 = vmul.f32 %v6744, %v7301
        %v7350 = vmul.f32 %v6745, %v7301
        %v7351 = vmul.f32 %v6746, %v7301
        %v7352 = vmul.f32 %v6747, %v7301
        %v7353 = vmul.f32 %v6748, %v7301
        %v7354 = vmul.f32 %v6749, %v7301
        %v7355 = vmul.f32 %v6750, %v7301
        %v7356 = vmul.f32 %v6751, %v7301
        %v7357 = vmul.f32 %v6752, %v7301
        %v7358 = vmul.f32 %v6753, %v7301
        %v7359 = vmul.f32 %v6754, %v7301
        %v7360 = vmul.f32 %v6755, %v7301
        %v7361 = vmul.f32 %v6756, %v7301
        %v7362 = vmul.f32 %v6757, %v7301
        %v7363 = vmul.f32 %v6758, %v7301
        %v7364 = vmul.f32 %v6759, %v7301
        %v7365 = vmul.f32 %v6760, %v7301
        %v7366 = vadd.f32 %v7233, %v7302
        %v7367 = vadd.f32 %v7234, %v7303
        %v7368 = vadd.f32 %v7235, %v7304
        %v7369 = vadd.f32 %v7236, %v7305
        %v7370 = vadd.f32 %v7237, %v7306
        %v7371 = vadd.f32 %v7238, %v7307
        %v7372 = vadd.f32 %v7239, %v7308
        %v7373 = vadd.f32 %v7240, %v7309
        %v7374 = vadd.f32 %v7241, %v7310
        %v7375 = vadd.f32 %v7242, %v7311
        %v7376 = vadd.f32 %v7243, %v7312
        %v7377 = vadd.f32 %v7244, %v7313
        %v7378 = vadd.f32 %v7245, %v7314
        %v7379 = vadd.f32 %v7246, %v7315
        %v7380 = vadd.f32 %v7247, %v7316
        %v7381 = vadd.f32 %v7248, %v7317
        %v7382 = vadd.f32 %v7249, %v7318
        %v7383 = vadd.f32 %v7250, %v7319
        %v7384 = vadd.f32 %v7251, %v7320
        %v7385 = vadd.f32 %v7252, %v7321
        %v7386 = vadd.f32 %v7253, %v7322
        %v7387 = vadd.f32 %v7254, %v7323
        %v7388 = vadd.f32 %v7255, %v7324
        %v7389 = vadd.f32 %v7256, %v7325
        %v7390 = vadd.f32 %v7257, %v7326
        %v7391 = vadd.f32 %v7258, %v7327
        %v7392 = vadd.f32 %v7259, %v7328
        %v7393 = vadd.f32 %v7260, %v7329
        %v7394 = vadd.f32 %v7261, %v7330
        %v7395 = vadd.f32 %v7262, %v7331
        %v7396 = vadd.f32 %v7263, %v7332
        %v7397 = vadd.f32 %v7264, %v7333
        %v7398 = vadd.f32 %v7265, %v7334
        %v7399 = vadd.f32 %v7266, %v7335
        %v7400 = vadd.f32 %v7267, %v7336
        %v7401 = vadd.f32 %v7268, %v7337
        %v7402 = vadd.f32 %v7269, %v7338
        %v7403 = vadd.f32 %v7270, %v7339
        %v7404 = vadd.f32 %v7271, %v7340
        %v7405 = vadd.f32 %v7272, %v7341
        %v7406 = vadd.f32 %v7273, %v7342
        %v7407 = vadd.f32 %v7274, %v7343
        %v7408 = vadd.f32 %v7275, %v7344
        %v7409 = vadd.f32 %v7276, %v7345
        %v7410 = vadd.f32 %v7277, %v7346
        %v7411 = vadd.f32 %v7278, %v7347
        %v7412 = vadd.f32 %v7279, %v7348
        %v7413 = vadd.f32 %v7280, %v7349
        %v7414 = vadd.f32 %v7281, %v7350
        %v7415 = vadd.f32 %v7282, %v7351
        %v7416 = vadd.f32 %v7283, %v7352
        %v7417 = vadd.f32 %v7284, %v7353
        %v7418 = vadd.f32 %v7285, %v7354
        %v7419 = vadd.f32 %v7286, %v7355
        %v7420 = vadd.f32 %v7287, %v7356
        %v7421 = vadd.f32 %v7288, %v7357
        %v7422 = vadd.f32 %v7289, %v7358
        %v7423 = vadd.f32 %v7290, %v7359
        %v7424 = vadd.f32 %v7291, %v7360
        %v7425 = vadd.f32 %v7292, %v7361
        %v7426 = vadd.f32 %v7293, %v7362
        %v7427 = vadd.f32 %v7294, %v7363
        %v7428 = vadd.f32 %v7295, %v7364
        %v7429 = vadd.f32 %v7296, %v7365
        %v7430 = vld [vmem:[%s1 + $0x29] sm:$0x1]
        %v7431 = vlaneseq
        %v7432 = vshrl.u32 %v7431, 7
        %v7433 = vsub.s32 0, %v7432
        %v7434 = vrot.slane %v7430, %v7433
        %v7435 = vmul.f32 %v6687, %v7434
        %v7436 = vmul.f32 %v6688, %v7434
        %v7437 = vmul.f32 %v6689, %v7434
        %v7438 = vmul.f32 %v6690, %v7434
        %v7439 = vmul.f32 %v6691, %v7434
        %v7440 = vmul.f32 %v6692, %v7434
        %v7441 = vmul.f32 %v6693, %v7434
        %v7442 = vmul.f32 %v6694, %v7434
        %v7443 = vmul.f32 %v6695, %v7434
        %v7444 = vmul.f32 %v6696, %v7434
        %v7445 = vmul.f32 %v6697, %v7434
        %v7446 = vmul.f32 %v6698, %v7434
        %v7447 = vmul.f32 %v6699, %v7434
        %v7448 = vmul.f32 %v6700, %v7434
        %v7449 = vmul.f32 %v6701, %v7434
        %v7450 = vmul.f32 %v6702, %v7434
        %v7451 = vmul.f32 %v6703, %v7434
        %v7452 = vmul.f32 %v6704, %v7434
        %v7453 = vmul.f32 %v6705, %v7434
        %v7454 = vmul.f32 %v6706, %v7434
        %v7455 = vmul.f32 %v6707, %v7434
        %v7456 = vmul.f32 %v6708, %v7434
        %v7457 = vmul.f32 %v6709, %v7434
        %v7458 = vmul.f32 %v6710, %v7434
        %v7459 = vmul.f32 %v6711, %v7434
        %v7460 = vmul.f32 %v6712, %v7434
        %v7461 = vmul.f32 %v6713, %v7434
        %v7462 = vmul.f32 %v6714, %v7434
        %v7463 = vmul.f32 %v6715, %v7434
        %v7464 = vmul.f32 %v6716, %v7434
        %v7465 = vmul.f32 %v6717, %v7434
        %v7466 = vmul.f32 %v6718, %v7434
        %v7467 = vmul.f32 %v6731, %v7434
        %v7468 = vmul.f32 %v6732, %v7434
        %v7469 = vmul.f32 %v6733, %v7434
        %v7470 = vmul.f32 %v6734, %v7434
        %v7471 = vmul.f32 %v6735, %v7434
        %v7472 = vmul.f32 %v6736, %v7434
        %v7473 = vmul.f32 %v6737, %v7434
        %v7474 = vmul.f32 %v6738, %v7434
        %v7475 = vmul.f32 %v6739, %v7434
        %v7476 = vmul.f32 %v6740, %v7434
        %v7477 = vmul.f32 %v6741, %v7434
        %v7478 = vmul.f32 %v6742, %v7434
        %v7479 = vmul.f32 %v6743, %v7434
        %v7480 = vmul.f32 %v6744, %v7434
        %v7481 = vmul.f32 %v6745, %v7434
        %v7482 = vmul.f32 %v6746, %v7434
        %v7483 = vmul.f32 %v6747, %v7434
        %v7484 = vmul.f32 %v6748, %v7434
        %v7485 = vmul.f32 %v6749, %v7434
        %v7486 = vmul.f32 %v6750, %v7434
        %v7487 = vmul.f32 %v6751, %v7434
        %v7488 = vmul.f32 %v6752, %v7434
        %v7489 = vmul.f32 %v6753, %v7434
        %v7490 = vmul.f32 %v6754, %v7434
        %v7491 = vmul.f32 %v6755, %v7434
        %v7492 = vmul.f32 %v6756, %v7434
        %v7493 = vmul.f32 %v6757, %v7434
        %v7494 = vmul.f32 %v6758, %v7434
        %v7495 = vmul.f32 %v6759, %v7434
        %v7496 = vmul.f32 %v6760, %v7434
        %v7497 = vmul.f32 %v6761, %v7434
        %v7498 = vmul.f32 %v6762, %v7434
        %v7499 = vadd.f32 %v7366, %v7435
        %v7500 = vadd.f32 %v7367, %v7436
        %v7501 = vadd.f32 %v7368, %v7437
        %v7502 = vadd.f32 %v7369, %v7438
        %v7503 = vadd.f32 %v7370, %v7439
        %v7504 = vadd.f32 %v7371, %v7440
        %v7505 = vadd.f32 %v7372, %v7441
        %v7506 = vadd.f32 %v7373, %v7442
        %v7507 = vadd.f32 %v7374, %v7443
        %v7508 = vadd.f32 %v7375, %v7444
        %v7509 = vadd.f32 %v7376, %v7445
        %v7510 = vadd.f32 %v7377, %v7446
        %v7511 = vadd.f32 %v7378, %v7447
        %v7512 = vadd.f32 %v7379, %v7448
        %v7513 = vadd.f32 %v7380, %v7449
        %v7514 = vadd.f32 %v7381, %v7450
        %v7515 = vadd.f32 %v7382, %v7451
        %v7516 = vadd.f32 %v7383, %v7452
        %v7517 = vadd.f32 %v7384, %v7453
        %v7518 = vadd.f32 %v7385, %v7454
        %v7519 = vadd.f32 %v7386, %v7455
        %v7520 = vadd.f32 %v7387, %v7456
        %v7521 = vadd.f32 %v7388, %v7457
        %v7522 = vadd.f32 %v7389, %v7458
        %v7523 = vadd.f32 %v7390, %v7459
        %v7524 = vadd.f32 %v7391, %v7460
        %v7525 = vadd.f32 %v7392, %v7461
        %v7526 = vadd.f32 %v7393, %v7462
        %v7527 = vadd.f32 %v7394, %v7463
        %v7528 = vadd.f32 %v7395, %v7464
        %v7529 = vadd.f32 %v7396, %v7465
        %v7530 = vadd.f32 %v7397, %v7466
        %v7531 = vadd.f32 %v7398, %v7467
        %v7532 = vadd.f32 %v7399, %v7468
        %v7533 = vadd.f32 %v7400, %v7469
        %v7534 = vadd.f32 %v7401, %v7470
        %v7535 = vadd.f32 %v7402, %v7471
        %v7536 = vadd.f32 %v7403, %v7472
        %v7537 = vadd.f32 %v7404, %v7473
        %v7538 = vadd.f32 %v7405, %v7474
        %v7539 = vadd.f32 %v7406, %v7475
        %v7540 = vadd.f32 %v7407, %v7476
        %v7541 = vadd.f32 %v7408, %v7477
        %v7542 = vadd.f32 %v7409, %v7478
        %v7543 = vadd.f32 %v7410, %v7479
        %v7544 = vadd.f32 %v7411, %v7480
        %v7545 = vadd.f32 %v7412, %v7481
        %v7546 = vadd.f32 %v7413, %v7482
        %v7547 = vadd.f32 %v7414, %v7483
        %v7548 = vadd.f32 %v7415, %v7484
        %v7549 = vadd.f32 %v7416, %v7485
        %v7550 = vadd.f32 %v7417, %v7486
        %v7551 = vadd.f32 %v7418, %v7487
        %v7552 = vadd.f32 %v7419, %v7488
        %v7553 = vadd.f32 %v7420, %v7489
        %v7554 = vadd.f32 %v7421, %v7490
        %v7555 = vadd.f32 %v7422, %v7491
        %v7556 = vadd.f32 %v7423, %v7492
        %v7557 = vadd.f32 %v7424, %v7493
        %v7558 = vadd.f32 %v7425, %v7494
        %v7559 = vadd.f32 %v7426, %v7495
        %v7560 = vadd.f32 %v7427, %v7496
        %v7561 = vadd.f32 %v7428, %v7497
        %v7562 = vadd.f32 %v7429, %v7498
        %v7563 = vld [vmem:[%s1 + $0x30] sm:$0x1]
        %v7564 = vlaneseq
        %v7565 = vshrl.u32 %v7564, 7
        %v7566 = vsub.s32 0, %v7565
        %v7567 = vrot.slane %v7563, %v7566
        %v7568 = vmul.f32 %v6689, %v7567
        %v7569 = vmul.f32 %v6690, %v7567
        %v7570 = vmul.f32 %v6691, %v7567
        %v7571 = vmul.f32 %v6692, %v7567
        %v7572 = vmul.f32 %v6693, %v7567
        %v7573 = vmul.f32 %v6694, %v7567
        %v7574 = vmul.f32 %v6695, %v7567
        %v7575 = vmul.f32 %v6696, %v7567
        %v7576 = vmul.f32 %v6697, %v7567
        %v7577 = vmul.f32 %v6698, %v7567
        %v7578 = vmul.f32 %v6699, %v7567
        %v7579 = vmul.f32 %v6700, %v7567
        %v7580 = vmul.f32 %v6701, %v7567
        %v7581 = vmul.f32 %v6702, %v7567
        %v7582 = vmul.f32 %v6703, %v7567
        %v7583 = vmul.f32 %v6704, %v7567
        %v7584 = vmul.f32 %v6705, %v7567
        %v7585 = vmul.f32 %v6706, %v7567
        %v7586 = vmul.f32 %v6707, %v7567
        %v7587 = vmul.f32 %v6708, %v7567
        %v7588 = vmul.f32 %v6709, %v7567
        %v7589 = vmul.f32 %v6710, %v7567
        %v7590 = vmul.f32 %v6711, %v7567
        %v7591 = vmul.f32 %v6712, %v7567
        %v7592 = vmul.f32 %v6713, %v7567
        %v7593 = vmul.f32 %v6714, %v7567
        %v7594 = vmul.f32 %v6715, %v7567
        %v7595 = vmul.f32 %v6716, %v7567
        %v7596 = vmul.f32 %v6717, %v7567
        %v7597 = vmul.f32 %v6718, %v7567
        %v7598 = vmul.f32 %v6719, %v7567
        %v7599 = vmul.f32 %v6720, %v7567
        %v7600 = vmul.f32 %v6733, %v7567
        %v7601 = vmul.f32 %v6734, %v7567
        %v7602 = vmul.f32 %v6735, %v7567
        %v7603 = vmul.f32 %v6736, %v7567
        %v7604 = vmul.f32 %v6737, %v7567
        %v7605 = vmul.f32 %v6738, %v7567
        %v7606 = vmul.f32 %v6739, %v7567
        %v7607 = vmul.f32 %v6740, %v7567
        %v7608 = vmul.f32 %v6741, %v7567
        %v7609 = vmul.f32 %v6742, %v7567
        %v7610 = vmul.f32 %v6743, %v7567
        %v7611 = vmul.f32 %v6744, %v7567
        %v7612 = vmul.f32 %v6745, %v7567
        %v7613 = vmul.f32 %v6746, %v7567
        %v7614 = vmul.f32 %v6747, %v7567
        %v7615 = vmul.f32 %v6748, %v7567
        %v7616 = vmul.f32 %v6749, %v7567
        %v7617 = vmul.f32 %v6750, %v7567
        %v7618 = vmul.f32 %v6751, %v7567
        %v7619 = vmul.f32 %v6752, %v7567
        %v7620 = vmul.f32 %v6753, %v7567
        %v7621 = vmul.f32 %v6754, %v7567
        %v7622 = vmul.f32 %v6755, %v7567
        %v7623 = vmul.f32 %v6756, %v7567
        %v7624 = vmul.f32 %v6757, %v7567
        %v7625 = vmul.f32 %v6758, %v7567
        %v7626 = vmul.f32 %v6759, %v7567
        %v7627 = vmul.f32 %v6760, %v7567
        %v7628 = vmul.f32 %v6761, %v7567
        %v7629 = vmul.f32 %v6762, %v7567
        %v7630 = vmul.f32 %v6763, %v7567
        %v7631 = vmul.f32 %v6764, %v7567
        %v7632 = vadd.f32 %v7499, %v7568
        %v7633 = vadd.f32 %v7500, %v7569
        %v7634 = vadd.f32 %v7501, %v7570
        %v7635 = vadd.f32 %v7502, %v7571
        %v7636 = vadd.f32 %v7503, %v7572
        %v7637 = vadd.f32 %v7504, %v7573
        %v7638 = vadd.f32 %v7505, %v7574
        %v7639 = vadd.f32 %v7506, %v7575
        %v7640 = vadd.f32 %v7507, %v7576
        %v7641 = vadd.f32 %v7508, %v7577
        %v7642 = vadd.f32 %v7509, %v7578
        %v7643 = vadd.f32 %v7510, %v7579
        %v7644 = vadd.f32 %v7511, %v7580
        %v7645 = vadd.f32 %v7512, %v7581
        %v7646 = vadd.f32 %v7513, %v7582
        %v7647 = vadd.f32 %v7514, %v7583
        %v7648 = vadd.f32 %v7515, %v7584
        %v7649 = vadd.f32 %v7516, %v7585
        %v7650 = vadd.f32 %v7517, %v7586
        %v7651 = vadd.f32 %v7518, %v7587
        %v7652 = vadd.f32 %v7519, %v7588
        %v7653 = vadd.f32 %v7520, %v7589
        %v7654 = vadd.f32 %v7521, %v7590
        %v7655 = vadd.f32 %v7522, %v7591
        %v7656 = vadd.f32 %v7523, %v7592
        %v7657 = vadd.f32 %v7524, %v7593
        %v7658 = vadd.f32 %v7525, %v7594
        %v7659 = vadd.f32 %v7526, %v7595
        %v7660 = vadd.f32 %v7527, %v7596
        %v7661 = vadd.f32 %v7528, %v7597
        %v7662 = vadd.f32 %v7529, %v7598
        %v7663 = vadd.f32 %v7530, %v7599
        %v7664 = vadd.f32 %v7531, %v7600
        %v7665 = vadd.f32 %v7532, %v7601
        %v7666 = vadd.f32 %v7533, %v7602
        %v7667 = vadd.f32 %v7534, %v7603
        %v7668 = vadd.f32 %v7535, %v7604
        %v7669 = vadd.f32 %v7536, %v7605
        %v7670 = vadd.f32 %v7537, %v7606
        %v7671 = vadd.f32 %v7538, %v7607
        %v7672 = vadd.f32 %v7539, %v7608
        %v7673 = vadd.f32 %v7540, %v7609
        %v7674 = vadd.f32 %v7541, %v7610
        %v7675 = vadd.f32 %v7542, %v7611
        %v7676 = vadd.f32 %v7543, %v7612
        %v7677 = vadd.f32 %v7544, %v7613
        %v7678 = vadd.f32 %v7545, %v7614
        %v7679 = vadd.f32 %v7546, %v7615
        %v7680 = vadd.f32 %v7547, %v7616
        %v7681 = vadd.f32 %v7548, %v7617
        %v7682 = vadd.f32 %v7549, %v7618
        %v7683 = vadd.f32 %v7550, %v7619
        %v7684 = vadd.f32 %v7551, %v7620
        %v7685 = vadd.f32 %v7552, %v7621
        %v7686 = vadd.f32 %v7553, %v7622
        %v7687 = vadd.f32 %v7554, %v7623
        %v7688 = vadd.f32 %v7555, %v7624
        %v7689 = vadd.f32 %v7556, %v7625
        %v7690 = vadd.f32 %v7557, %v7626
        %v7691 = vadd.f32 %v7558, %v7627
        %v7692 = vadd.f32 %v7559, %v7628
        %v7693 = vadd.f32 %v7560, %v7629
        %v7694 = vadd.f32 %v7561, %v7630
        %v7695 = vadd.f32 %v7562, %v7631
        %v7696 = vld [vmem:[%s2] sm:$0x1]
        %v7698 = vlaneseq
        %v7699 = vshrl.u32 %v7698, 7
        %v7700 = vsub.s32 0, %v7699
        %v7701 = vrot.slane %v7696, %v7700
        %v7703 = vadd.f32 %v7632, %v7701
        %v7704 = vadd.f32 %v7633, %v7701
        %v7705 = vadd.f32 %v7634, %v7701
        %v7706 = vadd.f32 %v7635, %v7701
        %v7707 = vadd.f32 %v7636, %v7701
        %v7708 = vadd.f32 %v7637, %v7701
        %v7709 = vadd.f32 %v7638, %v7701
        %v7710 = vadd.f32 %v7639, %v7701
        %v7711 = vadd.f32 %v7640, %v7701
        %v7712 = vadd.f32 %v7641, %v7701
        %v7713 = vadd.f32 %v7642, %v7701
        %v7714 = vadd.f32 %v7643, %v7701
        %v7715 = vadd.f32 %v7644, %v7701
        %v7716 = vadd.f32 %v7645, %v7701
        %v7717 = vadd.f32 %v7646, %v7701
        %v7718 = vadd.f32 %v7647, %v7701
        %v7719 = vadd.f32 %v7648, %v7701
        %v7720 = vadd.f32 %v7649, %v7701
        %v7721 = vadd.f32 %v7650, %v7701
        %v7722 = vadd.f32 %v7651, %v7701
        %v7723 = vadd.f32 %v7652, %v7701
        %v7724 = vadd.f32 %v7653, %v7701
        %v7725 = vadd.f32 %v7654, %v7701
        %v7726 = vadd.f32 %v7655, %v7701
        %v7727 = vadd.f32 %v7656, %v7701
        %v7728 = vadd.f32 %v7657, %v7701
        %v7729 = vadd.f32 %v7658, %v7701
        %v7730 = vadd.f32 %v7659, %v7701
        %v7731 = vadd.f32 %v7660, %v7701
        %v7732 = vadd.f32 %v7661, %v7701
        %v7733 = vadd.f32 %v7662, %v7701
        %v7734 = vadd.f32 %v7663, %v7701
        %v7735 = vadd.f32 %v7664, %v7701
        %v7736 = vadd.f32 %v7665, %v7701
        %v7737 = vadd.f32 %v7666, %v7701
        %v7738 = vadd.f32 %v7667, %v7701
        %v7739 = vadd.f32 %v7668, %v7701
        %v7740 = vadd.f32 %v7669, %v7701
        %v7741 = vadd.f32 %v7670, %v7701
        %v7742 = vadd.f32 %v7671, %v7701
        %v7743 = vadd.f32 %v7672, %v7701
        %v7744 = vadd.f32 %v7673, %v7701
        %v7745 = vadd.f32 %v7674, %v7701
        %v7746 = vadd.f32 %v7675, %v7701
        %v7747 = vadd.f32 %v7676, %v7701
        %v7748 = vadd.f32 %v7677, %v7701
        %v7749 = vadd.f32 %v7678, %v7701
        %v7750 = vadd.f32 %v7679, %v7701
        %v7751 = vadd.f32 %v7680, %v7701
        %v7752 = vadd.f32 %v7681, %v7701
        %v7753 = vadd.f32 %v7682, %v7701
        %v7754 = vadd.f32 %v7683, %v7701
        %v7755 = vadd.f32 %v7684, %v7701
        %v7756 = vadd.f32 %v7685, %v7701
        %v7757 = vadd.f32 %v7686, %v7701
        %v7758 = vadd.f32 %v7687, %v7701
        %v7759 = vadd.f32 %v7688, %v7701
        %v7760 = vadd.f32 %v7689, %v7701
        %v7761 = vadd.f32 %v7690, %v7701
        %v7762 = vadd.f32 %v7691, %v7701
        %v7763 = vadd.f32 %v7692, %v7701
        %v7764 = vadd.f32 %v7693, %v7701
        %v7765 = vadd.f32 %v7694, %v7701
        %v7766 = vadd.f32 %v7695, %v7701
        %v7767 = vsel %vm365, %v7703, 0.0
        %7768 = vadd.xlane.f32.xlu0 %v7767
        %v7769 = vpop.xlane.xlu0 %7768
        %v7770 = vsel %vm365, %v7704, 0.0
        %7771 = vadd.xlane.f32.xlu0 %v7770
        %v7772 = vpop.xlane.xlu0 %7771
        %v7773 = vsel %vm365, %v7705, 0.0
        %7774 = vadd.xlane.f32.xlu0 %v7773
        %v7775 = vpop.xlane.xlu0 %7774
        %v7776 = vsel %vm365, %v7706, 0.0
        %7777 = vadd.xlane.f32.xlu0 %v7776
        %v7778 = vpop.xlane.xlu0 %7777
        %v7779 = vsel %vm365, %v7707, 0.0
        %7780 = vadd.xlane.f32.xlu0 %v7779
        %v7781 = vpop.xlane.xlu0 %7780
        %v7782 = vsel %vm365, %v7708, 0.0
        %7783 = vadd.xlane.f32.xlu0 %v7782
        %v7784 = vpop.xlane.xlu0 %7783
        %v7785 = vsel %vm365, %v7709, 0.0
        %7786 = vadd.xlane.f32.xlu0 %v7785
        %v7787 = vpop.xlane.xlu0 %7786
        %v7788 = vsel %vm365, %v7710, 0.0
        %7789 = vadd.xlane.f32.xlu0 %v7788
        %v7790 = vpop.xlane.xlu0 %7789
        %v7791 = vsel %vm365, %v7711, 0.0
        %7792 = vadd.xlane.f32.xlu0 %v7791
        %v7793 = vpop.xlane.xlu0 %7792
        %v7794 = vsel %vm365, %v7712, 0.0
        %7795 = vadd.xlane.f32.xlu0 %v7794
        %v7796 = vpop.xlane.xlu0 %7795
        %v7797 = vsel %vm365, %v7713, 0.0
        %7798 = vadd.xlane.f32.xlu0 %v7797
        %v7799 = vpop.xlane.xlu0 %7798
        %v7800 = vsel %vm365, %v7714, 0.0
        %7801 = vadd.xlane.f32.xlu0 %v7800
        %v7802 = vpop.xlane.xlu0 %7801
        %v7803 = vsel %vm365, %v7715, 0.0
        %7804 = vadd.xlane.f32.xlu0 %v7803
        %v7805 = vpop.xlane.xlu0 %7804
        %v7806 = vsel %vm365, %v7716, 0.0
        %7807 = vadd.xlane.f32.xlu0 %v7806
        %v7808 = vpop.xlane.xlu0 %7807
        %v7809 = vsel %vm365, %v7717, 0.0
        %7810 = vadd.xlane.f32.xlu0 %v7809
        %v7811 = vpop.xlane.xlu0 %7810
        %v7812 = vsel %vm365, %v7718, 0.0
        %7813 = vadd.xlane.f32.xlu0 %v7812
        %v7814 = vpop.xlane.xlu0 %7813
        %v7815 = vsel %vm365, %v7719, 0.0
        %7816 = vadd.xlane.f32.xlu0 %v7815
        %v7817 = vpop.xlane.xlu0 %7816
        %v7818 = vsel %vm365, %v7720, 0.0
        %7819 = vadd.xlane.f32.xlu0 %v7818
        %v7820 = vpop.xlane.xlu0 %7819
        %v7821 = vsel %vm365, %v7721, 0.0
        %7822 = vadd.xlane.f32.xlu0 %v7821
        %v7823 = vpop.xlane.xlu0 %7822
        %v7824 = vsel %vm365, %v7722, 0.0
        %7825 = vadd.xlane.f32.xlu0 %v7824
        %v7826 = vpop.xlane.xlu0 %7825
        %v7827 = vsel %vm365, %v7723, 0.0
        %7828 = vadd.xlane.f32.xlu0 %v7827
        %v7829 = vpop.xlane.xlu0 %7828
        %v7830 = vsel %vm365, %v7724, 0.0
        %7831 = vadd.xlane.f32.xlu0 %v7830
        %v7832 = vpop.xlane.xlu0 %7831
        %v7833 = vsel %vm365, %v7725, 0.0
        %7834 = vadd.xlane.f32.xlu0 %v7833
        %v7835 = vpop.xlane.xlu0 %7834
        %v7836 = vsel %vm365, %v7726, 0.0
        %7837 = vadd.xlane.f32.xlu0 %v7836
        %v7838 = vpop.xlane.xlu0 %7837
        %v7839 = vsel %vm365, %v7727, 0.0
        %7840 = vadd.xlane.f32.xlu0 %v7839
        %v7841 = vpop.xlane.xlu0 %7840
        %v7842 = vsel %vm365, %v7728, 0.0
        %7843 = vadd.xlane.f32.xlu0 %v7842
        %v7844 = vpop.xlane.xlu0 %7843
        %v7845 = vsel %vm365, %v7729, 0.0
        %7846 = vadd.xlane.f32.xlu0 %v7845
        %v7847 = vpop.xlane.xlu0 %7846
        %v7848 = vsel %vm365, %v7730, 0.0
        %7849 = vadd.xlane.f32.xlu0 %v7848
        %v7850 = vpop.xlane.xlu0 %7849
        %v7851 = vsel %vm365, %v7731, 0.0
        %7852 = vadd.xlane.f32.xlu0 %v7851
        %v7853 = vpop.xlane.xlu0 %7852
        %v7854 = vsel %vm365, %v7732, 0.0
        %7855 = vadd.xlane.f32.xlu0 %v7854
        %v7856 = vpop.xlane.xlu0 %7855
        %v7857 = vsel %vm365, %v7733, 0.0
        %7858 = vadd.xlane.f32.xlu0 %v7857
        %v7859 = vpop.xlane.xlu0 %7858
        %v7860 = vsel %vm365, %v7734, 0.0
        %7861 = vadd.xlane.f32.xlu0 %v7860
        %v7862 = vpop.xlane.xlu0 %7861
        %v7863 = vsel %vm365, %v7735, 0.0
        %7864 = vadd.xlane.f32.xlu0 %v7863
        %v7865 = vpop.xlane.xlu0 %7864
        %v7866 = vsel %vm365, %v7736, 0.0
        %7867 = vadd.xlane.f32.xlu0 %v7866
        %v7868 = vpop.xlane.xlu0 %7867
        %v7869 = vsel %vm365, %v7737, 0.0
        %7870 = vadd.xlane.f32.xlu0 %v7869
        %v7871 = vpop.xlane.xlu0 %7870
        %v7872 = vsel %vm365, %v7738, 0.0
        %7873 = vadd.xlane.f32.xlu0 %v7872
        %v7874 = vpop.xlane.xlu0 %7873
        %v7875 = vsel %vm365, %v7739, 0.0
        %7876 = vadd.xlane.f32.xlu0 %v7875
        %v7877 = vpop.xlane.xlu0 %7876
        %v7878 = vsel %vm365, %v7740, 0.0
        %7879 = vadd.xlane.f32.xlu0 %v7878
        %v7880 = vpop.xlane.xlu0 %7879
        %v7881 = vsel %vm365, %v7741, 0.0
        %7882 = vadd.xlane.f32.xlu0 %v7881
        %v7883 = vpop.xlane.xlu0 %7882
        %v7884 = vsel %vm365, %v7742, 0.0
        %7885 = vadd.xlane.f32.xlu0 %v7884
        %v7886 = vpop.xlane.xlu0 %7885
        %v7887 = vsel %vm365, %v7743, 0.0
        %7888 = vadd.xlane.f32.xlu0 %v7887
        %v7889 = vpop.xlane.xlu0 %7888
        %v7890 = vsel %vm365, %v7744, 0.0
        %7891 = vadd.xlane.f32.xlu0 %v7890
        %v7892 = vpop.xlane.xlu0 %7891
        %v7893 = vsel %vm365, %v7745, 0.0
        %7894 = vadd.xlane.f32.xlu0 %v7893
        %v7895 = vpop.xlane.xlu0 %7894
        %v7896 = vsel %vm365, %v7746, 0.0
        %7897 = vadd.xlane.f32.xlu0 %v7896
        %v7898 = vpop.xlane.xlu0 %7897
        %v7899 = vsel %vm365, %v7747, 0.0
        %7900 = vadd.xlane.f32.xlu0 %v7899
        %v7901 = vpop.xlane.xlu0 %7900
        %v7902 = vsel %vm365, %v7748, 0.0
        %7903 = vadd.xlane.f32.xlu0 %v7902
        %v7904 = vpop.xlane.xlu0 %7903
        %v7905 = vsel %vm365, %v7749, 0.0
        %7906 = vadd.xlane.f32.xlu0 %v7905
        %v7907 = vpop.xlane.xlu0 %7906
        %v7908 = vsel %vm365, %v7750, 0.0
        %7909 = vadd.xlane.f32.xlu0 %v7908
        %v7910 = vpop.xlane.xlu0 %7909
        %v7911 = vsel %vm365, %v7751, 0.0
        %7912 = vadd.xlane.f32.xlu0 %v7911
        %v7913 = vpop.xlane.xlu0 %7912
        %v7914 = vsel %vm365, %v7752, 0.0
        %7915 = vadd.xlane.f32.xlu0 %v7914
        %v7916 = vpop.xlane.xlu0 %7915
        %v7917 = vsel %vm365, %v7753, 0.0
        %7918 = vadd.xlane.f32.xlu0 %v7917
        %v7919 = vpop.xlane.xlu0 %7918
        %v7920 = vsel %vm365, %v7754, 0.0
        %7921 = vadd.xlane.f32.xlu0 %v7920
        %v7922 = vpop.xlane.xlu0 %7921
        %v7923 = vsel %vm365, %v7755, 0.0
        %7924 = vadd.xlane.f32.xlu0 %v7923
        %v7925 = vpop.xlane.xlu0 %7924
        %v7926 = vsel %vm365, %v7756, 0.0
        %7927 = vadd.xlane.f32.xlu0 %v7926
        %v7928 = vpop.xlane.xlu0 %7927
        %v7929 = vsel %vm365, %v7757, 0.0
        %7930 = vadd.xlane.f32.xlu0 %v7929
        %v7931 = vpop.xlane.xlu0 %7930
        %v7932 = vsel %vm365, %v7758, 0.0
        %7933 = vadd.xlane.f32.xlu0 %v7932
        %v7934 = vpop.xlane.xlu0 %7933
        %v7935 = vsel %vm365, %v7759, 0.0
        %7936 = vadd.xlane.f32.xlu0 %v7935
        %v7937 = vpop.xlane.xlu0 %7936
        %v7938 = vsel %vm365, %v7760, 0.0
        %7939 = vadd.xlane.f32.xlu0 %v7938
        %v7940 = vpop.xlane.xlu0 %7939
        %v7941 = vsel %vm365, %v7761, 0.0
        %7942 = vadd.xlane.f32.xlu0 %v7941
        %v7943 = vpop.xlane.xlu0 %7942
        %v7944 = vsel %vm365, %v7762, 0.0
        %7945 = vadd.xlane.f32.xlu0 %v7944
        %v7946 = vpop.xlane.xlu0 %7945
        %v7947 = vsel %vm365, %v7763, 0.0
        %7948 = vadd.xlane.f32.xlu0 %v7947
        %v7949 = vpop.xlane.xlu0 %7948
        %v7950 = vsel %vm365, %v7764, 0.0
        %7951 = vadd.xlane.f32.xlu0 %v7950
        %v7952 = vpop.xlane.xlu0 %7951
        %v7953 = vsel %vm365, %v7765, 0.0
        %7954 = vadd.xlane.f32.xlu0 %v7953
        %v7955 = vpop.xlane.xlu0 %7954
        %v7956 = vsel %vm365, %v7766, 0.0
        %7957 = vadd.xlane.f32.xlu0 %v7956
        %v7958 = vpop.xlane.xlu0 %7957
        %v7959 = vrcp.pop 32.0
        %v7960 = vmul.f32 %v7769, %v7959
        %v7961 = vmul.f32 %v7772, %v7959
        %v7962 = vmul.f32 %v7775, %v7959
        %v7963 = vmul.f32 %v7778, %v7959
        %v7964 = vmul.f32 %v7781, %v7959
        %v7965 = vmul.f32 %v7784, %v7959
        %v7966 = vmul.f32 %v7787, %v7959
        %v7967 = vmul.f32 %v7790, %v7959
        %v7968 = vmul.f32 %v7793, %v7959
        %v7969 = vmul.f32 %v7796, %v7959
        %v7970 = vmul.f32 %v7799, %v7959
        %v7971 = vmul.f32 %v7802, %v7959
        %v7972 = vmul.f32 %v7805, %v7959
        %v7973 = vmul.f32 %v7808, %v7959
        %v7974 = vmul.f32 %v7811, %v7959
        %v7975 = vmul.f32 %v7814, %v7959
        %v7976 = vmul.f32 %v7817, %v7959
        %v7977 = vmul.f32 %v7820, %v7959
        %v7978 = vmul.f32 %v7823, %v7959
        %v7979 = vmul.f32 %v7826, %v7959
        %v7980 = vmul.f32 %v7829, %v7959
        %v7981 = vmul.f32 %v7832, %v7959
        %v7982 = vmul.f32 %v7835, %v7959
        %v7983 = vmul.f32 %v7838, %v7959
        %v7984 = vmul.f32 %v7841, %v7959
        %v7985 = vmul.f32 %v7844, %v7959
        %v7986 = vmul.f32 %v7847, %v7959
        %v7987 = vmul.f32 %v7850, %v7959
        %v7988 = vmul.f32 %v7853, %v7959
        %v7989 = vmul.f32 %v7856, %v7959
        %v7990 = vmul.f32 %v7859, %v7959
        %v7991 = vmul.f32 %v7862, %v7959
        %v7992 = vmul.f32 %v7865, %v7959
        %v7993 = vmul.f32 %v7868, %v7959
        %v7994 = vmul.f32 %v7871, %v7959
        %v7995 = vmul.f32 %v7874, %v7959
        %v7996 = vmul.f32 %v7877, %v7959
        %v7997 = vmul.f32 %v7880, %v7959
        %v7998 = vmul.f32 %v7883, %v7959
        %v7999 = vmul.f32 %v7886, %v7959
        %v8000 = vmul.f32 %v7889, %v7959
        %v8001 = vmul.f32 %v7892, %v7959
        %v8002 = vmul.f32 %v7895, %v7959
        %v8003 = vmul.f32 %v7898, %v7959
        %v8004 = vmul.f32 %v7901, %v7959
        %v8005 = vmul.f32 %v7904, %v7959
        %v8006 = vmul.f32 %v7907, %v7959
        %v8007 = vmul.f32 %v7910, %v7959
        %v8008 = vmul.f32 %v7913, %v7959
        %v8009 = vmul.f32 %v7916, %v7959
        %v8010 = vmul.f32 %v7919, %v7959
        %v8011 = vmul.f32 %v7922, %v7959
        %v8012 = vmul.f32 %v7925, %v7959
        %v8013 = vmul.f32 %v7928, %v7959
        %v8014 = vmul.f32 %v7931, %v7959
        %v8015 = vmul.f32 %v7934, %v7959
        %v8016 = vmul.f32 %v7937, %v7959
        %v8017 = vmul.f32 %v7940, %v7959
        %v8018 = vmul.f32 %v7943, %v7959
        %v8019 = vmul.f32 %v7946, %v7959
        %v8020 = vmul.f32 %v7949, %v7959
        %v8021 = vmul.f32 %v7952, %v7959
        %v8022 = vmul.f32 %v7955, %v7959
        %v8023 = vmul.f32 %v7958, %v7959
        %v8024 = vsub.f32 %v7703, %v7960
        %v8025 = vsub.f32 %v7704, %v7961
        %v8026 = vsub.f32 %v7705, %v7962
        %v8027 = vsub.f32 %v7706, %v7963
        %v8028 = vsub.f32 %v7707, %v7964
        %v8029 = vsub.f32 %v7708, %v7965
        %v8030 = vsub.f32 %v7709, %v7966
        %v8031 = vsub.f32 %v7710, %v7967
        %v8032 = vsub.f32 %v7711, %v7968
        %v8033 = vsub.f32 %v7712, %v7969
        %v8034 = vsub.f32 %v7713, %v7970
        %v8035 = vsub.f32 %v7714, %v7971
        %v8036 = vsub.f32 %v7715, %v7972
        %v8037 = vsub.f32 %v7716, %v7973
        %v8038 = vsub.f32 %v7717, %v7974
        %v8039 = vsub.f32 %v7718, %v7975
        %v8040 = vsub.f32 %v7719, %v7976
        %v8041 = vsub.f32 %v7720, %v7977
        %v8042 = vsub.f32 %v7721, %v7978
        %v8043 = vsub.f32 %v7722, %v7979
        %v8044 = vsub.f32 %v7723, %v7980
        %v8045 = vsub.f32 %v7724, %v7981
        %v8046 = vsub.f32 %v7725, %v7982
        %v8047 = vsub.f32 %v7726, %v7983
        %v8048 = vsub.f32 %v7727, %v7984
        %v8049 = vsub.f32 %v7728, %v7985
        %v8050 = vsub.f32 %v7729, %v7986
        %v8051 = vsub.f32 %v7730, %v7987
        %v8052 = vsub.f32 %v7731, %v7988
        %v8053 = vsub.f32 %v7732, %v7989
        %v8054 = vsub.f32 %v7733, %v7990
        %v8055 = vsub.f32 %v7734, %v7991
        %v8056 = vsub.f32 %v7735, %v7992
        %v8057 = vsub.f32 %v7736, %v7993
        %v8058 = vsub.f32 %v7737, %v7994
        %v8059 = vsub.f32 %v7738, %v7995
        %v8060 = vsub.f32 %v7739, %v7996
        %v8061 = vsub.f32 %v7740, %v7997
        %v8062 = vsub.f32 %v7741, %v7998
        %v8063 = vsub.f32 %v7742, %v7999
        %v8064 = vsub.f32 %v7743, %v8000
        %v8065 = vsub.f32 %v7744, %v8001
        %v8066 = vsub.f32 %v7745, %v8002
        %v8067 = vsub.f32 %v7746, %v8003
        %v8068 = vsub.f32 %v7747, %v8004
        %v8069 = vsub.f32 %v7748, %v8005
        %v8070 = vsub.f32 %v7749, %v8006
        %v8071 = vsub.f32 %v7750, %v8007
        %v8072 = vsub.f32 %v7751, %v8008
        %v8073 = vsub.f32 %v7752, %v8009
        %v8074 = vsub.f32 %v7753, %v8010
        %v8075 = vsub.f32 %v7754, %v8011
        %v8076 = vsub.f32 %v7755, %v8012
        %v8077 = vsub.f32 %v7756, %v8013
        %v8078 = vsub.f32 %v7757, %v8014
        %v8079 = vsub.f32 %v7758, %v8015
        %v8080 = vsub.f32 %v7759, %v8016
        %v8081 = vsub.f32 %v7760, %v8017
        %v8082 = vsub.f32 %v7761, %v8018
        %v8083 = vsub.f32 %v7762, %v8019
        %v8084 = vsub.f32 %v7763, %v8020
        %v8085 = vsub.f32 %v7764, %v8021
        %v8086 = vsub.f32 %v7765, %v8022
        %v8087 = vsub.f32 %v7766, %v8023
        %v8088 = vmul.f32 %v8024, %v8024
        %v8089 = vmul.f32 %v8025, %v8025
        %v8090 = vmul.f32 %v8026, %v8026
        %v8091 = vmul.f32 %v8027, %v8027
        %v8092 = vmul.f32 %v8028, %v8028
        %v8093 = vmul.f32 %v8029, %v8029
        %v8094 = vmul.f32 %v8030, %v8030
        %v8095 = vmul.f32 %v8031, %v8031
        %v8096 = vmul.f32 %v8032, %v8032
        %v8097 = vmul.f32 %v8033, %v8033
        %v8098 = vmul.f32 %v8034, %v8034
        %v8099 = vmul.f32 %v8035, %v8035
        %v8100 = vmul.f32 %v8036, %v8036
        %v8101 = vmul.f32 %v8037, %v8037
        %v8102 = vmul.f32 %v8038, %v8038
        %v8103 = vmul.f32 %v8039, %v8039
        %v8104 = vmul.f32 %v8040, %v8040
        %v8105 = vmul.f32 %v8041, %v8041
        %v8106 = vmul.f32 %v8042, %v8042
        %v8107 = vmul.f32 %v8043, %v8043
        %v8108 = vmul.f32 %v8044, %v8044
        %v8109 = vmul.f32 %v8045, %v8045
        %v8110 = vmul.f32 %v8046, %v8046
        %v8111 = vmul.f32 %v8047, %v8047
        %v8112 = vmul.f32 %v8048, %v8048
        %v8113 = vmul.f32 %v8049, %v8049
        %v8114 = vmul.f32 %v8050, %v8050
        %v8115 = vmul.f32 %v8051, %v8051
        %v8116 = vmul.f32 %v8052, %v8052
        %v8117 = vmul.f32 %v8053, %v8053
        %v8118 = vmul.f32 %v8054, %v8054
        %v8119 = vmul.f32 %v8055, %v8055
        %v8120 = vmul.f32 %v8056, %v8056
        %v8121 = vmul.f32 %v8057, %v8057
        %v8122 = vmul.f32 %v8058, %v8058
        %v8123 = vmul.f32 %v8059, %v8059
        %v8124 = vmul.f32 %v8060, %v8060
        %v8125 = vmul.f32 %v8061, %v8061
        %v8126 = vmul.f32 %v8062, %v8062
        %v8127 = vmul.f32 %v8063, %v8063
        %v8128 = vmul.f32 %v8064, %v8064
        %v8129 = vmul.f32 %v8065, %v8065
        %v8130 = vmul.f32 %v8066, %v8066
        %v8131 = vmul.f32 %v8067, %v8067
        %v8132 = vmul.f32 %v8068, %v8068
        %v8133 = vmul.f32 %v8069, %v8069
        %v8134 = vmul.f32 %v8070, %v8070
        %v8135 = vmul.f32 %v8071, %v8071
        %v8136 = vmul.f32 %v8072, %v8072
        %v8137 = vmul.f32 %v8073, %v8073
        %v8138 = vmul.f32 %v8074, %v8074
        %v8139 = vmul.f32 %v8075, %v8075
        %v8140 = vmul.f32 %v8076, %v8076
        %v8141 = vmul.f32 %v8077, %v8077
        %v8142 = vmul.f32 %v8078, %v8078
        %v8143 = vmul.f32 %v8079, %v8079
        %v8144 = vmul.f32 %v8080, %v8080
        %v8145 = vmul.f32 %v8081, %v8081
        %v8146 = vmul.f32 %v8082, %v8082
        %v8147 = vmul.f32 %v8083, %v8083
        %v8148 = vmul.f32 %v8084, %v8084
        %v8149 = vmul.f32 %v8085, %v8085
        %v8150 = vmul.f32 %v8086, %v8086
        %v8151 = vmul.f32 %v8087, %v8087
        %v8152 = vsel %vm365, %v8088, 0.0
        %8153 = vadd.xlane.f32.xlu0 %v8152
        %v8154 = vpop.xlane.xlu0 %8153
        %v8155 = vsel %vm365, %v8089, 0.0
        %8156 = vadd.xlane.f32.xlu0 %v8155
        %v8157 = vpop.xlane.xlu0 %8156
        %v8158 = vsel %vm365, %v8090, 0.0
        %8159 = vadd.xlane.f32.xlu0 %v8158
        %v8160 = vpop.xlane.xlu0 %8159
        %v8161 = vsel %vm365, %v8091, 0.0
        %8162 = vadd.xlane.f32.xlu0 %v8161
        %v8163 = vpop.xlane.xlu0 %8162
        %v8164 = vsel %vm365, %v8092, 0.0
        %8165 = vadd.xlane.f32.xlu0 %v8164
        %v8166 = vpop.xlane.xlu0 %8165
        %v8167 = vsel %vm365, %v8093, 0.0
        %8168 = vadd.xlane.f32.xlu0 %v8167
        %v8169 = vpop.xlane.xlu0 %8168
        %v8170 = vsel %vm365, %v8094, 0.0
        %8171 = vadd.xlane.f32.xlu0 %v8170
        %v8172 = vpop.xlane.xlu0 %8171
        %v8173 = vsel %vm365, %v8095, 0.0
        %8174 = vadd.xlane.f32.xlu0 %v8173
        %v8175 = vpop.xlane.xlu0 %8174
        %v8176 = vsel %vm365, %v8096, 0.0
        %8177 = vadd.xlane.f32.xlu0 %v8176
        %v8178 = vpop.xlane.xlu0 %8177
        %v8179 = vsel %vm365, %v8097, 0.0
        %8180 = vadd.xlane.f32.xlu0 %v8179
        %v8181 = vpop.xlane.xlu0 %8180
        %v8182 = vsel %vm365, %v8098, 0.0
        %8183 = vadd.xlane.f32.xlu0 %v8182
        %v8184 = vpop.xlane.xlu0 %8183
        %v8185 = vsel %vm365, %v8099, 0.0
        %8186 = vadd.xlane.f32.xlu0 %v8185
        %v8187 = vpop.xlane.xlu0 %8186
        %v8188 = vsel %vm365, %v8100, 0.0
        %8189 = vadd.xlane.f32.xlu0 %v8188
        %v8190 = vpop.xlane.xlu0 %8189
        %v8191 = vsel %vm365, %v8101, 0.0
        %8192 = vadd.xlane.f32.xlu0 %v8191
        %v8193 = vpop.xlane.xlu0 %8192
        %v8194 = vsel %vm365, %v8102, 0.0
        %8195 = vadd.xlane.f32.xlu0 %v8194
        %v8196 = vpop.xlane.xlu0 %8195
        %v8197 = vsel %vm365, %v8103, 0.0
        %8198 = vadd.xlane.f32.xlu0 %v8197
        %v8199 = vpop.xlane.xlu0 %8198
        %v8200 = vsel %vm365, %v8104, 0.0
        %8201 = vadd.xlane.f32.xlu0 %v8200
        %v8202 = vpop.xlane.xlu0 %8201
        %v8203 = vsel %vm365, %v8105, 0.0
        %8204 = vadd.xlane.f32.xlu0 %v8203
        %v8205 = vpop.xlane.xlu0 %8204
        %v8206 = vsel %vm365, %v8106, 0.0
        %8207 = vadd.xlane.f32.xlu0 %v8206
        %v8208 = vpop.xlane.xlu0 %8207
        %v8209 = vsel %vm365, %v8107, 0.0
        %8210 = vadd.xlane.f32.xlu0 %v8209
        %v8211 = vpop.xlane.xlu0 %8210
        %v8212 = vsel %vm365, %v8108, 0.0
        %8213 = vadd.xlane.f32.xlu0 %v8212
        %v8214 = vpop.xlane.xlu0 %8213
        %v8215 = vsel %vm365, %v8109, 0.0
        %8216 = vadd.xlane.f32.xlu0 %v8215
        %v8217 = vpop.xlane.xlu0 %8216
        %v8218 = vsel %vm365, %v8110, 0.0
        %8219 = vadd.xlane.f32.xlu0 %v8218
        %v8220 = vpop.xlane.xlu0 %8219
        %v8221 = vsel %vm365, %v8111, 0.0
        %8222 = vadd.xlane.f32.xlu0 %v8221
        %v8223 = vpop.xlane.xlu0 %8222
        %v8224 = vsel %vm365, %v8112, 0.0
        %8225 = vadd.xlane.f32.xlu0 %v8224
        %v8226 = vpop.xlane.xlu0 %8225
        %v8227 = vsel %vm365, %v8113, 0.0
        %8228 = vadd.xlane.f32.xlu0 %v8227
        %v8229 = vpop.xlane.xlu0 %8228
        %v8230 = vsel %vm365, %v8114, 0.0
        %8231 = vadd.xlane.f32.xlu0 %v8230
        %v8232 = vpop.xlane.xlu0 %8231
        %v8233 = vsel %vm365, %v8115, 0.0
        %8234 = vadd.xlane.f32.xlu0 %v8233
        %v8235 = vpop.xlane.xlu0 %8234
        %v8236 = vsel %vm365, %v8116, 0.0
        %8237 = vadd.xlane.f32.xlu0 %v8236
        %v8238 = vpop.xlane.xlu0 %8237
        %v8239 = vsel %vm365, %v8117, 0.0
        %8240 = vadd.xlane.f32.xlu0 %v8239
        %v8241 = vpop.xlane.xlu0 %8240
        %v8242 = vsel %vm365, %v8118, 0.0
        %8243 = vadd.xlane.f32.xlu0 %v8242
        %v8244 = vpop.xlane.xlu0 %8243
        %v8245 = vsel %vm365, %v8119, 0.0
        %8246 = vadd.xlane.f32.xlu0 %v8245
        %v8247 = vpop.xlane.xlu0 %8246
        %v8248 = vsel %vm365, %v8120, 0.0
        %8249 = vadd.xlane.f32.xlu0 %v8248
        %v8250 = vpop.xlane.xlu0 %8249
        %v8251 = vsel %vm365, %v8121, 0.0
        %8252 = vadd.xlane.f32.xlu0 %v8251
        %v8253 = vpop.xlane.xlu0 %8252
        %v8254 = vsel %vm365, %v8122, 0.0
        %8255 = vadd.xlane.f32.xlu0 %v8254
        %v8256 = vpop.xlane.xlu0 %8255
        %v8257 = vsel %vm365, %v8123, 0.0
        %8258 = vadd.xlane.f32.xlu0 %v8257
        %v8259 = vpop.xlane.xlu0 %8258
        %v8260 = vsel %vm365, %v8124, 0.0
        %8261 = vadd.xlane.f32.xlu0 %v8260
        %v8262 = vpop.xlane.xlu0 %8261
        %v8263 = vsel %vm365, %v8125, 0.0
        %8264 = vadd.xlane.f32.xlu0 %v8263
        %v8265 = vpop.xlane.xlu0 %8264
        %v8266 = vsel %vm365, %v8126, 0.0
        %8267 = vadd.xlane.f32.xlu0 %v8266
        %v8268 = vpop.xlane.xlu0 %8267
        %v8269 = vsel %vm365, %v8127, 0.0
        %8270 = vadd.xlane.f32.xlu0 %v8269
        %v8271 = vpop.xlane.xlu0 %8270
        %v8272 = vsel %vm365, %v8128, 0.0
        %8273 = vadd.xlane.f32.xlu0 %v8272
        %v8274 = vpop.xlane.xlu0 %8273
        %v8275 = vsel %vm365, %v8129, 0.0
        %8276 = vadd.xlane.f32.xlu0 %v8275
        %v8277 = vpop.xlane.xlu0 %8276
        %v8278 = vsel %vm365, %v8130, 0.0
        %8279 = vadd.xlane.f32.xlu0 %v8278
        %v8280 = vpop.xlane.xlu0 %8279
        %v8281 = vsel %vm365, %v8131, 0.0
        %8282 = vadd.xlane.f32.xlu0 %v8281
        %v8283 = vpop.xlane.xlu0 %8282
        %v8284 = vsel %vm365, %v8132, 0.0
        %8285 = vadd.xlane.f32.xlu0 %v8284
        %v8286 = vpop.xlane.xlu0 %8285
        %v8287 = vsel %vm365, %v8133, 0.0
        %8288 = vadd.xlane.f32.xlu0 %v8287
        %v8289 = vpop.xlane.xlu0 %8288
        %v8290 = vsel %vm365, %v8134, 0.0
        %8291 = vadd.xlane.f32.xlu0 %v8290
        %v8292 = vpop.xlane.xlu0 %8291
        %v8293 = vsel %vm365, %v8135, 0.0
        %8294 = vadd.xlane.f32.xlu0 %v8293
        %v8295 = vpop.xlane.xlu0 %8294
        %v8296 = vsel %vm365, %v8136, 0.0
        %8297 = vadd.xlane.f32.xlu0 %v8296
        %v8298 = vpop.xlane.xlu0 %8297
        %v8299 = vsel %vm365, %v8137, 0.0
        %8300 = vadd.xlane.f32.xlu0 %v8299
        %v8301 = vpop.xlane.xlu0 %8300
        %v8302 = vsel %vm365, %v8138, 0.0
        %8303 = vadd.xlane.f32.xlu0 %v8302
        %v8304 = vpop.xlane.xlu0 %8303
        %v8305 = vsel %vm365, %v8139, 0.0
        %8306 = vadd.xlane.f32.xlu0 %v8305
        %v8307 = vpop.xlane.xlu0 %8306
        %v8308 = vsel %vm365, %v8140, 0.0
        %8309 = vadd.xlane.f32.xlu0 %v8308
        %v8310 = vpop.xlane.xlu0 %8309
        %v8311 = vsel %vm365, %v8141, 0.0
        %8312 = vadd.xlane.f32.xlu0 %v8311
        %v8313 = vpop.xlane.xlu0 %8312
        %v8314 = vsel %vm365, %v8142, 0.0
        %8315 = vadd.xlane.f32.xlu0 %v8314
        %v8316 = vpop.xlane.xlu0 %8315
        %v8317 = vsel %vm365, %v8143, 0.0
        %8318 = vadd.xlane.f32.xlu0 %v8317
        %v8319 = vpop.xlane.xlu0 %8318
        %v8320 = vsel %vm365, %v8144, 0.0
        %8321 = vadd.xlane.f32.xlu0 %v8320
        %v8322 = vpop.xlane.xlu0 %8321
        %v8323 = vsel %vm365, %v8145, 0.0
        %8324 = vadd.xlane.f32.xlu0 %v8323
        %v8325 = vpop.xlane.xlu0 %8324
        %v8326 = vsel %vm365, %v8146, 0.0
        %8327 = vadd.xlane.f32.xlu0 %v8326
        %v8328 = vpop.xlane.xlu0 %8327
        %v8329 = vsel %vm365, %v8147, 0.0
        %8330 = vadd.xlane.f32.xlu0 %v8329
        %v8331 = vpop.xlane.xlu0 %8330
        %v8332 = vsel %vm365, %v8148, 0.0
        %8333 = vadd.xlane.f32.xlu0 %v8332
        %v8334 = vpop.xlane.xlu0 %8333
        %v8335 = vsel %vm365, %v8149, 0.0
        %8336 = vadd.xlane.f32.xlu0 %v8335
        %v8337 = vpop.xlane.xlu0 %8336
        %v8338 = vsel %vm365, %v8150, 0.0
        %8339 = vadd.xlane.f32.xlu0 %v8338
        %v8340 = vpop.xlane.xlu0 %8339
        %v8341 = vsel %vm365, %v8151, 0.0
        %8342 = vadd.xlane.f32.xlu0 %v8341
        %v8343 = vpop.xlane.xlu0 %8342
        %v8344 = vmul.f32 %v8154, %v7959
        %v8345 = vmul.f32 %v8157, %v7959
        %v8346 = vmul.f32 %v8160, %v7959
        %v8347 = vmul.f32 %v8163, %v7959
        %v8348 = vmul.f32 %v8166, %v7959
        %v8349 = vmul.f32 %v8169, %v7959
        %v8350 = vmul.f32 %v8172, %v7959
        %v8351 = vmul.f32 %v8175, %v7959
        %v8352 = vmul.f32 %v8178, %v7959
        %v8353 = vmul.f32 %v8181, %v7959
        %v8354 = vmul.f32 %v8184, %v7959
        %v8355 = vmul.f32 %v8187, %v7959
        %v8356 = vmul.f32 %v8190, %v7959
        %v8357 = vmul.f32 %v8193, %v7959
        %v8358 = vmul.f32 %v8196, %v7959
        %v8359 = vmul.f32 %v8199, %v7959
        %v8360 = vmul.f32 %v8202, %v7959
        %v8361 = vmul.f32 %v8205, %v7959
        %v8362 = vmul.f32 %v8208, %v7959
        %v8363 = vmul.f32 %v8211, %v7959
        %v8364 = vmul.f32 %v8214, %v7959
        %v8365 = vmul.f32 %v8217, %v7959
        %v8366 = vmul.f32 %v8220, %v7959
        %v8367 = vmul.f32 %v8223, %v7959
        %v8368 = vmul.f32 %v8226, %v7959
        %v8369 = vmul.f32 %v8229, %v7959
        %v8370 = vmul.f32 %v8232, %v7959
        %v8371 = vmul.f32 %v8235, %v7959
        %v8372 = vmul.f32 %v8238, %v7959
        %v8373 = vmul.f32 %v8241, %v7959
        %v8374 = vmul.f32 %v8244, %v7959
        %v8375 = vmul.f32 %v8247, %v7959
        %v8376 = vmul.f32 %v8250, %v7959
        %v8377 = vmul.f32 %v8253, %v7959
        %v8378 = vmul.f32 %v8256, %v7959
        %v8379 = vmul.f32 %v8259, %v7959
        %v8380 = vmul.f32 %v8262, %v7959
        %v8381 = vmul.f32 %v8265, %v7959
        %v8382 = vmul.f32 %v8268, %v7959
        %v8383 = vmul.f32 %v8271, %v7959
        %v8384 = vmul.f32 %v8274, %v7959
        %v8385 = vmul.f32 %v8277, %v7959
        %v8386 = vmul.f32 %v8280, %v7959
        %v8387 = vmul.f32 %v8283, %v7959
        %v8388 = vmul.f32 %v8286, %v7959
        %v8389 = vmul.f32 %v8289, %v7959
        %v8390 = vmul.f32 %v8292, %v7959
        %v8391 = vmul.f32 %v8295, %v7959
        %v8392 = vmul.f32 %v8298, %v7959
        %v8393 = vmul.f32 %v8301, %v7959
        %v8394 = vmul.f32 %v8304, %v7959
        %v8395 = vmul.f32 %v8307, %v7959
        %v8396 = vmul.f32 %v8310, %v7959
        %v8397 = vmul.f32 %v8313, %v7959
        %v8398 = vmul.f32 %v8316, %v7959
        %v8399 = vmul.f32 %v8319, %v7959
        %v8400 = vmul.f32 %v8322, %v7959
        %v8401 = vmul.f32 %v8325, %v7959
        %v8402 = vmul.f32 %v8328, %v7959
        %v8403 = vmul.f32 %v8331, %v7959
        %v8404 = vmul.f32 %v8334, %v7959
        %v8405 = vmul.f32 %v8337, %v7959
        %v8406 = vmul.f32 %v8340, %v7959
        %v8407 = vmul.f32 %v8343, %v7959
        %v8408 = vadd.f32 %v8344, 1e-06
        %v8409 = vadd.f32 %v8345, 1e-06
        %v8410 = vadd.f32 %v8346, 1e-06
        %v8411 = vadd.f32 %v8347, 1e-06
        %v8412 = vadd.f32 %v8348, 1e-06
        %v8413 = vadd.f32 %v8349, 1e-06
        %v8414 = vadd.f32 %v8350, 1e-06
        %v8415 = vadd.f32 %v8351, 1e-06
        %v8416 = vadd.f32 %v8352, 1e-06
        %v8417 = vadd.f32 %v8353, 1e-06
        %v8418 = vadd.f32 %v8354, 1e-06
        %v8419 = vadd.f32 %v8355, 1e-06
        %v8420 = vadd.f32 %v8356, 1e-06
        %v8421 = vadd.f32 %v8357, 1e-06
        %v8422 = vadd.f32 %v8358, 1e-06
        %v8423 = vadd.f32 %v8359, 1e-06
        %v8424 = vadd.f32 %v8360, 1e-06
        %v8425 = vadd.f32 %v8361, 1e-06
        %v8426 = vadd.f32 %v8362, 1e-06
        %v8427 = vadd.f32 %v8363, 1e-06
        %v8428 = vadd.f32 %v8364, 1e-06
        %v8429 = vadd.f32 %v8365, 1e-06
        %v8430 = vadd.f32 %v8366, 1e-06
        %v8431 = vadd.f32 %v8367, 1e-06
        %v8432 = vadd.f32 %v8368, 1e-06
        %v8433 = vadd.f32 %v8369, 1e-06
        %v8434 = vadd.f32 %v8370, 1e-06
        %v8435 = vadd.f32 %v8371, 1e-06
        %v8436 = vadd.f32 %v8372, 1e-06
        %v8437 = vadd.f32 %v8373, 1e-06
        %v8438 = vadd.f32 %v8374, 1e-06
        %v8439 = vadd.f32 %v8375, 1e-06
        %v8440 = vadd.f32 %v8376, 1e-06
        %v8441 = vadd.f32 %v8377, 1e-06
        %v8442 = vadd.f32 %v8378, 1e-06
        %v8443 = vadd.f32 %v8379, 1e-06
        %v8444 = vadd.f32 %v8380, 1e-06
        %v8445 = vadd.f32 %v8381, 1e-06
        %v8446 = vadd.f32 %v8382, 1e-06
        %v8447 = vadd.f32 %v8383, 1e-06
        %v8448 = vadd.f32 %v8384, 1e-06
        %v8449 = vadd.f32 %v8385, 1e-06
        %v8450 = vadd.f32 %v8386, 1e-06
        %v8451 = vadd.f32 %v8387, 1e-06
        %v8452 = vadd.f32 %v8388, 1e-06
        %v8453 = vadd.f32 %v8389, 1e-06
        %v8454 = vadd.f32 %v8390, 1e-06
        %v8455 = vadd.f32 %v8391, 1e-06
        %v8456 = vadd.f32 %v8392, 1e-06
        %v8457 = vadd.f32 %v8393, 1e-06
        %v8458 = vadd.f32 %v8394, 1e-06
        %v8459 = vadd.f32 %v8395, 1e-06
        %v8460 = vadd.f32 %v8396, 1e-06
        %v8461 = vadd.f32 %v8397, 1e-06
        %v8462 = vadd.f32 %v8398, 1e-06
        %v8463 = vadd.f32 %v8399, 1e-06
        %v8464 = vadd.f32 %v8400, 1e-06
        %v8465 = vadd.f32 %v8401, 1e-06
        %v8466 = vadd.f32 %v8402, 1e-06
        %v8467 = vadd.f32 %v8403, 1e-06
        %v8468 = vadd.f32 %v8404, 1e-06
        %v8469 = vadd.f32 %v8405, 1e-06
        %v8470 = vadd.f32 %v8406, 1e-06
        %v8471 = vadd.f32 %v8407, 1e-06
        %v8472 = vrsqrt.pop %v8408
        %v8473 = vrsqrt.pop %v8409
        %v8474 = vrsqrt.pop %v8410
        %v8475 = vrsqrt.pop %v8411
        %v8476 = vrsqrt.pop %v8412
        %v8477 = vrsqrt.pop %v8413
        %v8478 = vrsqrt.pop %v8414
        %v8479 = vrsqrt.pop %v8415
        %v8480 = vrsqrt.pop %v8416
        %v8481 = vrsqrt.pop %v8417
        %v8482 = vrsqrt.pop %v8418
        %v8483 = vrsqrt.pop %v8419
        %v8484 = vrsqrt.pop %v8420
        %v8485 = vrsqrt.pop %v8421
        %v8486 = vrsqrt.pop %v8422
        %v8487 = vrsqrt.pop %v8423
        %v8488 = vrsqrt.pop %v8424
        %v8489 = vrsqrt.pop %v8425
        %v8490 = vrsqrt.pop %v8426
        %v8491 = vrsqrt.pop %v8427
        %v8492 = vrsqrt.pop %v8428
        %v8493 = vrsqrt.pop %v8429
        %v8494 = vrsqrt.pop %v8430
        %v8495 = vrsqrt.pop %v8431
        %v8496 = vrsqrt.pop %v8432
        %v8497 = vrsqrt.pop %v8433
        %v8498 = vrsqrt.pop %v8434
        %v8499 = vrsqrt.pop %v8435
        %v8500 = vrsqrt.pop %v8436
        %v8501 = vrsqrt.pop %v8437
        %v8502 = vrsqrt.pop %v8438
        %v8503 = vrsqrt.pop %v8439
        %v8504 = vrsqrt.pop %v8440
        %v8505 = vrsqrt.pop %v8441
        %v8506 = vrsqrt.pop %v8442
        %v8507 = vrsqrt.pop %v8443
        %v8508 = vrsqrt.pop %v8444
        %v8509 = vrsqrt.pop %v8445
        %v8510 = vrsqrt.pop %v8446
        %v8511 = vrsqrt.pop %v8447
        %v8512 = vrsqrt.pop %v8448
        %v8513 = vrsqrt.pop %v8449
        %v8514 = vrsqrt.pop %v8450
        %v8515 = vrsqrt.pop %v8451
        %v8516 = vrsqrt.pop %v8452
        %v8517 = vrsqrt.pop %v8453
        %v8518 = vrsqrt.pop %v8454
        %v8519 = vrsqrt.pop %v8455
        %v8520 = vrsqrt.pop %v8456
        %v8521 = vrsqrt.pop %v8457
        %v8522 = vrsqrt.pop %v8458
        %v8523 = vrsqrt.pop %v8459
        %v8524 = vrsqrt.pop %v8460
        %v8525 = vrsqrt.pop %v8461
        %v8526 = vrsqrt.pop %v8462
        %v8527 = vrsqrt.pop %v8463
        %v8528 = vrsqrt.pop %v8464
        %v8529 = vrsqrt.pop %v8465
        %v8530 = vrsqrt.pop %v8466
        %v8531 = vrsqrt.pop %v8467
        %v8532 = vrsqrt.pop %v8468
        %v8533 = vrsqrt.pop %v8469
        %v8534 = vrsqrt.pop %v8470
        %v8535 = vrsqrt.pop %v8471
        %v8536 = vmul.f32 %v8024, %v8472
        %v8537 = vmul.f32 %v8025, %v8473
        %v8538 = vmul.f32 %v8026, %v8474
        %v8539 = vmul.f32 %v8027, %v8475
        %v8540 = vmul.f32 %v8028, %v8476
        %v8541 = vmul.f32 %v8029, %v8477
        %v8542 = vmul.f32 %v8030, %v8478
        %v8543 = vmul.f32 %v8031, %v8479
        %v8544 = vmul.f32 %v8032, %v8480
        %v8545 = vmul.f32 %v8033, %v8481
        %v8546 = vmul.f32 %v8034, %v8482
        %v8547 = vmul.f32 %v8035, %v8483
        %v8548 = vmul.f32 %v8036, %v8484
        %v8549 = vmul.f32 %v8037, %v8485
        %v8550 = vmul.f32 %v8038, %v8486
        %v8551 = vmul.f32 %v8039, %v8487
        %v8552 = vmul.f32 %v8040, %v8488
        %v8553 = vmul.f32 %v8041, %v8489
        %v8554 = vmul.f32 %v8042, %v8490
        %v8555 = vmul.f32 %v8043, %v8491
        %v8556 = vmul.f32 %v8044, %v8492
        %v8557 = vmul.f32 %v8045, %v8493
        %v8558 = vmul.f32 %v8046, %v8494
        %v8559 = vmul.f32 %v8047, %v8495
        %v8560 = vmul.f32 %v8048, %v8496
        %v8561 = vmul.f32 %v8049, %v8497
        %v8562 = vmul.f32 %v8050, %v8498
        %v8563 = vmul.f32 %v8051, %v8499
        %v8564 = vmul.f32 %v8052, %v8500
        %v8565 = vmul.f32 %v8053, %v8501
        %v8566 = vmul.f32 %v8054, %v8502
        %v8567 = vmul.f32 %v8055, %v8503
        %v8568 = vmul.f32 %v8056, %v8504
        %v8569 = vmul.f32 %v8057, %v8505
        %v8570 = vmul.f32 %v8058, %v8506
        %v8571 = vmul.f32 %v8059, %v8507
        %v8572 = vmul.f32 %v8060, %v8508
        %v8573 = vmul.f32 %v8061, %v8509
        %v8574 = vmul.f32 %v8062, %v8510
        %v8575 = vmul.f32 %v8063, %v8511
        %v8576 = vmul.f32 %v8064, %v8512
        %v8577 = vmul.f32 %v8065, %v8513
        %v8578 = vmul.f32 %v8066, %v8514
        %v8579 = vmul.f32 %v8067, %v8515
        %v8580 = vmul.f32 %v8068, %v8516
        %v8581 = vmul.f32 %v8069, %v8517
        %v8582 = vmul.f32 %v8070, %v8518
        %v8583 = vmul.f32 %v8071, %v8519
        %v8584 = vmul.f32 %v8072, %v8520
        %v8585 = vmul.f32 %v8073, %v8521
        %v8586 = vmul.f32 %v8074, %v8522
        %v8587 = vmul.f32 %v8075, %v8523
        %v8588 = vmul.f32 %v8076, %v8524
        %v8589 = vmul.f32 %v8077, %v8525
        %v8590 = vmul.f32 %v8078, %v8526
        %v8591 = vmul.f32 %v8079, %v8527
        %v8592 = vmul.f32 %v8080, %v8528
        %v8593 = vmul.f32 %v8081, %v8529
        %v8594 = vmul.f32 %v8082, %v8530
        %v8595 = vmul.f32 %v8083, %v8531
        %v8596 = vmul.f32 %v8084, %v8532
        %v8597 = vmul.f32 %v8085, %v8533
        %v8598 = vmul.f32 %v8086, %v8534
        %v8599 = vmul.f32 %v8087, %v8535
        %v8600 = vpack.c.bf16 %v8537, %v8536
        %v8601 = vpack.c.bf16 %v8539, %v8538
        %v8602 = vpack.c.bf16 %v8541, %v8540
        %v8603 = vpack.c.bf16 %v8543, %v8542
        %v8604 = vpack.c.bf16 %v8545, %v8544
        %v8605 = vpack.c.bf16 %v8547, %v8546
        %v8606 = vpack.c.bf16 %v8549, %v8548
        %v8607 = vpack.c.bf16 %v8551, %v8550
        %v8608 = vpack.c.bf16 %v8553, %v8552
        %v8609 = vpack.c.bf16 %v8555, %v8554
        %v8610 = vpack.c.bf16 %v8557, %v8556
        %v8611 = vpack.c.bf16 %v8559, %v8558
        %v8612 = vpack.c.bf16 %v8561, %v8560
        %v8613 = vpack.c.bf16 %v8563, %v8562
        %v8614 = vpack.c.bf16 %v8565, %v8564
        %v8615 = vpack.c.bf16 %v8567, %v8566
        %v8616 = vpack.c.bf16 %v8569, %v8568
        %v8617 = vpack.c.bf16 %v8571, %v8570
        %v8618 = vpack.c.bf16 %v8573, %v8572
        %v8619 = vpack.c.bf16 %v8575, %v8574
        %v8620 = vpack.c.bf16 %v8577, %v8576
        %v8621 = vpack.c.bf16 %v8579, %v8578
        %v8622 = vpack.c.bf16 %v8581, %v8580
        %v8623 = vpack.c.bf16 %v8583, %v8582
        %v8624 = vpack.c.bf16 %v8585, %v8584
        %v8625 = vpack.c.bf16 %v8587, %v8586
        %v8626 = vpack.c.bf16 %v8589, %v8588
        %v8627 = vpack.c.bf16 %v8591, %v8590
        %v8628 = vpack.c.bf16 %v8593, %v8592
        %v8629 = vpack.c.bf16 %v8595, %v8594
        %v8630 = vpack.c.bf16 %v8597, %v8596
        %v8631 = vpack.c.bf16 %v8599, %v8598
        %v8632 = vld [vmem:[%s3] sm:$0xf]
        %v8633 = vld [vmem:[%s3 + $0x4] sm:$0xf]
        %v8634 = vld [vmem:[%s3 + $0x8] sm:$0xf]
        %v8635 = vld [vmem:[%s3 + $0xc] sm:$0xf]
        %v8636 = vld [vmem:[%s4] sm:$0x1]
        %v8638 = vlaneseq
        %v8639 = vshrl.u32 %v8638, 7
        %v8640 = vsub.s32 0, %v8639
        %v8641 = vrot.slane %v8636, %v8640
        %v8647 = vunpack.c.l.b16 %v8632
        %v8648 = vunpack.c.l.b16 %v8633
        %v8649 = vunpack.c.l.b16 %v8634
        %v8650 = vunpack.c.l.b16 %v8635
        %v8651 = vpack.c.b16 %v8648, %v8647
        %v8652 = vpack.c.b16 %v8650, %v8649
        %v8656 = vsel %vm365, %v8600, 0
        %v8659 = vsel %vm365, %v8601, 0
        %v8662 = vsel %vm365, %v8602, 0
        %v8665 = vsel %vm365, %v8603, 0
        %v8668 = vsel %vm365, %v8604, 0
        %v8671 = vsel %vm365, %v8605, 0
        %v8674 = vsel %vm365, %v8606, 0
        %v8677 = vsel %vm365, %v8607, 0
        %v8680 = vsel %vm365, %v8608, 0
        %v8683 = vsel %vm365, %v8609, 0
        %v8686 = vsel %vm365, %v8610, 0
        %v8689 = vsel %vm365, %v8611, 0
        %v8692 = vsel %vm365, %v8612, 0
        %v8695 = vsel %vm365, %v8613, 0
        %v8698 = vsel %vm365, %v8614, 0
        %v8701 = vsel %vm365, %v8615, 0
        %v8704 = vsel %vm365, %v8616, 0
        %v8707 = vsel %vm365, %v8617, 0
        %v8710 = vsel %vm365, %v8618, 0
        %v8713 = vsel %vm365, %v8619, 0
        %v8716 = vsel %vm365, %v8620, 0
        %v8719 = vsel %vm365, %v8621, 0
        %v8722 = vsel %vm365, %v8622, 0
        %v8725 = vsel %vm365, %v8623, 0
        %v8728 = vsel %vm365, %v8624, 0
        %v8731 = vsel %vm365, %v8625, 0
        %v8734 = vsel %vm365, %v8626, 0
        %v8737 = vsel %vm365, %v8627, 0
        %v8740 = vsel %vm365, %v8628, 0
        %v8743 = vsel %vm365, %v8629, 0
        %v8746 = vsel %vm365, %v8630, 0
        %v8749 = vsel %vm365, %v8631, 0
        %8751 = vmatprep.subr.bf16.mxu0 0
        %8752 = vmatpush1.bf16.msra.mxu0 %v8651
        %8753 = vmatprep.subr.bf16.mxu0 0
        %8754 = vmatpush1.bf16.msra.mxu0 %v8652
        %8755 = vmatprep.subr.bf16.mxu0 0
        %8756 = vmatpush1.bf16.msra.mxu0 0
        %8757 = vmatprep.subr.bf16.mxu0 0
        %8758 = vmatpush1.bf16.msra.mxu0 0
        %8759 = vmatprep.subr.bf16.mxu0 0
        %8760 = vmatpush1.bf16.msra.mxu0 0
        %8761 = vmatprep.subr.bf16.mxu0 0
        %8762 = vmatpush1.bf16.msra.mxu0 0
        %8763 = vmatprep.subr.bf16.mxu0 0
        %8764 = vmatpush1.bf16.msra.mxu0 0
        %8765 = vmatprep.subr.bf16.mxu0 0
        %8766 = vmatpush1.bf16.msra.mxu0 0
        %8767 = vmatprep.subr.bf16.mxu0 0
        %8768 = vmatpush1.bf16.msra.mxu0 0
        %8769 = vmatprep.subr.bf16.mxu0 0
        %8770 = vmatpush1.bf16.msra.mxu0 0
        %8771 = vmatprep.subr.bf16.mxu0 0
        %8772 = vmatpush1.bf16.msra.mxu0 0
        %8773 = vmatprep.subr.bf16.mxu0 0
        %8774 = vmatpush1.bf16.msra.mxu0 0
        %8775 = vmatprep.subr.bf16.mxu0 0
        %8776 = vmatpush1.bf16.msra.mxu0 0
        %8777 = vmatprep.subr.bf16.mxu0 0
        %8778 = vmatpush1.bf16.msra.mxu0 0
        %8779 = vmatprep.subr.bf16.mxu0 0
        %8780 = vmatpush1.bf16.msra.mxu0 0
        %8781 = vmatprep.subr.bf16.mxu0 0
        %8782 = vmatpush1.bf16.msra.mxu0 0
        %8783 = vmatprep.mubr.bf16.mxu0 0
        %8784 = vmatmul.mubr.bf16.gmra.mrb[0].mxu0 %v8656
        %v8785 = vpop.f32.mrb[0].mxu0
        %v8786 = vadd.f32 %v8641, %v8785
        %v8787 = vpop.f32.mrb[0].mxu0
        %v8788 = vpop.f32.mrb[0].mxu0
        %v8789 = vadd.f32 %v8641, %v8788
        %v8790 = vpop.f32.mrb[0].mxu0
        %8791 = vmatprep.mubr.bf16.mxu0 0
        %8792 = vmatmul.mubr.bf16.gmra.mrb[0].mxu0 %v8659
        %v8793 = vpop.f32.mrb[0].mxu0
        %v8794 = vadd.f32 %v8641, %v8793
        %v8795 = vpop.f32.mrb[0].mxu0
        %v8796 = vpop.f32.mrb[0].mxu0
        %v8797 = vadd.f32 %v8641, %v8796
        %v8798 = vpop.f32.mrb[0].mxu0
        %8799 = vmatprep.mubr.bf16.mxu0 0
        %8800 = vmatmul.mubr.bf16.gmra.mrb[0].mxu0 %v8662
        %v8801 = vpop.f32.mrb[0].mxu0
        %v8802 = vadd.f32 %v8641, %v8801
        %v8803 = vpop.f32.mrb[0].mxu0
        %v8804 = vpop.f32.mrb[0].mxu0
        %v8805 = vadd.f32 %v8641, %v8804
        %v8806 = vpop.f32.mrb[0].mxu0
        %8807 = vmatprep.mubr.bf16.mxu0 0
        %8808 = vmatmul.mubr.bf16.gmra.mrb[0].mxu0 %v8665
        %v8809 = vpop.f32.mrb[0].mxu0
        %v8810 = vadd.f32 %v8641, %v8809
        %v8811 = vpop.f32.mrb[0].mxu0
        %v8812 = vpop.f32.mrb[0].mxu0
        %v8813 = vadd.f32 %v8641, %v8812
        %v8814 = vpop.f32.mrb[0].mxu0
        %8815 = vmatprep.mubr.bf16.mxu0 0
        %8816 = vmatmul.mubr.bf16.gmra.mrb[0].mxu0 %v8668
        %v8817 = vpop.f32.mrb[0].mxu0
        %v8818 = vadd.f32 %v8641, %v8817
        %v8819 = vpop.f32.mrb[0].mxu0
        %v8820 = vpop.f32.mrb[0].mxu0
        %v8821 = vadd.f32 %v8641, %v8820
        %v8822 = vpop.f32.mrb[0].mxu0
        %8823 = vmatprep.mubr.bf16.mxu0 0
        %8824 = vmatmul.mubr.bf16.gmra.mrb[0].mxu0 %v8671
        %v8825 = vpop.f32.mrb[0].mxu0
        %v8826 = vadd.f32 %v8641, %v8825
        %v8827 = vpop.f32.mrb[0].mxu0
        %v8828 = vpop.f32.mrb[0].mxu0
        %v8829 = vadd.f32 %v8641, %v8828
        %v8830 = vpop.f32.mrb[0].mxu0
        %8831 = vmatprep.mubr.bf16.mxu0 0
        %8832 = vmatmul.mubr.bf16.gmra.mrb[0].mxu0 %v8674
        %v8833 = vpop.f32.mrb[0].mxu0
        %v8834 = vadd.f32 %v8641, %v8833
        %v8835 = vpop.f32.mrb[0].mxu0
        %v8836 = vpop.f32.mrb[0].mxu0
        %v8837 = vadd.f32 %v8641, %v8836
        %v8838 = vpop.f32.mrb[0].mxu0
        %8839 = vmatprep.mubr.bf16.mxu0 0
        %8840 = vmatmul.mubr.bf16.gmra.mrb[0].mxu0 %v8677
        %v8841 = vpop.f32.mrb[0].mxu0
        %v8842 = vadd.f32 %v8641, %v8841
        %v8843 = vpop.f32.mrb[0].mxu0
        %v8844 = vpop.f32.mrb[0].mxu0
        %v8845 = vadd.f32 %v8641, %v8844
        %v8846 = vpop.f32.mrb[0].mxu0
        %8847 = vmatprep.mubr.bf16.mxu0 0
        %8848 = vmatmul.mubr.bf16.gmra.mrb[0].mxu0 %v8680
        %v8849 = vpop.f32.mrb[0].mxu0
        %v8850 = vadd.f32 %v8641, %v8849
        %v8851 = vpop.f32.mrb[0].mxu0
        %v8852 = vpop.f32.mrb[0].mxu0
        %v8853 = vadd.f32 %v8641, %v8852
        %v8854 = vpop.f32.mrb[0].mxu0
        %8855 = vmatprep.mubr.bf16.mxu0 0
        %8856 = vmatmul.mubr.bf16.gmra.mrb[0].mxu0 %v8683
        %v8857 = vpop.f32.mrb[0].mxu0
        %v8858 = vadd.f32 %v8641, %v8857
        %v8859 = vpop.f32.mrb[0].mxu0
        %v8860 = vpop.f32.mrb[0].mxu0
        %v8861 = vadd.f32 %v8641, %v8860
        %v8862 = vpop.f32.mrb[0].mxu0
        %8863 = vmatprep.mubr.bf16.mxu0 0
        %8864 = vmatmul.mubr.bf16.gmra.mrb[0].mxu0 %v8686
        %v8865 = vpop.f32.mrb[0].mxu0
        %v8866 = vadd.f32 %v8641, %v8865
        %v8867 = vpop.f32.mrb[0].mxu0
        %v8868 = vpop.f32.mrb[0].mxu0
        %v8869 = vadd.f32 %v8641, %v8868
        %v8870 = vpop.f32.mrb[0].mxu0
        %8871 = vmatprep.mubr.bf16.mxu0 0
        %8872 = vmatmul.mubr.bf16.gmra.mrb[0].mxu0 %v8689
        %v8873 = vpop.f32.mrb[0].mxu0
        %v8874 = vadd.f32 %v8641, %v8873
        %v8875 = vpop.f32.mrb[0].mxu0
        %v8876 = vpop.f32.mrb[0].mxu0
        %v8877 = vadd.f32 %v8641, %v8876
        %v8878 = vpop.f32.mrb[0].mxu0
        %8879 = vmatprep.mubr.bf16.mxu0 0
        %8880 = vmatmul.mubr.bf16.gmra.mrb[0].mxu0 %v8692
        %v8881 = vpop.f32.mrb[0].mxu0
        %v8882 = vadd.f32 %v8641, %v8881
        %v8883 = vpop.f32.mrb[0].mxu0
        %v8884 = vpop.f32.mrb[0].mxu0
        %v8885 = vadd.f32 %v8641, %v8884
        %v8886 = vpop.f32.mrb[0].mxu0
        %8887 = vmatprep.mubr.bf16.mxu0 0
        %8888 = vmatmul.mubr.bf16.gmra.mrb[0].mxu0 %v8695
        %v8889 = vpop.f32.mrb[0].mxu0
        %v8890 = vadd.f32 %v8641, %v8889
        %v8891 = vpop.f32.mrb[0].mxu0
        %v8892 = vpop.f32.mrb[0].mxu0
        %v8893 = vadd.f32 %v8641, %v8892
        %v8894 = vpop.f32.mrb[0].mxu0
        %8895 = vmatprep.mubr.bf16.mxu0 0
        %8896 = vmatmul.mubr.bf16.gmra.mrb[0].mxu0 %v8698
        %v8897 = vpop.f32.mrb[0].mxu0
        %v8898 = vadd.f32 %v8641, %v8897
        %v8899 = vpop.f32.mrb[0].mxu0
        %v8900 = vpop.f32.mrb[0].mxu0
        %v8901 = vadd.f32 %v8641, %v8900
        %v8902 = vpop.f32.mrb[0].mxu0
        %8903 = vmatprep.mubr.bf16.mxu0 0
        %8904 = vmatmul.mubr.bf16.gmra.mrb[0].mxu0 %v8701
        %v8905 = vpop.f32.mrb[0].mxu0
        %v8906 = vadd.f32 %v8641, %v8905
        %v8907 = vpop.f32.mrb[0].mxu0
        %v8908 = vpop.f32.mrb[0].mxu0
        %v8909 = vadd.f32 %v8641, %v8908
        %v8910 = vpop.f32.mrb[0].mxu0
        %8911 = vmatprep.mubr.bf16.mxu0 0
        %8912 = vmatmul.mubr.bf16.gmra.mrb[0].mxu0 %v8704
        %v8913 = vpop.f32.mrb[0].mxu0
        %v8914 = vadd.f32 %v8641, %v8913
        %v8915 = vpop.f32.mrb[0].mxu0
        %v8916 = vpop.f32.mrb[0].mxu0
        %v8917 = vadd.f32 %v8641, %v8916
        %v8918 = vpop.f32.mrb[0].mxu0
        %8919 = vmatprep.mubr.bf16.mxu0 0
        %8920 = vmatmul.mubr.bf16.gmra.mrb[0].mxu0 %v8707
        %v8921 = vpop.f32.mrb[0].mxu0
        %v8922 = vadd.f32 %v8641, %v8921
        %v8923 = vpop.f32.mrb[0].mxu0
        %v8924 = vpop.f32.mrb[0].mxu0
        %v8925 = vadd.f32 %v8641, %v8924
        %v8926 = vpop.f32.mrb[0].mxu0
        %8927 = vmatprep.mubr.bf16.mxu0 0
        %8928 = vmatmul.mubr.bf16.gmra.mrb[0].mxu0 %v8710
        %v8929 = vpop.f32.mrb[0].mxu0
        %v8930 = vadd.f32 %v8641, %v8929
        %v8931 = vpop.f32.mrb[0].mxu0
        %v8932 = vpop.f32.mrb[0].mxu0
        %v8933 = vadd.f32 %v8641, %v8932
        %v8934 = vpop.f32.mrb[0].mxu0
        %8935 = vmatprep.mubr.bf16.mxu0 0
        %8936 = vmatmul.mubr.bf16.gmra.mrb[0].mxu0 %v8713
        %v8937 = vpop.f32.mrb[0].mxu0
        %v8938 = vadd.f32 %v8641, %v8937
        %v8939 = vpop.f32.mrb[0].mxu0
        %v8940 = vpop.f32.mrb[0].mxu0
        %v8941 = vadd.f32 %v8641, %v8940
        %v8942 = vpop.f32.mrb[0].mxu0
        %8943 = vmatprep.mubr.bf16.mxu0 0
        %8944 = vmatmul.mubr.bf16.gmra.mrb[0].mxu0 %v8716
        %v8945 = vpop.f32.mrb[0].mxu0
        %v8946 = vadd.f32 %v8641, %v8945
        %v8947 = vpop.f32.mrb[0].mxu0
        %v8948 = vpop.f32.mrb[0].mxu0
        %v8949 = vadd.f32 %v8641, %v8948
        %v8950 = vpop.f32.mrb[0].mxu0
        %8951 = vmatprep.mubr.bf16.mxu0 0
        %8952 = vmatmul.mubr.bf16.gmra.mrb[0].mxu0 %v8719
        %v8953 = vpop.f32.mrb[0].mxu0
        %v8954 = vadd.f32 %v8641, %v8953
        %v8955 = vpop.f32.mrb[0].mxu0
        %v8956 = vpop.f32.mrb[0].mxu0
        %v8957 = vadd.f32 %v8641, %v8956
        %v8958 = vpop.f32.mrb[0].mxu0
        %8959 = vmatprep.mubr.bf16.mxu0 0
        %8960 = vmatmul.mubr.bf16.gmra.mrb[0].mxu0 %v8722
        %v8961 = vpop.f32.mrb[0].mxu0
        %v8962 = vadd.f32 %v8641, %v8961
        %v8963 = vpop.f32.mrb[0].mxu0
        %v8964 = vpop.f32.mrb[0].mxu0
        %v8965 = vadd.f32 %v8641, %v8964
        %v8966 = vpop.f32.mrb[0].mxu0
        %8967 = vmatprep.mubr.bf16.mxu0 0
        %8968 = vmatmul.mubr.bf16.gmra.mrb[0].mxu0 %v8725
        %v8969 = vpop.f32.mrb[0].mxu0
        %v8970 = vadd.f32 %v8641, %v8969
        %v8971 = vpop.f32.mrb[0].mxu0
        %v8972 = vpop.f32.mrb[0].mxu0
        %v8973 = vadd.f32 %v8641, %v8972
        %v8974 = vpop.f32.mrb[0].mxu0
        %8975 = vmatprep.mubr.bf16.mxu0 0
        %8976 = vmatmul.mubr.bf16.gmra.mrb[0].mxu0 %v8728
        %v8977 = vpop.f32.mrb[0].mxu0
        %v8978 = vadd.f32 %v8641, %v8977
        %v8979 = vpop.f32.mrb[0].mxu0
        %v8980 = vpop.f32.mrb[0].mxu0
        %v8981 = vadd.f32 %v8641, %v8980
        %v8982 = vpop.f32.mrb[0].mxu0
        %8983 = vmatprep.mubr.bf16.mxu0 0
        %8984 = vmatmul.mubr.bf16.gmra.mrb[0].mxu0 %v8731
        %v8985 = vpop.f32.mrb[0].mxu0
        %v8986 = vadd.f32 %v8641, %v8985
        %v8987 = vpop.f32.mrb[0].mxu0
        %v8988 = vpop.f32.mrb[0].mxu0
        %v8989 = vadd.f32 %v8641, %v8988
        %v8990 = vpop.f32.mrb[0].mxu0
        %8991 = vmatprep.mubr.bf16.mxu0 0
        %8992 = vmatmul.mubr.bf16.gmra.mrb[0].mxu0 %v8734
        %v8993 = vpop.f32.mrb[0].mxu0
        %v8994 = vadd.f32 %v8641, %v8993
        %v8995 = vpop.f32.mrb[0].mxu0
        %v8996 = vpop.f32.mrb[0].mxu0
        %v8997 = vadd.f32 %v8641, %v8996
        %v8998 = vpop.f32.mrb[0].mxu0
        %8999 = vmatprep.mubr.bf16.mxu0 0
        %9000 = vmatmul.mubr.bf16.gmra.mrb[0].mxu0 %v8737
        %v9001 = vpop.f32.mrb[0].mxu0
        %v9002 = vadd.f32 %v8641, %v9001
        %v9003 = vpop.f32.mrb[0].mxu0
        %v9004 = vpop.f32.mrb[0].mxu0
        %v9005 = vadd.f32 %v8641, %v9004
        %v9006 = vpop.f32.mrb[0].mxu0
        %9007 = vmatprep.mubr.bf16.mxu0 0
        %9008 = vmatmul.mubr.bf16.gmra.mrb[0].mxu0 %v8740
        %v9009 = vpop.f32.mrb[0].mxu0
        %v9010 = vadd.f32 %v8641, %v9009
        %v9011 = vpop.f32.mrb[0].mxu0
        %v9012 = vpop.f32.mrb[0].mxu0
        %v9013 = vadd.f32 %v8641, %v9012
        %v9014 = vpop.f32.mrb[0].mxu0
        %9015 = vmatprep.mubr.bf16.mxu0 0
        %9016 = vmatmul.mubr.bf16.gmra.mrb[0].mxu0 %v8743
        %v9017 = vpop.f32.mrb[0].mxu0
        %v9018 = vadd.f32 %v8641, %v9017
        %v9019 = vpop.f32.mrb[0].mxu0
        %v9020 = vpop.f32.mrb[0].mxu0
        %v9021 = vadd.f32 %v8641, %v9020
        %v9022 = vpop.f32.mrb[0].mxu0
        %9023 = vmatprep.mubr.bf16.mxu0 0
        %9024 = vmatmul.mubr.bf16.gmra.mrb[0].mxu0 %v8746
        %v9025 = vpop.f32.mrb[0].mxu0
        %v9026 = vadd.f32 %v8641, %v9025
        %v9027 = vpop.f32.mrb[0].mxu0
        %v9028 = vpop.f32.mrb[0].mxu0
        %v9029 = vadd.f32 %v8641, %v9028
        %v9030 = vpop.f32.mrb[0].mxu0
        %9031 = vmatprep.mubr.bf16.mxu0 0
        %9032 = vmatmul.mubr.bf16.gmra.mrb[0].mxu0 %v8749
        %v9033 = vpop.f32.mrb[0].mxu0
        %v9034 = vadd.f32 %v8641, %v9033
        %v9035 = vpop.f32.mrb[0].mxu0
        %v9036 = vpop.f32.mrb[0].mxu0
        %v9037 = vadd.f32 %v8641, %v9036
        %v9038 = vpop.f32.mrb[0].mxu0
        %9039 = vdwg.mxu0
        %v9040 = vmul.f32 %v8786, 0.5
        %v9041 = vmul.f32 %v8789, 0.5
        %v9042 = vmul.f32 %v8794, 0.5
        %v9043 = vmul.f32 %v8797, 0.5
        %v9044 = vmul.f32 %v8802, 0.5
        %v9045 = vmul.f32 %v8805, 0.5
        %v9046 = vmul.f32 %v8810, 0.5
        %v9047 = vmul.f32 %v8813, 0.5
        %v9048 = vmul.f32 %v8818, 0.5
        %v9049 = vmul.f32 %v8821, 0.5
        %v9050 = vmul.f32 %v8826, 0.5
        %v9051 = vmul.f32 %v8829, 0.5
        %v9052 = vmul.f32 %v8834, 0.5
        %v9053 = vmul.f32 %v8837, 0.5
        %v9054 = vmul.f32 %v8842, 0.5
        %v9055 = vmul.f32 %v8845, 0.5
        %v9056 = vmul.f32 %v8850, 0.5
        %v9057 = vmul.f32 %v8853, 0.5
        %v9058 = vmul.f32 %v8858, 0.5
        %v9059 = vmul.f32 %v8861, 0.5
        %v9060 = vmul.f32 %v8866, 0.5
        %v9061 = vmul.f32 %v8869, 0.5
        %v9062 = vmul.f32 %v8874, 0.5
        %v9063 = vmul.f32 %v8877, 0.5
        %v9064 = vmul.f32 %v8882, 0.5
        %v9065 = vmul.f32 %v8885, 0.5
        %v9066 = vmul.f32 %v8890, 0.5
        %v9067 = vmul.f32 %v8893, 0.5
        %v9068 = vmul.f32 %v8898, 0.5
        %v9069 = vmul.f32 %v8901, 0.5
        %v9070 = vmul.f32 %v8906, 0.5
        %v9071 = vmul.f32 %v8909, 0.5
        %v9072 = vmul.f32 %v8914, 0.5
        %v9073 = vmul.f32 %v8917, 0.5
        %v9074 = vmul.f32 %v8922, 0.5
        %v9075 = vmul.f32 %v8925, 0.5
        %v9076 = vmul.f32 %v8930, 0.5
        %v9077 = vmul.f32 %v8933, 0.5
        %v9078 = vmul.f32 %v8938, 0.5
        %v9079 = vmul.f32 %v8941, 0.5
        %v9080 = vmul.f32 %v8946, 0.5
        %v9081 = vmul.f32 %v8949, 0.5
        %v9082 = vmul.f32 %v8954, 0.5
        %v9083 = vmul.f32 %v8957, 0.5
        %v9084 = vmul.f32 %v8962, 0.5
        %v9085 = vmul.f32 %v8965, 0.5
        %v9086 = vmul.f32 %v8970, 0.5
        %v9087 = vmul.f32 %v8973, 0.5
        %v9088 = vmul.f32 %v8978, 0.5
        %v9089 = vmul.f32 %v8981, 0.5
        %v9090 = vmul.f32 %v8986, 0.5
        %v9091 = vmul.f32 %v8989, 0.5
        %v9092 = vmul.f32 %v8994, 0.5
        %v9093 = vmul.f32 %v8997, 0.5
        %v9094 = vmul.f32 %v9002, 0.5
        %v9095 = vmul.f32 %v9005, 0.5
        %v9096 = vmul.f32 %v9010, 0.5
        %v9097 = vmul.f32 %v9013, 0.5
        %v9098 = vmul.f32 %v9018, 0.5
        %v9099 = vmul.f32 %v9021, 0.5
        %v9100 = vmul.f32 %v9026, 0.5
        %v9101 = vmul.f32 %v9029, 0.5
        %v9102 = vmul.f32 %v9034, 0.5
        %v9103 = vmul.f32 %v9037, 0.5
        %v9104 = vmul.f32 %v8786, 0.70710677
        %v9105 = vmul.f32 %v8789, 0.70710677
        %v9106 = vmul.f32 %v8794, 0.70710677
        %v9107 = vmul.f32 %v8797, 0.70710677
        %v9108 = vmul.f32 %v8802, 0.70710677
        %v9109 = vmul.f32 %v8805, 0.70710677
        %v9110 = vmul.f32 %v8810, 0.70710677
        %v9111 = vmul.f32 %v8813, 0.70710677
        %v9112 = vmul.f32 %v8818, 0.70710677
        %v9113 = vmul.f32 %v8821, 0.70710677
        %v9114 = vmul.f32 %v8826, 0.70710677
        %v9115 = vmul.f32 %v8829, 0.70710677
        %v9116 = vmul.f32 %v8834, 0.70710677
        %v9117 = vmul.f32 %v8837, 0.70710677
        %v9118 = vmul.f32 %v8842, 0.70710677
        %v9119 = vmul.f32 %v8845, 0.70710677
        %v9120 = vmul.f32 %v8850, 0.70710677
        %v9121 = vmul.f32 %v8853, 0.70710677
        %v9122 = vmul.f32 %v8858, 0.70710677
        %v9123 = vmul.f32 %v8861, 0.70710677
        %v9124 = vmul.f32 %v8866, 0.70710677
        %v9125 = vmul.f32 %v8869, 0.70710677
        %v9126 = vmul.f32 %v8874, 0.70710677
        %v9127 = vmul.f32 %v8877, 0.70710677
        %v9128 = vmul.f32 %v8882, 0.70710677
        %v9129 = vmul.f32 %v8885, 0.70710677
        %v9130 = vmul.f32 %v8890, 0.70710677
        %v9131 = vmul.f32 %v8893, 0.70710677
        %v9132 = vmul.f32 %v8898, 0.70710677
        %v9133 = vmul.f32 %v8901, 0.70710677
        %v9134 = vmul.f32 %v8906, 0.70710677
        %v9135 = vmul.f32 %v8909, 0.70710677
        %v9136 = vmul.f32 %v8914, 0.70710677
        %v9137 = vmul.f32 %v8917, 0.70710677
        %v9138 = vmul.f32 %v8922, 0.70710677
        %v9139 = vmul.f32 %v8925, 0.70710677
        %v9140 = vmul.f32 %v8930, 0.70710677
        %v9141 = vmul.f32 %v8933, 0.70710677
        %v9142 = vmul.f32 %v8938, 0.70710677
        %v9143 = vmul.f32 %v8941, 0.70710677
        %v9144 = vmul.f32 %v8946, 0.70710677
        %v9145 = vmul.f32 %v8949, 0.70710677
        %v9146 = vmul.f32 %v8954, 0.70710677
        %v9147 = vmul.f32 %v8957, 0.70710677
        %v9148 = vmul.f32 %v8962, 0.70710677
        %v9149 = vmul.f32 %v8965, 0.70710677
        %v9150 = vmul.f32 %v8970, 0.70710677
        %v9151 = vmul.f32 %v8973, 0.70710677
        %v9152 = vmul.f32 %v8978, 0.70710677
        %v9153 = vmul.f32 %v8981, 0.70710677
        %v9154 = vmul.f32 %v8986, 0.70710677
        %v9155 = vmul.f32 %v8989, 0.70710677
        %v9156 = vmul.f32 %v8994, 0.70710677
        %v9157 = vmul.f32 %v8997, 0.70710677
        %v9158 = vmul.f32 %v9002, 0.70710677
        %v9159 = vmul.f32 %v9005, 0.70710677
        %v9160 = vmul.f32 %v9010, 0.70710677
        %v9161 = vmul.f32 %v9013, 0.70710677
        %v9162 = vmul.f32 %v9018, 0.70710677
        %v9163 = vmul.f32 %v9021, 0.70710677
        %v9164 = vmul.f32 %v9026, 0.70710677
        %v9165 = vmul.f32 %v9029, 0.70710677
        %v9166 = vmul.f32 %v9034, 0.70710677
        %v9167 = vmul.f32 %v9037, 0.70710677
        %v9168 = verf.f32.pop %v9104
        %v9169 = verf.f32.pop %v9105
        %v9170 = verf.f32.pop %v9106
        %v9171 = verf.f32.pop %v9107
        %v9172 = verf.f32.pop %v9108
        %v9173 = verf.f32.pop %v9109
        %v9174 = verf.f32.pop %v9110
        %v9175 = verf.f32.pop %v9111
        %v9176 = verf.f32.pop %v9112
        %v9177 = verf.f32.pop %v9113
        %v9178 = verf.f32.pop %v9114
        %v9179 = verf.f32.pop %v9115
        %v9180 = verf.f32.pop %v9116
        %v9181 = verf.f32.pop %v9117
        %v9182 = verf.f32.pop %v9118
        %v9183 = verf.f32.pop %v9119
        %v9184 = verf.f32.pop %v9120
        %v9185 = verf.f32.pop %v9121
        %v9186 = verf.f32.pop %v9122
        %v9187 = verf.f32.pop %v9123
        %v9188 = verf.f32.pop %v9124
        %v9189 = verf.f32.pop %v9125
        %v9190 = verf.f32.pop %v9126
        %v9191 = verf.f32.pop %v9127
        %v9192 = verf.f32.pop %v9128
        %v9193 = verf.f32.pop %v9129
        %v9194 = verf.f32.pop %v9130
        %v9195 = verf.f32.pop %v9131
        %v9196 = verf.f32.pop %v9132
        %v9197 = verf.f32.pop %v9133
        %v9198 = verf.f32.pop %v9134
        %v9199 = verf.f32.pop %v9135
        %v9200 = verf.f32.pop %v9136
        %v9201 = verf.f32.pop %v9137
        %v9202 = verf.f32.pop %v9138
        %v9203 = verf.f32.pop %v9139
        %v9204 = verf.f32.pop %v9140
        %v9205 = verf.f32.pop %v9141
        %v9206 = verf.f32.pop %v9142
        %v9207 = verf.f32.pop %v9143
        %v9208 = verf.f32.pop %v9144
        %v9209 = verf.f32.pop %v9145
        %v9210 = verf.f32.pop %v9146
        %v9211 = verf.f32.pop %v9147
        %v9212 = verf.f32.pop %v9148
        %v9213 = verf.f32.pop %v9149
        %v9214 = verf.f32.pop %v9150
        %v9215 = verf.f32.pop %v9151
        %v9216 = verf.f32.pop %v9152
        %v9217 = verf.f32.pop %v9153
        %v9218 = verf.f32.pop %v9154
        %v9219 = verf.f32.pop %v9155
        %v9220 = verf.f32.pop %v9156
        %v9221 = verf.f32.pop %v9157
        %v9222 = verf.f32.pop %v9158
        %v9223 = verf.f32.pop %v9159
        %v9224 = verf.f32.pop %v9160
        %v9225 = verf.f32.pop %v9161
        %v9226 = verf.f32.pop %v9162
        %v9227 = verf.f32.pop %v9163
        %v9228 = verf.f32.pop %v9164
        %v9229 = verf.f32.pop %v9165
        %v9230 = verf.f32.pop %v9166
        %v9231 = verf.f32.pop %v9167
        %v9232 = vadd.f32 %v9168, 1.0
        %v9233 = vadd.f32 %v9169, 1.0
        %v9234 = vadd.f32 %v9170, 1.0
        %v9235 = vadd.f32 %v9171, 1.0
        %v9236 = vadd.f32 %v9172, 1.0
        %v9237 = vadd.f32 %v9173, 1.0
        %v9238 = vadd.f32 %v9174, 1.0
        %v9239 = vadd.f32 %v9175, 1.0
        %v9240 = vadd.f32 %v9176, 1.0
        %v9241 = vadd.f32 %v9177, 1.0
        %v9242 = vadd.f32 %v9178, 1.0
        %v9243 = vadd.f32 %v9179, 1.0
        %v9244 = vadd.f32 %v9180, 1.0
        %v9245 = vadd.f32 %v9181, 1.0
        %v9246 = vadd.f32 %v9182, 1.0
        %v9247 = vadd.f32 %v9183, 1.0
        %v9248 = vadd.f32 %v9184, 1.0
        %v9249 = vadd.f32 %v9185, 1.0
        %v9250 = vadd.f32 %v9186, 1.0
        %v9251 = vadd.f32 %v9187, 1.0
        %v9252 = vadd.f32 %v9188, 1.0
        %v9253 = vadd.f32 %v9189, 1.0
        %v9254 = vadd.f32 %v9190, 1.0
        %v9255 = vadd.f32 %v9191, 1.0
        %v9256 = vadd.f32 %v9192, 1.0
        %v9257 = vadd.f32 %v9193, 1.0
        %v9258 = vadd.f32 %v9194, 1.0
        %v9259 = vadd.f32 %v9195, 1.0
        %v9260 = vadd.f32 %v9196, 1.0
        %v9261 = vadd.f32 %v9197, 1.0
        %v9262 = vadd.f32 %v9198, 1.0
        %v9263 = vadd.f32 %v9199, 1.0
        %v9264 = vadd.f32 %v9200, 1.0
        %v9265 = vadd.f32 %v9201, 1.0
        %v9266 = vadd.f32 %v9202, 1.0
        %v9267 = vadd.f32 %v9203, 1.0
        %v9268 = vadd.f32 %v9204, 1.0
        %v9269 = vadd.f32 %v9205, 1.0
        %v9270 = vadd.f32 %v9206, 1.0
        %v9271 = vadd.f32 %v9207, 1.0
        %v9272 = vadd.f32 %v9208, 1.0
        %v9273 = vadd.f32 %v9209, 1.0
        %v9274 = vadd.f32 %v9210, 1.0
        %v9275 = vadd.f32 %v9211, 1.0
        %v9276 = vadd.f32 %v9212, 1.0
        %v9277 = vadd.f32 %v9213, 1.0
        %v9278 = vadd.f32 %v9214, 1.0
        %v9279 = vadd.f32 %v9215, 1.0
        %v9280 = vadd.f32 %v9216, 1.0
        %v9281 = vadd.f32 %v9217, 1.0
        %v9282 = vadd.f32 %v9218, 1.0
        %v9283 = vadd.f32 %v9219, 1.0
        %v9284 = vadd.f32 %v9220, 1.0
        %v9285 = vadd.f32 %v9221, 1.0
        %v9286 = vadd.f32 %v9222, 1.0
        %v9287 = vadd.f32 %v9223, 1.0
        %v9288 = vadd.f32 %v9224, 1.0
        %v9289 = vadd.f32 %v9225, 1.0
        %v9290 = vadd.f32 %v9226, 1.0
        %v9291 = vadd.f32 %v9227, 1.0
        %v9292 = vadd.f32 %v9228, 1.0
        %v9293 = vadd.f32 %v9229, 1.0
        %v9294 = vadd.f32 %v9230, 1.0
        %v9295 = vadd.f32 %v9231, 1.0
        %v9296 = vmul.f32 %v9040, %v9232
        %v9297 = vmul.f32 %v9041, %v9233
        %v9298 = vmul.f32 %v9042, %v9234
        %v9299 = vmul.f32 %v9043, %v9235
        %v9300 = vmul.f32 %v9044, %v9236
        %v9301 = vmul.f32 %v9045, %v9237
        %v9302 = vmul.f32 %v9046, %v9238
        %v9303 = vmul.f32 %v9047, %v9239
        %v9304 = vmul.f32 %v9048, %v9240
        %v9305 = vmul.f32 %v9049, %v9241
        %v9306 = vmul.f32 %v9050, %v9242
        %v9307 = vmul.f32 %v9051, %v9243
        %v9308 = vmul.f32 %v9052, %v9244
        %v9309 = vmul.f32 %v9053, %v9245
        %v9310 = vmul.f32 %v9054, %v9246
        %v9311 = vmul.f32 %v9055, %v9247
        %v9312 = vmul.f32 %v9056, %v9248
        %v9313 = vmul.f32 %v9057, %v9249
        %v9314 = vmul.f32 %v9058, %v9250
        %v9315 = vmul.f32 %v9059, %v9251
        %v9316 = vmul.f32 %v9060, %v9252
        %v9317 = vmul.f32 %v9061, %v9253
        %v9318 = vmul.f32 %v9062, %v9254
        %v9319 = vmul.f32 %v9063, %v9255
        %v9320 = vmul.f32 %v9064, %v9256
        %v9321 = vmul.f32 %v9065, %v9257
        %v9322 = vmul.f32 %v9066, %v9258
        %v9323 = vmul.f32 %v9067, %v9259
        %v9324 = vmul.f32 %v9068, %v9260
        %v9325 = vmul.f32 %v9069, %v9261
        %v9326 = vmul.f32 %v9070, %v9262
        %v9327 = vmul.f32 %v9071, %v9263
        %v9328 = vmul.f32 %v9072, %v9264
        %v9329 = vmul.f32 %v9073, %v9265
        %v9330 = vmul.f32 %v9074, %v9266
        %v9331 = vmul.f32 %v9075, %v9267
        %v9332 = vmul.f32 %v9076, %v9268
        %v9333 = vmul.f32 %v9077, %v9269
        %v9334 = vmul.f32 %v9078, %v9270
        %v9335 = vmul.f32 %v9079, %v9271
        %v9336 = vmul.f32 %v9080, %v9272
        %v9337 = vmul.f32 %v9081, %v9273
        %v9338 = vmul.f32 %v9082, %v9274
        %v9339 = vmul.f32 %v9083, %v9275
        %v9340 = vmul.f32 %v9084, %v9276
        %v9341 = vmul.f32 %v9085, %v9277
        %v9342 = vmul.f32 %v9086, %v9278
        %v9343 = vmul.f32 %v9087, %v9279
        %v9344 = vmul.f32 %v9088, %v9280
        %v9345 = vmul.f32 %v9089, %v9281
        %v9346 = vmul.f32 %v9090, %v9282
        %v9347 = vmul.f32 %v9091, %v9283
        %v9348 = vmul.f32 %v9092, %v9284
        %v9349 = vmul.f32 %v9093, %v9285
        %v9350 = vmul.f32 %v9094, %v9286
        %v9351 = vmul.f32 %v9095, %v9287
        %v9352 = vmul.f32 %v9096, %v9288
        %v9353 = vmul.f32 %v9097, %v9289
        %v9354 = vmul.f32 %v9098, %v9290
        %v9355 = vmul.f32 %v9099, %v9291
        %v9356 = vmul.f32 %v9100, %v9292
        %v9357 = vmul.f32 %v9101, %v9293
        %v9358 = vmul.f32 %v9102, %v9294
        %v9359 = vmul.f32 %v9103, %v9295
        %v9360 = vpack.c.bf16 %v9297, %v9296
        %v9361 = vpack.c.bf16 %v9299, %v9298
        %v9362 = vpack.c.bf16 %v9301, %v9300
        %v9363 = vpack.c.bf16 %v9303, %v9302
        %v9364 = vpack.c.bf16 %v9305, %v9304
        %v9365 = vpack.c.bf16 %v9307, %v9306
        %v9366 = vpack.c.bf16 %v9309, %v9308
        %v9367 = vpack.c.bf16 %v9311, %v9310
        %v9368 = vpack.c.bf16 %v9313, %v9312
        %v9369 = vpack.c.bf16 %v9315, %v9314
        %v9370 = vpack.c.bf16 %v9317, %v9316
        %v9371 = vpack.c.bf16 %v9319, %v9318
        %v9372 = vpack.c.bf16 %v9321, %v9320
        %v9373 = vpack.c.bf16 %v9323, %v9322
        %v9374 = vpack.c.bf16 %v9325, %v9324
        %v9375 = vpack.c.bf16 %v9327, %v9326
        %v9376 = vpack.c.bf16 %v9329, %v9328
        %v9377 = vpack.c.bf16 %v9331, %v9330
        %v9378 = vpack.c.bf16 %v9333, %v9332
        %v9379 = vpack.c.bf16 %v9335, %v9334
        %v9380 = vpack.c.bf16 %v9337, %v9336
        %v9381 = vpack.c.bf16 %v9339, %v9338
        %v9382 = vpack.c.bf16 %v9341, %v9340
        %v9383 = vpack.c.bf16 %v9343, %v9342
        %v9384 = vpack.c.bf16 %v9345, %v9344
        %v9385 = vpack.c.bf16 %v9347, %v9346
        %v9386 = vpack.c.bf16 %v9349, %v9348
        %v9387 = vpack.c.bf16 %v9351, %v9350
        %v9388 = vpack.c.bf16 %v9353, %v9352
        %v9389 = vpack.c.bf16 %v9355, %v9354
        %v9390 = vpack.c.bf16 %v9357, %v9356
        %v9391 = vpack.c.bf16 %v9359, %v9358
        %v9392 = vld [vmem:[%s5] sm:$0xf]
        %v9393 = vld [vmem:[%s5 + $0x4] sm:$0xf]
        %v9394 = vld [vmem:[%s5 + $0x8] sm:$0xf]
        %v9395 = vld [vmem:[%s5 + $0xc] sm:$0xf]
        %v9396 = vld [vmem:[%s5 + $0x10] sm:$0xf]
        %v9397 = vld [vmem:[%s5 + $0x14] sm:$0xf]
        %v9398 = vld [vmem:[%s5 + $0x18] sm:$0xf]
        %v9399 = vld [vmem:[%s5 + $0x1c] sm:$0xf]
        %v9400 = vld [vmem:[%s5 + $0x20] sm:$0xf]
        %v9401 = vld [vmem:[%s5 + $0x24] sm:$0xf]
        %v9402 = vld [vmem:[%s5 + $0x28] sm:$0xf]
        %v9403 = vld [vmem:[%s5 + $0x2c] sm:$0xf]
        %v9404 = vld [vmem:[%s5 + $0x30] sm:$0xf]
        %v9405 = vld [vmem:[%s5 + $0x34] sm:$0xf]
        %v9406 = vld [vmem:[%s5 + $0x38] sm:$0xf]
        %v9407 = vld [vmem:[%s5 + $0x3c] sm:$0xf]
        %v9408 = vld [vmem:[%s6] sm:$0x1]
        %v9410 = vlaneseq
        %v9411 = vshrl.u32 %v9410, 7
        %v9412 = vsub.s32 0, %v9411
        %v9413 = vrot.slane %v9408, %v9412
        %v9431 = vunpack.c.l.b16 %v9392
        %v9432 = vunpack.c.l.b16 %v9393
        %v9433 = vunpack.c.l.b16 %v9394
        %v9434 = vunpack.c.l.b16 %v9395
        %v9435 = vunpack.c.l.b16 %v9396
        %v9436 = vunpack.c.l.b16 %v9397
        %v9437 = vunpack.c.l.b16 %v9398
        %v9438 = vunpack.c.l.b16 %v9399
        %v9439 = vunpack.c.l.b16 %v9400
        %v9440 = vunpack.c.l.b16 %v9401
        %v9441 = vunpack.c.l.b16 %v9402
        %v9442 = vunpack.c.l.b16 %v9403
        %v9443 = vunpack.c.l.b16 %v9404
        %v9444 = vunpack.c.l.b16 %v9405
        %v9445 = vunpack.c.l.b16 %v9406
        %v9446 = vunpack.c.l.b16 %v9407
        %v9447 = vpack.c.b16 %v9432, %v9431
        %v9448 = vpack.c.b16 %v9434, %v9433
        %v9449 = vpack.c.b16 %v9436, %v9435
        %v9450 = vpack.c.b16 %v9438, %v9437
        %v9451 = vpack.c.b16 %v9440, %v9439
        %v9452 = vpack.c.b16 %v9442, %v9441
        %v9453 = vpack.c.b16 %v9444, %v9443
        %v9454 = vpack.c.b16 %v9446, %v9445
        %9463 = vmatprep.subr.bf16.mxu0 0
        %9464 = vmatpush1.bf16.msra.mxu0 %v9447
        %9465 = vmatprep.subr.bf16.mxu0 0
        %9466 = vmatpush1.bf16.msra.mxu0 %v9448
        %9467 = vmatprep.subr.bf16.mxu0 0
        %9468 = vmatpush1.bf16.msra.mxu0 %v9449
        %9469 = vmatprep.subr.bf16.mxu0 0
        %9470 = vmatpush1.bf16.msra.mxu0 %v9450
        %9471 = vmatprep.subr.bf16.mxu0 0
        %9472 = vmatpush1.bf16.msra.mxu0 %v9451
        %9473 = vmatprep.subr.bf16.mxu0 0
        %9474 = vmatpush1.bf16.msra.mxu0 %v9452
        %9475 = vmatprep.subr.bf16.mxu0 0
        %9476 = vmatpush1.bf16.msra.mxu0 %v9453
        %9477 = vmatprep.subr.bf16.mxu0 0
        %9478 = vmatpush1.bf16.msra.mxu0 %v9454
        %9479 = vmatprep.subr.bf16.mxu0 0
        %9480 = vmatpush1.bf16.msra.mxu0 0
        %9481 = vmatprep.subr.bf16.mxu0 0
        %9482 = vmatpush1.bf16.msra.mxu0 0
        %9483 = vmatprep.subr.bf16.mxu0 0
        %9484 = vmatpush1.bf16.msra.mxu0 0
        %9485 = vmatprep.subr.bf16.mxu0 0
        %9486 = vmatpush1.bf16.msra.mxu0 0
        %9487 = vmatprep.subr.bf16.mxu0 0
        %9488 = vmatpush1.bf16.msra.mxu0 0
        %9489 = vmatprep.subr.bf16.mxu0 0
        %9490 = vmatpush1.bf16.msra.mxu0 0
        %9491 = vmatprep.subr.bf16.mxu0 0
        %9492 = vmatpush1.bf16.msra.mxu0 0
        %9493 = vmatprep.subr.bf16.mxu0 0
        %9494 = vmatpush1.bf16.msra.mxu0 0
        %9495 = vmatprep.mubr.bf16.mxu0 0
        %9496 = vmatmul.mubr.bf16.gmra.mrb[0].mxu0 %v9360
        %v9497 = vpop.f32.mrb[0].mxu0
        %v9498 = vadd.f32 %v9413, %v9497
        %v9499 = vpop.f32.mrb[0].mxu0
        %v9500 = vpop.f32.mrb[0].mxu0
        %v9501 = vadd.f32 %v9413, %v9500
        %v9502 = vpop.f32.mrb[0].mxu0
        %9503 = vmatprep.mubr.bf16.mxu0 0
        %9504 = vmatmul.mubr.bf16.gmra.mrb[0].mxu0 %v9361
        %v9505 = vpop.f32.mrb[0].mxu0
        %v9506 = vadd.f32 %v9413, %v9505
        %v9507 = vpop.f32.mrb[0].mxu0
        %v9508 = vpop.f32.mrb[0].mxu0
        %v9509 = vadd.f32 %v9413, %v9508
        %v9510 = vpop.f32.mrb[0].mxu0
        %9511 = vmatprep.mubr.bf16.mxu0 0
        %9512 = vmatmul.mubr.bf16.gmra.mrb[0].mxu0 %v9362
        %v9513 = vpop.f32.mrb[0].mxu0
        %v9514 = vadd.f32 %v9413, %v9513
        %v9515 = vpop.f32.mrb[0].mxu0
        %v9516 = vpop.f32.mrb[0].mxu0
        %v9517 = vadd.f32 %v9413, %v9516
        %v9518 = vpop.f32.mrb[0].mxu0
        %9519 = vmatprep.mubr.bf16.mxu0 0
        %9520 = vmatmul.mubr.bf16.gmra.mrb[0].mxu0 %v9363
        %v9521 = vpop.f32.mrb[0].mxu0
        %v9522 = vadd.f32 %v9413, %v9521
        %v9523 = vpop.f32.mrb[0].mxu0
        %v9524 = vpop.f32.mrb[0].mxu0
        %v9525 = vadd.f32 %v9413, %v9524
        %v9526 = vpop.f32.mrb[0].mxu0
        %9527 = vmatprep.mubr.bf16.mxu0 0
        %9528 = vmatmul.mubr.bf16.gmra.mrb[0].mxu0 %v9364
        %v9529 = vpop.f32.mrb[0].mxu0
        %v9530 = vadd.f32 %v9413, %v9529
        %v9531 = vpop.f32.mrb[0].mxu0
        %v9532 = vpop.f32.mrb[0].mxu0
        %v9533 = vadd.f32 %v9413, %v9532
        %v9534 = vpop.f32.mrb[0].mxu0
        %9535 = vmatprep.mubr.bf16.mxu0 0
        %9536 = vmatmul.mubr.bf16.gmra.mrb[0].mxu0 %v9365
        %v9537 = vpop.f32.mrb[0].mxu0
        %v9538 = vadd.f32 %v9413, %v9537
        %v9539 = vpop.f32.mrb[0].mxu0
        %v9540 = vpop.f32.mrb[0].mxu0
        %v9541 = vadd.f32 %v9413, %v9540
        %v9542 = vpop.f32.mrb[0].mxu0
        %9543 = vmatprep.mubr.bf16.mxu0 0
        %9544 = vmatmul.mubr.bf16.gmra.mrb[0].mxu0 %v9366
        %v9545 = vpop.f32.mrb[0].mxu0
        %v9546 = vadd.f32 %v9413, %v9545
        %v9547 = vpop.f32.mrb[0].mxu0
        %v9548 = vpop.f32.mrb[0].mxu0
        %v9549 = vadd.f32 %v9413, %v9548
        %v9550 = vpop.f32.mrb[0].mxu0
        %9551 = vmatprep.mubr.bf16.mxu0 0
        %9552 = vmatmul.mubr.bf16.gmra.mrb[0].mxu0 %v9367
        %v9553 = vpop.f32.mrb[0].mxu0
        %v9554 = vadd.f32 %v9413, %v9553
        %v9555 = vpop.f32.mrb[0].mxu0
        %v9556 = vpop.f32.mrb[0].mxu0
        %v9557 = vadd.f32 %v9413, %v9556
        %v9558 = vpop.f32.mrb[0].mxu0
        %9559 = vmatprep.mubr.bf16.mxu0 0
        %9560 = vmatmul.mubr.bf16.gmra.mrb[0].mxu0 %v9368
        %v9561 = vpop.f32.mrb[0].mxu0
        %v9562 = vadd.f32 %v9413, %v9561
        %v9563 = vpop.f32.mrb[0].mxu0
        %v9564 = vpop.f32.mrb[0].mxu0
        %v9565 = vadd.f32 %v9413, %v9564
        %v9566 = vpop.f32.mrb[0].mxu0
        %9567 = vmatprep.mubr.bf16.mxu0 0
        %9568 = vmatmul.mubr.bf16.gmra.mrb[0].mxu0 %v9369
        %v9569 = vpop.f32.mrb[0].mxu0
        %v9570 = vadd.f32 %v9413, %v9569
        %v9571 = vpop.f32.mrb[0].mxu0
        %v9572 = vpop.f32.mrb[0].mxu0
        %v9573 = vadd.f32 %v9413, %v9572
        %v9574 = vpop.f32.mrb[0].mxu0
        %9575 = vmatprep.mubr.bf16.mxu0 0
        %9576 = vmatmul.mubr.bf16.gmra.mrb[0].mxu0 %v9370
        %v9577 = vpop.f32.mrb[0].mxu0
        %v9578 = vadd.f32 %v9413, %v9577
        %v9579 = vpop.f32.mrb[0].mxu0
        %v9580 = vpop.f32.mrb[0].mxu0
        %v9581 = vadd.f32 %v9413, %v9580
        %v9582 = vpop.f32.mrb[0].mxu0
        %9583 = vmatprep.mubr.bf16.mxu0 0
        %9584 = vmatmul.mubr.bf16.gmra.mrb[0].mxu0 %v9371
        %v9585 = vpop.f32.mrb[0].mxu0
        %v9586 = vadd.f32 %v9413, %v9585
        %v9587 = vpop.f32.mrb[0].mxu0
        %v9588 = vpop.f32.mrb[0].mxu0
        %v9589 = vadd.f32 %v9413, %v9588
        %v9590 = vpop.f32.mrb[0].mxu0
        %9591 = vmatprep.mubr.bf16.mxu0 0
        %9592 = vmatmul.mubr.bf16.gmra.mrb[0].mxu0 %v9372
        %v9593 = vpop.f32.mrb[0].mxu0
        %v9594 = vadd.f32 %v9413, %v9593
        %v9595 = vpop.f32.mrb[0].mxu0
        %v9596 = vpop.f32.mrb[0].mxu0
        %v9597 = vadd.f32 %v9413, %v9596
        %v9598 = vpop.f32.mrb[0].mxu0
        %9599 = vmatprep.mubr.bf16.mxu0 0
        %9600 = vmatmul.mubr.bf16.gmra.mrb[0].mxu0 %v9373
        %v9601 = vpop.f32.mrb[0].mxu0
        %v9602 = vadd.f32 %v9413, %v9601
        %v9603 = vpop.f32.mrb[0].mxu0
        %v9604 = vpop.f32.mrb[0].mxu0
        %v9605 = vadd.f32 %v9413, %v9604
        %v9606 = vpop.f32.mrb[0].mxu0
        %9607 = vmatprep.mubr.bf16.mxu0 0
        %9608 = vmatmul.mubr.bf16.gmra.mrb[0].mxu0 %v9374
        %v9609 = vpop.f32.mrb[0].mxu0
        %v9610 = vadd.f32 %v9413, %v9609
        %v9611 = vpop.f32.mrb[0].mxu0
        %v9612 = vpop.f32.mrb[0].mxu0
        %v9613 = vadd.f32 %v9413, %v9612
        %v9614 = vpop.f32.mrb[0].mxu0
        %9615 = vmatprep.mubr.bf16.mxu0 0
        %9616 = vmatmul.mubr.bf16.gmra.mrb[0].mxu0 %v9375
        %v9617 = vpop.f32.mrb[0].mxu0
        %v9618 = vadd.f32 %v9413, %v9617
        %v9619 = vpop.f32.mrb[0].mxu0
        %v9620 = vpop.f32.mrb[0].mxu0
        %v9621 = vadd.f32 %v9413, %v9620
        %v9622 = vpop.f32.mrb[0].mxu0
        %9623 = vmatprep.mubr.bf16.mxu0 0
        %9624 = vmatmul.mubr.bf16.gmra.mrb[0].mxu0 %v9376
        %v9625 = vpop.f32.mrb[0].mxu0
        %v9626 = vadd.f32 %v9413, %v9625
        %v9627 = vpop.f32.mrb[0].mxu0
        %v9628 = vpop.f32.mrb[0].mxu0
        %v9629 = vadd.f32 %v9413, %v9628
        %v9630 = vpop.f32.mrb[0].mxu0
        %9631 = vmatprep.mubr.bf16.mxu0 0
        %9632 = vmatmul.mubr.bf16.gmra.mrb[0].mxu0 %v9377
        %v9633 = vpop.f32.mrb[0].mxu0
        %v9634 = vadd.f32 %v9413, %v9633
        %v9635 = vpop.f32.mrb[0].mxu0
        %v9636 = vpop.f32.mrb[0].mxu0
        %v9637 = vadd.f32 %v9413, %v9636
        %v9638 = vpop.f32.mrb[0].mxu0
        %9639 = vmatprep.mubr.bf16.mxu0 0
        %9640 = vmatmul.mubr.bf16.gmra.mrb[0].mxu0 %v9378
        %v9641 = vpop.f32.mrb[0].mxu0
        %v9642 = vadd.f32 %v9413, %v9641
        %v9643 = vpop.f32.mrb[0].mxu0
        %v9644 = vpop.f32.mrb[0].mxu0
        %v9645 = vadd.f32 %v9413, %v9644
        %v9646 = vpop.f32.mrb[0].mxu0
        %9647 = vmatprep.mubr.bf16.mxu0 0
        %9648 = vmatmul.mubr.bf16.gmra.mrb[0].mxu0 %v9379
        %v9649 = vpop.f32.mrb[0].mxu0
        %v9650 = vadd.f32 %v9413, %v9649
        %v9651 = vpop.f32.mrb[0].mxu0
        %v9652 = vpop.f32.mrb[0].mxu0
        %v9653 = vadd.f32 %v9413, %v9652
        %v9654 = vpop.f32.mrb[0].mxu0
        %9655 = vmatprep.mubr.bf16.mxu0 0
        %9656 = vmatmul.mubr.bf16.gmra.mrb[0].mxu0 %v9380
        %v9657 = vpop.f32.mrb[0].mxu0
        %v9658 = vadd.f32 %v9413, %v9657
        %v9659 = vpop.f32.mrb[0].mxu0
        %v9660 = vpop.f32.mrb[0].mxu0
        %v9661 = vadd.f32 %v9413, %v9660
        %v9662 = vpop.f32.mrb[0].mxu0
        %9663 = vmatprep.mubr.bf16.mxu0 0
        %9664 = vmatmul.mubr.bf16.gmra.mrb[0].mxu0 %v9381
        %v9665 = vpop.f32.mrb[0].mxu0
        %v9666 = vadd.f32 %v9413, %v9665
        %v9667 = vpop.f32.mrb[0].mxu0
        %v9668 = vpop.f32.mrb[0].mxu0
        %v9669 = vadd.f32 %v9413, %v9668
        %v9670 = vpop.f32.mrb[0].mxu0
        %9671 = vmatprep.mubr.bf16.mxu0 0
        %9672 = vmatmul.mubr.bf16.gmra.mrb[0].mxu0 %v9382
        %v9673 = vpop.f32.mrb[0].mxu0
        %v9674 = vadd.f32 %v9413, %v9673
        %v9675 = vpop.f32.mrb[0].mxu0
        %v9676 = vpop.f32.mrb[0].mxu0
        %v9677 = vadd.f32 %v9413, %v9676
        %v9678 = vpop.f32.mrb[0].mxu0
        %9679 = vmatprep.mubr.bf16.mxu0 0
        %9680 = vmatmul.mubr.bf16.gmra.mrb[0].mxu0 %v9383
        %v9681 = vpop.f32.mrb[0].mxu0
        %v9682 = vadd.f32 %v9413, %v9681
        %v9683 = vpop.f32.mrb[0].mxu0
        %v9684 = vpop.f32.mrb[0].mxu0
        %v9685 = vadd.f32 %v9413, %v9684
        %v9686 = vpop.f32.mrb[0].mxu0
        %9687 = vmatprep.mubr.bf16.mxu0 0
        %9688 = vmatmul.mubr.bf16.gmra.mrb[0].mxu0 %v9384
        %v9689 = vpop.f32.mrb[0].mxu0
        %v9690 = vadd.f32 %v9413, %v9689
        %v9691 = vpop.f32.mrb[0].mxu0
        %v9692 = vpop.f32.mrb[0].mxu0
        %v9693 = vadd.f32 %v9413, %v9692
        %v9694 = vpop.f32.mrb[0].mxu0
        %9695 = vmatprep.mubr.bf16.mxu0 0
        %9696 = vmatmul.mubr.bf16.gmra.mrb[0].mxu0 %v9385
        %v9697 = vpop.f32.mrb[0].mxu0
        %v9698 = vadd.f32 %v9413, %v9697
        %v9699 = vpop.f32.mrb[0].mxu0
        %v9700 = vpop.f32.mrb[0].mxu0
        %v9701 = vadd.f32 %v9413, %v9700
        %v9702 = vpop.f32.mrb[0].mxu0
        %9703 = vmatprep.mubr.bf16.mxu0 0
        %9704 = vmatmul.mubr.bf16.gmra.mrb[0].mxu0 %v9386
        %v9705 = vpop.f32.mrb[0].mxu0
        %v9706 = vadd.f32 %v9413, %v9705
        %v9707 = vpop.f32.mrb[0].mxu0
        %v9708 = vpop.f32.mrb[0].mxu0
        %v9709 = vadd.f32 %v9413, %v9708
        %v9710 = vpop.f32.mrb[0].mxu0
        %9711 = vmatprep.mubr.bf16.mxu0 0
        %9712 = vmatmul.mubr.bf16.gmra.mrb[0].mxu0 %v9387
        %v9713 = vpop.f32.mrb[0].mxu0
        %v9714 = vadd.f32 %v9413, %v9713
        %v9715 = vpop.f32.mrb[0].mxu0
        %v9716 = vpop.f32.mrb[0].mxu0
        %v9717 = vadd.f32 %v9413, %v9716
        %v9718 = vpop.f32.mrb[0].mxu0
        %9719 = vmatprep.mubr.bf16.mxu0 0
        %9720 = vmatmul.mubr.bf16.gmra.mrb[0].mxu0 %v9388
        %v9721 = vpop.f32.mrb[0].mxu0
        %v9722 = vadd.f32 %v9413, %v9721
        %v9723 = vpop.f32.mrb[0].mxu0
        %v9724 = vpop.f32.mrb[0].mxu0
        %v9725 = vadd.f32 %v9413, %v9724
        %v9726 = vpop.f32.mrb[0].mxu0
        %9727 = vmatprep.mubr.bf16.mxu0 0
        %9728 = vmatmul.mubr.bf16.gmra.mrb[0].mxu0 %v9389
        %v9729 = vpop.f32.mrb[0].mxu0
        %v9730 = vadd.f32 %v9413, %v9729
        %v9731 = vpop.f32.mrb[0].mxu0
        %v9732 = vpop.f32.mrb[0].mxu0
        %v9733 = vadd.f32 %v9413, %v9732
        %v9734 = vpop.f32.mrb[0].mxu0
        %9735 = vmatprep.mubr.bf16.mxu0 0
        %9736 = vmatmul.mubr.bf16.gmra.mrb[0].mxu0 %v9390
        %v9737 = vpop.f32.mrb[0].mxu0
        %v9738 = vadd.f32 %v9413, %v9737
        %v9739 = vpop.f32.mrb[0].mxu0
        %v9740 = vpop.f32.mrb[0].mxu0
        %v9741 = vadd.f32 %v9413, %v9740
        %v9742 = vpop.f32.mrb[0].mxu0
        %9743 = vmatprep.mubr.bf16.mxu0 0
        %9744 = vmatmul.mubr.bf16.gmra.mrb[0].mxu0 %v9391
        %v9745 = vpop.f32.mrb[0].mxu0
        %v9746 = vadd.f32 %v9413, %v9745
        %v9747 = vpop.f32.mrb[0].mxu0
        %v9748 = vpop.f32.mrb[0].mxu0
        %v9749 = vadd.f32 %v9413, %v9748
        %v9750 = vpop.f32.mrb[0].mxu0
        %9751 = vdwg.mxu0
        %v9752 = vadd.f32 %v301, %v9498
        %v9753 = vadd.f32 %v302, %v9501
        %v9754 = vadd.f32 %v303, %v9506
        %v9755 = vadd.f32 %v304, %v9509
        %v9756 = vadd.f32 %v305, %v9514
        %v9757 = vadd.f32 %v306, %v9517
        %v9758 = vadd.f32 %v307, %v9522
        %v9759 = vadd.f32 %v308, %v9525
        %v9760 = vadd.f32 %v309, %v9530
        %v9761 = vadd.f32 %v310, %v9533
        %v9762 = vadd.f32 %v311, %v9538
        %v9763 = vadd.f32 %v312, %v9541
        %v9764 = vadd.f32 %v313, %v9546
        %v9765 = vadd.f32 %v314, %v9549
        %v9766 = vadd.f32 %v315, %v9554
        %v9767 = vadd.f32 %v316, %v9557
        %v9768 = vadd.f32 %v317, %v9562
        %v9769 = vadd.f32 %v318, %v9565
        %v9770 = vadd.f32 %v319, %v9570
        %v9771 = vadd.f32 %v320, %v9573
        %v9772 = vadd.f32 %v321, %v9578
        %v9773 = vadd.f32 %v322, %v9581
        %v9774 = vadd.f32 %v323, %v9586
        %v9775 = vadd.f32 %v324, %v9589
        %v9776 = vadd.f32 %v325, %v9594
        %v9777 = vadd.f32 %v326, %v9597
        %v9778 = vadd.f32 %v327, %v9602
        %v9779 = vadd.f32 %v328, %v9605
        %v9780 = vadd.f32 %v329, %v9610
        %v9781 = vadd.f32 %v330, %v9613
        %v9782 = vadd.f32 %v331, %v9618
        %v9783 = vadd.f32 %v332, %v9621
        %v9784 = vadd.f32 %v333, %v9626
        %v9785 = vadd.f32 %v334, %v9629
        %v9786 = vadd.f32 %v335, %v9634
        %v9787 = vadd.f32 %v336, %v9637
        %v9788 = vadd.f32 %v337, %v9642
        %v9789 = vadd.f32 %v338, %v9645
        %v9790 = vadd.f32 %v339, %v9650
        %v9791 = vadd.f32 %v340, %v9653
        %v9792 = vadd.f32 %v341, %v9658
        %v9793 = vadd.f32 %v342, %v9661
        %v9794 = vadd.f32 %v343, %v9666
        %v9795 = vadd.f32 %v344, %v9669
        %v9796 = vadd.f32 %v345, %v9674
        %v9797 = vadd.f32 %v346, %v9677
        %v9798 = vadd.f32 %v347, %v9682
        %v9799 = vadd.f32 %v348, %v9685
        %v9800 = vadd.f32 %v349, %v9690
        %v9801 = vadd.f32 %v350, %v9693
        %v9802 = vadd.f32 %v351, %v9698
        %v9803 = vadd.f32 %v352, %v9701
        %v9804 = vadd.f32 %v353, %v9706
        %v9805 = vadd.f32 %v354, %v9709
        %v9806 = vadd.f32 %v355, %v9714
        %v9807 = vadd.f32 %v356, %v9717
        %v9808 = vadd.f32 %v357, %v9722
        %v9809 = vadd.f32 %v358, %v9725
        %v9810 = vadd.f32 %v359, %v9730
        %v9811 = vadd.f32 %v360, %v9733
        %v9812 = vadd.f32 %v361, %v9738
        %v9813 = vadd.f32 %v362, %v9741
        %v9814 = vadd.f32 %v363, %v9746
        %v9815 = vadd.f32 %v364, %v9749
        %9816 = vst.msk [vmem:[%s297] sm:$0xff] %vm365, %v9752
        %9817 = vst.msk [vmem:[%s297 + $0x8] sm:$0xff] %vm365, %v9753
        %9818 = vst.msk [vmem:[%s297 + $0x10] sm:$0xff] %vm365, %v9754
        %9819 = vst.msk [vmem:[%s297 + $0x18] sm:$0xff] %vm365, %v9755
        %9820 = vst.msk [vmem:[%s297 + $0x20] sm:$0xff] %vm365, %v9756
        %9821 = vst.msk [vmem:[%s297 + $0x28] sm:$0xff] %vm365, %v9757
        %9822 = vst.msk [vmem:[%s297 + $0x30] sm:$0xff] %vm365, %v9758
        %9823 = vst.msk [vmem:[%s297 + $0x38] sm:$0xff] %vm365, %v9759
        %9824 = vst.msk [vmem:[%s297 + $0x40] sm:$0xff] %vm365, %v9760
        %9825 = vst.msk [vmem:[%s297 + $0x48] sm:$0xff] %vm365, %v9761
        %9826 = vst.msk [vmem:[%s297 + $0x50] sm:$0xff] %vm365, %v9762
        %9827 = vst.msk [vmem:[%s297 + $0x58] sm:$0xff] %vm365, %v9763
        %9828 = vst.msk [vmem:[%s297 + $0x60] sm:$0xff] %vm365, %v9764
        %9829 = vst.msk [vmem:[%s297 + $0x68] sm:$0xff] %vm365, %v9765
        %9830 = vst.msk [vmem:[%s297 + $0x70] sm:$0xff] %vm365, %v9766
        %9831 = vst.msk [vmem:[%s297 + $0x78] sm:$0xff] %vm365, %v9767
        %9832 = vst.msk [vmem:[%s297 + $0x80] sm:$0xff] %vm365, %v9768
        %9833 = vst.msk [vmem:[%s297 + $0x88] sm:$0xff] %vm365, %v9769
        %9834 = vst.msk [vmem:[%s297 + $0x90] sm:$0xff] %vm365, %v9770
        %9835 = vst.msk [vmem:[%s297 + $0x98] sm:$0xff] %vm365, %v9771
        %9836 = vst.msk [vmem:[%s297 + $0xa0] sm:$0xff] %vm365, %v9772
        %9837 = vst.msk [vmem:[%s297 + $0xa8] sm:$0xff] %vm365, %v9773
        %9838 = vst.msk [vmem:[%s297 + $0xb0] sm:$0xff] %vm365, %v9774
        %9839 = vst.msk [vmem:[%s297 + $0xb8] sm:$0xff] %vm365, %v9775
        %9840 = vst.msk [vmem:[%s297 + $0xc0] sm:$0xff] %vm365, %v9776
        %9841 = vst.msk [vmem:[%s297 + $0xc8] sm:$0xff] %vm365, %v9777
        %9842 = vst.msk [vmem:[%s297 + $0xd0] sm:$0xff] %vm365, %v9778
        %9843 = vst.msk [vmem:[%s297 + $0xd8] sm:$0xff] %vm365, %v9779
        %9844 = vst.msk [vmem:[%s297 + $0xe0] sm:$0xff] %vm365, %v9780
        %9845 = vst.msk [vmem:[%s297 + $0xe8] sm:$0xff] %vm365, %v9781
        %9846 = vst.msk [vmem:[%s297 + $0xf0] sm:$0xff] %vm365, %v9782
        %9847 = vst.msk [vmem:[%s297 + $0xf8] sm:$0xff] %vm365, %v9783
        %9848 = vst.msk [vmem:[%s297 + $0x100] sm:$0xff] %vm365, %v9784
        %9849 = vst.msk [vmem:[%s297 + $0x108] sm:$0xff] %vm365, %v9785
        %9850 = vst.msk [vmem:[%s297 + $0x110] sm:$0xff] %vm365, %v9786
        %9851 = vst.msk [vmem:[%s297 + $0x118] sm:$0xff] %vm365, %v9787
        %9852 = vst.msk [vmem:[%s297 + $0x120] sm:$0xff] %vm365, %v9788
        %9853 = vst.msk [vmem:[%s297 + $0x128] sm:$0xff] %vm365, %v9789
        %9854 = vst.msk [vmem:[%s297 + $0x130] sm:$0xff] %vm365, %v9790
        %9855 = vst.msk [vmem:[%s297 + $0x138] sm:$0xff] %vm365, %v9791
        %9856 = vst.msk [vmem:[%s297 + $0x140] sm:$0xff] %vm365, %v9792
        %9857 = vst.msk [vmem:[%s297 + $0x148] sm:$0xff] %vm365, %v9793
        %9858 = vst.msk [vmem:[%s297 + $0x150] sm:$0xff] %vm365, %v9794
        %9859 = vst.msk [vmem:[%s297 + $0x158] sm:$0xff] %vm365, %v9795
        %9860 = vst.msk [vmem:[%s297 + $0x160] sm:$0xff] %vm365, %v9796
        %9861 = vst.msk [vmem:[%s297 + $0x168] sm:$0xff] %vm365, %v9797
        %9862 = vst.msk [vmem:[%s297 + $0x170] sm:$0xff] %vm365, %v9798
        %9863 = vst.msk [vmem:[%s297 + $0x178] sm:$0xff] %vm365, %v9799
        %9864 = vst.msk [vmem:[%s297 + $0x180] sm:$0xff] %vm365, %v9800
        %9865 = vst.msk [vmem:[%s297 + $0x188] sm:$0xff] %vm365, %v9801
        %9866 = vst.msk [vmem:[%s297 + $0x190] sm:$0xff] %vm365, %v9802
        %9867 = vst.msk [vmem:[%s297 + $0x198] sm:$0xff] %vm365, %v9803
        %9868 = vst.msk [vmem:[%s297 + $0x1a0] sm:$0xff] %vm365, %v9804
        %9869 = vst.msk [vmem:[%s297 + $0x1a8] sm:$0xff] %vm365, %v9805
        %9870 = vst.msk [vmem:[%s297 + $0x1b0] sm:$0xff] %vm365, %v9806
        %9871 = vst.msk [vmem:[%s297 + $0x1b8] sm:$0xff] %vm365, %v9807
        %9872 = vst.msk [vmem:[%s297 + $0x1c0] sm:$0xff] %vm365, %v9808
        %9873 = vst.msk [vmem:[%s297 + $0x1c8] sm:$0xff] %vm365, %v9809
        %9874 = vst.msk [vmem:[%s297 + $0x1d0] sm:$0xff] %vm365, %v9810
        %9875 = vst.msk [vmem:[%s297 + $0x1d8] sm:$0xff] %vm365, %v9811
        %9876 = vst.msk [vmem:[%s297 + $0x1e0] sm:$0xff] %vm365, %v9812
        %9877 = vst.msk [vmem:[%s297 + $0x1e8] sm:$0xff] %vm365, %v9813
        %9878 = vst.msk [vmem:[%s297 + $0x1f0] sm:$0xff] %vm365, %v9814
        %9879 = vst.msk [vmem:[%s297 + $0x1f8] sm:$0xff] %vm365, %v9815
        %s9880 = sand.u32 %s184, 1
        %s9881 = scalar_lea.sflag [#allocation5], %s9880
        %s9882 = sand.u32 %s184, 1
        %s9883 = smul.addr %s9882, 512
        %s9884 = scalar_lea.vmem [#allocation6], %s9883
        // Predicated region
        $region53: #{convnext_block.1} parent=47 // pred_check
          %p9885 = pneg %p194
        $region54: #{convnext_block.1} parent=47 // pred_check_branch
          %9887 = sbr.rel (%p9885) target = $region56
        $region55: #{convnext_block.1} parent=47 // pred_region
          %s9888 = smul.u32 2, %s24
          %s9890 = ssub.s32 8192, 8192
          %9891 = vsyncadd %s9881, %s9890
          %s9892 = smul.addr %s9888, 32
          %s9893 = smul.addr %s9892, 128
          %s9894 = scalar_lea.hbm %s7, %s9893
          %s9895 = sshll.u32 %s9884, 4
          %s9896 = int_to_ptr.vmem [resolvable:$true] %s9895
          %9901 = dma.vmem_to_hbm [thread:$0]  %s9896, 8192, %s9894, %s9881, 128, 128, 8
        $region56: #{convnext_block.1} parent=47 // pred_fallthru
          _
      $region48: #{convnext_block.1} parent=5 // pred_fallthru
        _
      %p9902 = scmp.le.s32.totalorder 2, %s19
      // Predicated region
      $region57: #{convnext_block.1} parent=5 // pred_check
        %p9903 = pneg %p9902
      $region58: #{convnext_block.1} parent=5 // pred_check_branch
        %9905 = sbr.rel (%p9903) target = $region60
      $region59: #{convnext_block.1} parent=5 // pred_region
        %s9906 = ssub.s32 %s19, 2
        // Predicated region
        $region61: #{convnext_block.1} parent=59 // pred_check
          %p9907 = pneg %p200
        $region62: #{convnext_block.1} parent=59 // pred_check_branch
          %9909 = sbr.rel (%p9907) target = $region64
        $region63: #{convnext_block.1} parent=59 // pred_region
          %s9910 = sand.u32 %s185, 1
          %s9911 = scalar_lea.sflag [#allocation5], %s9910
          %s9912 = sand.u32 %s185, 1
          %s9913 = smul.addr %s9912, 512
          %s9914 = scalar_lea.vmem [#allocation6], %s9913
          %9915 = dma.done %s9911, 8192
        $region64: #{convnext_block.1} parent=59 // pred_fallthru
          _
      $region60: #{convnext_block.1} parent=5 // pred_fallthru
        _
    $region6: #{convnext_block.1} parent=1 // loop_footer
      %s23 = sadd.s32 1, %s19
    $region7: #{convnext_block.1} parent=1 // loop_footer_branch
      %18 = sbr.rel target = $region3
    $region8: #{convnext_block.1} parent=1 // loop_exit
      _
    %9916 = vsyncpa [#allocation4], 1
    %s9917 = scalar_lea.sflag [#allocation4], 1
    %9918 = vsyncpa %s9917, 1
    %9919 = vsyncpa [#allocation5], 1
    %s9920 = scalar_lea.sflag [#allocation5], 1
    %9921 = vsyncpa %s9920, 1

</llo_original>
